<compile_context>
chip_gen: v6e
topology: v6e:2x2x1
jax: 0.10.0
libtpu: 0.0.40
codegen_flags: <defaults>
</compile_context>

<pallas_src>
import functools

import jax
import jax.numpy as jnp
import numpy as np
from jax.experimental import pallas as pl
from jax.experimental.pallas import tpu as pltpu


# ----------------------------------------------------------------------------- #
# In-kernel helpers
# ----------------------------------------------------------------------------- #
def _gelu_tanh(y):
    # TODO(synk): PyTorch nn.GELU default is exact erf-GELU; tanh approximation used
    # for safe Mosaic lowering (difference ~1e-3).
    c = 0.7978845608028654  # sqrt(2/pi)
    return 0.5 * y * (1.0 + jnp.tanh(c * (y + 0.044715 * y * y * y)))


def _layer_norm(x_f32, gamma, beta, eps):
    mu = jnp.mean(x_f32, axis=-1, keepdims=True)
    xc = x_f32 - mu
    var = jnp.mean(xc * xc, axis=-1, keepdims=True)
    return (xc * jax.lax.rsqrt(var + eps)) * gamma + beta


# ----------------------------------------------------------------------------- #
# Pallas kernels
# ----------------------------------------------------------------------------- #
def _linear_bias_kernel(x_ref, w_ref, b_ref, o_ref):
    """Plain tiled linear: (rows x in) @ (in x out) + bias.  (PatchMerging)"""
    y = jnp.dot(x_ref[...].astype(jnp.bfloat16), w_ref[...],
                preferred_element_type=jnp.float32)
    o_ref[...] = (y + b_ref[...]).astype(o_ref.dtype)


def _mlp_block_kernel(x_ref, g_ref, beta_ref, w1_ref, b1_ref, w2_ref, b2_ref, o_ref,
                      *, eps):
    """Fused Residual(PreNorm(FeedForward)): LN -> FF1 -> GELU -> FF2 -> +x.

    The (tr, 4*dim) hidden activation stays in VMEM/vregs (no HBM round trip).
    """
    x = x_ref[...].astype(jnp.float32)                       # (tr, dim)
    xn = _layer_norm(x, g_ref[...], beta_ref[...], eps)
    h = jnp.dot(xn.astype(jnp.bfloat16), w1_ref[...],
                preferred_element_type=jnp.float32)
    h = _gelu_tanh(h + b1_ref[...])                          # (tr, 4*dim) f32
    y = jnp.dot(h.astype(jnp.bfloat16), w2_ref[...],
                preferred_element_type=jnp.float32)
    o_ref[...] = (y + b2_ref[...] + x).astype(o_ref.dtype)


def _attn_block_kernel(x_ref, g_ref, beta_ref, qkvw_ref, outw_ref, outb_ref, bias_ref,
                       o_ref, *, heads, head_dim, scale, eps, per_window_bias):
    """Fused Residual(PreNorm(WindowAttention)) on a block of `wb` whole windows.

    x block: (wb, n, dim) f32 window-major.  Per window (static unroll):
      LN -> QKV matmul -> per-head softmax attention (+precombined rel-pos/shift bias)
      -> head concat -> out-projection -> + residual -> store.
    Only 2-D matmuls / lane slices / last-axis concats are used (safe Mosaic lowering).
    """
    wb = x_ref.shape[0]
    inner = heads * head_dim
    gamma = g_ref[...]                                       # (1, dim)
    beta = beta_ref[...]                                     # (1, dim)
    qkv_w = qkvw_ref[...]                                    # (dim, 3*inner) bf16
    out_w = outw_ref[...]                                    # (inner, dim)   bf16
    out_b = outb_ref[...]                                    # (1, dim)       f32

    for w in range(wb):                                      # wb is small & static
        xw = x_ref[w].astype(jnp.float32)                    # (n, dim)
        xn = _layer_norm(xw, gamma, beta, eps)
        qkv = jnp.dot(xn.astype(jnp.bfloat16), qkv_w,
                      preferred_element_type=jnp.float32)    # (n, 3*inner)
        bias_w = bias_ref[w] if per_window_bias else bias_ref[0]   # (n, n) f32

        head_outs = []
        for h in range(heads):
            lo = h * head_dim
            q = qkv[:, lo:lo + head_dim].astype(jnp.bfloat16)
            k = qkv[:, inner + lo:inner + lo + head_dim].astype(jnp.bfloat16)
            v = qkv[:, 2 * inner + lo:2 * inner + lo + head_dim].astype(jnp.bfloat16)
            s = jax.lax.dot_general(q, k, (((1,), (1,)), ((), ())),
                                    preferred_element_type=jnp.float32)
            s = s * scale + bias_w                           # rel-pos bias (+ -inf mask)
            m = jnp.max(s, axis=-1, keepdims=True)
            p = jnp.exp(s - m)
            denom = jnp.sum(p, axis=-1, keepdims=True)
            attn = p * pl.reciprocal(denom, approx=True)
            oh = jax.lax.dot_general(attn.astype(jnp.bfloat16), v,
                                     (((1,), (0,)), ((), ())),
                                     preferred_element_type=jnp.float32)
            head_outs.append(oh)                             # (n, head_dim)
        ow = head_outs[0] if heads == 1 else jnp.concatenate(head_outs, axis=-1)

        y = jnp.dot(ow.astype(jnp.bfloat16), out_w,
                    preferred_element_type=jnp.float32)
        y = y + out_b + xw                                   # residual add in-kernel
        o_ref[w] = y.astype(o_ref.dtype)


# ----------------------------------------------------------------------------- #
# Tiling helpers
# ----------------------------------------------------------------------------- #
def _row_tile(rows, cap=512):
    """Largest power-of-two row tile <= cap, preferring >= 2 grid steps (v7x megacore)."""
    limit = min(cap, rows // 2) if rows >= 16 else rows
    for t in (512, 256, 128, 64, 32, 16, 8):
        if t <= limit and rows % t == 0:
            return t
    # TODO(synk): pad rows to a sublane multiple for awkward row counts instead of
    # falling back to one full-array block.
    return rows


def _pick_window_block(num_w, total_windows, cap=8):
    """Largest divisor of num_w (<= cap windows per step) keeping >= 2 grid steps."""
    best = 1
    for d in range(1, num_w + 1):
        if num_w % d == 0 and d <= cap and (total_windows // d >= 2 or d == 1):
            best = d
    return best


# ----------------------------------------------------------------------------- #
# pallas_call wrappers
# ----------------------------------------------------------------------------- #
def patch_merging(x_nchw, w_bf16, b_row, df):
    b_, c, h, w_ = x_nchw.shape
    nh, nw = h // df, w_ // df
    # nn.Unfold(kernel=stride=df) + view + permute  ==  feature order (c, kh, kw).
    # TODO(synk): this relayout could move into a BlockSpec index_map on the NCHW
    # input; kept in XLA (single small pass at stage entry).
    p = x_nchw.reshape(b_, c, nh, df, nw, df)
    p = p.transpose(0, 2, 4, 1, 3, 5).reshape(b_ * nh * nw, c * df * df)
    rows, din = p.shape
    dout = w_bf16.shape[1]
    tr = _row_tile(rows)
    y = pl.pallas_call(
        _linear_bias_kernel,
        out_shape=jax.ShapeDtypeStruct((rows, dout), jnp.float32),
        grid=(rows // tr,),
        in_specs=[
            pl.BlockSpec((tr, din), lambda i: (i, 0)),
            pl.BlockSpec((din, dout), lambda i: (0, 0)),
            pl.BlockSpec((1, dout), lambda i: (0, 0)),
        ],
        out_specs=pl.BlockSpec((tr, dout), lambda i: (i, 0)),
        compiler_params=pltpu.CompilerParams(dimension_semantics=("parallel",)),
    )(p, w_bf16, b_row)
    return y.reshape(b_, nh, nw, dout)


def mlp_block(x, p):
    b, H, W, dim = x.shape
    rows = b * H * W
    x2d = x.reshape(rows, dim)                 # free metadata reshape in XLA
    hid = p["ff_w1"].shape[1]
    tr = _row_tile(rows)
    y = pl.pallas_call(
        functools.partial(_mlp_block_kernel, eps=1e-5),
        out_shape=jax.ShapeDtypeStruct((rows, dim), x.dtype),
        grid=(rows // tr,),
        in_specs=[
            pl.BlockSpec((tr, dim), lambda i: (i, 0)),
            pl.BlockSpec((1, dim), lambda i: (0, 0)),
            pl.BlockSpec((1, dim), lambda i: (0, 0)),
            pl.BlockSpec((dim, hid), lambda i: (0, 0)),
            pl.BlockSpec((1, hid), lambda i: (0, 0)),
            pl.BlockSpec((hid, dim), lambda i: (0, 0)),
            pl.BlockSpec((1, dim), lambda i: (0, 0)),
        ],
        out_specs=pl.BlockSpec((tr, dim), lambda i: (i, 0)),
        compiler_params=pltpu.CompilerParams(dimension_semantics=("parallel",)),
    )(x2d, p["ln2_g"], p["ln2_b"], p["ff_w1"], p["ff_b1"], p["ff_w2"], p["ff_b2"])
    return y.reshape(b, H, W, dim)


def _window_partition(x, ws):
    b, H, W, dim = x.shape
    nw_h, nw_w = H // ws, W // ws
    xw = x.reshape(b, nw_h, ws, nw_w, ws, dim).transpose(0, 1, 3, 2, 4, 5)
    return xw.reshape(b * nw_h * nw_w, ws * ws, dim)


def _window_merge(xw, b, H, W, ws):
    nw_h, nw_w = H // ws, W // ws
    x = xw.reshape(b, nw_h, nw_w, ws, ws, -1).transpose(0, 1, 3, 2, 4, 5)
    return x.reshape(b, H, W, -1)


def attention_block(x, p, shifted, ws, heads, head_dim):
    """Fused Residual(PreNorm(WindowAttention)); rolls + window partition in XLA."""
    b, H, W, dim = x.shape
    disp = ws // 2
    # LN is per-position so LN(roll(x)) == roll(LN(x)); roll first, LN in-kernel.
    x_in = jnp.roll(x, shift=(-disp, -disp), axis=(1, 2)) if shifted else x
    # TODO(synk): fold the cyclic shift + window partition/merge into the kernel's
    # index maps (needs element-level gathers); kept as XLA passes over the dim-wide
    # activation for now.
    xw = _window_partition(x_in, ws)                          # (G, n, dim)
    G, n, _ = xw.shape
    num_w = (H // ws) * (W // ws)
    inner = heads * head_dim
    bias = p["attn_bias"]                                     # (num_w or 1, n, n) f32
    per_window = bias.shape[0] > 1
    wb = _pick_window_block(num_w, G)
    nb = num_w // wb
    scale = float(head_dim) ** -0.5

    if per_window:
        bias_spec = pl.BlockSpec((wb, n, n), lambda g: (g % nb, 0, 0))
    else:
        bias_spec = pl.BlockSpec((1, n, n), lambda g: (0, 0, 0))

    yw = pl.pallas_call(
        functools.partial(_attn_block_kernel, heads=heads, head_dim=head_dim,
                          scale=scale, eps=1e-5, per_window_bias=per_window),
        out_shape=jax.ShapeDtypeStruct((G, n, dim), xw.dtype),
        grid=(G // wb,),
        in_specs=[
            pl.BlockSpec((wb, n, dim), lambda g: (g, 0, 0)),
            pl.BlockSpec((1, dim), lambda g: (0, 0)),
            pl.BlockSpec((1, dim), lambda g: (0, 0)),
            pl.BlockSpec((dim, 3 * inner), lambda g: (0, 0)),
            pl.BlockSpec((inner, dim), lambda g: (0, 0)),
            pl.BlockSpec((1, dim), lambda g: (0, 0)),
            bias_spec,
        ],
        out_specs=pl.BlockSpec((wb, n, dim), lambda g: (g, 0, 0)),
        compiler_params=pltpu.CompilerParams(dimension_semantics=("parallel",)),
    )(xw, p["ln1_g"], p["ln1_b"], p["qkv_w"], p["out_w"], p["out_b"], bias)

    y = _window_merge(yw, b, H, W, ws)
    if shifted:
        y = jnp.roll(y, shift=(disp, disp), axis=(1, 2))
    return y


def swin_block(x, p, shifted, ws, heads, head_dim):
    x = attention_block(x, p, shifted, ws, heads, head_dim)
    x = mlp_block(x, p)
    return x


def stage_forward(x_nchw, prep, cfg):
    df, ws = cfg["downscaling_factor"], cfg["window_size"]
    heads, head_dim = cfg["num_heads"], cfg["head_dim"]
    x = patch_merging(x_nchw, prep["pm_w"], prep["pm_b"], df)    # (b, nh, nw, hidden)
    for reg_p, shf_p in prep["blocks"]:
        x = swin_block(x, reg_p, False, ws, heads, head_dim)
        x = swin_block(x, shf_p, True, ws, heads, head_dim)
    return x.transpose(0, 3, 1, 2)                               # back to NCHW


# ----------------------------------------------------------------------------- #
# Mask / relative-position helpers (mirror the PyTorch helpers exactly)
# ----------------------------------------------------------------------------- #
def create_mask(window_size, displacement, upper_lower, left_right):
    n = window_size ** 2
    mask = np.zeros((n, n), dtype=np.float32)
    if upper_lower:
        mask[-displacement * window_size:, :-displacement * window_size] = -np.inf
        mask[:-displacement * window_size, -displacement * window_size:] = -np.inf
    if left_right:
        mask = mask.reshape(window_size, window_size, window_size, window_size)
        mask[:, -displacement:, :, :-displacement] = -np.inf
        mask[:, :-displacement, :, -displacement:] = -np.inf
        mask = mask.reshape(n, n)
    return mask


def get_relative_indices(window_size):
    idx = np.array([[x, y] for x in range(window_size) for y in range(window_size)])
    rel = idx[None, :, :] - idx[:, None, :] + window_size - 1
    return rel  # (n, n, 2), values in [0, 2*ws-2]


def build_attn_bias(p, cfg, shifted, nw_h, nw_w):
    """Rel-pos bias (+ shift masks pre-added) -> (num_w or 1, n, n) f32, built once."""
    ws = cfg["window_size"]
    n = ws * ws
    if cfg["relative_pos_embedding"]:
        rel = np.asarray(p["rel_idx"])
        rel_bias = p["pos_emb"][rel[..., 0], rel[..., 1]].astype(jnp.float32)
    else:
        rel_bias = p["pos_emb"].astype(jnp.float32)              # (n, n)
    if not shifted:
        return rel_bias.reshape(1, n, n)
    disp = ws // 2
    ul = jnp.asarray(create_mask(ws, disp, upper_lower=True, left_right=False))
    lr = jnp.asarray(create_mask(ws, disp, upper_lower=False, left_right=True))
    bias = jnp.tile(rel_bias[None, None], (nw_h, nw_w, 1, 1))
    bias = bias.at[-1, :, :, :].add(ul)      # dots[:, :, -nw_w:]        += upper_lower
    bias = bias.at[:, -1, :, :].add(lr)      # dots[:, :, nw_w-1::nw_w]  += left_right
    return bias.reshape(nw_h * nw_w, n, n)


# ----------------------------------------------------------------------------- #
# Parameter init (shapes follow the PyTorch __init__) and one-time preparation
# ----------------------------------------------------------------------------- #
def init_block_params(key, dim, heads, head_dim, window_size, relative_pos_embedding):
    inner = heads * head_dim
    ks = jax.random.split(key, 5)
    if relative_pos_embedding:
        pos_emb = jax.random.normal(ks[1], (2 * window_size - 1, 2 * window_size - 1),
                                    jnp.float32)
    else:
        pos_emb = jax.random.normal(ks[1], (window_size ** 2, window_size ** 2),
                                    jnp.float32)
    return dict(
        ln1_g=jnp.ones((dim,), jnp.float32),
        ln1_b=jnp.zeros((dim,), jnp.float32),
        qkv_w=0.02 * jax.random.normal(ks[0], (dim, 3 * inner), jnp.float32),
        pos_emb=pos_emb,
        out_w=0.02 * jax.random.normal(ks[2], (inner, dim), jnp.float32),
        out_b=jnp.zeros((dim,), jnp.float32),
        ln2_g=jnp.ones((dim,), jnp.float32),
        ln2_b=jnp.zeros((dim,), jnp.float32),
        ff_w1=0.02 * jax.random.normal(ks[3], (dim, 4 * dim), jnp.float32),
        ff_b1=jnp.zeros((4 * dim,), jnp.float32),
        ff_w2=0.02 * jax.random.normal(ks[4], (4 * dim, dim), jnp.float32),
        ff_b2=jnp.zeros((dim,), jnp.float32),
        rel_idx=jnp.asarray(get_relative_indices(window_size), jnp.int32),
    )


def init_params(key, cfg):
    in_ch, hidden, df = cfg["in_channels"], cfg["hidden_dimension"], cfg["downscaling_factor"]
    heads, head_dim, ws = cfg["num_heads"], cfg["head_dim"], cfg["window_size"]
    rpe = cfg["relative_pos_embedding"]
    n_pairs = cfg["layers"] // 2
    keys = jax.random.split(key, 2 + 2 * n_pairs)
    params = dict(
        pm_w=0.02 * jax.random.normal(keys[0], (in_ch * df * df, hidden), jnp.float32),
        pm_b=jnp.zeros((hidden,), jnp.float32),
        blocks=[],
    )
    for i in range(n_pairs):
        reg = init_block_params(keys[2 + 2 * i], hidden, heads, head_dim, ws, rpe)
        shf = init_block_params(keys[3 + 2 * i], hidden, heads, head_dim, ws, rpe)
        params["blocks"].append((reg, shf))
    return params


def _prepare_block(p, cfg, shifted, nw_h, nw_w):
    """One-time: bf16 weight copies, row-shaped biases, combined attention bias."""
    return dict(
        ln1_g=p["ln1_g"].reshape(1, -1), ln1_b=p["ln1_b"].reshape(1, -1),
        qkv_w=p["qkv_w"].astype(jnp.bfloat16),
        out_w=p["out_w"].astype(jnp.bfloat16), out_b=p["out_b"].reshape(1, -1),
        ln2_g=p["ln2_g"].reshape(1, -1), ln2_b=p["ln2_b"].reshape(1, -1),
        ff_w1=p["ff_w1"].astype(jnp.bfloat16), ff_b1=p["ff_b1"].reshape(1, -1),
        ff_w2=p["ff_w2"].astype(jnp.bfloat16), ff_b2=p["ff_b2"].reshape(1, -1),
        attn_bias=build_attn_bias(p, cfg, shifted, nw_h, nw_w),
    )


def prepare_params(params, cfg, grid_h, grid_w):
    ws = cfg["window_size"]
    nw_h, nw_w = grid_h // ws, grid_w // ws
    prep = dict(
        pm_w=params["pm_w"].astype(jnp.bfloat16),
        pm_b=params["pm_b"].reshape(1, -1),
        blocks=[],
    )
    for reg, shf in params["blocks"]:
        prep["blocks"].append((
            _prepare_block(reg, cfg, False, nw_h, nw_w),
            _prepare_block(shf, cfg, True, nw_h, nw_w),
        ))
    return prep


# ----------------------------------------------------------------------------- #
if __name__ == "__main__":
    cfg = dict(
        in_channels=4,
        hidden_dimension=32,
        layers=2,                   # one (regular, shifted) pair
        downscaling_factor=2,
        num_heads=2,
        head_dim=16,
        window_size=4,
        relative_pos_embedding=True,
    )
    key = jax.random.PRNGKey(0)
    k_param, k_data = jax.random.split(key)
    params = init_params(k_param, cfg)

    B, C, H, W = 2, cfg["in_channels"], 16, 16
    x = jax.random.normal(k_data, (B, C, H, W), jnp.float32)

    nh, nw = H // cfg["downscaling_factor"], W // cfg["downscaling_factor"]
    prep = prepare_params(params, cfg, nh, nw)   # bf16 weights / biases built once

    fwd = jax.jit(lambda inp, pp: stage_forward(inp, pp, cfg))
    out = jax.block_until_ready(fwd(x, prep))

    expected = (B, cfg["hidden_dimension"], nh, nw)
    assert out.shape == expected, (out.shape, expected)
    assert bool(jnp.all(jnp.isfinite(out)))
    print("KERNEL_OK")
</pallas_src>

<mosaic_0001>
module attributes {stable_mosaic.version = 11 : i64} {
  func.func @_linear_bias_kernel(%arg0: i32, %arg1: memref<64x16xf32, #tpu.memory_space<vmem>>, %arg2: memref<16x32xbf16, #tpu.memory_space<vmem>>, %arg3: memref<1x32xf32, #tpu.memory_space<vmem>>, %arg4: memref<64x32xf32, #tpu.memory_space<vmem>>) attributes {dimension_semantics = [#tpu.dimension_semantics<parallel>], iteration_bounds = array<i64: 2>, scalar_prefetch = 0 : i64, scratch_operands = 0 : i64, tpu.core_type = #tpu.core_type<tc>, window_params = [{transform_indices = @transform_0, window_bounds = array<i64: 64, 16>}, {pipeline_mode = #tpu.pipeline_mode<synchronous>, transform_indices = @transform_1, window_bounds = array<i64: 16, 32>}, {pipeline_mode = #tpu.pipeline_mode<synchronous>, transform_indices = @transform_2, window_bounds = array<i64: 1, 32>}, {transform_indices = @transform_3, window_bounds = array<i64: 64, 32>}]} {
    %c0 = arith.constant 0 : index
    %c0_0 = arith.constant 0 : index
    %0 = vector.load %arg1[%c0, %c0_0] : memref<64x16xf32, #tpu.memory_space<vmem>>, vector<64x16xf32>
    %1 = arith.truncf %0 : vector<64x16xf32> to vector<64x16xbf16>
    %c0_1 = arith.constant 0 : index
    %c0_2 = arith.constant 0 : index
    %2 = vector.load %arg2[%c0_1, %c0_2] : memref<16x32xbf16, #tpu.memory_space<vmem>>, vector<16x32xbf16>
    %cst = arith.constant dense<0.000000e+00> : vector<64x32xf32>
    %3 = tpu.matmul %1, %2, %cst {dimension_numbers = #tpu.dot_dimension_numbers<[1], [0], [0], [1], [0, 0, 1, 1], [], []>} : vector<64x16xbf16>, vector<16x32xbf16>, vector<64x32xf32> -> vector<64x32xf32>
    %c0_3 = arith.constant 0 : index
    %c0_4 = arith.constant 0 : index
    %4 = vector.load %arg3[%c0_3, %c0_4] : memref<1x32xf32, #tpu.memory_space<vmem>>, vector<1x32xf32>
    %5 = vector.broadcast %4 : vector<1x32xf32> to vector<64x32xf32>
    %6 = arith.addf %3, %5 : vector<64x32xf32>
    %c0_5 = arith.constant 0 : index
    %c0_6 = arith.constant 0 : index
    %7 = vector.load %arg4[%c0_5, %c0_6] : memref<64x32xf32, #tpu.memory_space<vmem>>, vector<64x32xf32>
    tpu.vector_store %arg4[%c0_5, %c0_6], %6 {strides = array<i32>} : memref<64x32xf32, #tpu.memory_space<vmem>>, vector<64x32xf32>,
    return
  }
  func.func @transform_0(%arg0: i32) -> (i32, i32) {
    %c0_i32 = arith.constant 0 : i32
    %c0_i32_0 = arith.constant 0 : i32
    return %arg0, %c0_i32 : i32, i32
  }
  func.func @transform_1(%arg0: i32) -> (i32, i32) {
    %c0_i32 = arith.constant 0 : i32
    %c0_i32_0 = arith.constant 0 : i32
    %c0_i32_1 = arith.constant 0 : i32
    return %c0_i32, %c0_i32_0 : i32, i32
  }
  func.func @transform_2(%arg0: i32) -> (i32, i32) {
    %c0_i32 = arith.constant 0 : i32
    %c0_i32_0 = arith.constant 0 : i32
    %c0_i32_1 = arith.constant 0 : i32
    return %c0_i32, %c0_i32_0 : i32, i32
  }
  func.func @transform_3(%arg0: i32) -> (i32, i32) {
    %c0_i32 = arith.constant 0 : i32
    %c0_i32_0 = arith.constant 0 : i32
    return %arg0, %c0_i32 : i32, i32
  }
}

module attributes {stable_mosaic.version = 11 : i64} {
  func.func @_attn_block_kernel(%arg0: i32, %arg1: memref<4x16x32xf32, #tpu.memory_space<vmem>>, %arg2: memref<1x32xf32, #tpu.memory_space<vmem>>, %arg3: memref<1x32xf32, #tpu.memory_space<vmem>>, %arg4: memref<32x96xbf16, #tpu.memory_space<vmem>>, %arg5: memref<32x32xbf16, #tpu.memory_space<vmem>>, %arg6: memref<1x32xf32, #tpu.memory_space<vmem>>, %arg7: memref<1x16x16xf32, #tpu.memory_space<vmem>>, %arg8: memref<4x16x32xf32, #tpu.memory_space<vmem>>) attributes {dimension_semantics = [#tpu.dimension_semantics<parallel>], iteration_bounds = array<i64: 2>, scalar_prefetch = 0 : i64, scratch_operands = 0 : i64, tpu.core_type = #tpu.core_type<tc>, window_params = [{transform_indices = @transform_0, window_bounds = array<i64: 4, 16, 32>}, {pipeline_mode = #tpu.pipeline_mode<synchronous>, transform_indices = @transform_1, window_bounds = array<i64: 1, 32>}, {pipeline_mode = #tpu.pipeline_mode<synchronous>, transform_indices = @transform_2, window_bounds = array<i64: 1, 32>}, {pipeline_mode = #tpu.pipeline_mode<synchronous>, transform_indices = @transform_3, window_bounds = array<i64: 32, 96>}, {pipeline_mode = #tpu.pipeline_mode<synchronous>, transform_indices = @transform_4, window_bounds = array<i64: 32, 32>}, {pipeline_mode = #tpu.pipeline_mode<synchronous>, transform_indices = @transform_5, window_bounds = array<i64: 1, 32>}, {pipeline_mode = #tpu.pipeline_mode<synchronous>, transform_indices = @transform_6, window_bounds = array<i64: 1, 16, 16>}, {transform_indices = @transform_7, window_bounds = array<i64: 4, 16, 32>}]} {
    %c0 = arith.constant 0 : index
    %c0_0 = arith.constant 0 : index
    %0 = vector.load %arg2[%c0, %c0_0] : memref<1x32xf32, #tpu.memory_space<vmem>>, vector<1x32xf32>
    %c0_1 = arith.constant 0 : index
    %c0_2 = arith.constant 0 : index
    %1 = vector.load %arg3[%c0_1, %c0_2] : memref<1x32xf32, #tpu.memory_space<vmem>>, vector<1x32xf32>
    %c0_3 = arith.constant 0 : index
    %c0_4 = arith.constant 0 : index
    %2 = vector.load %arg4[%c0_3, %c0_4] : memref<32x96xbf16, #tpu.memory_space<vmem>>, vector<32x96xbf16>
    %c0_5 = arith.constant 0 : index
    %c0_6 = arith.constant 0 : index
    %3 = vector.load %arg5[%c0_5, %c0_6] : memref<32x32xbf16, #tpu.memory_space<vmem>>, vector<32x32xbf16>
    %c0_7 = arith.constant 0 : index
    %c0_8 = arith.constant 0 : index
    %4 = vector.load %arg6[%c0_7, %c0_8] : memref<1x32xf32, #tpu.memory_space<vmem>>, vector<1x32xf32>
    %c0_9 = arith.constant 0 : index
    %c0_10 = arith.constant 0 : index
    %c0_11 = arith.constant 0 : index
    %5 = vector.load %arg1[%c0_9, %c0_10, %c0_11] : memref<4x16x32xf32, #tpu.memory_space<vmem>>, vector<1x16x32xf32>
    %6 = vector.shape_cast %5 : vector<1x16x32xf32> to vector<16x32xf32>
    %cst = arith.constant dense<0.000000e+00> : vector<16xf32>
    %7 = vector.multi_reduction <add>, %6, %cst [1] : vector<16x32xf32> to vector<16xf32>
    %8 = vector.shape_cast %7 : vector<16xf32> to vector<16x1xf32>
    %cst_12 = arith.constant 3.200000e+01 : f32
    %9 = vector.broadcast %cst_12 : f32 to vector<16x1xf32>
    %10 = arith.divf %8, %9 : vector<16x1xf32>
    %11 = vector.broadcast %10 : vector<16x1xf32> to vector<16x32xf32>
    %12 = arith.subf %6, %11 : vector<16x32xf32>
    %13 = arith.mulf %12, %12 : vector<16x32xf32>
    %cst_13 = arith.constant dense<0.000000e+00> : vector<16xf32>
    %14 = vector.multi_reduction <add>, %13, %cst_13 [1] : vector<16x32xf32> to vector<16xf32>
    %15 = vector.shape_cast %14 : vector<16xf32> to vector<16x1xf32>
    %cst_14 = arith.constant 3.200000e+01 : f32
    %16 = vector.broadcast %cst_14 : f32 to vector<16x1xf32>
    %17 = arith.divf %15, %16 : vector<16x1xf32>
    %cst_15 = arith.constant 9.99999974E-6 : f32
    %18 = vector.broadcast %cst_15 : f32 to vector<16x1xf32>
    %19 = arith.addf %17, %18 : vector<16x1xf32>
    %20 = math.rsqrt %19 : vector<16x1xf32>
    %21 = vector.broadcast %20 : vector<16x1xf32> to vector<16x32xf32>
    %22 = arith.mulf %12, %21 : vector<16x32xf32>
    %23 = vector.broadcast %0 : vector<1x32xf32> to vector<16x32xf32>
    %24 = arith.mulf %22, %23 : vector<16x32xf32>
    %25 = vector.broadcast %1 : vector<1x32xf32> to vector<16x32xf32>
    %26 = arith.addf %24, %25 : vector<16x32xf32>
    %27 = arith.truncf %26 : vector<16x32xf32> to vector<16x32xbf16>
    %cst_16 = arith.constant dense<0.000000e+00> : vector<16x96xf32>
    %28 = tpu.matmul %27, %2, %cst_16 {dimension_numbers = #tpu.dot_dimension_numbers<[1], [0], [0], [1], [0, 0, 1, 1], [], []>} : vector<16x32xbf16>, vector<32x96xbf16>, vector<16x96xf32> -> vector<16x96xf32>
    %c0_17 = arith.constant 0 : index
    %c0_18 = arith.constant 0 : index
    %c0_19 = arith.constant 0 : index
    %29 = vector.load %arg7[%c0_17, %c0_18, %c0_19] : memref<1x16x16xf32, #tpu.memory_space<vmem>>, vector<1x16x16xf32>
    %30 = vector.shape_cast %29 : vector<1x16x16xf32> to vector<16x16xf32>
    %31 = vector.extract_strided_slice %28 {offsets = [0, 0], sizes = [16, 16], strides = [1, 1]} : vector<16x96xf32> to vector<16x16xf32>
    %32 = arith.truncf %31 : vector<16x16xf32> to vector<16x16xbf16>
    %33 = vector.extract_strided_slice %28 {offsets = [0, 32], sizes = [16, 16], strides = [1, 1]} : vector<16x96xf32> to vector<16x16xf32>
    %34 = arith.truncf %33 : vector<16x16xf32> to vector<16x16xbf16>
    %35 = vector.extract_strided_slice %28 {offsets = [0, 64], sizes = [16, 16], strides = [1, 1]} : vector<16x96xf32> to vector<16x16xf32>
    %36 = arith.truncf %35 : vector<16x16xf32> to vector<16x16xbf16>
    %cst_20 = arith.constant dense<0.000000e+00> : vector<16x16xf32>
    %37 = tpu.matmul %32, %34, %cst_20 {dimension_numbers = #tpu.dot_dimension_numbers<[1], [1], [0], [0], [0, 0, 1, 0], [], []>} : vector<16x16xbf16>, vector<16x16xbf16>, vector<16x16xf32> -> vector<16x16xf32>
    %cst_21 = arith.constant 2.500000e-01 : f32
    %38 = vector.broadcast %cst_21 : f32 to vector<16x16xf32>
    %39 = arith.mulf %37, %38 : vector<16x16xf32>
    %40 = arith.addf %39, %30 : vector<16x16xf32>
    %cst_22 = arith.constant dense<0xFF800000> : vector<16xf32>
    %41 = vector.multi_reduction <maximumf>, %40, %cst_22 [1] : vector<16x16xf32> to vector<16xf32>
    %42 = vector.shape_cast %41 : vector<16xf32> to vector<16x1xf32>
    %43 = vector.broadcast %42 : vector<16x1xf32> to vector<16x16xf32>
    %44 = arith.subf %40, %43 : vector<16x16xf32>
    %45 = math.exp %44 : vector<16x16xf32>
    %cst_23 = arith.constant dense<0.000000e+00> : vector<16xf32>
    %46 = vector.multi_reduction <add>, %45, %cst_23 [1] : vector<16x16xf32> to vector<16xf32>
    %47 = vector.shape_cast %46 : vector<16xf32> to vector<16x1xf32>
    %48 = tpu.reciprocal %47 {approx = true} : vector<16x1xf32> -> vector<16x1xf32>
    %49 = vector.broadcast %48 : vector<16x1xf32> to vector<16x16xf32>
    %50 = arith.mulf %45, %49 : vector<16x16xf32>
    %51 = arith.truncf %50 : vector<16x16xf32> to vector<16x16xbf16>
    %cst_24 = arith.constant dense<0.000000e+00> : vector<16x16xf32>
    %52 = tpu.matmul %51, %36, %cst_24 {dimension_numbers = #tpu.dot_dimension_numbers<[1], [0], [0], [1], [0, 0, 1, 1], [], []>} : vector<16x16xbf16>, vector<16x16xbf16>, vector<16x16xf32> -> vector<16x16xf32>
    %53 = vector.extract_strided_slice %28 {offsets = [0, 16], sizes = [16, 16], strides = [1, 1]} : vector<16x96xf32> to vector<16x16xf32>
    %54 = arith.truncf %53 : vector<16x16xf32> to vector<16x16xbf16>
    %55 = vector.extract_strided_slice %28 {offsets = [0, 48], sizes = [16, 16], strides = [1, 1]} : vector<16x96xf32> to vector<16x16xf32>
    %56 = arith.truncf %55 : vector<16x16xf32> to vector<16x16xbf16>
    %57 = vector.extract_strided_slice %28 {offsets = [0, 80], sizes = [16, 16], strides = [1, 1]} : vector<16x96xf32> to vector<16x16xf32>
    %58 = arith.truncf %57 : vector<16x16xf32> to vector<16x16xbf16>
    %cst_25 = arith.constant dense<0.000000e+00> : vector<16x16xf32>
    %59 = tpu.matmul %54, %56, %cst_25 {dimension_numbers = #tpu.dot_dimension_numbers<[1], [1], [0], [0], [0, 0, 1, 0], [], []>} : vector<16x16xbf16>, vector<16x16xbf16>, vector<16x16xf32> -> vector<16x16xf32>
    %cst_26 = arith.constant 2.500000e-01 : f32
    %60 = vector.broadcast %cst_26 : f32 to vector<16x16xf32>
    %61 = arith.mulf %59, %60 : vector<16x16xf32>
    %62 = arith.addf %61, %30 : vector<16x16xf32>
    %cst_27 = arith.constant dense<0xFF800000> : vector<16xf32>
    %63 = vector.multi_reduction <maximumf>, %62, %cst_27 [1] : vector<16x16xf32> to vector<16xf32>
    %64 = vector.shape_cast %63 : vector<16xf32> to vector<16x1xf32>
    %65 = vector.broadcast %64 : vector<16x1xf32> to vector<16x16xf32>
    %66 = arith.subf %62, %65 : vector<16x16xf32>
    %67 = math.exp %66 : vector<16x16xf32>
    %cst_28 = arith.constant dense<0.000000e+00> : vector<16xf32>
    %68 = vector.multi_reduction <add>, %67, %cst_28 [1] : vector<16x16xf32> to vector<16xf32>
    %69 = vector.shape_cast %68 : vector<16xf32> to vector<16x1xf32>
    %70 = tpu.reciprocal %69 {approx = true} : vector<16x1xf32> -> vector<16x1xf32>
    %71 = vector.broadcast %70 : vector<16x1xf32> to vector<16x16xf32>
    %72 = arith.mulf %67, %71 : vector<16x16xf32>
    %73 = arith.truncf %72 : vector<16x16xf32> to vector<16x16xbf16>
    %cst_29 = arith.constant dense<0.000000e+00> : vector<16x16xf32>
    %74 = tpu.matmul %73, %58, %cst_29 {dimension_numbers = #tpu.dot_dimension_numbers<[1], [0], [0], [1], [0, 0, 1, 1], [], []>} : vector<16x16xbf16>, vector<16x16xbf16>, vector<16x16xf32> -> vector<16x16xf32>
    %75 = tpu.concatenate %52, %74 in 1 : vector<16x16xf32>, vector<16x16xf32> -> vector<16x32xf32>
    %76 = arith.truncf %75 : vector<16x32xf32> to vector<16x32xbf16>
    %cst_30 = arith.constant dense<0.000000e+00> : vector<16x32xf32>
    %77 = tpu.matmul %76, %3, %cst_30 {dimension_numbers = #tpu.dot_dimension_numbers<[1], [0], [0], [1], [0, 0, 1, 1], [], []>} : vector<16x32xbf16>, vector<32x32xbf16>, vector<16x32xf32> -> vector<16x32xf32>
    %78 = vector.broadcast %4 : vector<1x32xf32> to vector<16x32xf32>
    %79 = arith.addf %77, %78 : vector<16x32xf32>
    %80 = arith.addf %79, %6 : vector<16x32xf32>
    %c0_31 = arith.constant 0 : index
    %c0_32 = arith.constant 0 : index
    %c0_33 = arith.constant 0 : index
    %81 = vector.load %arg8[%c0_31, %c0_32, %c0_33] : memref<4x16x32xf32, #tpu.memory_space<vmem>>, vector<1x16x32xf32>
    %82 = vector.shape_cast %81 : vector<1x16x32xf32> to vector<16x32xf32>
    %83 = vector.shape_cast %80 : vector<16x32xf32> to vector<1x16x32xf32>
    tpu.vector_store %arg8[%c0_31, %c0_32, %c0_33], %83 {strides = array<i32>} : memref<4x16x32xf32, #tpu.memory_space<vmem>>, vector<1x16x32xf32>,
    %c1 = arith.constant 1 : index
    %c0_34 = arith.constant 0 : index
    %c0_35 = arith.constant 0 : index
    %84 = vector.load %arg1[%c1, %c0_34, %c0_35] : memref<4x16x32xf32, #tpu.memory_space<vmem>>, vector<1x16x32xf32>
    %85 = vector.shape_cast %84 : vector<1x16x32xf32> to vector<16x32xf32>
    %cst_36 = arith.constant dense<0.000000e+00> : vector<16xf32>
    %86 = vector.multi_reduction <add>, %85, %cst_36 [1] : vector<16x32xf32> to vector<16xf32>
    %87 = vector.shape_cast %86 : vector<16xf32> to vector<16x1xf32>
    %cst_37 = arith.constant 3.200000e+01 : f32
    %88 = vector.broadcast %cst_37 : f32 to vector<16x1xf32>
    %89 = arith.divf %87, %88 : vector<16x1xf32>
    %90 = vector.broadcast %89 : vector<16x1xf32> to vector<16x32xf32>
    %91 = arith.subf %85, %90 : vector<16x32xf32>
    %92 = arith.mulf %91, %91 : vector<16x32xf32>
    %cst_38 = arith.constant dense<0.000000e+00> : vector<16xf32>
    %93 = vector.multi_reduction <add>, %92, %cst_38 [1] : vector<16x32xf32> to vector<16xf32>
    %94 = vector.shape_cast %93 : vector<16xf32> to vector<16x1xf32>
    %cst_39 = arith.constant 3.200000e+01 : f32
    %95 = vector.broadcast %cst_39 : f32 to vector<16x1xf32>
    %96 = arith.divf %94, %95 : vector<16x1xf32>
    %cst_40 = arith.constant 9.99999974E-6 : f32
    %97 = vector.broadcast %cst_40 : f32 to vector<16x1xf32>
    %98 = arith.addf %96, %97 : vector<16x1xf32>
    %99 = math.rsqrt %98 : vector<16x1xf32>
    %100 = vector.broadcast %99 : vector<16x1xf32> to vector<16x32xf32>
    %101 = arith.mulf %91, %100 : vector<16x32xf32>
    %102 = vector.broadcast %0 : vector<1x32xf32> to vector<16x32xf32>
    %103 = arith.mulf %101, %102 : vector<16x32xf32>
    %104 = vector.broadcast %1 : vector<1x32xf32> to vector<16x32xf32>
    %105 = arith.addf %103, %104 : vector<16x32xf32>
    %106 = arith.truncf %105 : vector<16x32xf32> to vector<16x32xbf16>
    %cst_41 = arith.constant dense<0.000000e+00> : vector<16x96xf32>
    %107 = tpu.matmul %106, %2, %cst_41 {dimension_numbers = #tpu.dot_dimension_numbers<[1], [0], [0], [1], [0, 0, 1, 1], [], []>} : vector<16x32xbf16>, vector<32x96xbf16>, vector<16x96xf32> -> vector<16x96xf32>
    %c0_42 = arith.constant 0 : index
    %c0_43 = arith.constant 0 : index
    %c0_44 = arith.constant 0 : index
    %108 = vector.load %arg7[%c0_42, %c0_43, %c0_44] : memref<1x16x16xf32, #tpu.memory_space<vmem>>, vector<1x16x16xf32>
    %109 = vector.shape_cast %108 : vector<1x16x16xf32> to vector<16x16xf32>
    %110 = vector.extract_strided_slice %107 {offsets = [0, 0], sizes = [16, 16], strides = [1, 1]} : vector<16x96xf32> to vector<16x16xf32>
    %111 = arith.truncf %110 : vector<16x16xf32> to vector<16x16xbf16>
    %112 = vector.extract_strided_slice %107 {offsets = [0, 32], sizes = [16, 16], strides = [1, 1]} : vector<16x96xf32> to vector<16x16xf32>
    %113 = arith.truncf %112 : vector<16x16xf32> to vector<16x16xbf16>
    %114 = vector.extract_strided_slice %107 {offsets = [0, 64], sizes = [16, 16], strides = [1, 1]} : vector<16x96xf32> to vector<16x16xf32>
    %115 = arith.truncf %114 : vector<16x16xf32> to vector<16x16xbf16>
    %cst_45 = arith.constant dense<0.000000e+00> : vector<16x16xf32>
    %116 = tpu.matmul %111, %113, %cst_45 {dimension_numbers = #tpu.dot_dimension_numbers<[1], [1], [0], [0], [0, 0, 1, 0], [], []>} : vector<16x16xbf16>, vector<16x16xbf16>, vector<16x16xf32> -> vector<16x16xf32>
    %cst_46 = arith.constant 2.500000e-01 : f32
    %117 = vector.broadcast %cst_46 : f32 to vector<16x16xf32>
    %118 = arith.mulf %116, %117 : vector<16x16xf32>
    %119 = arith.addf %118, %109 : vector<16x16xf32>
    %cst_47 = arith.constant dense<0xFF800000> : vector<16xf32>
    %120 = vector.multi_reduction <maximumf>, %119, %cst_47 [1] : vector<16x16xf32> to vector<16xf32>
    %121 = vector.shape_cast %120 : vector<16xf32> to vector<16x1xf32>
    %122 = vector.broadcast %121 : vector<16x1xf32> to vector<16x16xf32>
    %123 = arith.subf %119, %122 : vector<16x16xf32>
    %124 = math.exp %123 : vector<16x16xf32>
    %cst_48 = arith.constant dense<0.000000e+00> : vector<16xf32>
    %125 = vector.multi_reduction <add>, %124, %cst_48 [1] : vector<16x16xf32> to vector<16xf32>
    %126 = vector.shape_cast %125 : vector<16xf32> to vector<16x1xf32>
    %127 = tpu.reciprocal %126 {approx = true} : vector<16x1xf32> -> vector<16x1xf32>
    %128 = vector.broadcast %127 : vector<16x1xf32> to vector<16x16xf32>
    %129 = arith.mulf %124, %128 : vector<16x16xf32>
    %130 = arith.truncf %129 : vector<16x16xf32> to vector<16x16xbf16>
    %cst_49 = arith.constant dense<0.000000e+00> : vector<16x16xf32>
    %131 = tpu.matmul %130, %115, %cst_49 {dimension_numbers = #tpu.dot_dimension_numbers<[1], [0], [0], [1], [0, 0, 1, 1], [], []>} : vector<16x16xbf16>, vector<16x16xbf16>, vector<16x16xf32> -> vector<16x16xf32>
    %132 = vector.extract_strided_slice %107 {offsets = [0, 16], sizes = [16, 16], strides = [1, 1]} : vector<16x96xf32> to vector<16x16xf32>
    %133 = arith.truncf %132 : vector<16x16xf32> to vector<16x16xbf16>
    %134 = vector.extract_strided_slice %107 {offsets = [0, 48], sizes = [16, 16], strides = [1, 1]} : vector<16x96xf32> to vector<16x16xf32>
    %135 = arith.truncf %134 : vector<16x16xf32> to vector<16x16xbf16>
    %136 = vector.extract_strided_slice %107 {offsets = [0, 80], sizes = [16, 16], strides = [1, 1]} : vector<16x96xf32> to vector<16x16xf32>
    %137 = arith.truncf %136 : vector<16x16xf32> to vector<16x16xbf16>
    %cst_50 = arith.constant dense<0.000000e+00> : vector<16x16xf32>
    %138 = tpu.matmul %133, %135, %cst_50 {dimension_numbers = #tpu.dot_dimension_numbers<[1], [1], [0], [0], [0, 0, 1, 0], [], []>} : vector<16x16xbf16>, vector<16x16xbf16>, vector<16x16xf32> -> vector<16x16xf32>
    %cst_51 = arith.constant 2.500000e-01 : f32
    %139 = vector.broadcast %cst_51 : f32 to vector<16x16xf32>
    %140 = arith.mulf %138, %139 : vector<16x16xf32>
    %141 = arith.addf %140, %109 : vector<16x16xf32>
    %cst_52 = arith.constant dense<0xFF800000> : vector<16xf32>
    %142 = vector.multi_reduction <maximumf>, %141, %cst_52 [1] : vector<16x16xf32> to vector<16xf32>
    %143 = vector.shape_cast %142 : vector<16xf32> to vector<16x1xf32>
    %144 = vector.broadcast %143 : vector<16x1xf32> to vector<16x16xf32>
    %145 = arith.subf %141, %144 : vector<16x16xf32>
    %146 = math.exp %145 : vector<16x16xf32>
    %cst_53 = arith.constant dense<0.000000e+00> : vector<16xf32>
    %147 = vector.multi_reduction <add>, %146, %cst_53 [1] : vector<16x16xf32> to vector<16xf32>
    %148 = vector.shape_cast %147 : vector<16xf32> to vector<16x1xf32>
    %149 = tpu.reciprocal %148 {approx = true} : vector<16x1xf32> -> vector<16x1xf32>
    %150 = vector.broadcast %149 : vector<16x1xf32> to vector<16x16xf32>
    %151 = arith.mulf %146, %150 : vector<16x16xf32>
    %152 = arith.truncf %151 : vector<16x16xf32> to vector<16x16xbf16>
    %cst_54 = arith.constant dense<0.000000e+00> : vector<16x16xf32>
    %153 = tpu.matmul %152, %137, %cst_54 {dimension_numbers = #tpu.dot_dimension_numbers<[1], [0], [0], [1], [0, 0, 1, 1], [], []>} : vector<16x16xbf16>, vector<16x16xbf16>, vector<16x16xf32> -> vector<16x16xf32>
    %154 = tpu.concatenate %131, %153 in 1 : vector<16x16xf32>, vector<16x16xf32> -> vector<16x32xf32>
    %155 = arith.truncf %154 : vector<16x32xf32> to vector<16x32xbf16>
    %cst_55 = arith.constant dense<0.000000e+00> : vector<16x32xf32>
    %156 = tpu.matmul %155, %3, %cst_55 {dimension_numbers = #tpu.dot_dimension_numbers<[1], [0], [0], [1], [0, 0, 1, 1], [], []>} : vector<16x32xbf16>, vector<32x32xbf16>, vector<16x32xf32> -> vector<16x32xf32>
    %157 = vector.broadcast %4 : vector<1x32xf32> to vector<16x32xf32>
    %158 = arith.addf %156, %157 : vector<16x32xf32>
    %159 = arith.addf %158, %85 : vector<16x32xf32>
    %c1_56 = arith.constant 1 : index
    %c0_57 = arith.constant 0 : index
    %c0_58 = arith.constant 0 : index
    %160 = vector.load %arg8[%c1_56, %c0_57, %c0_58] : memref<4x16x32xf32, #tpu.memory_space<vmem>>, vector<1x16x32xf32>
    %161 = vector.shape_cast %160 : vector<1x16x32xf32> to vector<16x32xf32>
    %162 = vector.shape_cast %159 : vector<16x32xf32> to vector<1x16x32xf32>
    tpu.vector_store %arg8[%c1_56, %c0_57, %c0_58], %162 {strides = array<i32>} : memref<4x16x32xf32, #tpu.memory_space<vmem>>, vector<1x16x32xf32>,
    %c2 = arith.constant 2 : index
    %c0_59 = arith.constant 0 : index
    %c0_60 = arith.constant 0 : index
    %163 = vector.load %arg1[%c2, %c0_59, %c0_60] : memref<4x16x32xf32, #tpu.memory_space<vmem>>, vector<1x16x32xf32>
    %164 = vector.shape_cast %163 : vector<1x16x32xf32> to vector<16x32xf32>
    %cst_61 = arith.constant dense<0.000000e+00> : vector<16xf32>
    %165 = vector.multi_reduction <add>, %164, %cst_61 [1] : vector<16x32xf32> to vector<16xf32>
    %166 = vector.shape_cast %165 : vector<16xf32> to vector<16x1xf32>
    %cst_62 = arith.constant 3.200000e+01 : f32
    %167 = vector.broadcast %cst_62 : f32 to vector<16x1xf32>
    %168 = arith.divf %166, %167 : vector<16x1xf32>
    %169 = vector.broadcast %168 : vector<16x1xf32> to vector<16x32xf32>
    %170 = arith.subf %164, %169 : vector<16x32xf32>
    %171 = arith.mulf %170, %170 : vector<16x32xf32>
    %cst_63 = arith.constant dense<0.000000e+00> : vector<16xf32>
    %172 = vector.multi_reduction <add>, %171, %cst_63 [1] : vector<16x32xf32> to vector<16xf32>
    %173 = vector.shape_cast %172 : vector<16xf32> to vector<16x1xf32>
    %cst_64 = arith.constant 3.200000e+01 : f32
    %174 = vector.broadcast %cst_64 : f32 to vector<16x1xf32>
    %175 = arith.divf %173, %174 : vector<16x1xf32>
    %cst_65 = arith.constant 9.99999974E-6 : f32
    %176 = vector.broadcast %cst_65 : f32 to vector<16x1xf32>
    %177 = arith.addf %175, %176 : vector<16x1xf32>
    %178 = math.rsqrt %177 : vector<16x1xf32>
    %179 = vector.broadcast %178 : vector<16x1xf32> to vector<16x32xf32>
    %180 = arith.mulf %170, %179 : vector<16x32xf32>
    %181 = vector.broadcast %0 : vector<1x32xf32> to vector<16x32xf32>
    %182 = arith.mulf %180, %181 : vector<16x32xf32>
    %183 = vector.broadcast %1 : vector<1x32xf32> to vector<16x32xf32>
    %184 = arith.addf %182, %183 : vector<16x32xf32>
    %185 = arith.truncf %184 : vector<16x32xf32> to vector<16x32xbf16>
    %cst_66 = arith.constant dense<0.000000e+00> : vector<16x96xf32>
    %186 = tpu.matmul %185, %2, %cst_66 {dimension_numbers = #tpu.dot_dimension_numbers<[1], [0], [0], [1], [0, 0, 1, 1], [], []>} : vector<16x32xbf16>, vector<32x96xbf16>, vector<16x96xf32> -> vector<16x96xf32>
    %c0_67 = arith.constant 0 : index
    %c0_68 = arith.constant 0 : index
    %c0_69 = arith.constant 0 : index
    %187 = vector.load %arg7[%c0_67, %c0_68, %c0_69] : memref<1x16x16xf32, #tpu.memory_space<vmem>>, vector<1x16x16xf32>
    %188 = vector.shape_cast %187 : vector<1x16x16xf32> to vector<16x16xf32>
    %189 = vector.extract_strided_slice %186 {offsets = [0, 0], sizes = [16, 16], strides = [1, 1]} : vector<16x96xf32> to vector<16x16xf32>
    %190 = arith.truncf %189 : vector<16x16xf32> to vector<16x16xbf16>
    %191 = vector.extract_strided_slice %186 {offsets = [0, 32], sizes = [16, 16], strides = [1, 1]} : vector<16x96xf32> to vector<16x16xf32>
    %192 = arith.truncf %191 : vector<16x16xf32> to vector<16x16xbf16>
    %193 = vector.extract_strided_slice %186 {offsets = [0, 64], sizes = [16, 16], strides = [1, 1]} : vector<16x96xf32> to vector<16x16xf32>
    %194 = arith.truncf %193 : vector<16x16xf32> to vector<16x16xbf16>
    %cst_70 = arith.constant dense<0.000000e+00> : vector<16x16xf32>
    %195 = tpu.matmul %190, %192, %cst_70 {dimension_numbers = #tpu.dot_dimension_numbers<[1], [1], [0], [0], [0, 0, 1, 0], [], []>} : vector<16x16xbf16>, vector<16x16xbf16>, vector<16x16xf32> -> vector<16x16xf32>
    %cst_71 = arith.constant 2.500000e-01 : f32
    %196 = vector.broadcast %cst_71 : f32 to vector<16x16xf32>
    %197 = arith.mulf %195, %196 : vector<16x16xf32>
    %198 = arith.addf %197, %188 : vector<16x16xf32>
    %cst_72 = arith.constant dense<0xFF800000> : vector<16xf32>
    %199 = vector.multi_reduction <maximumf>, %198, %cst_72 [1] : vector<16x16xf32> to vector<16xf32>
    %200 = vector.shape_cast %199 : vector<16xf32> to vector<16x1xf32>
    %201 = vector.broadcast %200 : vector<16x1xf32> to vector<16x16xf32>
    %202 = arith.subf %198, %201 : vector<16x16xf32>
    %203 = math.exp %202 : vector<16x16xf32>
    %cst_73 = arith.constant dense<0.000000e+00> : vector<16xf32>
    %204 = vector.multi_reduction <add>, %203, %cst_73 [1] : vector<16x16xf32> to vector<16xf32>
    %205 = vector.shape_cast %204 : vector<16xf32> to vector<16x1xf32>
    %206 = tpu.reciprocal %205 {approx = true} : vector<16x1xf32> -> vector<16x1xf32>
    %207 = vector.broadcast %206 : vector<16x1xf32> to vector<16x16xf32>
    %208 = arith.mulf %203, %207 : vector<16x16xf32>
    %209 = arith.truncf %208 : vector<16x16xf32> to vector<16x16xbf16>
    %cst_74 = arith.constant dense<0.000000e+00> : vector<16x16xf32>
    %210 = tpu.matmul %209, %194, %cst_74 {dimension_numbers = #tpu.dot_dimension_numbers<[1], [0], [0], [1], [0, 0, 1, 1], [], []>} : vector<16x16xbf16>, vector<16x16xbf16>, vector<16x16xf32> -> vector<16x16xf32>
    %211 = vector.extract_strided_slice %186 {offsets = [0, 16], sizes = [16, 16], strides = [1, 1]} : vector<16x96xf32> to vector<16x16xf32>
    %212 = arith.truncf %211 : vector<16x16xf32> to vector<16x16xbf16>
    %213 = vector.extract_strided_slice %186 {offsets = [0, 48], sizes = [16, 16], strides = [1, 1]} : vector<16x96xf32> to vector<16x16xf32>
    %214 = arith.truncf %213 : vector<16x16xf32> to vector<16x16xbf16>
    %215 = vector.extract_strided_slice %186 {offsets = [0, 80], sizes = [16, 16], strides = [1, 1]} : vector<16x96xf32> to vector<16x16xf32>
    %216 = arith.truncf %215 : vector<16x16xf32> to vector<16x16xbf16>
    %cst_75 = arith.constant dense<0.000000e+00> : vector<16x16xf32>
    %217 = tpu.matmul %212, %214, %cst_75 {dimension_numbers = #tpu.dot_dimension_numbers<[1], [1], [0], [0], [0, 0, 1, 0], [], []>} : vector<16x16xbf16>, vector<16x16xbf16>, vector<16x16xf32> -> vector<16x16xf32>
    %cst_76 = arith.constant 2.500000e-01 : f32
    %218 = vector.broadcast %cst_76 : f32 to vector<16x16xf32>
    %219 = arith.mulf %217, %218 : vector<16x16xf32>
    %220 = arith.addf %219, %188 : vector<16x16xf32>
    %cst_77 = arith.constant dense<0xFF800000> : vector<16xf32>
    %221 = vector.multi_reduction <maximumf>, %220, %cst_77 [1] : vector<16x16xf32> to vector<16xf32>
    %222 = vector.shape_cast %221 : vector<16xf32> to vector<16x1xf32>
    %223 = vector.broadcast %222 : vector<16x1xf32> to vector<16x16xf32>
    %224 = arith.subf %220, %223 : vector<16x16xf32>
    %225 = math.exp %224 : vector<16x16xf32>
    %cst_78 = arith.constant dense<0.000000e+00> : vector<16xf32>
    %226 = vector.multi_reduction <add>, %225, %cst_78 [1] : vector<16x16xf32> to vector<16xf32>
    %227 = vector.shape_cast %226 : vector<16xf32> to vector<16x1xf32>
    %228 = tpu.reciprocal %227 {approx = true} : vector<16x1xf32> -> vector<16x1xf32>
    %229 = vector.broadcast %228 : vector<16x1xf32> to vector<16x16xf32>
    %230 = arith.mulf %225, %229 : vector<16x16xf32>
    %231 = arith.truncf %230 : vector<16x16xf32> to vector<16x16xbf16>
    %cst_79 = arith.constant dense<0.000000e+00> : vector<16x16xf32>
    %232 = tpu.matmul %231, %216, %cst_79 {dimension_numbers = #tpu.dot_dimension_numbers<[1], [0], [0], [1], [0, 0, 1, 1], [], []>} : vector<16x16xbf16>, vector<16x16xbf16>, vector<16x16xf32> -> vector<16x16xf32>
    %233 = tpu.concatenate %210, %232 in 1 : vector<16x16xf32>, vector<16x16xf32> -> vector<16x32xf32>
    %234 = arith.truncf %233 : vector<16x32xf32> to vector<16x32xbf16>
    %cst_80 = arith.constant dense<0.000000e+00> : vector<16x32xf32>
    %235 = tpu.matmul %234, %3, %cst_80 {dimension_numbers = #tpu.dot_dimension_numbers<[1], [0], [0], [1], [0, 0, 1, 1], [], []>} : vector<16x32xbf16>, vector<32x32xbf16>, vector<16x32xf32> -> vector<16x32xf32>
    %236 = vector.broadcast %4 : vector<1x32xf32> to vector<16x32xf32>
    %237 = arith.addf %235, %236 : vector<16x32xf32>
    %238 = arith.addf %237, %164 : vector<16x32xf32>
    %c2_81 = arith.constant 2 : index
    %c0_82 = arith.constant 0 : index
    %c0_83 = arith.constant 0 : index
    %239 = vector.load %arg8[%c2_81, %c0_82, %c0_83] : memref<4x16x32xf32, #tpu.memory_space<vmem>>, vector<1x16x32xf32>
    %240 = vector.shape_cast %239 : vector<1x16x32xf32> to vector<16x32xf32>
    %241 = vector.shape_cast %238 : vector<16x32xf32> to vector<1x16x32xf32>
    tpu.vector_store %arg8[%c2_81, %c0_82, %c0_83], %241 {strides = array<i32>} : memref<4x16x32xf32, #tpu.memory_space<vmem>>, vector<1x16x32xf32>,
    %c3 = arith.constant 3 : index
    %c0_84 = arith.constant 0 : index
    %c0_85 = arith.constant 0 : index
    %242 = vector.load %arg1[%c3, %c0_84, %c0_85] : memref<4x16x32xf32, #tpu.memory_space<vmem>>, vector<1x16x32xf32>
    %243 = vector.shape_cast %242 : vector<1x16x32xf32> to vector<16x32xf32>
    %cst_86 = arith.constant dense<0.000000e+00> : vector<16xf32>
    %244 = vector.multi_reduction <add>, %243, %cst_86 [1] : vector<16x32xf32> to vector<16xf32>
    %245 = vector.shape_cast %244 : vector<16xf32> to vector<16x1xf32>
    %cst_87 = arith.constant 3.200000e+01 : f32
    %246 = vector.broadcast %cst_87 : f32 to vector<16x1xf32>
    %247 = arith.divf %245, %246 : vector<16x1xf32>
    %248 = vector.broadcast %247 : vector<16x1xf32> to vector<16x32xf32>
    %249 = arith.subf %243, %248 : vector<16x32xf32>
    %250 = arith.mulf %249, %249 : vector<16x32xf32>
    %cst_88 = arith.constant dense<0.000000e+00> : vector<16xf32>
    %251 = vector.multi_reduction <add>, %250, %cst_88 [1] : vector<16x32xf32> to vector<16xf32>
    %252 = vector.shape_cast %251 : vector<16xf32> to vector<16x1xf32>
    %cst_89 = arith.constant 3.200000e+01 : f32
    %253 = vector.broadcast %cst_89 : f32 to vector<16x1xf32>
    %254 = arith.divf %252, %253 : vector<16x1xf32>
    %cst_90 = arith.constant 9.99999974E-6 : f32
    %255 = vector.broadcast %cst_90 : f32 to vector<16x1xf32>
    %256 = arith.addf %254, %255 : vector<16x1xf32>
    %257 = math.rsqrt %256 : vector<16x1xf32>
    %258 = vector.broadcast %257 : vector<16x1xf32> to vector<16x32xf32>
    %259 = arith.mulf %249, %258 : vector<16x32xf32>
    %260 = vector.broadcast %0 : vector<1x32xf32> to vector<16x32xf32>
    %261 = arith.mulf %259, %260 : vector<16x32xf32>
    %262 = vector.broadcast %1 : vector<1x32xf32> to vector<16x32xf32>
    %263 = arith.addf %261, %262 : vector<16x32xf32>
    %264 = arith.truncf %263 : vector<16x32xf32> to vector<16x32xbf16>
    %cst_91 = arith.constant dense<0.000000e+00> : vector<16x96xf32>
    %265 = tpu.matmul %264, %2, %cst_91 {dimension_numbers = #tpu.dot_dimension_numbers<[1], [0], [0], [1], [0, 0, 1, 1], [], []>} : vector<16x32xbf16>, vector<32x96xbf16>, vector<16x96xf32> -> vector<16x96xf32>
    %c0_92 = arith.constant 0 : index
    %c0_93 = arith.constant 0 : index
    %c0_94 = arith.constant 0 : index
    %266 = vector.load %arg7[%c0_92, %c0_93, %c0_94] : memref<1x16x16xf32, #tpu.memory_space<vmem>>, vector<1x16x16xf32>
    %267 = vector.shape_cast %266 : vector<1x16x16xf32> to vector<16x16xf32>
    %268 = vector.extract_strided_slice %265 {offsets = [0, 0], sizes = [16, 16], strides = [1, 1]} : vector<16x96xf32> to vector<16x16xf32>
    %269 = arith.truncf %268 : vector<16x16xf32> to vector<16x16xbf16>
    %270 = vector.extract_strided_slice %265 {offsets = [0, 32], sizes = [16, 16], strides = [1, 1]} : vector<16x96xf32> to vector<16x16xf32>
    %271 = arith.truncf %270 : vector<16x16xf32> to vector<16x16xbf16>
    %272 = vector.extract_strided_slice %265 {offsets = [0, 64], sizes = [16, 16], strides = [1, 1]} : vector<16x96xf32> to vector<16x16xf32>
    %273 = arith.truncf %272 : vector<16x16xf32> to vector<16x16xbf16>
    %cst_95 = arith.constant dense<0.000000e+00> : vector<16x16xf32>
    %274 = tpu.matmul %269, %271, %cst_95 {dimension_numbers = #tpu.dot_dimension_numbers<[1], [1], [0], [0], [0, 0, 1, 0], [], []>} : vector<16x16xbf16>, vector<16x16xbf16>, vector<16x16xf32> -> vector<16x16xf32>
    %cst_96 = arith.constant 2.500000e-01 : f32
    %275 = vector.broadcast %cst_96 : f32 to vector<16x16xf32>
    %276 = arith.mulf %274, %275 : vector<16x16xf32>
    %277 = arith.addf %276, %267 : vector<16x16xf32>
    %cst_97 = arith.constant dense<0xFF800000> : vector<16xf32>
    %278 = vector.multi_reduction <maximumf>, %277, %cst_97 [1] : vector<16x16xf32> to vector<16xf32>
    %279 = vector.shape_cast %278 : vector<16xf32> to vector<16x1xf32>
    %280 = vector.broadcast %279 : vector<16x1xf32> to vector<16x16xf32>
    %281 = arith.subf %277, %280 : vector<16x16xf32>
    %282 = math.exp %281 : vector<16x16xf32>
    %cst_98 = arith.constant dense<0.000000e+00> : vector<16xf32>
    %283 = vector.multi_reduction <add>, %282, %cst_98 [1] : vector<16x16xf32> to vector<16xf32>
    %284 = vector.shape_cast %283 : vector<16xf32> to vector<16x1xf32>
    %285 = tpu.reciprocal %284 {approx = true} : vector<16x1xf32> -> vector<16x1xf32>
    %286 = vector.broadcast %285 : vector<16x1xf32> to vector<16x16xf32>
    %287 = arith.mulf %282, %286 : vector<16x16xf32>
    %288 = arith.truncf %287 : vector<16x16xf32> to vector<16x16xbf16>
    %cst_99 = arith.constant dense<0.000000e+00> : vector<16x16xf32>
    %289 = tpu.matmul %288, %273, %cst_99 {dimension_numbers = #tpu.dot_dimension_numbers<[1], [0], [0], [1], [0, 0, 1, 1], [], []>} : vector<16x16xbf16>, vector<16x16xbf16>, vector<16x16xf32> -> vector<16x16xf32>
    %290 = vector.extract_strided_slice %265 {offsets = [0, 16], sizes = [16, 16], strides = [1, 1]} : vector<16x96xf32> to vector<16x16xf32>
    %291 = arith.truncf %290 : vector<16x16xf32> to vector<16x16xbf16>
    %292 = vector.extract_strided_slice %265 {offsets = [0, 48], sizes = [16, 16], strides = [1, 1]} : vector<16x96xf32> to vector<16x16xf32>
    %293 = arith.truncf %292 : vector<16x16xf32> to vector<16x16xbf16>
    %294 = vector.extract_strided_slice %265 {offsets = [0, 80], sizes = [16, 16], strides = [1, 1]} : vector<16x96xf32> to vector<16x16xf32>
    %295 = arith.truncf %294 : vector<16x16xf32> to vector<16x16xbf16>
    %cst_100 = arith.constant dense<0.000000e+00> : vector<16x16xf32>
    %296 = tpu.matmul %291, %293, %cst_100 {dimension_numbers = #tpu.dot_dimension_numbers<[1], [1], [0], [0], [0, 0, 1, 0], [], []>} : vector<16x16xbf16>, vector<16x16xbf16>, vector<16x16xf32> -> vector<16x16xf32>
    %cst_101 = arith.constant 2.500000e-01 : f32
    %297 = vector.broadcast %cst_101 : f32 to vector<16x16xf32>
    %298 = arith.mulf %296, %297 : vector<16x16xf32>
    %299 = arith.addf %298, %267 : vector<16x16xf32>
    %cst_102 = arith.constant dense<0xFF800000> : vector<16xf32>
    %300 = vector.multi_reduction <maximumf>, %299, %cst_102 [1] : vector<16x16xf32> to vector<16xf32>
    %301 = vector.shape_cast %300 : vector<16xf32> to vector<16x1xf32>
    %302 = vector.broadcast %301 : vector<16x1xf32> to vector<16x16xf32>
    %303 = arith.subf %299, %302 : vector<16x16xf32>
    %304 = math.exp %303 : vector<16x16xf32>
    %cst_103 = arith.constant dense<0.000000e+00> : vector<16xf32>
    %305 = vector.multi_reduction <add>, %304, %cst_103 [1] : vector<16x16xf32> to vector<16xf32>
    %306 = vector.shape_cast %305 : vector<16xf32> to vector<16x1xf32>
    %307 = tpu.reciprocal %306 {approx = true} : vector<16x1xf32> -> vector<16x1xf32>
    %308 = vector.broadcast %307 : vector<16x1xf32> to vector<16x16xf32>
    %309 = arith.mulf %304, %308 : vector<16x16xf32>
    %310 = arith.truncf %309 : vector<16x16xf32> to vector<16x16xbf16>
    %cst_104 = arith.constant dense<0.000000e+00> : vector<16x16xf32>
    %311 = tpu.matmul %310, %295, %cst_104 {dimension_numbers = #tpu.dot_dimension_numbers<[1], [0], [0], [1], [0, 0, 1, 1], [], []>} : vector<16x16xbf16>, vector<16x16xbf16>, vector<16x16xf32> -> vector<16x16xf32>
    %312 = tpu.concatenate %289, %311 in 1 : vector<16x16xf32>, vector<16x16xf32> -> vector<16x32xf32>
    %313 = arith.truncf %312 : vector<16x32xf32> to vector<16x32xbf16>
    %cst_105 = arith.constant dense<0.000000e+00> : vector<16x32xf32>
    %314 = tpu.matmul %313, %3, %cst_105 {dimension_numbers = #tpu.dot_dimension_numbers<[1], [0], [0], [1], [0, 0, 1, 1], [], []>} : vector<16x32xbf16>, vector<32x32xbf16>, vector<16x32xf32> -> vector<16x32xf32>
    %315 = vector.broadcast %4 : vector<1x32xf32> to vector<16x32xf32>
    %316 = arith.addf %314, %315 : vector<16x32xf32>
    %317 = arith.addf %316, %243 : vector<16x32xf32>
    %c3_106 = arith.constant 3 : index
    %c0_107 = arith.constant 0 : index
    %c0_108 = arith.constant 0 : index
    %318 = vector.load %arg8[%c3_106, %c0_107, %c0_108] : memref<4x16x32xf32, #tpu.memory_space<vmem>>, vector<1x16x32xf32>
    %319 = vector.shape_cast %318 : vector<1x16x32xf32> to vector<16x32xf32>
    %320 = vector.shape_cast %317 : vector<16x32xf32> to vector<1x16x32xf32>
    tpu.vector_store %arg8[%c3_106, %c0_107, %c0_108], %320 {strides = array<i32>} : memref<4x16x32xf32, #tpu.memory_space<vmem>>, vector<1x16x32xf32>,
    return
  }
  func.func @transform_0(%arg0: i32) -> (i32, i32, i32) {
    %c0_i32 = arith.constant 0 : i32
    %c0_i32_0 = arith.constant 0 : i32
    %c0_i32_1 = arith.constant 0 : i32
    return %arg0, %c0_i32, %c0_i32_0 : i32, i32, i32
  }
  func.func @transform_1(%arg0: i32) -> (i32, i32) {
    %c0_i32 = arith.constant 0 : i32
    %c0_i32_0 = arith.constant 0 : i32
    %c0_i32_1 = arith.constant 0 : i32
    return %c0_i32, %c0_i32_0 : i32, i32
  }
  func.func @transform_2(%arg0: i32) -> (i32, i32) {
    %c0_i32 = arith.constant 0 : i32
    %c0_i32_0 = arith.constant 0 : i32
    %c0_i32_1 = arith.constant 0 : i32
    return %c0_i32, %c0_i32_0 : i32, i32
  }
  func.func @transform_3(%arg0: i32) -> (i32, i32) {
    %c0_i32 = arith.constant 0 : i32
    %c0_i32_0 = arith.constant 0 : i32
    %c0_i32_1 = arith.constant 0 : i32
    return %c0_i32, %c0_i32_0 : i32, i32
  }
  func.func @transform_4(%arg0: i32) -> (i32, i32) {
    %c0_i32 = arith.constant 0 : i32
    %c0_i32_0 = arith.constant 0 : i32
    %c0_i32_1 = arith.constant 0 : i32
    return %c0_i32, %c0_i32_0 : i32, i32
  }
  func.func @transform_5(%arg0: i32) -> (i32, i32) {
    %c0_i32 = arith.constant 0 : i32
    %c0_i32_0 = arith.constant 0 : i32
    %c0_i32_1 = arith.constant 0 : i32
    return %c0_i32, %c0_i32_0 : i32, i32
  }
  func.func @transform_6(%arg0: i32) -> (i32, i32, i32) {
    %c0_i32 = arith.constant 0 : i32
    %c0_i32_0 = arith.constant 0 : i32
    %c0_i32_1 = arith.constant 0 : i32
    %c0_i32_2 = arith.constant 0 : i32
    return %c0_i32, %c0_i32_0, %c0_i32_1 : i32, i32, i32
  }
  func.func @transform_7(%arg0: i32) -> (i32, i32, i32) {
    %c0_i32 = arith.constant 0 : i32
    %c0_i32_0 = arith.constant 0 : i32
    %c0_i32_1 = arith.constant 0 : i32
    return %arg0, %c0_i32, %c0_i32_0 : i32, i32, i32
  }
}

module attributes {stable_mosaic.version = 11 : i64} {
  func.func @_mlp_block_kernel(%arg0: i32, %arg1: memref<64x32xf32, #tpu.memory_space<vmem>>, %arg2: memref<1x32xf32, #tpu.memory_space<vmem>>, %arg3: memref<1x32xf32, #tpu.memory_space<vmem>>, %arg4: memref<32x128xbf16, #tpu.memory_space<vmem>>, %arg5: memref<1x128xf32, #tpu.memory_space<vmem>>, %arg6: memref<128x32xbf16, #tpu.memory_space<vmem>>, %arg7: memref<1x32xf32, #tpu.memory_space<vmem>>, %arg8: memref<64x32xf32, #tpu.memory_space<vmem>>) attributes {dimension_semantics = [#tpu.dimension_semantics<parallel>], iteration_bounds = array<i64: 2>, scalar_prefetch = 0 : i64, scratch_operands = 0 : i64, tpu.core_type = #tpu.core_type<tc>, window_params = [{transform_indices = @transform_0, window_bounds = array<i64: 64, 32>}, {pipeline_mode = #tpu.pipeline_mode<synchronous>, transform_indices = @transform_1, window_bounds = array<i64: 1, 32>}, {pipeline_mode = #tpu.pipeline_mode<synchronous>, transform_indices = @transform_2, window_bounds = array<i64: 1, 32>}, {pipeline_mode = #tpu.pipeline_mode<synchronous>, transform_indices = @transform_3, window_bounds = array<i64: 32, 128>}, {pipeline_mode = #tpu.pipeline_mode<synchronous>, transform_indices = @transform_4, window_bounds = array<i64: 1, 128>}, {pipeline_mode = #tpu.pipeline_mode<synchronous>, transform_indices = @transform_5, window_bounds = array<i64: 128, 32>}, {pipeline_mode = #tpu.pipeline_mode<synchronous>, transform_indices = @transform_6, window_bounds = array<i64: 1, 32>}, {transform_indices = @transform_7, window_bounds = array<i64: 64, 32>}]} {
    %c0 = arith.constant 0 : index
    %c0_0 = arith.constant 0 : index
    %0 = vector.load %arg1[%c0, %c0_0] : memref<64x32xf32, #tpu.memory_space<vmem>>, vector<64x32xf32>
    %c0_1 = arith.constant 0 : index
    %c0_2 = arith.constant 0 : index
    %1 = vector.load %arg2[%c0_1, %c0_2] : memref<1x32xf32, #tpu.memory_space<vmem>>, vector<1x32xf32>
    %c0_3 = arith.constant 0 : index
    %c0_4 = arith.constant 0 : index
    %2 = vector.load %arg3[%c0_3, %c0_4] : memref<1x32xf32, #tpu.memory_space<vmem>>, vector<1x32xf32>
    %cst = arith.constant dense<0.000000e+00> : vector<64xf32>
    %3 = vector.multi_reduction <add>, %0, %cst [1] : vector<64x32xf32> to vector<64xf32>
    %4 = vector.shape_cast %3 : vector<64xf32> to vector<64x1xf32>
    %cst_5 = arith.constant 3.200000e+01 : f32
    %5 = vector.broadcast %cst_5 : f32 to vector<64x1xf32>
    %6 = arith.divf %4, %5 : vector<64x1xf32>
    %7 = vector.broadcast %6 : vector<64x1xf32> to vector<64x32xf32>
    %8 = arith.subf %0, %7 : vector<64x32xf32>
    %9 = arith.mulf %8, %8 : vector<64x32xf32>
    %cst_6 = arith.constant dense<0.000000e+00> : vector<64xf32>
    %10 = vector.multi_reduction <add>, %9, %cst_6 [1] : vector<64x32xf32> to vector<64xf32>
    %11 = vector.shape_cast %10 : vector<64xf32> to vector<64x1xf32>
    %cst_7 = arith.constant 3.200000e+01 : f32
    %12 = vector.broadcast %cst_7 : f32 to vector<64x1xf32>
    %13 = arith.divf %11, %12 : vector<64x1xf32>
    %cst_8 = arith.constant 9.99999974E-6 : f32
    %14 = vector.broadcast %cst_8 : f32 to vector<64x1xf32>
    %15 = arith.addf %13, %14 : vector<64x1xf32>
    %16 = math.rsqrt %15 : vector<64x1xf32>
    %17 = vector.broadcast %16 : vector<64x1xf32> to vector<64x32xf32>
    %18 = arith.mulf %8, %17 : vector<64x32xf32>
    %19 = vector.broadcast %1 : vector<1x32xf32> to vector<64x32xf32>
    %20 = arith.mulf %18, %19 : vector<64x32xf32>
    %21 = vector.broadcast %2 : vector<1x32xf32> to vector<64x32xf32>
    %22 = arith.addf %20, %21 : vector<64x32xf32>
    %23 = arith.truncf %22 : vector<64x32xf32> to vector<64x32xbf16>
    %c0_9 = arith.constant 0 : index
    %c0_10 = arith.constant 0 : index
    %24 = vector.load %arg4[%c0_9, %c0_10] : memref<32x128xbf16, #tpu.memory_space<vmem>>, vector<32x128xbf16>
    %cst_11 = arith.constant dense<0.000000e+00> : vector<64x128xf32>
    %25 = tpu.matmul %23, %24, %cst_11 {dimension_numbers = #tpu.dot_dimension_numbers<[1], [0], [0], [1], [0, 0, 1, 1], [], []>} : vector<64x32xbf16>, vector<32x128xbf16>, vector<64x128xf32> -> vector<64x128xf32>
    %c0_12 = arith.constant 0 : index
    %c0_13 = arith.constant 0 : index
    %26 = vector.load %arg5[%c0_12, %c0_13] : memref<1x128xf32, #tpu.memory_space<vmem>>, vector<1x128xf32>
    %27 = vector.broadcast %26 : vector<1x128xf32> to vector<64x128xf32>
    %28 = arith.addf %25, %27 : vector<64x128xf32>
    %cst_14 = arith.constant 5.000000e-01 : f32
    %29 = vector.broadcast %cst_14 : f32 to vector<64x128xf32>
    %30 = arith.mulf %29, %28 : vector<64x128xf32>
    %cst_15 = arith.constant 4.471500e-02 : f32
    %31 = vector.broadcast %cst_15 : f32 to vector<64x128xf32>
    %32 = arith.mulf %31, %28 : vector<64x128xf32>
    %33 = arith.mulf %32, %28 : vector<64x128xf32>
    %34 = arith.mulf %33, %28 : vector<64x128xf32>
    %35 = arith.addf %28, %34 : vector<64x128xf32>
    %cst_16 = arith.constant 0.797884583 : f32
    %36 = vector.broadcast %cst_16 : f32 to vector<64x128xf32>
    %37 = arith.mulf %36, %35 : vector<64x128xf32>
    %38 = math.tanh %37 : vector<64x128xf32>
    %cst_17 = arith.constant 1.000000e+00 : f32
    %39 = vector.broadcast %cst_17 : f32 to vector<64x128xf32>
    %40 = arith.addf %39, %38 : vector<64x128xf32>
    %41 = arith.mulf %30, %40 : vector<64x128xf32>
    %42 = arith.truncf %41 : vector<64x128xf32> to vector<64x128xbf16>
    %c0_18 = arith.constant 0 : index
    %c0_19 = arith.constant 0 : index
    %43 = vector.load %arg6[%c0_18, %c0_19] : memref<128x32xbf16, #tpu.memory_space<vmem>>, vector<128x32xbf16>
    %cst_20 = arith.constant dense<0.000000e+00> : vector<64x32xf32>
    %44 = tpu.matmul %42, %43, %cst_20 {dimension_numbers = #tpu.dot_dimension_numbers<[1], [0], [0], [1], [0, 0, 1, 1], [], []>} : vector<64x128xbf16>, vector<128x32xbf16>, vector<64x32xf32> -> vector<64x32xf32>
    %c0_21 = arith.constant 0 : index
    %c0_22 = arith.constant 0 : index
    %45 = vector.load %arg7[%c0_21, %c0_22] : memref<1x32xf32, #tpu.memory_space<vmem>>, vector<1x32xf32>
    %46 = vector.broadcast %45 : vector<1x32xf32> to vector<64x32xf32>
    %47 = arith.addf %44, %46 : vector<64x32xf32>
    %48 = arith.addf %47, %0 : vector<64x32xf32>
    %c0_23 = arith.constant 0 : index
    %c0_24 = arith.constant 0 : index
    %49 = vector.load %arg8[%c0_23, %c0_24] : memref<64x32xf32, #tpu.memory_space<vmem>>, vector<64x32xf32>
    tpu.vector_store %arg8[%c0_23, %c0_24], %48 {strides = array<i32>} : memref<64x32xf32, #tpu.memory_space<vmem>>, vector<64x32xf32>,
    return
  }
  func.func @transform_0(%arg0: i32) -> (i32, i32) {
    %c0_i32 = arith.constant 0 : i32
    %c0_i32_0 = arith.constant 0 : i32
    return %arg0, %c0_i32 : i32, i32
  }
  func.func @transform_1(%arg0: i32) -> (i32, i32) {
    %c0_i32 = arith.constant 0 : i32
    %c0_i32_0 = arith.constant 0 : i32
    %c0_i32_1 = arith.constant 0 : i32
    return %c0_i32, %c0_i32_0 : i32, i32
  }
  func.func @transform_2(%arg0: i32) -> (i32, i32) {
    %c0_i32 = arith.constant 0 : i32
    %c0_i32_0 = arith.constant 0 : i32
    %c0_i32_1 = arith.constant 0 : i32
    return %c0_i32, %c0_i32_0 : i32, i32
  }
  func.func @transform_3(%arg0: i32) -> (i32, i32) {
    %c0_i32 = arith.constant 0 : i32
    %c0_i32_0 = arith.constant 0 : i32
    %c0_i32_1 = arith.constant 0 : i32
    return %c0_i32, %c0_i32_0 : i32, i32
  }
  func.func @transform_4(%arg0: i32) -> (i32, i32) {
    %c0_i32 = arith.constant 0 : i32
    %c0_i32_0 = arith.constant 0 : i32
    %c0_i32_1 = arith.constant 0 : i32
    return %c0_i32, %c0_i32_0 : i32, i32
  }
  func.func @transform_5(%arg0: i32) -> (i32, i32) {
    %c0_i32 = arith.constant 0 : i32
    %c0_i32_0 = arith.constant 0 : i32
    %c0_i32_1 = arith.constant 0 : i32
    return %c0_i32, %c0_i32_0 : i32, i32
  }
  func.func @transform_6(%arg0: i32) -> (i32, i32) {
    %c0_i32 = arith.constant 0 : i32
    %c0_i32_0 = arith.constant 0 : i32
    %c0_i32_1 = arith.constant 0 : i32
    return %c0_i32, %c0_i32_0 : i32, i32
  }
  func.func @transform_7(%arg0: i32) -> (i32, i32) {
    %c0_i32 = arith.constant 0 : i32
    %c0_i32_0 = arith.constant 0 : i32
    return %arg0, %c0_i32 : i32, i32
  }
}

module attributes {stable_mosaic.version = 11 : i64} {
  func.func @_attn_block_kernel(%arg0: i32, %arg1: memref<4x16x32xf32, #tpu.memory_space<vmem>>, %arg2: memref<1x32xf32, #tpu.memory_space<vmem>>, %arg3: memref<1x32xf32, #tpu.memory_space<vmem>>, %arg4: memref<32x96xbf16, #tpu.memory_space<vmem>>, %arg5: memref<32x32xbf16, #tpu.memory_space<vmem>>, %arg6: memref<1x32xf32, #tpu.memory_space<vmem>>, %arg7: memref<4x16x16xf32, #tpu.memory_space<vmem>>, %arg8: memref<4x16x32xf32, #tpu.memory_space<vmem>>) attributes {dimension_semantics = [#tpu.dimension_semantics<parallel>], iteration_bounds = array<i64: 2>, scalar_prefetch = 0 : i64, scratch_operands = 0 : i64, tpu.core_type = #tpu.core_type<tc>, window_params = [{transform_indices = @transform_0, window_bounds = array<i64: 4, 16, 32>}, {pipeline_mode = #tpu.pipeline_mode<synchronous>, transform_indices = @transform_1, window_bounds = array<i64: 1, 32>}, {pipeline_mode = #tpu.pipeline_mode<synchronous>, transform_indices = @transform_2, window_bounds = array<i64: 1, 32>}, {pipeline_mode = #tpu.pipeline_mode<synchronous>, transform_indices = @transform_3, window_bounds = array<i64: 32, 96>}, {pipeline_mode = #tpu.pipeline_mode<synchronous>, transform_indices = @transform_4, window_bounds = array<i64: 32, 32>}, {pipeline_mode = #tpu.pipeline_mode<synchronous>, transform_indices = @transform_5, window_bounds = array<i64: 1, 32>}, {transform_indices = @transform_6, window_bounds = array<i64: 4, 16, 16>}, {transform_indices = @transform_7, window_bounds = array<i64: 4, 16, 32>}]} {
    %c0 = arith.constant 0 : index
    %c0_0 = arith.constant 0 : index
    %0 = vector.load %arg2[%c0, %c0_0] : memref<1x32xf32, #tpu.memory_space<vmem>>, vector<1x32xf32>
    %c0_1 = arith.constant 0 : index
    %c0_2 = arith.constant 0 : index
    %1 = vector.load %arg3[%c0_1, %c0_2] : memref<1x32xf32, #tpu.memory_space<vmem>>, vector<1x32xf32>
    %c0_3 = arith.constant 0 : index
    %c0_4 = arith.constant 0 : index
    %2 = vector.load %arg4[%c0_3, %c0_4] : memref<32x96xbf16, #tpu.memory_space<vmem>>, vector<32x96xbf16>
    %c0_5 = arith.constant 0 : index
    %c0_6 = arith.constant 0 : index
    %3 = vector.load %arg5[%c0_5, %c0_6] : memref<32x32xbf16, #tpu.memory_space<vmem>>, vector<32x32xbf16>
    %c0_7 = arith.constant 0 : index
    %c0_8 = arith.constant 0 : index
    %4 = vector.load %arg6[%c0_7, %c0_8] : memref<1x32xf32, #tpu.memory_space<vmem>>, vector<1x32xf32>
    %c0_9 = arith.constant 0 : index
    %c0_10 = arith.constant 0 : index
    %c0_11 = arith.constant 0 : index
    %5 = vector.load %arg1[%c0_9, %c0_10, %c0_11] : memref<4x16x32xf32, #tpu.memory_space<vmem>>, vector<1x16x32xf32>
    %6 = vector.shape_cast %5 : vector<1x16x32xf32> to vector<16x32xf32>
    %cst = arith.constant dense<0.000000e+00> : vector<16xf32>
    %7 = vector.multi_reduction <add>, %6, %cst [1] : vector<16x32xf32> to vector<16xf32>
    %8 = vector.shape_cast %7 : vector<16xf32> to vector<16x1xf32>
    %cst_12 = arith.constant 3.200000e+01 : f32
    %9 = vector.broadcast %cst_12 : f32 to vector<16x1xf32>
    %10 = arith.divf %8, %9 : vector<16x1xf32>
    %11 = vector.broadcast %10 : vector<16x1xf32> to vector<16x32xf32>
    %12 = arith.subf %6, %11 : vector<16x32xf32>
    %13 = arith.mulf %12, %12 : vector<16x32xf32>
    %cst_13 = arith.constant dense<0.000000e+00> : vector<16xf32>
    %14 = vector.multi_reduction <add>, %13, %cst_13 [1] : vector<16x32xf32> to vector<16xf32>
    %15 = vector.shape_cast %14 : vector<16xf32> to vector<16x1xf32>
    %cst_14 = arith.constant 3.200000e+01 : f32
    %16 = vector.broadcast %cst_14 : f32 to vector<16x1xf32>
    %17 = arith.divf %15, %16 : vector<16x1xf32>
    %cst_15 = arith.constant 9.99999974E-6 : f32
    %18 = vector.broadcast %cst_15 : f32 to vector<16x1xf32>
    %19 = arith.addf %17, %18 : vector<16x1xf32>
    %20 = math.rsqrt %19 : vector<16x1xf32>
    %21 = vector.broadcast %20 : vector<16x1xf32> to vector<16x32xf32>
    %22 = arith.mulf %12, %21 : vector<16x32xf32>
    %23 = vector.broadcast %0 : vector<1x32xf32> to vector<16x32xf32>
    %24 = arith.mulf %22, %23 : vector<16x32xf32>
    %25 = vector.broadcast %1 : vector<1x32xf32> to vector<16x32xf32>
    %26 = arith.addf %24, %25 : vector<16x32xf32>
    %27 = arith.truncf %26 : vector<16x32xf32> to vector<16x32xbf16>
    %cst_16 = arith.constant dense<0.000000e+00> : vector<16x96xf32>
    %28 = tpu.matmul %27, %2, %cst_16 {dimension_numbers = #tpu.dot_dimension_numbers<[1], [0], [0], [1], [0, 0, 1, 1], [], []>} : vector<16x32xbf16>, vector<32x96xbf16>, vector<16x96xf32> -> vector<16x96xf32>
    %c0_17 = arith.constant 0 : index
    %c0_18 = arith.constant 0 : index
    %c0_19 = arith.constant 0 : index
    %29 = vector.load %arg7[%c0_17, %c0_18, %c0_19] : memref<4x16x16xf32, #tpu.memory_space<vmem>>, vector<1x16x16xf32>
    %30 = vector.shape_cast %29 : vector<1x16x16xf32> to vector<16x16xf32>
    %31 = vector.extract_strided_slice %28 {offsets = [0, 0], sizes = [16, 16], strides = [1, 1]} : vector<16x96xf32> to vector<16x16xf32>
    %32 = arith.truncf %31 : vector<16x16xf32> to vector<16x16xbf16>
    %33 = vector.extract_strided_slice %28 {offsets = [0, 32], sizes = [16, 16], strides = [1, 1]} : vector<16x96xf32> to vector<16x16xf32>
    %34 = arith.truncf %33 : vector<16x16xf32> to vector<16x16xbf16>
    %35 = vector.extract_strided_slice %28 {offsets = [0, 64], sizes = [16, 16], strides = [1, 1]} : vector<16x96xf32> to vector<16x16xf32>
    %36 = arith.truncf %35 : vector<16x16xf32> to vector<16x16xbf16>
    %cst_20 = arith.constant dense<0.000000e+00> : vector<16x16xf32>
    %37 = tpu.matmul %32, %34, %cst_20 {dimension_numbers = #tpu.dot_dimension_numbers<[1], [1], [0], [0], [0, 0, 1, 0], [], []>} : vector<16x16xbf16>, vector<16x16xbf16>, vector<16x16xf32> -> vector<16x16xf32>
    %cst_21 = arith.constant 2.500000e-01 : f32
    %38 = vector.broadcast %cst_21 : f32 to vector<16x16xf32>
    %39 = arith.mulf %37, %38 : vector<16x16xf32>
    %40 = arith.addf %39, %30 : vector<16x16xf32>
    %cst_22 = arith.constant dense<0xFF800000> : vector<16xf32>
    %41 = vector.multi_reduction <maximumf>, %40, %cst_22 [1] : vector<16x16xf32> to vector<16xf32>
    %42 = vector.shape_cast %41 : vector<16xf32> to vector<16x1xf32>
    %43 = vector.broadcast %42 : vector<16x1xf32> to vector<16x16xf32>
    %44 = arith.subf %40, %43 : vector<16x16xf32>
    %45 = math.exp %44 : vector<16x16xf32>
    %cst_23 = arith.constant dense<0.000000e+00> : vector<16xf32>
    %46 = vector.multi_reduction <add>, %45, %cst_23 [1] : vector<16x16xf32> to vector<16xf32>
    %47 = vector.shape_cast %46 : vector<16xf32> to vector<16x1xf32>
    %48 = tpu.reciprocal %47 {approx = true} : vector<16x1xf32> -> vector<16x1xf32>
    %49 = vector.broadcast %48 : vector<16x1xf32> to vector<16x16xf32>
    %50 = arith.mulf %45, %49 : vector<16x16xf32>
    %51 = arith.truncf %50 : vector<16x16xf32> to vector<16x16xbf16>
    %cst_24 = arith.constant dense<0.000000e+00> : vector<16x16xf32>
    %52 = tpu.matmul %51, %36, %cst_24 {dimension_numbers = #tpu.dot_dimension_numbers<[1], [0], [0], [1], [0, 0, 1, 1], [], []>} : vector<16x16xbf16>, vector<16x16xbf16>, vector<16x16xf32> -> vector<16x16xf32>
    %53 = vector.extract_strided_slice %28 {offsets = [0, 16], sizes = [16, 16], strides = [1, 1]} : vector<16x96xf32> to vector<16x16xf32>
    %54 = arith.truncf %53 : vector<16x16xf32> to vector<16x16xbf16>
    %55 = vector.extract_strided_slice %28 {offsets = [0, 48], sizes = [16, 16], strides = [1, 1]} : vector<16x96xf32> to vector<16x16xf32>
    %56 = arith.truncf %55 : vector<16x16xf32> to vector<16x16xbf16>
    %57 = vector.extract_strided_slice %28 {offsets = [0, 80], sizes = [16, 16], strides = [1, 1]} : vector<16x96xf32> to vector<16x16xf32>
    %58 = arith.truncf %57 : vector<16x16xf32> to vector<16x16xbf16>
    %cst_25 = arith.constant dense<0.000000e+00> : vector<16x16xf32>
    %59 = tpu.matmul %54, %56, %cst_25 {dimension_numbers = #tpu.dot_dimension_numbers<[1], [1], [0], [0], [0, 0, 1, 0], [], []>} : vector<16x16xbf16>, vector<16x16xbf16>, vector<16x16xf32> -> vector<16x16xf32>
    %cst_26 = arith.constant 2.500000e-01 : f32
    %60 = vector.broadcast %cst_26 : f32 to vector<16x16xf32>
    %61 = arith.mulf %59, %60 : vector<16x16xf32>
    %62 = arith.addf %61, %30 : vector<16x16xf32>
    %cst_27 = arith.constant dense<0xFF800000> : vector<16xf32>
    %63 = vector.multi_reduction <maximumf>, %62, %cst_27 [1] : vector<16x16xf32> to vector<16xf32>
    %64 = vector.shape_cast %63 : vector<16xf32> to vector<16x1xf32>
    %65 = vector.broadcast %64 : vector<16x1xf32> to vector<16x16xf32>
    %66 = arith.subf %62, %65 : vector<16x16xf32>
    %67 = math.exp %66 : vector<16x16xf32>
    %cst_28 = arith.constant dense<0.000000e+00> : vector<16xf32>
    %68 = vector.multi_reduction <add>, %67, %cst_28 [1] : vector<16x16xf32> to vector<16xf32>
    %69 = vector.shape_cast %68 : vector<16xf32> to vector<16x1xf32>
    %70 = tpu.reciprocal %69 {approx = true} : vector<16x1xf32> -> vector<16x1xf32>
    %71 = vector.broadcast %70 : vector<16x1xf32> to vector<16x16xf32>
    %72 = arith.mulf %67, %71 : vector<16x16xf32>
    %73 = arith.truncf %72 : vector<16x16xf32> to vector<16x16xbf16>
    %cst_29 = arith.constant dense<0.000000e+00> : vector<16x16xf32>
    %74 = tpu.matmul %73, %58, %cst_29 {dimension_numbers = #tpu.dot_dimension_numbers<[1], [0], [0], [1], [0, 0, 1, 1], [], []>} : vector<16x16xbf16>, vector<16x16xbf16>, vector<16x16xf32> -> vector<16x16xf32>
    %75 = tpu.concatenate %52, %74 in 1 : vector<16x16xf32>, vector<16x16xf32> -> vector<16x32xf32>
    %76 = arith.truncf %75 : vector<16x32xf32> to vector<16x32xbf16>
    %cst_30 = arith.constant dense<0.000000e+00> : vector<16x32xf32>
    %77 = tpu.matmul %76, %3, %cst_30 {dimension_numbers = #tpu.dot_dimension_numbers<[1], [0], [0], [1], [0, 0, 1, 1], [], []>} : vector<16x32xbf16>, vector<32x32xbf16>, vector<16x32xf32> -> vector<16x32xf32>
    %78 = vector.broadcast %4 : vector<1x32xf32> to vector<16x32xf32>
    %79 = arith.addf %77, %78 : vector<16x32xf32>
    %80 = arith.addf %79, %6 : vector<16x32xf32>
    %c0_31 = arith.constant 0 : index
    %c0_32 = arith.constant 0 : index
    %c0_33 = arith.constant 0 : index
    %81 = vector.load %arg8[%c0_31, %c0_32, %c0_33] : memref<4x16x32xf32, #tpu.memory_space<vmem>>, vector<1x16x32xf32>
    %82 = vector.shape_cast %81 : vector<1x16x32xf32> to vector<16x32xf32>
    %83 = vector.shape_cast %80 : vector<16x32xf32> to vector<1x16x32xf32>
    tpu.vector_store %arg8[%c0_31, %c0_32, %c0_33], %83 {strides = array<i32>} : memref<4x16x32xf32, #tpu.memory_space<vmem>>, vector<1x16x32xf32>,
    %c1 = arith.constant 1 : index
    %c0_34 = arith.constant 0 : index
    %c0_35 = arith.constant 0 : index
    %84 = vector.load %arg1[%c1, %c0_34, %c0_35] : memref<4x16x32xf32, #tpu.memory_space<vmem>>, vector<1x16x32xf32>
    %85 = vector.shape_cast %84 : vector<1x16x32xf32> to vector<16x32xf32>
    %cst_36 = arith.constant dense<0.000000e+00> : vector<16xf32>
    %86 = vector.multi_reduction <add>, %85, %cst_36 [1] : vector<16x32xf32> to vector<16xf32>
    %87 = vector.shape_cast %86 : vector<16xf32> to vector<16x1xf32>
    %cst_37 = arith.constant 3.200000e+01 : f32
    %88 = vector.broadcast %cst_37 : f32 to vector<16x1xf32>
    %89 = arith.divf %87, %88 : vector<16x1xf32>
    %90 = vector.broadcast %89 : vector<16x1xf32> to vector<16x32xf32>
    %91 = arith.subf %85, %90 : vector<16x32xf32>
    %92 = arith.mulf %91, %91 : vector<16x32xf32>
    %cst_38 = arith.constant dense<0.000000e+00> : vector<16xf32>
    %93 = vector.multi_reduction <add>, %92, %cst_38 [1] : vector<16x32xf32> to vector<16xf32>
    %94 = vector.shape_cast %93 : vector<16xf32> to vector<16x1xf32>
    %cst_39 = arith.constant 3.200000e+01 : f32
    %95 = vector.broadcast %cst_39 : f32 to vector<16x1xf32>
    %96 = arith.divf %94, %95 : vector<16x1xf32>
    %cst_40 = arith.constant 9.99999974E-6 : f32
    %97 = vector.broadcast %cst_40 : f32 to vector<16x1xf32>
    %98 = arith.addf %96, %97 : vector<16x1xf32>
    %99 = math.rsqrt %98 : vector<16x1xf32>
    %100 = vector.broadcast %99 : vector<16x1xf32> to vector<16x32xf32>
    %101 = arith.mulf %91, %100 : vector<16x32xf32>
    %102 = vector.broadcast %0 : vector<1x32xf32> to vector<16x32xf32>
    %103 = arith.mulf %101, %102 : vector<16x32xf32>
    %104 = vector.broadcast %1 : vector<1x32xf32> to vector<16x32xf32>
    %105 = arith.addf %103, %104 : vector<16x32xf32>
    %106 = arith.truncf %105 : vector<16x32xf32> to vector<16x32xbf16>
    %cst_41 = arith.constant dense<0.000000e+00> : vector<16x96xf32>
    %107 = tpu.matmul %106, %2, %cst_41 {dimension_numbers = #tpu.dot_dimension_numbers<[1], [0], [0], [1], [0, 0, 1, 1], [], []>} : vector<16x32xbf16>, vector<32x96xbf16>, vector<16x96xf32> -> vector<16x96xf32>
    %c1_42 = arith.constant 1 : index
    %c0_43 = arith.constant 0 : index
    %c0_44 = arith.constant 0 : index
    %108 = vector.load %arg7[%c1_42, %c0_43, %c0_44] : memref<4x16x16xf32, #tpu.memory_space<vmem>>, vector<1x16x16xf32>
    %109 = vector.shape_cast %108 : vector<1x16x16xf32> to vector<16x16xf32>
    %110 = vector.extract_strided_slice %107 {offsets = [0, 0], sizes = [16, 16], strides = [1, 1]} : vector<16x96xf32> to vector<16x16xf32>
    %111 = arith.truncf %110 : vector<16x16xf32> to vector<16x16xbf16>
    %112 = vector.extract_strided_slice %107 {offsets = [0, 32], sizes = [16, 16], strides = [1, 1]} : vector<16x96xf32> to vector<16x16xf32>
    %113 = arith.truncf %112 : vector<16x16xf32> to vector<16x16xbf16>
    %114 = vector.extract_strided_slice %107 {offsets = [0, 64], sizes = [16, 16], strides = [1, 1]} : vector<16x96xf32> to vector<16x16xf32>
    %115 = arith.truncf %114 : vector<16x16xf32> to vector<16x16xbf16>
    %cst_45 = arith.constant dense<0.000000e+00> : vector<16x16xf32>
    %116 = tpu.matmul %111, %113, %cst_45 {dimension_numbers = #tpu.dot_dimension_numbers<[1], [1], [0], [0], [0, 0, 1, 0], [], []>} : vector<16x16xbf16>, vector<16x16xbf16>, vector<16x16xf32> -> vector<16x16xf32>
    %cst_46 = arith.constant 2.500000e-01 : f32
    %117 = vector.broadcast %cst_46 : f32 to vector<16x16xf32>
    %118 = arith.mulf %116, %117 : vector<16x16xf32>
    %119 = arith.addf %118, %109 : vector<16x16xf32>
    %cst_47 = arith.constant dense<0xFF800000> : vector<16xf32>
    %120 = vector.multi_reduction <maximumf>, %119, %cst_47 [1] : vector<16x16xf32> to vector<16xf32>
    %121 = vector.shape_cast %120 : vector<16xf32> to vector<16x1xf32>
    %122 = vector.broadcast %121 : vector<16x1xf32> to vector<16x16xf32>
    %123 = arith.subf %119, %122 : vector<16x16xf32>
    %124 = math.exp %123 : vector<16x16xf32>
    %cst_48 = arith.constant dense<0.000000e+00> : vector<16xf32>
    %125 = vector.multi_reduction <add>, %124, %cst_48 [1] : vector<16x16xf32> to vector<16xf32>
    %126 = vector.shape_cast %125 : vector<16xf32> to vector<16x1xf32>
    %127 = tpu.reciprocal %126 {approx = true} : vector<16x1xf32> -> vector<16x1xf32>
    %128 = vector.broadcast %127 : vector<16x1xf32> to vector<16x16xf32>
    %129 = arith.mulf %124, %128 : vector<16x16xf32>
    %130 = arith.truncf %129 : vector<16x16xf32> to vector<16x16xbf16>
    %cst_49 = arith.constant dense<0.000000e+00> : vector<16x16xf32>
    %131 = tpu.matmul %130, %115, %cst_49 {dimension_numbers = #tpu.dot_dimension_numbers<[1], [0], [0], [1], [0, 0, 1, 1], [], []>} : vector<16x16xbf16>, vector<16x16xbf16>, vector<16x16xf32> -> vector<16x16xf32>
    %132 = vector.extract_strided_slice %107 {offsets = [0, 16], sizes = [16, 16], strides = [1, 1]} : vector<16x96xf32> to vector<16x16xf32>
    %133 = arith.truncf %132 : vector<16x16xf32> to vector<16x16xbf16>
    %134 = vector.extract_strided_slice %107 {offsets = [0, 48], sizes = [16, 16], strides = [1, 1]} : vector<16x96xf32> to vector<16x16xf32>
    %135 = arith.truncf %134 : vector<16x16xf32> to vector<16x16xbf16>
    %136 = vector.extract_strided_slice %107 {offsets = [0, 80], sizes = [16, 16], strides = [1, 1]} : vector<16x96xf32> to vector<16x16xf32>
    %137 = arith.truncf %136 : vector<16x16xf32> to vector<16x16xbf16>
    %cst_50 = arith.constant dense<0.000000e+00> : vector<16x16xf32>
    %138 = tpu.matmul %133, %135, %cst_50 {dimension_numbers = #tpu.dot_dimension_numbers<[1], [1], [0], [0], [0, 0, 1, 0], [], []>} : vector<16x16xbf16>, vector<16x16xbf16>, vector<16x16xf32> -> vector<16x16xf32>
    %cst_51 = arith.constant 2.500000e-01 : f32
    %139 = vector.broadcast %cst_51 : f32 to vector<16x16xf32>
    %140 = arith.mulf %138, %139 : vector<16x16xf32>
    %141 = arith.addf %140, %109 : vector<16x16xf32>
    %cst_52 = arith.constant dense<0xFF800000> : vector<16xf32>
    %142 = vector.multi_reduction <maximumf>, %141, %cst_52 [1] : vector<16x16xf32> to vector<16xf32>
    %143 = vector.shape_cast %142 : vector<16xf32> to vector<16x1xf32>
    %144 = vector.broadcast %143 : vector<16x1xf32> to vector<16x16xf32>
    %145 = arith.subf %141, %144 : vector<16x16xf32>
    %146 = math.exp %145 : vector<16x16xf32>
    %cst_53 = arith.constant dense<0.000000e+00> : vector<16xf32>
    %147 = vector.multi_reduction <add>, %146, %cst_53 [1] : vector<16x16xf32> to vector<16xf32>
    %148 = vector.shape_cast %147 : vector<16xf32> to vector<16x1xf32>
    %149 = tpu.reciprocal %148 {approx = true} : vector<16x1xf32> -> vector<16x1xf32>
    %150 = vector.broadcast %149 : vector<16x1xf32> to vector<16x16xf32>
    %151 = arith.mulf %146, %150 : vector<16x16xf32>
    %152 = arith.truncf %151 : vector<16x16xf32> to vector<16x16xbf16>
    %cst_54 = arith.constant dense<0.000000e+00> : vector<16x16xf32>
    %153 = tpu.matmul %152, %137, %cst_54 {dimension_numbers = #tpu.dot_dimension_numbers<[1], [0], [0], [1], [0, 0, 1, 1], [], []>} : vector<16x16xbf16>, vector<16x16xbf16>, vector<16x16xf32> -> vector<16x16xf32>
    %154 = tpu.concatenate %131, %153 in 1 : vector<16x16xf32>, vector<16x16xf32> -> vector<16x32xf32>
    %155 = arith.truncf %154 : vector<16x32xf32> to vector<16x32xbf16>
    %cst_55 = arith.constant dense<0.000000e+00> : vector<16x32xf32>
    %156 = tpu.matmul %155, %3, %cst_55 {dimension_numbers = #tpu.dot_dimension_numbers<[1], [0], [0], [1], [0, 0, 1, 1], [], []>} : vector<16x32xbf16>, vector<32x32xbf16>, vector<16x32xf32> -> vector<16x32xf32>
    %157 = vector.broadcast %4 : vector<1x32xf32> to vector<16x32xf32>
    %158 = arith.addf %156, %157 : vector<16x32xf32>
    %159 = arith.addf %158, %85 : vector<16x32xf32>
    %c1_56 = arith.constant 1 : index
    %c0_57 = arith.constant 0 : index
    %c0_58 = arith.constant 0 : index
    %160 = vector.load %arg8[%c1_56, %c0_57, %c0_58] : memref<4x16x32xf32, #tpu.memory_space<vmem>>, vector<1x16x32xf32>
    %161 = vector.shape_cast %160 : vector<1x16x32xf32> to vector<16x32xf32>
    %162 = vector.shape_cast %159 : vector<16x32xf32> to vector<1x16x32xf32>
    tpu.vector_store %arg8[%c1_56, %c0_57, %c0_58], %162 {strides = array<i32>} : memref<4x16x32xf32, #tpu.memory_space<vmem>>, vector<1x16x32xf32>,
    %c2 = arith.constant 2 : index
    %c0_59 = arith.constant 0 : index
    %c0_60 = arith.constant 0 : index
    %163 = vector.load %arg1[%c2, %c0_59, %c0_60] : memref<4x16x32xf32, #tpu.memory_space<vmem>>, vector<1x16x32xf32>
    %164 = vector.shape_cast %163 : vector<1x16x32xf32> to vector<16x32xf32>
    %cst_61 = arith.constant dense<0.000000e+00> : vector<16xf32>
    %165 = vector.multi_reduction <add>, %164, %cst_61 [1] : vector<16x32xf32> to vector<16xf32>
    %166 = vector.shape_cast %165 : vector<16xf32> to vector<16x1xf32>
    %cst_62 = arith.constant 3.200000e+01 : f32
    %167 = vector.broadcast %cst_62 : f32 to vector<16x1xf32>
    %168 = arith.divf %166, %167 : vector<16x1xf32>
    %169 = vector.broadcast %168 : vector<16x1xf32> to vector<16x32xf32>
    %170 = arith.subf %164, %169 : vector<16x32xf32>
    %171 = arith.mulf %170, %170 : vector<16x32xf32>
    %cst_63 = arith.constant dense<0.000000e+00> : vector<16xf32>
    %172 = vector.multi_reduction <add>, %171, %cst_63 [1] : vector<16x32xf32> to vector<16xf32>
    %173 = vector.shape_cast %172 : vector<16xf32> to vector<16x1xf32>
    %cst_64 = arith.constant 3.200000e+01 : f32
    %174 = vector.broadcast %cst_64 : f32 to vector<16x1xf32>
    %175 = arith.divf %173, %174 : vector<16x1xf32>
    %cst_65 = arith.constant 9.99999974E-6 : f32
    %176 = vector.broadcast %cst_65 : f32 to vector<16x1xf32>
    %177 = arith.addf %175, %176 : vector<16x1xf32>
    %178 = math.rsqrt %177 : vector<16x1xf32>
    %179 = vector.broadcast %178 : vector<16x1xf32> to vector<16x32xf32>
    %180 = arith.mulf %170, %179 : vector<16x32xf32>
    %181 = vector.broadcast %0 : vector<1x32xf32> to vector<16x32xf32>
    %182 = arith.mulf %180, %181 : vector<16x32xf32>
    %183 = vector.broadcast %1 : vector<1x32xf32> to vector<16x32xf32>
    %184 = arith.addf %182, %183 : vector<16x32xf32>
    %185 = arith.truncf %184 : vector<16x32xf32> to vector<16x32xbf16>
    %cst_66 = arith.constant dense<0.000000e+00> : vector<16x96xf32>
    %186 = tpu.matmul %185, %2, %cst_66 {dimension_numbers = #tpu.dot_dimension_numbers<[1], [0], [0], [1], [0, 0, 1, 1], [], []>} : vector<16x32xbf16>, vector<32x96xbf16>, vector<16x96xf32> -> vector<16x96xf32>
    %c2_67 = arith.constant 2 : index
    %c0_68 = arith.constant 0 : index
    %c0_69 = arith.constant 0 : index
    %187 = vector.load %arg7[%c2_67, %c0_68, %c0_69] : memref<4x16x16xf32, #tpu.memory_space<vmem>>, vector<1x16x16xf32>
    %188 = vector.shape_cast %187 : vector<1x16x16xf32> to vector<16x16xf32>
    %189 = vector.extract_strided_slice %186 {offsets = [0, 0], sizes = [16, 16], strides = [1, 1]} : vector<16x96xf32> to vector<16x16xf32>
    %190 = arith.truncf %189 : vector<16x16xf32> to vector<16x16xbf16>
    %191 = vector.extract_strided_slice %186 {offsets = [0, 32], sizes = [16, 16], strides = [1, 1]} : vector<16x96xf32> to vector<16x16xf32>
    %192 = arith.truncf %191 : vector<16x16xf32> to vector<16x16xbf16>
    %193 = vector.extract_strided_slice %186 {offsets = [0, 64], sizes = [16, 16], strides = [1, 1]} : vector<16x96xf32> to vector<16x16xf32>
    %194 = arith.truncf %193 : vector<16x16xf32> to vector<16x16xbf16>
    %cst_70 = arith.constant dense<0.000000e+00> : vector<16x16xf32>
    %195 = tpu.matmul %190, %192, %cst_70 {dimension_numbers = #tpu.dot_dimension_numbers<[1], [1], [0], [0], [0, 0, 1, 0], [], []>} : vector<16x16xbf16>, vector<16x16xbf16>, vector<16x16xf32> -> vector<16x16xf32>
    %cst_71 = arith.constant 2.500000e-01 : f32
    %196 = vector.broadcast %cst_71 : f32 to vector<16x16xf32>
    %197 = arith.mulf %195, %196 : vector<16x16xf32>
    %198 = arith.addf %197, %188 : vector<16x16xf32>
    %cst_72 = arith.constant dense<0xFF800000> : vector<16xf32>
    %199 = vector.multi_reduction <maximumf>, %198, %cst_72 [1] : vector<16x16xf32> to vector<16xf32>
    %200 = vector.shape_cast %199 : vector<16xf32> to vector<16x1xf32>
    %201 = vector.broadcast %200 : vector<16x1xf32> to vector<16x16xf32>
    %202 = arith.subf %198, %201 : vector<16x16xf32>
    %203 = math.exp %202 : vector<16x16xf32>
    %cst_73 = arith.constant dense<0.000000e+00> : vector<16xf32>
    %204 = vector.multi_reduction <add>, %203, %cst_73 [1] : vector<16x16xf32> to vector<16xf32>
    %205 = vector.shape_cast %204 : vector<16xf32> to vector<16x1xf32>
    %206 = tpu.reciprocal %205 {approx = true} : vector<16x1xf32> -> vector<16x1xf32>
    %207 = vector.broadcast %206 : vector<16x1xf32> to vector<16x16xf32>
    %208 = arith.mulf %203, %207 : vector<16x16xf32>
    %209 = arith.truncf %208 : vector<16x16xf32> to vector<16x16xbf16>
    %cst_74 = arith.constant dense<0.000000e+00> : vector<16x16xf32>
    %210 = tpu.matmul %209, %194, %cst_74 {dimension_numbers = #tpu.dot_dimension_numbers<[1], [0], [0], [1], [0, 0, 1, 1], [], []>} : vector<16x16xbf16>, vector<16x16xbf16>, vector<16x16xf32> -> vector<16x16xf32>
    %211 = vector.extract_strided_slice %186 {offsets = [0, 16], sizes = [16, 16], strides = [1, 1]} : vector<16x96xf32> to vector<16x16xf32>
    %212 = arith.truncf %211 : vector<16x16xf32> to vector<16x16xbf16>
    %213 = vector.extract_strided_slice %186 {offsets = [0, 48], sizes = [16, 16], strides = [1, 1]} : vector<16x96xf32> to vector<16x16xf32>
    %214 = arith.truncf %213 : vector<16x16xf32> to vector<16x16xbf16>
    %215 = vector.extract_strided_slice %186 {offsets = [0, 80], sizes = [16, 16], strides = [1, 1]} : vector<16x96xf32> to vector<16x16xf32>
    %216 = arith.truncf %215 : vector<16x16xf32> to vector<16x16xbf16>
    %cst_75 = arith.constant dense<0.000000e+00> : vector<16x16xf32>
    %217 = tpu.matmul %212, %214, %cst_75 {dimension_numbers = #tpu.dot_dimension_numbers<[1], [1], [0], [0], [0, 0, 1, 0], [], []>} : vector<16x16xbf16>, vector<16x16xbf16>, vector<16x16xf32> -> vector<16x16xf32>
    %cst_76 = arith.constant 2.500000e-01 : f32
    %218 = vector.broadcast %cst_76 : f32 to vector<16x16xf32>
    %219 = arith.mulf %217, %218 : vector<16x16xf32>
    %220 = arith.addf %219, %188 : vector<16x16xf32>
    %cst_77 = arith.constant dense<0xFF800000> : vector<16xf32>
    %221 = vector.multi_reduction <maximumf>, %220, %cst_77 [1] : vector<16x16xf32> to vector<16xf32>
    %222 = vector.shape_cast %221 : vector<16xf32> to vector<16x1xf32>
    %223 = vector.broadcast %222 : vector<16x1xf32> to vector<16x16xf32>
    %224 = arith.subf %220, %223 : vector<16x16xf32>
    %225 = math.exp %224 : vector<16x16xf32>
    %cst_78 = arith.constant dense<0.000000e+00> : vector<16xf32>
    %226 = vector.multi_reduction <add>, %225, %cst_78 [1] : vector<16x16xf32> to vector<16xf32>
    %227 = vector.shape_cast %226 : vector<16xf32> to vector<16x1xf32>
    %228 = tpu.reciprocal %227 {approx = true} : vector<16x1xf32> -> vector<16x1xf32>
    %229 = vector.broadcast %228 : vector<16x1xf32> to vector<16x16xf32>
    %230 = arith.mulf %225, %229 : vector<16x16xf32>
    %231 = arith.truncf %230 : vector<16x16xf32> to vector<16x16xbf16>
    %cst_79 = arith.constant dense<0.000000e+00> : vector<16x16xf32>
    %232 = tpu.matmul %231, %216, %cst_79 {dimension_numbers = #tpu.dot_dimension_numbers<[1], [0], [0], [1], [0, 0, 1, 1], [], []>} : vector<16x16xbf16>, vector<16x16xbf16>, vector<16x16xf32> -> vector<16x16xf32>
    %233 = tpu.concatenate %210, %232 in 1 : vector<16x16xf32>, vector<16x16xf32> -> vector<16x32xf32>
    %234 = arith.truncf %233 : vector<16x32xf32> to vector<16x32xbf16>
    %cst_80 = arith.constant dense<0.000000e+00> : vector<16x32xf32>
    %235 = tpu.matmul %234, %3, %cst_80 {dimension_numbers = #tpu.dot_dimension_numbers<[1], [0], [0], [1], [0, 0, 1, 1], [], []>} : vector<16x32xbf16>, vector<32x32xbf16>, vector<16x32xf32> -> vector<16x32xf32>
    %236 = vector.broadcast %4 : vector<1x32xf32> to vector<16x32xf32>
    %237 = arith.addf %235, %236 : vector<16x32xf32>
    %238 = arith.addf %237, %164 : vector<16x32xf32>
    %c2_81 = arith.constant 2 : index
    %c0_82 = arith.constant 0 : index
    %c0_83 = arith.constant 0 : index
    %239 = vector.load %arg8[%c2_81, %c0_82, %c0_83] : memref<4x16x32xf32, #tpu.memory_space<vmem>>, vector<1x16x32xf32>
    %240 = vector.shape_cast %239 : vector<1x16x32xf32> to vector<16x32xf32>
    %241 = vector.shape_cast %238 : vector<16x32xf32> to vector<1x16x32xf32>
    tpu.vector_store %arg8[%c2_81, %c0_82, %c0_83], %241 {strides = array<i32>} : memref<4x16x32xf32, #tpu.memory_space<vmem>>, vector<1x16x32xf32>,
    %c3 = arith.constant 3 : index
    %c0_84 = arith.constant 0 : index
    %c0_85 = arith.constant 0 : index
    %242 = vector.load %arg1[%c3, %c0_84, %c0_85] : memref<4x16x32xf32, #tpu.memory_space<vmem>>, vector<1x16x32xf32>
    %243 = vector.shape_cast %242 : vector<1x16x32xf32> to vector<16x32xf32>
    %cst_86 = arith.constant dense<0.000000e+00> : vector<16xf32>
    %244 = vector.multi_reduction <add>, %243, %cst_86 [1] : vector<16x32xf32> to vector<16xf32>
    %245 = vector.shape_cast %244 : vector<16xf32> to vector<16x1xf32>
    %cst_87 = arith.constant 3.200000e+01 : f32
    %246 = vector.broadcast %cst_87 : f32 to vector<16x1xf32>
    %247 = arith.divf %245, %246 : vector<16x1xf32>
    %248 = vector.broadcast %247 : vector<16x1xf32> to vector<16x32xf32>
    %249 = arith.subf %243, %248 : vector<16x32xf32>
    %250 = arith.mulf %249, %249 : vector<16x32xf32>
    %cst_88 = arith.constant dense<0.000000e+00> : vector<16xf32>
    %251 = vector.multi_reduction <add>, %250, %cst_88 [1] : vector<16x32xf32> to vector<16xf32>
    %252 = vector.shape_cast %251 : vector<16xf32> to vector<16x1xf32>
    %cst_89 = arith.constant 3.200000e+01 : f32
    %253 = vector.broadcast %cst_89 : f32 to vector<16x1xf32>
    %254 = arith.divf %252, %253 : vector<16x1xf32>
    %cst_90 = arith.constant 9.99999974E-6 : f32
    %255 = vector.broadcast %cst_90 : f32 to vector<16x1xf32>
    %256 = arith.addf %254, %255 : vector<16x1xf32>
    %257 = math.rsqrt %256 : vector<16x1xf32>
    %258 = vector.broadcast %257 : vector<16x1xf32> to vector<16x32xf32>
    %259 = arith.mulf %249, %258 : vector<16x32xf32>
    %260 = vector.broadcast %0 : vector<1x32xf32> to vector<16x32xf32>
    %261 = arith.mulf %259, %260 : vector<16x32xf32>
    %262 = vector.broadcast %1 : vector<1x32xf32> to vector<16x32xf32>
    %263 = arith.addf %261, %262 : vector<16x32xf32>
    %264 = arith.truncf %263 : vector<16x32xf32> to vector<16x32xbf16>
    %cst_91 = arith.constant dense<0.000000e+00> : vector<16x96xf32>
    %265 = tpu.matmul %264, %2, %cst_91 {dimension_numbers = #tpu.dot_dimension_numbers<[1], [0], [0], [1], [0, 0, 1, 1], [], []>} : vector<16x32xbf16>, vector<32x96xbf16>, vector<16x96xf32> -> vector<16x96xf32>
    %c3_92 = arith.constant 3 : index
    %c0_93 = arith.constant 0 : index
    %c0_94 = arith.constant 0 : index
    %266 = vector.load %arg7[%c3_92, %c0_93, %c0_94] : memref<4x16x16xf32, #tpu.memory_space<vmem>>, vector<1x16x16xf32>
    %267 = vector.shape_cast %266 : vector<1x16x16xf32> to vector<16x16xf32>
    %268 = vector.extract_strided_slice %265 {offsets = [0, 0], sizes = [16, 16], strides = [1, 1]} : vector<16x96xf32> to vector<16x16xf32>
    %269 = arith.truncf %268 : vector<16x16xf32> to vector<16x16xbf16>
    %270 = vector.extract_strided_slice %265 {offsets = [0, 32], sizes = [16, 16], strides = [1, 1]} : vector<16x96xf32> to vector<16x16xf32>
    %271 = arith.truncf %270 : vector<16x16xf32> to vector<16x16xbf16>
    %272 = vector.extract_strided_slice %265 {offsets = [0, 64], sizes = [16, 16], strides = [1, 1]} : vector<16x96xf32> to vector<16x16xf32>
    %273 = arith.truncf %272 : vector<16x16xf32> to vector<16x16xbf16>
    %cst_95 = arith.constant dense<0.000000e+00> : vector<16x16xf32>
    %274 = tpu.matmul %269, %271, %cst_95 {dimension_numbers = #tpu.dot_dimension_numbers<[1], [1], [0], [0], [0, 0, 1, 0], [], []>} : vector<16x16xbf16>, vector<16x16xbf16>, vector<16x16xf32> -> vector<16x16xf32>
    %cst_96 = arith.constant 2.500000e-01 : f32
    %275 = vector.broadcast %cst_96 : f32 to vector<16x16xf32>
    %276 = arith.mulf %274, %275 : vector<16x16xf32>
    %277 = arith.addf %276, %267 : vector<16x16xf32>
    %cst_97 = arith.constant dense<0xFF800000> : vector<16xf32>
    %278 = vector.multi_reduction <maximumf>, %277, %cst_97 [1] : vector<16x16xf32> to vector<16xf32>
    %279 = vector.shape_cast %278 : vector<16xf32> to vector<16x1xf32>
    %280 = vector.broadcast %279 : vector<16x1xf32> to vector<16x16xf32>
    %281 = arith.subf %277, %280 : vector<16x16xf32>
    %282 = math.exp %281 : vector<16x16xf32>
    %cst_98 = arith.constant dense<0.000000e+00> : vector<16xf32>
    %283 = vector.multi_reduction <add>, %282, %cst_98 [1] : vector<16x16xf32> to vector<16xf32>
    %284 = vector.shape_cast %283 : vector<16xf32> to vector<16x1xf32>
    %285 = tpu.reciprocal %284 {approx = true} : vector<16x1xf32> -> vector<16x1xf32>
    %286 = vector.broadcast %285 : vector<16x1xf32> to vector<16x16xf32>
    %287 = arith.mulf %282, %286 : vector<16x16xf32>
    %288 = arith.truncf %287 : vector<16x16xf32> to vector<16x16xbf16>
    %cst_99 = arith.constant dense<0.000000e+00> : vector<16x16xf32>
    %289 = tpu.matmul %288, %273, %cst_99 {dimension_numbers = #tpu.dot_dimension_numbers<[1], [0], [0], [1], [0, 0, 1, 1], [], []>} : vector<16x16xbf16>, vector<16x16xbf16>, vector<16x16xf32> -> vector<16x16xf32>
    %290 = vector.extract_strided_slice %265 {offsets = [0, 16], sizes = [16, 16], strides = [1, 1]} : vector<16x96xf32> to vector<16x16xf32>
    %291 = arith.truncf %290 : vector<16x16xf32> to vector<16x16xbf16>
    %292 = vector.extract_strided_slice %265 {offsets = [0, 48], sizes = [16, 16], strides = [1, 1]} : vector<16x96xf32> to vector<16x16xf32>
    %293 = arith.truncf %292 : vector<16x16xf32> to vector<16x16xbf16>
    %294 = vector.extract_strided_slice %265 {offsets = [0, 80], sizes = [16, 16], strides = [1, 1]} : vector<16x96xf32> to vector<16x16xf32>
    %295 = arith.truncf %294 : vector<16x16xf32> to vector<16x16xbf16>
    %cst_100 = arith.constant dense<0.000000e+00> : vector<16x16xf32>
    %296 = tpu.matmul %291, %293, %cst_100 {dimension_numbers = #tpu.dot_dimension_numbers<[1], [1], [0], [0], [0, 0, 1, 0], [], []>} : vector<16x16xbf16>, vector<16x16xbf16>, vector<16x16xf32> -> vector<16x16xf32>
    %cst_101 = arith.constant 2.500000e-01 : f32
    %297 = vector.broadcast %cst_101 : f32 to vector<16x16xf32>
    %298 = arith.mulf %296, %297 : vector<16x16xf32>
    %299 = arith.addf %298, %267 : vector<16x16xf32>
    %cst_102 = arith.constant dense<0xFF800000> : vector<16xf32>
    %300 = vector.multi_reduction <maximumf>, %299, %cst_102 [1] : vector<16x16xf32> to vector<16xf32>
    %301 = vector.shape_cast %300 : vector<16xf32> to vector<16x1xf32>
    %302 = vector.broadcast %301 : vector<16x1xf32> to vector<16x16xf32>
    %303 = arith.subf %299, %302 : vector<16x16xf32>
    %304 = math.exp %303 : vector<16x16xf32>
    %cst_103 = arith.constant dense<0.000000e+00> : vector<16xf32>
    %305 = vector.multi_reduction <add>, %304, %cst_103 [1] : vector<16x16xf32> to vector<16xf32>
    %306 = vector.shape_cast %305 : vector<16xf32> to vector<16x1xf32>
    %307 = tpu.reciprocal %306 {approx = true} : vector<16x1xf32> -> vector<16x1xf32>
    %308 = vector.broadcast %307 : vector<16x1xf32> to vector<16x16xf32>
    %309 = arith.mulf %304, %308 : vector<16x16xf32>
    %310 = arith.truncf %309 : vector<16x16xf32> to vector<16x16xbf16>
    %cst_104 = arith.constant dense<0.000000e+00> : vector<16x16xf32>
    %311 = tpu.matmul %310, %295, %cst_104 {dimension_numbers = #tpu.dot_dimension_numbers<[1], [0], [0], [1], [0, 0, 1, 1], [], []>} : vector<16x16xbf16>, vector<16x16xbf16>, vector<16x16xf32> -> vector<16x16xf32>
    %312 = tpu.concatenate %289, %311 in 1 : vector<16x16xf32>, vector<16x16xf32> -> vector<16x32xf32>
    %313 = arith.truncf %312 : vector<16x32xf32> to vector<16x32xbf16>
    %cst_105 = arith.constant dense<0.000000e+00> : vector<16x32xf32>
    %314 = tpu.matmul %313, %3, %cst_105 {dimension_numbers = #tpu.dot_dimension_numbers<[1], [0], [0], [1], [0, 0, 1, 1], [], []>} : vector<16x32xbf16>, vector<32x32xbf16>, vector<16x32xf32> -> vector<16x32xf32>
    %315 = vector.broadcast %4 : vector<1x32xf32> to vector<16x32xf32>
    %316 = arith.addf %314, %315 : vector<16x32xf32>
    %317 = arith.addf %316, %243 : vector<16x32xf32>
    %c3_106 = arith.constant 3 : index
    %c0_107 = arith.constant 0 : index
    %c0_108 = arith.constant 0 : index
    %318 = vector.load %arg8[%c3_106, %c0_107, %c0_108] : memref<4x16x32xf32, #tpu.memory_space<vmem>>, vector<1x16x32xf32>
    %319 = vector.shape_cast %318 : vector<1x16x32xf32> to vector<16x32xf32>
    %320 = vector.shape_cast %317 : vector<16x32xf32> to vector<1x16x32xf32>
    tpu.vector_store %arg8[%c3_106, %c0_107, %c0_108], %320 {strides = array<i32>} : memref<4x16x32xf32, #tpu.memory_space<vmem>>, vector<1x16x32xf32>,
    return
  }
  func.func @transform_0(%arg0: i32) -> (i32, i32, i32) {
    %c0_i32 = arith.constant 0 : i32
    %c0_i32_0 = arith.constant 0 : i32
    %c0_i32_1 = arith.constant 0 : i32
    return %arg0, %c0_i32, %c0_i32_0 : i32, i32, i32
  }
  func.func @transform_1(%arg0: i32) -> (i32, i32) {
    %c0_i32 = arith.constant 0 : i32
    %c0_i32_0 = arith.constant 0 : i32
    %c0_i32_1 = arith.constant 0 : i32
    return %c0_i32, %c0_i32_0 : i32, i32
  }
  func.func @transform_2(%arg0: i32) -> (i32, i32) {
    %c0_i32 = arith.constant 0 : i32
    %c0_i32_0 = arith.constant 0 : i32
    %c0_i32_1 = arith.constant 0 : i32
    return %c0_i32, %c0_i32_0 : i32, i32
  }
  func.func @transform_3(%arg0: i32) -> (i32, i32) {
    %c0_i32 = arith.constant 0 : i32
    %c0_i32_0 = arith.constant 0 : i32
    %c0_i32_1 = arith.constant 0 : i32
    return %c0_i32, %c0_i32_0 : i32, i32
  }
  func.func @transform_4(%arg0: i32) -> (i32, i32) {
    %c0_i32 = arith.constant 0 : i32
    %c0_i32_0 = arith.constant 0 : i32
    %c0_i32_1 = arith.constant 0 : i32
    return %c0_i32, %c0_i32_0 : i32, i32
  }
  func.func @transform_5(%arg0: i32) -> (i32, i32) {
    %c0_i32 = arith.constant 0 : i32
    %c0_i32_0 = arith.constant 0 : i32
    %c0_i32_1 = arith.constant 0 : i32
    return %c0_i32, %c0_i32_0 : i32, i32
  }
  func.func @transform_6(%arg0: i32) -> (i32, i32, i32) {
    %c1_i32 = arith.constant 1 : i32
    %c0_i32 = arith.constant 0 : i32
    %0 = arith.cmpi eq, %c1_i32, %c0_i32 : i32
    %c1_i32_0 = arith.constant 1 : i32
    %1 = arith.select %0, %c1_i32_0, %c1_i32 : i32
    %2 = arith.remsi %arg0, %1 : i32
    %c0_i32_1 = arith.constant 0 : i32
    %3 = arith.cmpi ne, %2, %c0_i32_1 : i32
    %c0_i32_2 = arith.constant 0 : i32
    %4 = arith.cmpi slt, %2, %c0_i32_2 : i32
    %c0_i32_3 = arith.constant 0 : i32
    %5 = arith.cmpi slt, %1, %c0_i32_3 : i32
    %6 = arith.xori %4, %5 : i1
    %7 = arith.andi %6, %3 : i1
    %8 = arith.addi %2, %1 : i32
    %9 = arith.select %7, %8, %2 : i32
    %c0_i32_4 = arith.constant 0 : i32
    %c0_i32_5 = arith.constant 0 : i32
    %c0_i32_6 = arith.constant 0 : i32
    return %9, %c0_i32_4, %c0_i32_5 : i32, i32, i32
  }
  func.func @transform_7(%arg0: i32) -> (i32, i32, i32) {
    %c0_i32 = arith.constant 0 : i32
    %c0_i32_0 = arith.constant 0 : i32
    %c0_i32_1 = arith.constant 0 : i32
    return %arg0, %c0_i32, %c0_i32_0 : i32, i32, i32
  }
}

module attributes {stable_mosaic.version = 11 : i64} {
  func.func @_mlp_block_kernel(%arg0: i32, %arg1: memref<64x32xf32, #tpu.memory_space<vmem>>, %arg2: memref<1x32xf32, #tpu.memory_space<vmem>>, %arg3: memref<1x32xf32, #tpu.memory_space<vmem>>, %arg4: memref<32x128xbf16, #tpu.memory_space<vmem>>, %arg5: memref<1x128xf32, #tpu.memory_space<vmem>>, %arg6: memref<128x32xbf16, #tpu.memory_space<vmem>>, %arg7: memref<1x32xf32, #tpu.memory_space<vmem>>, %arg8: memref<64x32xf32, #tpu.memory_space<vmem>>) attributes {dimension_semantics = [#tpu.dimension_semantics<parallel>], iteration_bounds = array<i64: 2>, scalar_prefetch = 0 : i64, scratch_operands = 0 : i64, tpu.core_type = #tpu.core_type<tc>, window_params = [{transform_indices = @transform_0, window_bounds = array<i64: 64, 32>}, {pipeline_mode = #tpu.pipeline_mode<synchronous>, transform_indices = @transform_1, window_bounds = array<i64: 1, 32>}, {pipeline_mode = #tpu.pipeline_mode<synchronous>, transform_indices = @transform_2, window_bounds = array<i64: 1, 32>}, {pipeline_mode = #tpu.pipeline_mode<synchronous>, transform_indices = @transform_3, window_bounds = array<i64: 32, 128>}, {pipeline_mode = #tpu.pipeline_mode<synchronous>, transform_indices = @transform_4, window_bounds = array<i64: 1, 128>}, {pipeline_mode = #tpu.pipeline_mode<synchronous>, transform_indices = @transform_5, window_bounds = array<i64: 128, 32>}, {pipeline_mode = #tpu.pipeline_mode<synchronous>, transform_indices = @transform_6, window_bounds = array<i64: 1, 32>}, {transform_indices = @transform_7, window_bounds = array<i64: 64, 32>}]} {
    %c0 = arith.constant 0 : index
    %c0_0 = arith.constant 0 : index
    %0 = vector.load %arg1[%c0, %c0_0] : memref<64x32xf32, #tpu.memory_space<vmem>>, vector<64x32xf32>
    %c0_1 = arith.constant 0 : index
    %c0_2 = arith.constant 0 : index
    %1 = vector.load %arg2[%c0_1, %c0_2] : memref<1x32xf32, #tpu.memory_space<vmem>>, vector<1x32xf32>
    %c0_3 = arith.constant 0 : index
    %c0_4 = arith.constant 0 : index
    %2 = vector.load %arg3[%c0_3, %c0_4] : memref<1x32xf32, #tpu.memory_space<vmem>>, vector<1x32xf32>
    %cst = arith.constant dense<0.000000e+00> : vector<64xf32>
    %3 = vector.multi_reduction <add>, %0, %cst [1] : vector<64x32xf32> to vector<64xf32>
    %4 = vector.shape_cast %3 : vector<64xf32> to vector<64x1xf32>
    %cst_5 = arith.constant 3.200000e+01 : f32
    %5 = vector.broadcast %cst_5 : f32 to vector<64x1xf32>
    %6 = arith.divf %4, %5 : vector<64x1xf32>
    %7 = vector.broadcast %6 : vector<64x1xf32> to vector<64x32xf32>
    %8 = arith.subf %0, %7 : vector<64x32xf32>
    %9 = arith.mulf %8, %8 : vector<64x32xf32>
    %cst_6 = arith.constant dense<0.000000e+00> : vector<64xf32>
    %10 = vector.multi_reduction <add>, %9, %cst_6 [1] : vector<64x32xf32> to vector<64xf32>
    %11 = vector.shape_cast %10 : vector<64xf32> to vector<64x1xf32>
    %cst_7 = arith.constant 3.200000e+01 : f32
    %12 = vector.broadcast %cst_7 : f32 to vector<64x1xf32>
    %13 = arith.divf %11, %12 : vector<64x1xf32>
    %cst_8 = arith.constant 9.99999974E-6 : f32
    %14 = vector.broadcast %cst_8 : f32 to vector<64x1xf32>
    %15 = arith.addf %13, %14 : vector<64x1xf32>
    %16 = math.rsqrt %15 : vector<64x1xf32>
    %17 = vector.broadcast %16 : vector<64x1xf32> to vector<64x32xf32>
    %18 = arith.mulf %8, %17 : vector<64x32xf32>
    %19 = vector.broadcast %1 : vector<1x32xf32> to vector<64x32xf32>
    %20 = arith.mulf %18, %19 : vector<64x32xf32>
    %21 = vector.broadcast %2 : vector<1x32xf32> to vector<64x32xf32>
    %22 = arith.addf %20, %21 : vector<64x32xf32>
    %23 = arith.truncf %22 : vector<64x32xf32> to vector<64x32xbf16>
    %c0_9 = arith.constant 0 : index
    %c0_10 = arith.constant 0 : index
    %24 = vector.load %arg4[%c0_9, %c0_10] : memref<32x128xbf16, #tpu.memory_space<vmem>>, vector<32x128xbf16>
    %cst_11 = arith.constant dense<0.000000e+00> : vector<64x128xf32>
    %25 = tpu.matmul %23, %24, %cst_11 {dimension_numbers = #tpu.dot_dimension_numbers<[1], [0], [0], [1], [0, 0, 1, 1], [], []>} : vector<64x32xbf16>, vector<32x128xbf16>, vector<64x128xf32> -> vector<64x128xf32>
    %c0_12 = arith.constant 0 : index
    %c0_13 = arith.constant 0 : index
    %26 = vector.load %arg5[%c0_12, %c0_13] : memref<1x128xf32, #tpu.memory_space<vmem>>, vector<1x128xf32>
    %27 = vector.broadcast %26 : vector<1x128xf32> to vector<64x128xf32>
    %28 = arith.addf %25, %27 : vector<64x128xf32>
    %cst_14 = arith.constant 5.000000e-01 : f32
    %29 = vector.broadcast %cst_14 : f32 to vector<64x128xf32>
    %30 = arith.mulf %29, %28 : vector<64x128xf32>
    %cst_15 = arith.constant 4.471500e-02 : f32
    %31 = vector.broadcast %cst_15 : f32 to vector<64x128xf32>
    %32 = arith.mulf %31, %28 : vector<64x128xf32>
    %33 = arith.mulf %32, %28 : vector<64x128xf32>
    %34 = arith.mulf %33, %28 : vector<64x128xf32>
    %35 = arith.addf %28, %34 : vector<64x128xf32>
    %cst_16 = arith.constant 0.797884583 : f32
    %36 = vector.broadcast %cst_16 : f32 to vector<64x128xf32>
    %37 = arith.mulf %36, %35 : vector<64x128xf32>
    %38 = math.tanh %37 : vector<64x128xf32>
    %cst_17 = arith.constant 1.000000e+00 : f32
    %39 = vector.broadcast %cst_17 : f32 to vector<64x128xf32>
    %40 = arith.addf %39, %38 : vector<64x128xf32>
    %41 = arith.mulf %30, %40 : vector<64x128xf32>
    %42 = arith.truncf %41 : vector<64x128xf32> to vector<64x128xbf16>
    %c0_18 = arith.constant 0 : index
    %c0_19 = arith.constant 0 : index
    %43 = vector.load %arg6[%c0_18, %c0_19] : memref<128x32xbf16, #tpu.memory_space<vmem>>, vector<128x32xbf16>
    %cst_20 = arith.constant dense<0.000000e+00> : vector<64x32xf32>
    %44 = tpu.matmul %42, %43, %cst_20 {dimension_numbers = #tpu.dot_dimension_numbers<[1], [0], [0], [1], [0, 0, 1, 1], [], []>} : vector<64x128xbf16>, vector<128x32xbf16>, vector<64x32xf32> -> vector<64x32xf32>
    %c0_21 = arith.constant 0 : index
    %c0_22 = arith.constant 0 : index
    %45 = vector.load %arg7[%c0_21, %c0_22] : memref<1x32xf32, #tpu.memory_space<vmem>>, vector<1x32xf32>
    %46 = vector.broadcast %45 : vector<1x32xf32> to vector<64x32xf32>
    %47 = arith.addf %44, %46 : vector<64x32xf32>
    %48 = arith.addf %47, %0 : vector<64x32xf32>
    %c0_23 = arith.constant 0 : index
    %c0_24 = arith.constant 0 : index
    %49 = vector.load %arg8[%c0_23, %c0_24] : memref<64x32xf32, #tpu.memory_space<vmem>>, vector<64x32xf32>
    tpu.vector_store %arg8[%c0_23, %c0_24], %48 {strides = array<i32>} : memref<64x32xf32, #tpu.memory_space<vmem>>, vector<64x32xf32>,
    return
  }
  func.func @transform_0(%arg0: i32) -> (i32, i32) {
    %c0_i32 = arith.constant 0 : i32
    %c0_i32_0 = arith.constant 0 : i32
    return %arg0, %c0_i32 : i32, i32
  }
  func.func @transform_1(%arg0: i32) -> (i32, i32) {
    %c0_i32 = arith.constant 0 : i32
    %c0_i32_0 = arith.constant 0 : i32
    %c0_i32_1 = arith.constant 0 : i32
    return %c0_i32, %c0_i32_0 : i32, i32
  }
  func.func @transform_2(%arg0: i32) -> (i32, i32) {
    %c0_i32 = arith.constant 0 : i32
    %c0_i32_0 = arith.constant 0 : i32
    %c0_i32_1 = arith.constant 0 : i32
    return %c0_i32, %c0_i32_0 : i32, i32
  }
  func.func @transform_3(%arg0: i32) -> (i32, i32) {
    %c0_i32 = arith.constant 0 : i32
    %c0_i32_0 = arith.constant 0 : i32
    %c0_i32_1 = arith.constant 0 : i32
    return %c0_i32, %c0_i32_0 : i32, i32
  }
  func.func @transform_4(%arg0: i32) -> (i32, i32) {
    %c0_i32 = arith.constant 0 : i32
    %c0_i32_0 = arith.constant 0 : i32
    %c0_i32_1 = arith.constant 0 : i32
    return %c0_i32, %c0_i32_0 : i32, i32
  }
  func.func @transform_5(%arg0: i32) -> (i32, i32) {
    %c0_i32 = arith.constant 0 : i32
    %c0_i32_0 = arith.constant 0 : i32
    %c0_i32_1 = arith.constant 0 : i32
    return %c0_i32, %c0_i32_0 : i32, i32
  }
  func.func @transform_6(%arg0: i32) -> (i32, i32) {
    %c0_i32 = arith.constant 0 : i32
    %c0_i32_0 = arith.constant 0 : i32
    %c0_i32_1 = arith.constant 0 : i32
    return %c0_i32, %c0_i32_0 : i32, i32
  }
  func.func @transform_7(%arg0: i32) -> (i32, i32) {
    %c0_i32 = arith.constant 0 : i32
    %c0_i32_0 = arith.constant 0 : i32
    return %arg0, %c0_i32 : i32, i32
  }
}

</mosaic_0001>

<llo_original>
// kernel: _lambda_.5
$region0: #{_lambda_.5}
  #allocation0 [shape = 'u32[]', space=smem, size = 0x4, offset = 0x4, fixed_abs, tag = 'smem constant byte address 0x4 - core index']
  #allocation1 [shape = 'u32[144,128]{1,0:T(1,128)}', space=vmem, size = 0x12000, scoped, tag = 'internal scratch']
  %s0 = inlined_call_operand.vmem [shape: f32[128,16], index: 0, kind: input, shape index: {}]
  %s1 = inlined_call_operand.vmem [shape: bf16[16,32], index: 1, kind: input, shape index: {}]
  %s2 = inlined_call_operand.vmem [shape: f32[1,32], index: 2, kind: input, shape index: {}]
  %s3 = inlined_call_operand.vmem [shape: f32[128,32], index: 3, kind: output, shape index: {}]
  %s4 = sld [smem:[#allocation0]]
  $region45: #{_lambda_.5} parent=0
    _
  %s6 = ssub.s32 1, %s4
  %s7 = scalar_select 0, %s6, %s4
  loop: start=0, step=1, limit=4
  $region2: #{_lambda_.5} parent=0 // loop_pre_header
    _
  $region3: #{_lambda_.5} parent=0 // loop_header
    %s9 = sphi 0, %s13
    %p10 = scmp.ge.s32.totalorder %s9, 4
    %s19 = sphi 0, %s21
    %s22 = sphi 0, %s19
    %s23 = sphi 0, %s22
    %s39 = sphi 0, %s23
    %s43 = sphi 0, %s43
    %s45 = sphi 0, %s43
    %s46 = sphi 0, %s45
    %s60 = sphi 0, %s46
    %s64 = sphi 0, %s64
    %s66 = sphi 0, %s64
    %s67 = sphi 0, %s66
    %s81 = sphi 0, %s67
    %s87 = sphi 0, %s89
    %s90 = sphi 0, %s87
    %s91 = sphi 0, %s90
    %s107 = sphi 0, %s91
  $region4: #{_lambda_.5} parent=0 // loop_header_branch
    %12 = sbr.rel (%p10) target = $region8
  $region5: #{_lambda_.5} parent=0 // loop_body
    %s14 = ssub.s32 %s9, 1
    %s15 = ssub.s32 %s9, 2
    %s16 = sadd.s32 %s9, 1
    %s17 = ssub.s32 %s9, %s16
    %p18 = scmp.eq.s32.totalorder %s17, 0
    %s20 = sadd.s32 %s19, 1
    %s21 = scalar_select %p18, %s19, %s20
    %p24 = pneg %p18
    %p25 = scmp.eq.s32.totalorder %s9, 1
    %p26 = por %p24, %p25
    %p27 = scmp.ne.s32.totalorder %s19, %s22
    %p28 = scmp.eq.s32.totalorder %s9, 0
    %p29 = por %p27, %p28
    %p30 = scmp.ne.s32.totalorder %s19, %s22
    %p31 = scmp.eq.s32.totalorder %s14, 1
    %p32 = por %p30, %p31
    %p33 = scmp.ne.s32.totalorder %s22, %s23
    %p34 = scmp.eq.s32.totalorder %s14, 0
    %p35 = por %p33, %p34
    %p36 = scmp.ne.s32.totalorder %s22, %s23
    %p37 = scmp.eq.s32.totalorder %s15, 1
    %p38 = por %p36, %p37
    %p40 = scmp.ne.s32.totalorder %s23, %s39
    %p41 = scmp.eq.s32.totalorder %s15, 0
    %p42 = por %p40, %p41
    %s44 = sadd.s32 %s43, 1
    %p47 = scmp.eq.s32.totalorder %s9, 1
    %p48 = scmp.ne.s32.totalorder %s43, %s45
    %p49 = scmp.eq.s32.totalorder %s9, 0
    %p50 = por %p48, %p49
    %p51 = scmp.ne.s32.totalorder %s43, %s45
    %p52 = scmp.eq.s32.totalorder %s14, 1
    %p53 = por %p51, %p52
    %p54 = scmp.ne.s32.totalorder %s45, %s46
    %p55 = scmp.eq.s32.totalorder %s14, 0
    %p56 = por %p54, %p55
    %p57 = scmp.ne.s32.totalorder %s45, %s46
    %p58 = scmp.eq.s32.totalorder %s15, 1
    %p59 = por %p57, %p58
    %p61 = scmp.ne.s32.totalorder %s46, %s60
    %p62 = scmp.eq.s32.totalorder %s15, 0
    %p63 = por %p61, %p62
    %s65 = sadd.s32 %s64, 1
    %p68 = scmp.eq.s32.totalorder %s9, 1
    %p69 = scmp.ne.s32.totalorder %s64, %s66
    %p70 = scmp.eq.s32.totalorder %s9, 0
    %p71 = por %p69, %p70
    %p72 = scmp.ne.s32.totalorder %s64, %s66
    %p73 = scmp.eq.s32.totalorder %s14, 1
    %p74 = por %p72, %p73
    %p75 = scmp.ne.s32.totalorder %s66, %s67
    %p76 = scmp.eq.s32.totalorder %s14, 0
    %p77 = por %p75, %p76
    %p78 = scmp.ne.s32.totalorder %s66, %s67
    %p79 = scmp.eq.s32.totalorder %s15, 1
    %p80 = por %p78, %p79
    %p82 = scmp.ne.s32.totalorder %s67, %s81
    %p83 = scmp.eq.s32.totalorder %s15, 0
    %p84 = por %p82, %p83
    %s85 = ssub.s32 %s9, %s16
    %p86 = scmp.eq.s32.totalorder %s85, 0
    %s88 = sadd.s32 %s87, 1
    %s89 = scalar_select %p86, %s87, %s88
    %p92 = pneg %p86
    %p93 = scmp.eq.s32.totalorder %s9, 1
    %p94 = por %p92, %p93
    %p95 = scmp.ne.s32.totalorder %s87, %s90
    %p96 = scmp.eq.s32.totalorder %s9, 0
    %p97 = por %p95, %p96
    %p98 = scmp.ne.s32.totalorder %s87, %s90
    %p99 = scmp.eq.s32.totalorder %s14, 1
    %p100 = por %p98, %p99
    %p101 = scmp.ne.s32.totalorder %s90, %s91
    %p102 = scmp.eq.s32.totalorder %s14, 0
    %p103 = por %p101, %p102
    %p104 = scmp.ne.s32.totalorder %s90, %s91
    %p105 = scmp.eq.s32.totalorder %s15, 1
    %p106 = por %p104, %p105
    %p108 = scmp.ne.s32.totalorder %s91, %s107
    %p109 = scmp.eq.s32.totalorder %s15, 0
    %p110 = por %p108, %p109
    %p111 = scmp.le.s32.totalorder 1, %s9
    %p112 = scmp.lt.s32.totalorder %s9, 3
    %p113 = pnand %p111, %p112
    %p114 = pneg %p113
    // Predicated region
    $region9: #{_lambda_.5} parent=5 // pred_check
      _
    $region10: #{_lambda_.5} parent=5 // pred_check_branch
      %116 = sbr.rel (%p113) target = $region12
    $region11: #{_lambda_.5} parent=5 // pred_region
      %s117 = ssub.s32 %s9, 1
      // Predicated region
      $region13: #{_lambda_.5} parent=11 // pred_check
        %p118 = pneg %p56
      $region14: #{_lambda_.5} parent=11 // pred_check_branch
        %120 = sbr.rel (%p118) target = $region16
      $region15: #{_lambda_.5} parent=11 // pred_region
        _
      $region16: #{_lambda_.5} parent=11 // pred_fallthru
        _
      // Predicated region
      $region17: #{_lambda_.5} parent=11 // pred_check
        %p121 = pneg %p77
      $region18: #{_lambda_.5} parent=11 // pred_check_branch
        %123 = sbr.rel (%p121) target = $region20
      $region19: #{_lambda_.5} parent=11 // pred_region
        _
      $region20: #{_lambda_.5} parent=11 // pred_fallthru
        _
    $region12: #{_lambda_.5} parent=5 // pred_fallthru
      _
    %p124 = scmp.lt.s32.totalorder %s9, 2
    // Predicated region
    $region21: #{_lambda_.5} parent=5 // pred_check
      %p125 = pneg %p124
    $region22: #{_lambda_.5} parent=5 // pred_check_branch
      %127 = sbr.rel (%p125) target = $region24
    $region23: #{_lambda_.5} parent=5 // pred_region
      // Predicated region
      $region25: #{_lambda_.5} parent=23 // pred_check
        %p128 = pneg %p29
      $region26: #{_lambda_.5} parent=23 // pred_check_branch
        %130 = sbr.rel (%p128) target = $region28
      $region27: #{_lambda_.5} parent=23 // pred_region
        %s131 = smul.u32 8, %s9
        %p132 = scmp.lt.s32.totalorder %s131, 15
        %s133 = scalar_select %p132, %s131, 15
        %s134 = smul.addr %s133, 8
        %s135 = scalar_lea.vmem %s0, %s134
        %s136 = smul.u32 8, %s9
      $region28: #{_lambda_.5} parent=23 // pred_fallthru
        _
    $region24: #{_lambda_.5} parent=5 // pred_fallthru
      _
    %p137 = scmp.le.s32.totalorder 1, %s9
    %p138 = scmp.lt.s32.totalorder %s9, 3
    %p139 = pnand %p137, %p138
    %p140 = pneg %p139
    // Predicated region
    $region29: #{_lambda_.5} parent=5 // pred_check
      _
    $region30: #{_lambda_.5} parent=5 // pred_check_branch
      %142 = sbr.rel (%p139) target = $region32
    $region31: #{_lambda_.5} parent=5 // pred_region
      %s143 = ssub.s32 %s9, 1
      %s144 = smul.u32 8, %s14
      %p145 = scmp.lt.s32.totalorder %s144, 15
      %s146 = scalar_select %p145, %s144, 15
      %s147 = smul.addr %s146, 8
      %s148 = scalar_lea.vmem %s0, %s147
      %p149 = pneg %p35
      %p150 = pneg %p32
      %p151 = pneg %p56
      %p152 = pneg %p53
      %p153 = pneg %p77
      %p154 = pneg %p74
      %p155 = pneg %p103
      %p156 = pneg %p100
      %s157 = smul.u32 8, %s14
      %p158 = scmp.lt.s32.totalorder %s157, 15
      %s159 = scalar_select %p158, %s157, 15
      %s160 = smul.addr %s159, 8
      %s161 = scalar_lea.vmem %s3, %s160
      %s162 = smul.u32 8, %s14
      %p163 = scmp.lt.s32.totalorder %s162, 15
      %s164 = scalar_select %p163, %s162, 15
      %s165 = smul.addr %s164, 8
      %s166 = scalar_lea.vmem %s0, %s165
      %s167 = smul.u32 8, %s14
      %s168 = smul.u32 8, %s14
      %p169 = scmp.lt.s32.totalorder %s168, 15
      %s170 = scalar_select %p169, %s168, 15
      %s171 = smul.addr %s170, 8
      %s172 = scalar_lea.vmem %s3, %s171
      %s173 = smul.u32 8, %s14
      %v175 = vld [vmem:[%s166] sm:$0xff]
      %v176 = vld [vmem:[%s166 + $0x8] sm:$0xff]
      %v177 = vld [vmem:[%s166 + $0x10] sm:$0xff]
      %v178 = vld [vmem:[%s166 + $0x18] sm:$0xff]
      %v179 = vld [vmem:[%s166 + $0x20] sm:$0xff]
      %v180 = vld [vmem:[%s166 + $0x28] sm:$0xff]
      %v181 = vld [vmem:[%s166 + $0x30] sm:$0xff]
      %v182 = vld [vmem:[%s166 + $0x38] sm:$0xff]
      %v183 = vpack.c.bf16 %v176, %v175
      %v184 = vpack.c.bf16 %v178, %v177
      %v185 = vpack.c.bf16 %v180, %v179
      %v186 = vpack.c.bf16 %v182, %v181
      %v187 = vld [vmem:[%s1] sm:$0xf]
      %v188 = vld [vmem:[%s1 + $0x4] sm:$0xf]
      %v189 = vld [vmem:[%s2] sm:$0x1]
      %v191 = vlaneseq
      %v192 = vshrl.u32 %v191, 7
      %v193 = vsub.s32 0, %v192
      %v194 = vrot.slane %v189, %v193
      %v198 = vunpack.c.l.b16 %v187
      %v199 = vunpack.c.l.b16 %v188
      %v200 = vpack.c.b16 %v199, %v198
      %vm202 = vcmask 130048
      %v204 = vsel %vm202, %v183, 0
      %v207 = vsel %vm202, %v184, 0
      %v210 = vsel %vm202, %v185, 0
      %v213 = vsel %vm202, %v186, 0
      %215 = vmatprep.subr.bf16.mxu0 0
      %216 = vmatpush1.bf16.msra.mxu0 0
      %217 = vmatprep.subr.bf16.mxu0 0
      %218 = vmatpush1.bf16.msra.mxu0 0
      %219 = vmatprep.subr.bf16.mxu0 0
      %220 = vmatpush1.bf16.msra.mxu0 0
      %221 = vmatprep.subr.bf16.mxu0 0
      %222 = vmatpush1.bf16.msra.mxu0 0
      %223 = vmatprep.subr.bf16.mxu0 0
      %224 = vmatpush1.bf16.msra.mxu0 0
      %225 = vmatprep.subr.bf16.mxu0 0
      %226 = vmatpush1.bf16.msra.mxu0 0
      %227 = vmatprep.subr.bf16.mxu0 0
      %228 = vmatpush1.bf16.msra.mxu0 0
      %229 = vmatprep.subr.bf16.mxu0 0
      %230 = vmatpush1.bf16.msra.mxu0 %v200
      %231 = vmatprep.subr.bf16.mxu0 0
      %232 = vmatpush2.bf16.msra.mxu0 0
      %233 = vmatprep.subr.bf16.mxu0 0
      %234 = vmatpush2.bf16.msra.mxu0 0
      %235 = vmatprep.subr.bf16.mxu0 0
      %236 = vmatpush2.bf16.msra.mxu0 0
      %237 = vmatprep.subr.bf16.mxu0 0
      %238 = vmatpush2.bf16.msra.mxu0 0
      %239 = vmatprep.subr.bf16.mxu0 0
      %240 = vmatpush2.bf16.msra.mxu0 0
      %241 = vmatprep.subr.bf16.mxu0 0
      %242 = vmatpush2.bf16.msra.mxu0 0
      %243 = vmatprep.subr.bf16.mxu0 0
      %244 = vmatpush2.bf16.msra.mxu0 0
      %245 = vmatprep.subr.bf16.mxu0 0
      %246 = vmatpush2.bf16.msra.mxu0 0
      %247 = vmatprep.mubr.bf16.mxu0 0
      %248 = vmatmul.mubr.bf16.gmra.mxu0 %v204
      %v249 = vpop.f32.mrf.mxu0
      %v250 = vadd.f32 %v194, %v249
      %v251 = vpop.f32.mrf.mxu0
      %v252 = vpop.f32.mrf.mxu0
      %v253 = vadd.f32 %v194, %v252
      %v254 = vpop.f32.mrf.mxu0
      %255 = vmatprep.mubr.bf16.mxu0 0
      %256 = vmatmul.mubr.bf16.gmra.mxu0 %v207
      %v257 = vpop.f32.mrf.mxu0
      %v258 = vadd.f32 %v194, %v257
      %v259 = vpop.f32.mrf.mxu0
      %v260 = vpop.f32.mrf.mxu0
      %v261 = vadd.f32 %v194, %v260
      %v262 = vpop.f32.mrf.mxu0
      %263 = vmatprep.mubr.bf16.mxu0 0
      %264 = vmatmul.mubr.bf16.gmra.mxu0 %v210
      %v265 = vpop.f32.mrf.mxu0
      %v266 = vadd.f32 %v194, %v265
      %v267 = vpop.f32.mrf.mxu0
      %v268 = vpop.f32.mrf.mxu0
      %v269 = vadd.f32 %v194, %v268
      %v270 = vpop.f32.mrf.mxu0
      %271 = vmatprep.mubr.bf16.mxu0 0
      %272 = vmatmul.mubr.bf16.gmra.mxu0 %v213
      %v273 = vpop.f32.mrf.mxu0
      %v274 = vadd.f32 %v194, %v273
      %v275 = vpop.f32.mrf.mxu0
      %v276 = vpop.f32.mrf.mxu0
      %v277 = vadd.f32 %v194, %v276
      %v278 = vpop.f32.mrf.mxu0
      %279 = vdwg.mxu0
      %vm280 = vcmask 261120
      %281 = vst.msk [vmem:[%s172] sm:$0xff] %vm280, %v250
      %282 = vst.msk [vmem:[%s172 + $0x8] sm:$0xff] %vm280, %v253
      %283 = vst.msk [vmem:[%s172 + $0x10] sm:$0xff] %vm280, %v258
      %284 = vst.msk [vmem:[%s172 + $0x18] sm:$0xff] %vm280, %v261
      %285 = vst.msk [vmem:[%s172 + $0x20] sm:$0xff] %vm280, %v266
      %286 = vst.msk [vmem:[%s172 + $0x28] sm:$0xff] %vm280, %v269
      %287 = vst.msk [vmem:[%s172 + $0x30] sm:$0xff] %vm280, %v274
      %288 = vst.msk [vmem:[%s172 + $0x38] sm:$0xff] %vm280, %v277
      %s289 = smul.u32 8, %s14
      %p290 = scmp.lt.s32.totalorder %s289, 15
      %s291 = scalar_select %p290, %s289, 15
      %s292 = smul.addr %s291, 8
      %s293 = scalar_lea.vmem %s3, %s292
      // Predicated region
      $region33: #{_lambda_.5} parent=31 // pred_check
        %p294 = pneg %p100
      $region34: #{_lambda_.5} parent=31 // pred_check_branch
        %296 = sbr.rel (%p294) target = $region36
      $region35: #{_lambda_.5} parent=31 // pred_region
        %s297 = smul.u32 8, %s14
      $region36: #{_lambda_.5} parent=31 // pred_fallthru
        _
    $region32: #{_lambda_.5} parent=5 // pred_fallthru
      _
    %p298 = scmp.le.s32.totalorder 2, %s9
    // Predicated region
    $region37: #{_lambda_.5} parent=5 // pred_check
      %p299 = pneg %p298
    $region38: #{_lambda_.5} parent=5 // pred_check_branch
      %301 = sbr.rel (%p299) target = $region40
    $region39: #{_lambda_.5} parent=5 // pred_region
      %s302 = ssub.s32 %s9, 2
      // Predicated region
      $region41: #{_lambda_.5} parent=39 // pred_check
        %p303 = pneg %p106
      $region42: #{_lambda_.5} parent=39 // pred_check_branch
        %305 = sbr.rel (%p303) target = $region44
      $region43: #{_lambda_.5} parent=39 // pred_region
        %s306 = smul.u32 8, %s15
        %p307 = scmp.lt.s32.totalorder %s306, 15
        %s308 = scalar_select %p307, %s306, 15
        %s309 = smul.addr %s308, 8
        %s310 = scalar_lea.vmem %s3, %s309
      $region44: #{_lambda_.5} parent=39 // pred_fallthru
        _
    $region40: #{_lambda_.5} parent=5 // pred_fallthru
      _
  $region6: #{_lambda_.5} parent=0 // loop_footer
    %s13 = sadd.s32 1, %s9
  $region7: #{_lambda_.5} parent=0 // loop_footer_branch
    %8 = sbr.rel target = $region3
  $region8: #{_lambda_.5} parent=0 // loop_exit
    _

// kernel: _lambda_.7
$region0: #{_lambda_.7}
  #allocation0 [shape = 'u32[]', space=smem, size = 0x4, offset = 0x4, fixed_abs, tag = 'smem constant byte address 0x4 - core index']
  #allocation1 [shape = 'u32[144,128]{1,0:T(1,128)}', space=vmem, size = 0x12000, scoped, tag = 'internal scratch']
  %s0 = inlined_call_operand.vmem [shape: f32[128,32], index: 0, kind: input, shape index: {}]
  %s1 = inlined_call_operand.vmem [shape: f32[1,32], index: 1, kind: input, shape index: {}]
  %s2 = inlined_call_operand.vmem [shape: f32[1,32], index: 2, kind: input, shape index: {}]
  %s3 = inlined_call_operand.vmem [shape: bf16[32,128], index: 3, kind: input, shape index: {}]
  %s4 = inlined_call_operand.vmem [shape: f32[1,128], index: 4, kind: input, shape index: {}]
  %s5 = inlined_call_operand.vmem [shape: bf16[128,32], index: 5, kind: input, shape index: {}]
  %s6 = inlined_call_operand.vmem [shape: f32[1,32], index: 6, kind: input, shape index: {}]
  %s7 = inlined_call_operand.vmem [shape: f32[128,32], index: 7, kind: output, shape index: {}]
  %s8 = sld [smem:[#allocation0]]
  $region61: #{_lambda_.7} parent=0
    _
  %s10 = ssub.s32 1, %s8
  %s11 = scalar_select 0, %s10, %s8
  loop: start=0, step=1, limit=4
  $region2: #{_lambda_.7} parent=0 // loop_pre_header
    _
  $region3: #{_lambda_.7} parent=0 // loop_header
    %s13 = sphi 0, %s17
    %p14 = scmp.ge.s32.totalorder %s13, 4
    %s23 = sphi 0, %s25
    %s26 = sphi 0, %s23
    %s27 = sphi 0, %s26
    %s43 = sphi 0, %s27
    %s47 = sphi 0, %s47
    %s49 = sphi 0, %s47
    %s50 = sphi 0, %s49
    %s64 = sphi 0, %s50
    %s68 = sphi 0, %s68
    %s70 = sphi 0, %s68
    %s71 = sphi 0, %s70
    %s85 = sphi 0, %s71
    %s89 = sphi 0, %s89
    %s91 = sphi 0, %s89
    %s92 = sphi 0, %s91
    %s106 = sphi 0, %s92
    %s110 = sphi 0, %s110
    %s112 = sphi 0, %s110
    %s113 = sphi 0, %s112
    %s127 = sphi 0, %s113
    %s131 = sphi 0, %s131
    %s133 = sphi 0, %s131
    %s134 = sphi 0, %s133
    %s148 = sphi 0, %s134
    %s152 = sphi 0, %s152
    %s154 = sphi 0, %s152
    %s155 = sphi 0, %s154
    %s169 = sphi 0, %s155
    %s175 = sphi 0, %s177
    %s178 = sphi 0, %s175
    %s179 = sphi 0, %s178
    %s195 = sphi 0, %s179
  $region4: #{_lambda_.7} parent=0 // loop_header_branch
    %16 = sbr.rel (%p14) target = $region8
  $region5: #{_lambda_.7} parent=0 // loop_body
    %s18 = ssub.s32 %s13, 1
    %s19 = ssub.s32 %s13, 2
    %s20 = sadd.s32 %s13, 1
    %s21 = ssub.s32 %s13, %s20
    %p22 = scmp.eq.s32.totalorder %s21, 0
    %s24 = sadd.s32 %s23, 1
    %s25 = scalar_select %p22, %s23, %s24
    %p28 = pneg %p22
    %p29 = scmp.eq.s32.totalorder %s13, 1
    %p30 = por %p28, %p29
    %p31 = scmp.ne.s32.totalorder %s23, %s26
    %p32 = scmp.eq.s32.totalorder %s13, 0
    %p33 = por %p31, %p32
    %p34 = scmp.ne.s32.totalorder %s23, %s26
    %p35 = scmp.eq.s32.totalorder %s18, 1
    %p36 = por %p34, %p35
    %p37 = scmp.ne.s32.totalorder %s26, %s27
    %p38 = scmp.eq.s32.totalorder %s18, 0
    %p39 = por %p37, %p38
    %p40 = scmp.ne.s32.totalorder %s26, %s27
    %p41 = scmp.eq.s32.totalorder %s19, 1
    %p42 = por %p40, %p41
    %p44 = scmp.ne.s32.totalorder %s27, %s43
    %p45 = scmp.eq.s32.totalorder %s19, 0
    %p46 = por %p44, %p45
    %s48 = sadd.s32 %s47, 1
    %p51 = scmp.eq.s32.totalorder %s13, 1
    %p52 = scmp.ne.s32.totalorder %s47, %s49
    %p53 = scmp.eq.s32.totalorder %s13, 0
    %p54 = por %p52, %p53
    %p55 = scmp.ne.s32.totalorder %s47, %s49
    %p56 = scmp.eq.s32.totalorder %s18, 1
    %p57 = por %p55, %p56
    %p58 = scmp.ne.s32.totalorder %s49, %s50
    %p59 = scmp.eq.s32.totalorder %s18, 0
    %p60 = por %p58, %p59
    %p61 = scmp.ne.s32.totalorder %s49, %s50
    %p62 = scmp.eq.s32.totalorder %s19, 1
    %p63 = por %p61, %p62
    %p65 = scmp.ne.s32.totalorder %s50, %s64
    %p66 = scmp.eq.s32.totalorder %s19, 0
    %p67 = por %p65, %p66
    %s69 = sadd.s32 %s68, 1
    %p72 = scmp.eq.s32.totalorder %s13, 1
    %p73 = scmp.ne.s32.totalorder %s68, %s70
    %p74 = scmp.eq.s32.totalorder %s13, 0
    %p75 = por %p73, %p74
    %p76 = scmp.ne.s32.totalorder %s68, %s70
    %p77 = scmp.eq.s32.totalorder %s18, 1
    %p78 = por %p76, %p77
    %p79 = scmp.ne.s32.totalorder %s70, %s71
    %p80 = scmp.eq.s32.totalorder %s18, 0
    %p81 = por %p79, %p80
    %p82 = scmp.ne.s32.totalorder %s70, %s71
    %p83 = scmp.eq.s32.totalorder %s19, 1
    %p84 = por %p82, %p83
    %p86 = scmp.ne.s32.totalorder %s71, %s85
    %p87 = scmp.eq.s32.totalorder %s19, 0
    %p88 = por %p86, %p87
    %s90 = sadd.s32 %s89, 1
    %p93 = scmp.eq.s32.totalorder %s13, 1
    %p94 = scmp.ne.s32.totalorder %s89, %s91
    %p95 = scmp.eq.s32.totalorder %s13, 0
    %p96 = por %p94, %p95
    %p97 = scmp.ne.s32.totalorder %s89, %s91
    %p98 = scmp.eq.s32.totalorder %s18, 1
    %p99 = por %p97, %p98
    %p100 = scmp.ne.s32.totalorder %s91, %s92
    %p101 = scmp.eq.s32.totalorder %s18, 0
    %p102 = por %p100, %p101
    %p103 = scmp.ne.s32.totalorder %s91, %s92
    %p104 = scmp.eq.s32.totalorder %s19, 1
    %p105 = por %p103, %p104
    %p107 = scmp.ne.s32.totalorder %s92, %s106
    %p108 = scmp.eq.s32.totalorder %s19, 0
    %p109 = por %p107, %p108
    %s111 = sadd.s32 %s110, 1
    %p114 = scmp.eq.s32.totalorder %s13, 1
    %p115 = scmp.ne.s32.totalorder %s110, %s112
    %p116 = scmp.eq.s32.totalorder %s13, 0
    %p117 = por %p115, %p116
    %p118 = scmp.ne.s32.totalorder %s110, %s112
    %p119 = scmp.eq.s32.totalorder %s18, 1
    %p120 = por %p118, %p119
    %p121 = scmp.ne.s32.totalorder %s112, %s113
    %p122 = scmp.eq.s32.totalorder %s18, 0
    %p123 = por %p121, %p122
    %p124 = scmp.ne.s32.totalorder %s112, %s113
    %p125 = scmp.eq.s32.totalorder %s19, 1
    %p126 = por %p124, %p125
    %p128 = scmp.ne.s32.totalorder %s113, %s127
    %p129 = scmp.eq.s32.totalorder %s19, 0
    %p130 = por %p128, %p129
    %s132 = sadd.s32 %s131, 1
    %p135 = scmp.eq.s32.totalorder %s13, 1
    %p136 = scmp.ne.s32.totalorder %s131, %s133
    %p137 = scmp.eq.s32.totalorder %s13, 0
    %p138 = por %p136, %p137
    %p139 = scmp.ne.s32.totalorder %s131, %s133
    %p140 = scmp.eq.s32.totalorder %s18, 1
    %p141 = por %p139, %p140
    %p142 = scmp.ne.s32.totalorder %s133, %s134
    %p143 = scmp.eq.s32.totalorder %s18, 0
    %p144 = por %p142, %p143
    %p145 = scmp.ne.s32.totalorder %s133, %s134
    %p146 = scmp.eq.s32.totalorder %s19, 1
    %p147 = por %p145, %p146
    %p149 = scmp.ne.s32.totalorder %s134, %s148
    %p150 = scmp.eq.s32.totalorder %s19, 0
    %p151 = por %p149, %p150
    %s153 = sadd.s32 %s152, 1
    %p156 = scmp.eq.s32.totalorder %s13, 1
    %p157 = scmp.ne.s32.totalorder %s152, %s154
    %p158 = scmp.eq.s32.totalorder %s13, 0
    %p159 = por %p157, %p158
    %p160 = scmp.ne.s32.totalorder %s152, %s154
    %p161 = scmp.eq.s32.totalorder %s18, 1
    %p162 = por %p160, %p161
    %p163 = scmp.ne.s32.totalorder %s154, %s155
    %p164 = scmp.eq.s32.totalorder %s18, 0
    %p165 = por %p163, %p164
    %p166 = scmp.ne.s32.totalorder %s154, %s155
    %p167 = scmp.eq.s32.totalorder %s19, 1
    %p168 = por %p166, %p167
    %p170 = scmp.ne.s32.totalorder %s155, %s169
    %p171 = scmp.eq.s32.totalorder %s19, 0
    %p172 = por %p170, %p171
    %s173 = ssub.s32 %s13, %s20
    %p174 = scmp.eq.s32.totalorder %s173, 0
    %s176 = sadd.s32 %s175, 1
    %s177 = scalar_select %p174, %s175, %s176
    %p180 = pneg %p174
    %p181 = scmp.eq.s32.totalorder %s13, 1
    %p182 = por %p180, %p181
    %p183 = scmp.ne.s32.totalorder %s175, %s178
    %p184 = scmp.eq.s32.totalorder %s13, 0
    %p185 = por %p183, %p184
    %p186 = scmp.ne.s32.totalorder %s175, %s178
    %p187 = scmp.eq.s32.totalorder %s18, 1
    %p188 = por %p186, %p187
    %p189 = scmp.ne.s32.totalorder %s178, %s179
    %p190 = scmp.eq.s32.totalorder %s18, 0
    %p191 = por %p189, %p190
    %p192 = scmp.ne.s32.totalorder %s178, %s179
    %p193 = scmp.eq.s32.totalorder %s19, 1
    %p194 = por %p192, %p193
    %p196 = scmp.ne.s32.totalorder %s179, %s195
    %p197 = scmp.eq.s32.totalorder %s19, 0
    %p198 = por %p196, %p197
    %p199 = scmp.le.s32.totalorder 1, %s13
    %p200 = scmp.lt.s32.totalorder %s13, 3
    %p201 = pnand %p199, %p200
    %p202 = pneg %p201
    // Predicated region
    $region9: #{_lambda_.7} parent=5 // pred_check
      _
    $region10: #{_lambda_.7} parent=5 // pred_check_branch
      %204 = sbr.rel (%p201) target = $region12
    $region11: #{_lambda_.7} parent=5 // pred_region
      %s205 = ssub.s32 %s13, 1
      // Predicated region
      $region13: #{_lambda_.7} parent=11 // pred_check
        %p206 = pneg %p60
      $region14: #{_lambda_.7} parent=11 // pred_check_branch
        %208 = sbr.rel (%p206) target = $region16
      $region15: #{_lambda_.7} parent=11 // pred_region
        _
      $region16: #{_lambda_.7} parent=11 // pred_fallthru
        _
      // Predicated region
      $region17: #{_lambda_.7} parent=11 // pred_check
        %p209 = pneg %p81
      $region18: #{_lambda_.7} parent=11 // pred_check_branch
        %211 = sbr.rel (%p209) target = $region20
      $region19: #{_lambda_.7} parent=11 // pred_region
        _
      $region20: #{_lambda_.7} parent=11 // pred_fallthru
        _
      // Predicated region
      $region21: #{_lambda_.7} parent=11 // pred_check
        %p212 = pneg %p102
      $region22: #{_lambda_.7} parent=11 // pred_check_branch
        %214 = sbr.rel (%p212) target = $region24
      $region23: #{_lambda_.7} parent=11 // pred_region
        _
      $region24: #{_lambda_.7} parent=11 // pred_fallthru
        _
      // Predicated region
      $region25: #{_lambda_.7} parent=11 // pred_check
        %p215 = pneg %p123
      $region26: #{_lambda_.7} parent=11 // pred_check_branch
        %217 = sbr.rel (%p215) target = $region28
      $region27: #{_lambda_.7} parent=11 // pred_region
        _
      $region28: #{_lambda_.7} parent=11 // pred_fallthru
        _
      // Predicated region
      $region29: #{_lambda_.7} parent=11 // pred_check
        %p218 = pneg %p144
      $region30: #{_lambda_.7} parent=11 // pred_check_branch
        %220 = sbr.rel (%p218) target = $region32
      $region31: #{_lambda_.7} parent=11 // pred_region
        _
      $region32: #{_lambda_.7} parent=11 // pred_fallthru
        _
      // Predicated region
      $region33: #{_lambda_.7} parent=11 // pred_check
        %p221 = pneg %p165
      $region34: #{_lambda_.7} parent=11 // pred_check_branch
        %223 = sbr.rel (%p221) target = $region36
      $region35: #{_lambda_.7} parent=11 // pred_region
        _
      $region36: #{_lambda_.7} parent=11 // pred_fallthru
        _
    $region12: #{_lambda_.7} parent=5 // pred_fallthru
      _
    %p224 = scmp.lt.s32.totalorder %s13, 2
    // Predicated region
    $region37: #{_lambda_.7} parent=5 // pred_check
      %p225 = pneg %p224
    $region38: #{_lambda_.7} parent=5 // pred_check_branch
      %227 = sbr.rel (%p225) target = $region40
    $region39: #{_lambda_.7} parent=5 // pred_region
      // Predicated region
      $region41: #{_lambda_.7} parent=39 // pred_check
        %p228 = pneg %p33
      $region42: #{_lambda_.7} parent=39 // pred_check_branch
        %230 = sbr.rel (%p228) target = $region44
      $region43: #{_lambda_.7} parent=39 // pred_region
        %s231 = smul.u32 8, %s13
        %p232 = scmp.lt.s32.totalorder %s231, 15
        %s233 = scalar_select %p232, %s231, 15
        %s234 = smul.addr %s233, 8
        %s235 = scalar_lea.vmem %s0, %s234
        %s236 = smul.u32 8, %s13
      $region44: #{_lambda_.7} parent=39 // pred_fallthru
        _
    $region40: #{_lambda_.7} parent=5 // pred_fallthru
      _
    %p237 = scmp.le.s32.totalorder 1, %s13
    %p238 = scmp.lt.s32.totalorder %s13, 3
    %p239 = pnand %p237, %p238
    %p240 = pneg %p239
    // Predicated region
    $region45: #{_lambda_.7} parent=5 // pred_check
      _
    $region46: #{_lambda_.7} parent=5 // pred_check_branch
      %242 = sbr.rel (%p239) target = $region48
    $region47: #{_lambda_.7} parent=5 // pred_region
      %s243 = ssub.s32 %s13, 1
      %s244 = smul.u32 8, %s18
      %p245 = scmp.lt.s32.totalorder %s244, 15
      %s246 = scalar_select %p245, %s244, 15
      %s247 = smul.addr %s246, 8
      %s248 = scalar_lea.vmem %s0, %s247
      %p249 = pneg %p39
      %p250 = pneg %p36
      %p251 = pneg %p60
      %p252 = pneg %p57
      %p253 = pneg %p81
      %p254 = pneg %p78
      %p255 = pneg %p102
      %p256 = pneg %p99
      %p257 = pneg %p123
      %p258 = pneg %p120
      %p259 = pneg %p144
      %p260 = pneg %p141
      %p261 = pneg %p165
      %p262 = pneg %p162
      %p263 = pneg %p191
      %p264 = pneg %p188
      %s265 = smul.u32 8, %s18
      %p266 = scmp.lt.s32.totalorder %s265, 15
      %s267 = scalar_select %p266, %s265, 15
      %s268 = smul.addr %s267, 8
      %s269 = scalar_lea.vmem %s7, %s268
      %s270 = smul.u32 8, %s18
      %p271 = scmp.lt.s32.totalorder %s270, 15
      %s272 = scalar_select %p271, %s270, 15
      %s273 = smul.addr %s272, 8
      %s274 = scalar_lea.vmem %s0, %s273
      %s275 = smul.u32 8, %s18
      %s276 = smul.u32 8, %s18
      %p277 = scmp.lt.s32.totalorder %s276, 15
      %s278 = scalar_select %p277, %s276, 15
      %s279 = smul.addr %s278, 8
      %s280 = scalar_lea.vmem %s7, %s279
      %s281 = smul.u32 8, %s18
      %v283 = vld [vmem:[%s274] sm:$0xff]
      %v284 = vld [vmem:[%s274 + $0x8] sm:$0xff]
      %v285 = vld [vmem:[%s274 + $0x10] sm:$0xff]
      %v286 = vld [vmem:[%s274 + $0x18] sm:$0xff]
      %v287 = vld [vmem:[%s274 + $0x20] sm:$0xff]
      %v288 = vld [vmem:[%s274 + $0x28] sm:$0xff]
      %v289 = vld [vmem:[%s274 + $0x30] sm:$0xff]
      %v290 = vld [vmem:[%s274 + $0x38] sm:$0xff]
      %v291 = vld [vmem:[%s1] sm:$0x1]
      %v292 = vld [vmem:[%s2] sm:$0x1]
      %vm293 = vcmask 261120
      %v294 = vsel %vm293, %v283, 0.0
      %295 = vadd.xlane.f32.xlu0 %v294
      %v296 = vpop.xlane.xlu0 %295
      %v297 = vsel %vm293, %v284, 0.0
      %298 = vadd.xlane.f32.xlu0 %v297
      %v299 = vpop.xlane.xlu0 %298
      %v300 = vsel %vm293, %v285, 0.0
      %301 = vadd.xlane.f32.xlu0 %v300
      %v302 = vpop.xlane.xlu0 %301
      %v303 = vsel %vm293, %v286, 0.0
      %304 = vadd.xlane.f32.xlu0 %v303
      %v305 = vpop.xlane.xlu0 %304
      %v306 = vsel %vm293, %v287, 0.0
      %307 = vadd.xlane.f32.xlu0 %v306
      %v308 = vpop.xlane.xlu0 %307
      %v309 = vsel %vm293, %v288, 0.0
      %310 = vadd.xlane.f32.xlu0 %v309
      %v311 = vpop.xlane.xlu0 %310
      %v312 = vsel %vm293, %v289, 0.0
      %313 = vadd.xlane.f32.xlu0 %v312
      %v314 = vpop.xlane.xlu0 %313
      %v315 = vsel %vm293, %v290, 0.0
      %316 = vadd.xlane.f32.xlu0 %v315
      %v317 = vpop.xlane.xlu0 %316
      %v318 = vrcp.pop 32.0
      %v319 = vmul.f32 %v296, %v318
      %v320 = vmul.f32 %v299, %v318
      %v321 = vmul.f32 %v302, %v318
      %v322 = vmul.f32 %v305, %v318
      %v323 = vmul.f32 %v308, %v318
      %v324 = vmul.f32 %v311, %v318
      %v325 = vmul.f32 %v314, %v318
      %v326 = vmul.f32 %v317, %v318
      %v327 = vsub.f32 %v283, %v319
      %v328 = vsub.f32 %v284, %v320
      %v329 = vsub.f32 %v285, %v321
      %v330 = vsub.f32 %v286, %v322
      %v331 = vsub.f32 %v287, %v323
      %v332 = vsub.f32 %v288, %v324
      %v333 = vsub.f32 %v289, %v325
      %v334 = vsub.f32 %v290, %v326
      %v335 = vmul.f32 %v327, %v327
      %v336 = vmul.f32 %v328, %v328
      %v337 = vmul.f32 %v329, %v329
      %v338 = vmul.f32 %v330, %v330
      %v339 = vmul.f32 %v331, %v331
      %v340 = vmul.f32 %v332, %v332
      %v341 = vmul.f32 %v333, %v333
      %v342 = vmul.f32 %v334, %v334
      %v343 = vsel %vm293, %v335, 0.0
      %344 = vadd.xlane.f32.xlu0 %v343
      %v345 = vpop.xlane.xlu0 %344
      %v346 = vsel %vm293, %v336, 0.0
      %347 = vadd.xlane.f32.xlu0 %v346
      %v348 = vpop.xlane.xlu0 %347
      %v349 = vsel %vm293, %v337, 0.0
      %350 = vadd.xlane.f32.xlu0 %v349
      %v351 = vpop.xlane.xlu0 %350
      %v352 = vsel %vm293, %v338, 0.0
      %353 = vadd.xlane.f32.xlu0 %v352
      %v354 = vpop.xlane.xlu0 %353
      %v355 = vsel %vm293, %v339, 0.0
      %356 = vadd.xlane.f32.xlu0 %v355
      %v357 = vpop.xlane.xlu0 %356
      %v358 = vsel %vm293, %v340, 0.0
      %359 = vadd.xlane.f32.xlu0 %v358
      %v360 = vpop.xlane.xlu0 %359
      %v361 = vsel %vm293, %v341, 0.0
      %362 = vadd.xlane.f32.xlu0 %v361
      %v363 = vpop.xlane.xlu0 %362
      %v364 = vsel %vm293, %v342, 0.0
      %365 = vadd.xlane.f32.xlu0 %v364
      %v366 = vpop.xlane.xlu0 %365
      %v367 = vmul.f32 %v345, %v318
      %v368 = vmul.f32 %v348, %v318
      %v369 = vmul.f32 %v351, %v318
      %v370 = vmul.f32 %v354, %v318
      %v371 = vmul.f32 %v357, %v318
      %v372 = vmul.f32 %v360, %v318
      %v373 = vmul.f32 %v363, %v318
      %v374 = vmul.f32 %v366, %v318
      %v375 = vadd.f32 %v367, 1e-05
      %v376 = vadd.f32 %v368, 1e-05
      %v377 = vadd.f32 %v369, 1e-05
      %v378 = vadd.f32 %v370, 1e-05
      %v379 = vadd.f32 %v371, 1e-05
      %v380 = vadd.f32 %v372, 1e-05
      %v381 = vadd.f32 %v373, 1e-05
      %v382 = vadd.f32 %v374, 1e-05
      %v383 = vrsqrt.pop %v375
      %v384 = vrsqrt.pop %v376
      %v385 = vrsqrt.pop %v377
      %v386 = vrsqrt.pop %v378
      %v387 = vrsqrt.pop %v379
      %v388 = vrsqrt.pop %v380
      %v389 = vrsqrt.pop %v381
      %v390 = vrsqrt.pop %v382
      %v391 = vmul.f32 %v327, %v383
      %v392 = vmul.f32 %v328, %v384
      %v393 = vmul.f32 %v329, %v385
      %v394 = vmul.f32 %v330, %v386
      %v395 = vmul.f32 %v331, %v387
      %v396 = vmul.f32 %v332, %v388
      %v397 = vmul.f32 %v333, %v389
      %v398 = vmul.f32 %v334, %v390
      %v400 = vlaneseq
      %v401 = vshrl.u32 %v400, 7
      %v402 = vsub.s32 0, %v401
      %v403 = vrot.slane %v291, %v402
      %v405 = vmul.f32 %v391, %v403
      %v406 = vmul.f32 %v392, %v403
      %v407 = vmul.f32 %v393, %v403
      %v408 = vmul.f32 %v394, %v403
      %v409 = vmul.f32 %v395, %v403
      %v410 = vmul.f32 %v396, %v403
      %v411 = vmul.f32 %v397, %v403
      %v412 = vmul.f32 %v398, %v403
      %v414 = vlaneseq
      %v415 = vshrl.u32 %v414, 7
      %v416 = vsub.s32 0, %v415
      %v417 = vrot.slane %v292, %v416
      %v419 = vadd.f32 %v405, %v417
      %v420 = vadd.f32 %v406, %v417
      %v421 = vadd.f32 %v407, %v417
      %v422 = vadd.f32 %v408, %v417
      %v423 = vadd.f32 %v409, %v417
      %v424 = vadd.f32 %v410, %v417
      %v425 = vadd.f32 %v411, %v417
      %v426 = vadd.f32 %v412, %v417
      %v427 = vpack.c.bf16 %v420, %v419
      %v428 = vpack.c.bf16 %v422, %v421
      %v429 = vpack.c.bf16 %v424, %v423
      %v430 = vpack.c.bf16 %v426, %v425
      %v431 = vld [vmem:[%s3] sm:$0xf]
      %v432 = vld [vmem:[%s3 + $0x4] sm:$0xf]
      %v433 = vld [vmem:[%s3 + $0x8] sm:$0xf]
      %v434 = vld [vmem:[%s3 + $0xc] sm:$0xf]
      %v435 = vld [vmem:[%s4] sm:$0x1]
      %v437 = vlaneseq
      %v438 = vshrl.u32 %v437, 7
      %v439 = vsub.s32 0, %v438
      %v440 = vrot.slane %v435, %v439
      %v446 = vunpack.c.l.b16 %v431
      %v447 = vunpack.c.l.b16 %v432
      %v448 = vunpack.c.l.b16 %v433
      %v449 = vunpack.c.l.b16 %v434
      %v450 = vpack.c.b16 %v447, %v446
      %v451 = vpack.c.b16 %v449, %v448
      %v455 = vsel %vm293, %v427, 0
      %v458 = vsel %vm293, %v428, 0
      %v461 = vsel %vm293, %v429, 0
      %v464 = vsel %vm293, %v430, 0
      %466 = vmatprep.subr.bf16.mxu0 0
      %467 = vmatpush1.bf16.msra.mxu0 0
      %468 = vmatprep.subr.bf16.mxu0 0
      %469 = vmatpush1.bf16.msra.mxu0 0
      %470 = vmatprep.subr.bf16.mxu0 0
      %471 = vmatpush1.bf16.msra.mxu0 0
      %472 = vmatprep.subr.bf16.mxu0 0
      %473 = vmatpush1.bf16.msra.mxu0 0
      %474 = vmatprep.subr.bf16.mxu0 0
      %475 = vmatpush1.bf16.msra.mxu0 0
      %476 = vmatprep.subr.bf16.mxu0 0
      %477 = vmatpush1.bf16.msra.mxu0 0
      %478 = vmatprep.subr.bf16.mxu0 0
      %479 = vmatpush1.bf16.msra.mxu0 %v451
      %480 = vmatprep.subr.bf16.mxu0 0
      %481 = vmatpush1.bf16.msra.mxu0 %v450
      %482 = vmatprep.subr.bf16.mxu0 0
      %483 = vmatpush2.bf16.msra.mxu0 0
      %484 = vmatprep.subr.bf16.mxu0 0
      %485 = vmatpush2.bf16.msra.mxu0 0
      %486 = vmatprep.subr.bf16.mxu0 0
      %487 = vmatpush2.bf16.msra.mxu0 0
      %488 = vmatprep.subr.bf16.mxu0 0
      %489 = vmatpush2.bf16.msra.mxu0 0
      %490 = vmatprep.subr.bf16.mxu0 0
      %491 = vmatpush2.bf16.msra.mxu0 0
      %492 = vmatprep.subr.bf16.mxu0 0
      %493 = vmatpush2.bf16.msra.mxu0 0
      %494 = vmatprep.subr.bf16.mxu0 0
      %495 = vmatpush2.bf16.msra.mxu0 0
      %496 = vmatprep.subr.bf16.mxu0 0
      %497 = vmatpush2.bf16.msra.mxu0 0
      %498 = vmatprep.mubr.bf16.mxu0 0
      %499 = vmatmul.mubr.bf16.gmra.mxu0 %v455
      %v500 = vpop.f32.mrf.mxu0
      %v501 = vadd.f32 %v440, %v500
      %v502 = vpop.f32.mrf.mxu0
      %v503 = vpop.f32.mrf.mxu0
      %v504 = vadd.f32 %v440, %v503
      %v505 = vpop.f32.mrf.mxu0
      %506 = vmatprep.mubr.bf16.mxu0 0
      %507 = vmatmul.mubr.bf16.gmra.mxu0 %v458
      %v508 = vpop.f32.mrf.mxu0
      %v509 = vadd.f32 %v440, %v508
      %v510 = vpop.f32.mrf.mxu0
      %v511 = vpop.f32.mrf.mxu0
      %v512 = vadd.f32 %v440, %v511
      %v513 = vpop.f32.mrf.mxu0
      %514 = vmatprep.mubr.bf16.mxu0 0
      %515 = vmatmul.mubr.bf16.gmra.mxu0 %v461
      %v516 = vpop.f32.mrf.mxu0
      %v517 = vadd.f32 %v440, %v516
      %v518 = vpop.f32.mrf.mxu0
      %v519 = vpop.f32.mrf.mxu0
      %v520 = vadd.f32 %v440, %v519
      %v521 = vpop.f32.mrf.mxu0
      %522 = vmatprep.mubr.bf16.mxu0 0
      %523 = vmatmul.mubr.bf16.gmra.mxu0 %v464
      %v524 = vpop.f32.mrf.mxu0
      %v525 = vadd.f32 %v440, %v524
      %v526 = vpop.f32.mrf.mxu0
      %v527 = vpop.f32.mrf.mxu0
      %v528 = vadd.f32 %v440, %v527
      %v529 = vpop.f32.mrf.mxu0
      %530 = vdwg.mxu0
      %v531 = vmul.f32 %v501, 0.5
      %v532 = vmul.f32 %v504, 0.5
      %v533 = vmul.f32 %v509, 0.5
      %v534 = vmul.f32 %v512, 0.5
      %v535 = vmul.f32 %v517, 0.5
      %v536 = vmul.f32 %v520, 0.5
      %v537 = vmul.f32 %v525, 0.5
      %v538 = vmul.f32 %v528, 0.5
      %v539 = vmul.f32 %v501, 0.044715
      %v540 = vmul.f32 %v504, 0.044715
      %v541 = vmul.f32 %v509, 0.044715
      %v542 = vmul.f32 %v512, 0.044715
      %v543 = vmul.f32 %v517, 0.044715
      %v544 = vmul.f32 %v520, 0.044715
      %v545 = vmul.f32 %v525, 0.044715
      %v546 = vmul.f32 %v528, 0.044715
      %v547 = vmul.f32 %v539, %v501
      %v548 = vmul.f32 %v540, %v504
      %v549 = vmul.f32 %v541, %v509
      %v550 = vmul.f32 %v542, %v512
      %v551 = vmul.f32 %v543, %v517
      %v552 = vmul.f32 %v544, %v520
      %v553 = vmul.f32 %v545, %v525
      %v554 = vmul.f32 %v546, %v528
      %v555 = vmul.f32 %v547, %v501
      %v556 = vmul.f32 %v548, %v504
      %v557 = vmul.f32 %v549, %v509
      %v558 = vmul.f32 %v550, %v512
      %v559 = vmul.f32 %v551, %v517
      %v560 = vmul.f32 %v552, %v520
      %v561 = vmul.f32 %v553, %v525
      %v562 = vmul.f32 %v554, %v528
      %v563 = vadd.f32 %v501, %v555
      %v564 = vadd.f32 %v504, %v556
      %v565 = vadd.f32 %v509, %v557
      %v566 = vadd.f32 %v512, %v558
      %v567 = vadd.f32 %v517, %v559
      %v568 = vadd.f32 %v520, %v560
      %v569 = vadd.f32 %v525, %v561
      %v570 = vadd.f32 %v528, %v562
      %v571 = vmul.f32 %v563, 0.7978846
      %v572 = vmul.f32 %v564, 0.7978846
      %v573 = vmul.f32 %v565, 0.7978846
      %v574 = vmul.f32 %v566, 0.7978846
      %v575 = vmul.f32 %v567, 0.7978846
      %v576 = vmul.f32 %v568, 0.7978846
      %v577 = vmul.f32 %v569, 0.7978846
      %v578 = vmul.f32 %v570, 0.7978846
      %v579 = vtanh.pop %v571
      %v580 = vtanh.pop %v572
      %v581 = vtanh.pop %v573
      %v582 = vtanh.pop %v574
      %v583 = vtanh.pop %v575
      %v584 = vtanh.pop %v576
      %v585 = vtanh.pop %v577
      %v586 = vtanh.pop %v578
      %v587 = vadd.f32 %v579, 1.0
      %v588 = vadd.f32 %v580, 1.0
      %v589 = vadd.f32 %v581, 1.0
      %v590 = vadd.f32 %v582, 1.0
      %v591 = vadd.f32 %v583, 1.0
      %v592 = vadd.f32 %v584, 1.0
      %v593 = vadd.f32 %v585, 1.0
      %v594 = vadd.f32 %v586, 1.0
      %v595 = vmul.f32 %v531, %v587
      %v596 = vmul.f32 %v532, %v588
      %v597 = vmul.f32 %v533, %v589
      %v598 = vmul.f32 %v534, %v590
      %v599 = vmul.f32 %v535, %v591
      %v600 = vmul.f32 %v536, %v592
      %v601 = vmul.f32 %v537, %v593
      %v602 = vmul.f32 %v538, %v594
      %v603 = vpack.c.bf16 %v596, %v595
      %v604 = vpack.c.bf16 %v598, %v597
      %v605 = vpack.c.bf16 %v600, %v599
      %v606 = vpack.c.bf16 %v602, %v601
      %v607 = vld [vmem:[%s5] sm:$0xf]
      %v608 = vld [vmem:[%s5 + $0x4] sm:$0xf]
      %v609 = vld [vmem:[%s5 + $0x8] sm:$0xf]
      %v610 = vld [vmem:[%s5 + $0xc] sm:$0xf]
      %v611 = vld [vmem:[%s5 + $0x10] sm:$0xf]
      %v612 = vld [vmem:[%s5 + $0x14] sm:$0xf]
      %v613 = vld [vmem:[%s5 + $0x18] sm:$0xf]
      %v614 = vld [vmem:[%s5 + $0x1c] sm:$0xf]
      %v615 = vld [vmem:[%s5 + $0x20] sm:$0xf]
      %v616 = vld [vmem:[%s5 + $0x24] sm:$0xf]
      %v617 = vld [vmem:[%s5 + $0x28] sm:$0xf]
      %v618 = vld [vmem:[%s5 + $0x2c] sm:$0xf]
      %v619 = vld [vmem:[%s5 + $0x30] sm:$0xf]
      %v620 = vld [vmem:[%s5 + $0x34] sm:$0xf]
      %v621 = vld [vmem:[%s5 + $0x38] sm:$0xf]
      %v622 = vld [vmem:[%s5 + $0x3c] sm:$0xf]
      %v623 = vld [vmem:[%s6] sm:$0x1]
      %v625 = vlaneseq
      %v626 = vshrl.u32 %v625, 7
      %v627 = vsub.s32 0, %v626
      %v628 = vrot.slane %v623, %v627
      %v646 = vunpack.c.l.b16 %v607
      %v647 = vunpack.c.l.b16 %v608
      %v648 = vunpack.c.l.b16 %v609
      %v649 = vunpack.c.l.b16 %v610
      %v650 = vunpack.c.l.b16 %v611
      %v651 = vunpack.c.l.b16 %v612
      %v652 = vunpack.c.l.b16 %v613
      %v653 = vunpack.c.l.b16 %v614
      %v654 = vunpack.c.l.b16 %v615
      %v655 = vunpack.c.l.b16 %v616
      %v656 = vunpack.c.l.b16 %v617
      %v657 = vunpack.c.l.b16 %v618
      %v658 = vunpack.c.l.b16 %v619
      %v659 = vunpack.c.l.b16 %v620
      %v660 = vunpack.c.l.b16 %v621
      %v661 = vunpack.c.l.b16 %v622
      %v662 = vpack.c.b16 %v647, %v646
      %v663 = vpack.c.b16 %v649, %v648
      %v664 = vpack.c.b16 %v651, %v650
      %v665 = vpack.c.b16 %v653, %v652
      %v666 = vpack.c.b16 %v655, %v654
      %v667 = vpack.c.b16 %v657, %v656
      %v668 = vpack.c.b16 %v659, %v658
      %v669 = vpack.c.b16 %v661, %v660
      %678 = vmatprep.subr.bf16.mxu0 0
      %679 = vmatpush1.bf16.msra.mxu0 %v669
      %680 = vmatprep.subr.bf16.mxu0 0
      %681 = vmatpush1.bf16.msra.mxu0 %v668
      %682 = vmatprep.subr.bf16.mxu0 0
      %683 = vmatpush1.bf16.msra.mxu0 %v667
      %684 = vmatprep.subr.bf16.mxu0 0
      %685 = vmatpush1.bf16.msra.mxu0 %v666
      %686 = vmatprep.subr.bf16.mxu0 0
      %687 = vmatpush1.bf16.msra.mxu0 %v665
      %688 = vmatprep.subr.bf16.mxu0 0
      %689 = vmatpush1.bf16.msra.mxu0 %v664
      %690 = vmatprep.subr.bf16.mxu0 0
      %691 = vmatpush1.bf16.msra.mxu0 %v663
      %692 = vmatprep.subr.bf16.mxu0 0
      %693 = vmatpush1.bf16.msra.mxu0 %v662
      %694 = vmatprep.subr.bf16.mxu0 0
      %695 = vmatpush2.bf16.msra.mxu0 0
      %696 = vmatprep.subr.bf16.mxu0 0
      %697 = vmatpush2.bf16.msra.mxu0 0
      %698 = vmatprep.subr.bf16.mxu0 0
      %699 = vmatpush2.bf16.msra.mxu0 0
      %700 = vmatprep.subr.bf16.mxu0 0
      %701 = vmatpush2.bf16.msra.mxu0 0
      %702 = vmatprep.subr.bf16.mxu0 0
      %703 = vmatpush2.bf16.msra.mxu0 0
      %704 = vmatprep.subr.bf16.mxu0 0
      %705 = vmatpush2.bf16.msra.mxu0 0
      %706 = vmatprep.subr.bf16.mxu0 0
      %707 = vmatpush2.bf16.msra.mxu0 0
      %708 = vmatprep.subr.bf16.mxu0 0
      %709 = vmatpush2.bf16.msra.mxu0 0
      %710 = vmatprep.mubr.bf16.mxu0 0
      %711 = vmatmul.mubr.bf16.gmra.mxu0 %v603
      %v712 = vpop.f32.mrf.mxu0
      %v713 = vadd.f32 %v628, %v712
      %v714 = vpop.f32.mrf.mxu0
      %v715 = vpop.f32.mrf.mxu0
      %v716 = vadd.f32 %v628, %v715
      %v717 = vpop.f32.mrf.mxu0
      %718 = vmatprep.mubr.bf16.mxu0 0
      %719 = vmatmul.mubr.bf16.gmra.mxu0 %v604
      %v720 = vpop.f32.mrf.mxu0
      %v721 = vadd.f32 %v628, %v720
      %v722 = vpop.f32.mrf.mxu0
      %v723 = vpop.f32.mrf.mxu0
      %v724 = vadd.f32 %v628, %v723
      %v725 = vpop.f32.mrf.mxu0
      %726 = vmatprep.mubr.bf16.mxu0 0
      %727 = vmatmul.mubr.bf16.gmra.mxu0 %v605
      %v728 = vpop.f32.mrf.mxu0
      %v729 = vadd.f32 %v628, %v728
      %v730 = vpop.f32.mrf.mxu0
      %v731 = vpop.f32.mrf.mxu0
      %v732 = vadd.f32 %v628, %v731
      %v733 = vpop.f32.mrf.mxu0
      %734 = vmatprep.mubr.bf16.mxu0 0
      %735 = vmatmul.mubr.bf16.gmra.mxu0 %v606
      %v736 = vpop.f32.mrf.mxu0
      %v737 = vadd.f32 %v628, %v736
      %v738 = vpop.f32.mrf.mxu0
      %v739 = vpop.f32.mrf.mxu0
      %v740 = vadd.f32 %v628, %v739
      %v741 = vpop.f32.mrf.mxu0
      %742 = vdwg.mxu0
      %v743 = vadd.f32 %v713, %v283
      %v744 = vadd.f32 %v716, %v284
      %v745 = vadd.f32 %v721, %v285
      %v746 = vadd.f32 %v724, %v286
      %v747 = vadd.f32 %v729, %v287
      %v748 = vadd.f32 %v732, %v288
      %v749 = vadd.f32 %v737, %v289
      %v750 = vadd.f32 %v740, %v290
      %751 = vst.msk [vmem:[%s280] sm:$0xff] %vm293, %v743
      %752 = vst.msk [vmem:[%s280 + $0x8] sm:$0xff] %vm293, %v744
      %753 = vst.msk [vmem:[%s280 + $0x10] sm:$0xff] %vm293, %v745
      %754 = vst.msk [vmem:[%s280 + $0x18] sm:$0xff] %vm293, %v746
      %755 = vst.msk [vmem:[%s280 + $0x20] sm:$0xff] %vm293, %v747
      %756 = vst.msk [vmem:[%s280 + $0x28] sm:$0xff] %vm293, %v748
      %757 = vst.msk [vmem:[%s280 + $0x30] sm:$0xff] %vm293, %v749
      %758 = vst.msk [vmem:[%s280 + $0x38] sm:$0xff] %vm293, %v750
      %s759 = smul.u32 8, %s18
      %p760 = scmp.lt.s32.totalorder %s759, 15
      %s761 = scalar_select %p760, %s759, 15
      %s762 = smul.addr %s761, 8
      %s763 = scalar_lea.vmem %s7, %s762
      // Predicated region
      $region49: #{_lambda_.7} parent=47 // pred_check
        %p764 = pneg %p188
      $region50: #{_lambda_.7} parent=47 // pred_check_branch
        %766 = sbr.rel (%p764) target = $region52
      $region51: #{_lambda_.7} parent=47 // pred_region
        %s767 = smul.u32 8, %s18
      $region52: #{_lambda_.7} parent=47 // pred_fallthru
        _
    $region48: #{_lambda_.7} parent=5 // pred_fallthru
      _
    %p768 = scmp.le.s32.totalorder 2, %s13
    // Predicated region
    $region53: #{_lambda_.7} parent=5 // pred_check
      %p769 = pneg %p768
    $region54: #{_lambda_.7} parent=5 // pred_check_branch
      %771 = sbr.rel (%p769) target = $region56
    $region55: #{_lambda_.7} parent=5 // pred_region
      %s772 = ssub.s32 %s13, 2
      // Predicated region
      $region57: #{_lambda_.7} parent=55 // pred_check
        %p773 = pneg %p194
      $region58: #{_lambda_.7} parent=55 // pred_check_branch
        %775 = sbr.rel (%p773) target = $region60
      $region59: #{_lambda_.7} parent=55 // pred_region
        %s776 = smul.u32 8, %s19
        %p777 = scmp.lt.s32.totalorder %s776, 15
        %s778 = scalar_select %p777, %s776, 15
        %s779 = smul.addr %s778, 8
        %s780 = scalar_lea.vmem %s7, %s779
      $region60: #{_lambda_.7} parent=55 // pred_fallthru
        _
    $region56: #{_lambda_.7} parent=5 // pred_fallthru
      _
  $region6: #{_lambda_.7} parent=0 // loop_footer
    %s17 = sadd.s32 1, %s13
  $region7: #{_lambda_.7} parent=0 // loop_footer_branch
    %12 = sbr.rel target = $region3
  $region8: #{_lambda_.7} parent=0 // loop_exit
    _

// kernel: _lambda_.6
$region0: #{_lambda_.6}
  #allocation0 [shape = 'u32[]', space=smem, size = 0x4, offset = 0x4, fixed_abs, tag = 'smem constant byte address 0x4 - core index']
  #allocation1 [shape = 'u32[144,128]{1,0:T(1,128)}', space=vmem, size = 0x12000, scoped, tag = 'internal scratch']
  %s0 = inlined_call_operand.vmem [shape: f32[8,16,32], index: 0, kind: input, shape index: {}]
  %s1 = inlined_call_operand.vmem [shape: f32[1,32], index: 1, kind: input, shape index: {}]
  %s2 = inlined_call_operand.vmem [shape: f32[1,32], index: 2, kind: input, shape index: {}]
  %s3 = inlined_call_operand.vmem [shape: bf16[32,96], index: 3, kind: input, shape index: {}]
  %s4 = inlined_call_operand.vmem [shape: bf16[32,32], index: 4, kind: input, shape index: {}]
  %s5 = inlined_call_operand.vmem [shape: f32[1,32], index: 5, kind: input, shape index: {}]
  %s6 = inlined_call_operand.vmem [shape: f32[1,16,16], index: 6, kind: input, shape index: {}]
  %s7 = inlined_call_operand.vmem [shape: f32[8,16,32], index: 7, kind: output, shape index: {}]
  %s8 = sld [smem:[#allocation0]]
  $region61: #{_lambda_.6} parent=0
    _
  %s10 = ssub.s32 1, %s8
  %s11 = scalar_select 0, %s10, %s8
  loop: start=0, step=1, limit=4
  $region2: #{_lambda_.6} parent=0 // loop_pre_header
    _
  $region3: #{_lambda_.6} parent=0 // loop_header
    %s13 = sphi 0, %s17
    %p14 = scmp.ge.s32.totalorder %s13, 4
    %s23 = sphi 0, %s25
    %s26 = sphi 0, %s23
    %s27 = sphi 0, %s26
    %s43 = sphi 0, %s27
    %s47 = sphi 0, %s47
    %s49 = sphi 0, %s47
    %s50 = sphi 0, %s49
    %s64 = sphi 0, %s50
    %s68 = sphi 0, %s68
    %s70 = sphi 0, %s68
    %s71 = sphi 0, %s70
    %s85 = sphi 0, %s71
    %s89 = sphi 0, %s89
    %s91 = sphi 0, %s89
    %s92 = sphi 0, %s91
    %s106 = sphi 0, %s92
    %s110 = sphi 0, %s110
    %s112 = sphi 0, %s110
    %s113 = sphi 0, %s112
    %s127 = sphi 0, %s113
    %s131 = sphi 0, %s131
    %s133 = sphi 0, %s131
    %s134 = sphi 0, %s133
    %s148 = sphi 0, %s134
    %s152 = sphi 0, %s152
    %s154 = sphi 0, %s152
    %s155 = sphi 0, %s154
    %s169 = sphi 0, %s155
    %s175 = sphi 0, %s177
    %s178 = sphi 0, %s175
    %s179 = sphi 0, %s178
    %s195 = sphi 0, %s179
  $region4: #{_lambda_.6} parent=0 // loop_header_branch
    %16 = sbr.rel (%p14) target = $region8
  $region5: #{_lambda_.6} parent=0 // loop_body
    %s18 = ssub.s32 %s13, 1
    %s19 = ssub.s32 %s13, 2
    %s20 = sadd.s32 %s13, 1
    %s21 = ssub.s32 %s13, %s20
    %p22 = scmp.eq.s32.totalorder %s21, 0
    %s24 = sadd.s32 %s23, 1
    %s25 = scalar_select %p22, %s23, %s24
    %p28 = pneg %p22
    %p29 = scmp.eq.s32.totalorder %s13, 1
    %p30 = por %p28, %p29
    %p31 = scmp.ne.s32.totalorder %s23, %s26
    %p32 = scmp.eq.s32.totalorder %s13, 0
    %p33 = por %p31, %p32
    %p34 = scmp.ne.s32.totalorder %s23, %s26
    %p35 = scmp.eq.s32.totalorder %s18, 1
    %p36 = por %p34, %p35
    %p37 = scmp.ne.s32.totalorder %s26, %s27
    %p38 = scmp.eq.s32.totalorder %s18, 0
    %p39 = por %p37, %p38
    %p40 = scmp.ne.s32.totalorder %s26, %s27
    %p41 = scmp.eq.s32.totalorder %s19, 1
    %p42 = por %p40, %p41
    %p44 = scmp.ne.s32.totalorder %s27, %s43
    %p45 = scmp.eq.s32.totalorder %s19, 0
    %p46 = por %p44, %p45
    %s48 = sadd.s32 %s47, 1
    %p51 = scmp.eq.s32.totalorder %s13, 1
    %p52 = scmp.ne.s32.totalorder %s47, %s49
    %p53 = scmp.eq.s32.totalorder %s13, 0
    %p54 = por %p52, %p53
    %p55 = scmp.ne.s32.totalorder %s47, %s49
    %p56 = scmp.eq.s32.totalorder %s18, 1
    %p57 = por %p55, %p56
    %p58 = scmp.ne.s32.totalorder %s49, %s50
    %p59 = scmp.eq.s32.totalorder %s18, 0
    %p60 = por %p58, %p59
    %p61 = scmp.ne.s32.totalorder %s49, %s50
    %p62 = scmp.eq.s32.totalorder %s19, 1
    %p63 = por %p61, %p62
    %p65 = scmp.ne.s32.totalorder %s50, %s64
    %p66 = scmp.eq.s32.totalorder %s19, 0
    %p67 = por %p65, %p66
    %s69 = sadd.s32 %s68, 1
    %p72 = scmp.eq.s32.totalorder %s13, 1
    %p73 = scmp.ne.s32.totalorder %s68, %s70
    %p74 = scmp.eq.s32.totalorder %s13, 0
    %p75 = por %p73, %p74
    %p76 = scmp.ne.s32.totalorder %s68, %s70
    %p77 = scmp.eq.s32.totalorder %s18, 1
    %p78 = por %p76, %p77
    %p79 = scmp.ne.s32.totalorder %s70, %s71
    %p80 = scmp.eq.s32.totalorder %s18, 0
    %p81 = por %p79, %p80
    %p82 = scmp.ne.s32.totalorder %s70, %s71
    %p83 = scmp.eq.s32.totalorder %s19, 1
    %p84 = por %p82, %p83
    %p86 = scmp.ne.s32.totalorder %s71, %s85
    %p87 = scmp.eq.s32.totalorder %s19, 0
    %p88 = por %p86, %p87
    %s90 = sadd.s32 %s89, 1
    %p93 = scmp.eq.s32.totalorder %s13, 1
    %p94 = scmp.ne.s32.totalorder %s89, %s91
    %p95 = scmp.eq.s32.totalorder %s13, 0
    %p96 = por %p94, %p95
    %p97 = scmp.ne.s32.totalorder %s89, %s91
    %p98 = scmp.eq.s32.totalorder %s18, 1
    %p99 = por %p97, %p98
    %p100 = scmp.ne.s32.totalorder %s91, %s92
    %p101 = scmp.eq.s32.totalorder %s18, 0
    %p102 = por %p100, %p101
    %p103 = scmp.ne.s32.totalorder %s91, %s92
    %p104 = scmp.eq.s32.totalorder %s19, 1
    %p105 = por %p103, %p104
    %p107 = scmp.ne.s32.totalorder %s92, %s106
    %p108 = scmp.eq.s32.totalorder %s19, 0
    %p109 = por %p107, %p108
    %s111 = sadd.s32 %s110, 1
    %p114 = scmp.eq.s32.totalorder %s13, 1
    %p115 = scmp.ne.s32.totalorder %s110, %s112
    %p116 = scmp.eq.s32.totalorder %s13, 0
    %p117 = por %p115, %p116
    %p118 = scmp.ne.s32.totalorder %s110, %s112
    %p119 = scmp.eq.s32.totalorder %s18, 1
    %p120 = por %p118, %p119
    %p121 = scmp.ne.s32.totalorder %s112, %s113
    %p122 = scmp.eq.s32.totalorder %s18, 0
    %p123 = por %p121, %p122
    %p124 = scmp.ne.s32.totalorder %s112, %s113
    %p125 = scmp.eq.s32.totalorder %s19, 1
    %p126 = por %p124, %p125
    %p128 = scmp.ne.s32.totalorder %s113, %s127
    %p129 = scmp.eq.s32.totalorder %s19, 0
    %p130 = por %p128, %p129
    %s132 = sadd.s32 %s131, 1
    %p135 = scmp.eq.s32.totalorder %s13, 1
    %p136 = scmp.ne.s32.totalorder %s131, %s133
    %p137 = scmp.eq.s32.totalorder %s13, 0
    %p138 = por %p136, %p137
    %p139 = scmp.ne.s32.totalorder %s131, %s133
    %p140 = scmp.eq.s32.totalorder %s18, 1
    %p141 = por %p139, %p140
    %p142 = scmp.ne.s32.totalorder %s133, %s134
    %p143 = scmp.eq.s32.totalorder %s18, 0
    %p144 = por %p142, %p143
    %p145 = scmp.ne.s32.totalorder %s133, %s134
    %p146 = scmp.eq.s32.totalorder %s19, 1
    %p147 = por %p145, %p146
    %p149 = scmp.ne.s32.totalorder %s134, %s148
    %p150 = scmp.eq.s32.totalorder %s19, 0
    %p151 = por %p149, %p150
    %s153 = sadd.s32 %s152, 1
    %p156 = scmp.eq.s32.totalorder %s13, 1
    %p157 = scmp.ne.s32.totalorder %s152, %s154
    %p158 = scmp.eq.s32.totalorder %s13, 0
    %p159 = por %p157, %p158
    %p160 = scmp.ne.s32.totalorder %s152, %s154
    %p161 = scmp.eq.s32.totalorder %s18, 1
    %p162 = por %p160, %p161
    %p163 = scmp.ne.s32.totalorder %s154, %s155
    %p164 = scmp.eq.s32.totalorder %s18, 0
    %p165 = por %p163, %p164
    %p166 = scmp.ne.s32.totalorder %s154, %s155
    %p167 = scmp.eq.s32.totalorder %s19, 1
    %p168 = por %p166, %p167
    %p170 = scmp.ne.s32.totalorder %s155, %s169
    %p171 = scmp.eq.s32.totalorder %s19, 0
    %p172 = por %p170, %p171
    %s173 = ssub.s32 %s13, %s20
    %p174 = scmp.eq.s32.totalorder %s173, 0
    %s176 = sadd.s32 %s175, 1
    %s177 = scalar_select %p174, %s175, %s176
    %p180 = pneg %p174
    %p181 = scmp.eq.s32.totalorder %s13, 1
    %p182 = por %p180, %p181
    %p183 = scmp.ne.s32.totalorder %s175, %s178
    %p184 = scmp.eq.s32.totalorder %s13, 0
    %p185 = por %p183, %p184
    %p186 = scmp.ne.s32.totalorder %s175, %s178
    %p187 = scmp.eq.s32.totalorder %s18, 1
    %p188 = por %p186, %p187
    %p189 = scmp.ne.s32.totalorder %s178, %s179
    %p190 = scmp.eq.s32.totalorder %s18, 0
    %p191 = por %p189, %p190
    %p192 = scmp.ne.s32.totalorder %s178, %s179
    %p193 = scmp.eq.s32.totalorder %s19, 1
    %p194 = por %p192, %p193
    %p196 = scmp.ne.s32.totalorder %s179, %s195
    %p197 = scmp.eq.s32.totalorder %s19, 0
    %p198 = por %p196, %p197
    %p199 = scmp.le.s32.totalorder 1, %s13
    %p200 = scmp.lt.s32.totalorder %s13, 3
    %p201 = pnand %p199, %p200
    %p202 = pneg %p201
    // Predicated region
    $region9: #{_lambda_.6} parent=5 // pred_check
      _
    $region10: #{_lambda_.6} parent=5 // pred_check_branch
      %204 = sbr.rel (%p201) target = $region12
    $region11: #{_lambda_.6} parent=5 // pred_region
      %s205 = ssub.s32 %s13, 1
      // Predicated region
      $region13: #{_lambda_.6} parent=11 // pred_check
        %p206 = pneg %p60
      $region14: #{_lambda_.6} parent=11 // pred_check_branch
        %208 = sbr.rel (%p206) target = $region16
      $region15: #{_lambda_.6} parent=11 // pred_region
        _
      $region16: #{_lambda_.6} parent=11 // pred_fallthru
        _
      // Predicated region
      $region17: #{_lambda_.6} parent=11 // pred_check
        %p209 = pneg %p81
      $region18: #{_lambda_.6} parent=11 // pred_check_branch
        %211 = sbr.rel (%p209) target = $region20
      $region19: #{_lambda_.6} parent=11 // pred_region
        _
      $region20: #{_lambda_.6} parent=11 // pred_fallthru
        _
      // Predicated region
      $region21: #{_lambda_.6} parent=11 // pred_check
        %p212 = pneg %p102
      $region22: #{_lambda_.6} parent=11 // pred_check_branch
        %214 = sbr.rel (%p212) target = $region24
      $region23: #{_lambda_.6} parent=11 // pred_region
        _
      $region24: #{_lambda_.6} parent=11 // pred_fallthru
        _
      // Predicated region
      $region25: #{_lambda_.6} parent=11 // pred_check
        %p215 = pneg %p123
      $region26: #{_lambda_.6} parent=11 // pred_check_branch
        %217 = sbr.rel (%p215) target = $region28
      $region27: #{_lambda_.6} parent=11 // pred_region
        _
      $region28: #{_lambda_.6} parent=11 // pred_fallthru
        _
      // Predicated region
      $region29: #{_lambda_.6} parent=11 // pred_check
        %p218 = pneg %p144
      $region30: #{_lambda_.6} parent=11 // pred_check_branch
        %220 = sbr.rel (%p218) target = $region32
      $region31: #{_lambda_.6} parent=11 // pred_region
        _
      $region32: #{_lambda_.6} parent=11 // pred_fallthru
        _
      // Predicated region
      $region33: #{_lambda_.6} parent=11 // pred_check
        %p221 = pneg %p165
      $region34: #{_lambda_.6} parent=11 // pred_check_branch
        %223 = sbr.rel (%p221) target = $region36
      $region35: #{_lambda_.6} parent=11 // pred_region
        _
      $region36: #{_lambda_.6} parent=11 // pred_fallthru
        _
    $region12: #{_lambda_.6} parent=5 // pred_fallthru
      _
    %p224 = scmp.lt.s32.totalorder %s13, 2
    // Predicated region
    $region37: #{_lambda_.6} parent=5 // pred_check
      %p225 = pneg %p224
    $region38: #{_lambda_.6} parent=5 // pred_check_branch
      %227 = sbr.rel (%p225) target = $region40
    $region39: #{_lambda_.6} parent=5 // pred_region
      // Predicated region
      $region41: #{_lambda_.6} parent=39 // pred_check
        %p228 = pneg %p33
      $region42: #{_lambda_.6} parent=39 // pred_check_branch
        %230 = sbr.rel (%p228) target = $region44
      $region43: #{_lambda_.6} parent=39 // pred_region
        %s231 = smul.u32 4, %s13
        %p232 = scmp.lt.s32.totalorder %s231, 7
        %s233 = scalar_select %p232, %s231, 7
        %s234 = smul.addr %s233, 2
        %s235 = smul.addr %s234, 8
        %s236 = scalar_lea.vmem %s0, %s235
        %s237 = smul.u32 4, %s13
      $region44: #{_lambda_.6} parent=39 // pred_fallthru
        _
    $region40: #{_lambda_.6} parent=5 // pred_fallthru
      _
    %p238 = scmp.le.s32.totalorder 1, %s13
    %p239 = scmp.lt.s32.totalorder %s13, 3
    %p240 = pnand %p238, %p239
    %p241 = pneg %p240
    // Predicated region
    $region45: #{_lambda_.6} parent=5 // pred_check
      _
    $region46: #{_lambda_.6} parent=5 // pred_check_branch
      %243 = sbr.rel (%p240) target = $region48
    $region47: #{_lambda_.6} parent=5 // pred_region
      %s244 = ssub.s32 %s13, 1
      %s245 = smul.u32 4, %s18
      %p246 = scmp.lt.s32.totalorder %s245, 7
      %s247 = scalar_select %p246, %s245, 7
      %s248 = smul.addr %s247, 2
      %s249 = smul.addr %s248, 8
      %s250 = scalar_lea.vmem %s0, %s249
      %p251 = pneg %p39
      %p252 = pneg %p36
      %p253 = pneg %p60
      %p254 = pneg %p57
      %p255 = pneg %p81
      %p256 = pneg %p78
      %p257 = pneg %p102
      %p258 = pneg %p99
      %p259 = pneg %p123
      %p260 = pneg %p120
      %p261 = pneg %p144
      %p262 = pneg %p141
      %p263 = pneg %p165
      %p264 = pneg %p162
      %p265 = pneg %p191
      %p266 = pneg %p188
      %s267 = smul.u32 4, %s18
      %p268 = scmp.lt.s32.totalorder %s267, 7
      %s269 = scalar_select %p268, %s267, 7
      %s270 = smul.addr %s269, 2
      %s271 = smul.addr %s270, 8
      %s272 = scalar_lea.vmem %s7, %s271
      %s273 = smul.u32 4, %s18
      %p274 = scmp.lt.s32.totalorder %s273, 7
      %s275 = scalar_select %p274, %s273, 7
      %s276 = smul.addr %s275, 2
      %s277 = smul.addr %s276, 8
      %s278 = scalar_lea.vmem %s0, %s277
      %s279 = smul.u32 4, %s18
      %s280 = smul.u32 4, %s18
      %p281 = scmp.lt.s32.totalorder %s280, 7
      %s282 = scalar_select %p281, %s280, 7
      %s283 = smul.addr %s282, 2
      %s284 = smul.addr %s283, 8
      %s285 = scalar_lea.vmem %s7, %s284
      %s286 = smul.u32 4, %s18
      %v288 = vld [vmem:[%s1] sm:$0x1]
      %v289 = vld [vmem:[%s2] sm:$0x1]
      %v290 = vld [vmem:[%s3] sm:$0xf]
      %v291 = vld [vmem:[%s3 + $0x4] sm:$0xf]
      %v292 = vld [vmem:[%s3 + $0x8] sm:$0xf]
      %v293 = vld [vmem:[%s3 + $0xc] sm:$0xf]
      %v294 = vld [vmem:[%s4] sm:$0xf]
      %v295 = vld [vmem:[%s4 + $0x4] sm:$0xf]
      %v296 = vld [vmem:[%s4 + $0x8] sm:$0xf]
      %v297 = vld [vmem:[%s4 + $0xc] sm:$0xf]
      %v298 = vld [vmem:[%s5] sm:$0x1]
      %v299 = vld [vmem:[%s278] sm:$0xff]
      %v300 = vld [vmem:[%s278 + $0x8] sm:$0xff]
      %vm301 = vcmask 261120
      %v302 = vsel %vm301, %v299, 0.0
      %303 = vadd.xlane.f32.xlu0 %v302
      %v304 = vpop.xlane.xlu0 %303
      %v305 = vsel %vm301, %v300, 0.0
      %306 = vadd.xlane.f32.xlu0 %v305
      %v307 = vpop.xlane.xlu0 %306
      %v308 = vrcp.pop 32.0
      %v309 = vmul.f32 %v304, %v308
      %v310 = vmul.f32 %v307, %v308
      %v311 = vsub.f32 %v299, %v309
      %v312 = vsub.f32 %v300, %v310
      %v313 = vmul.f32 %v311, %v311
      %v314 = vmul.f32 %v312, %v312
      %v315 = vsel %vm301, %v313, 0.0
      %316 = vadd.xlane.f32.xlu0 %v315
      %v317 = vpop.xlane.xlu0 %316
      %v318 = vsel %vm301, %v314, 0.0
      %319 = vadd.xlane.f32.xlu0 %v318
      %v320 = vpop.xlane.xlu0 %319
      %v321 = vmul.f32 %v317, %v308
      %v322 = vmul.f32 %v320, %v308
      %v323 = vadd.f32 %v321, 1e-05
      %v324 = vadd.f32 %v322, 1e-05
      %v325 = vrsqrt.pop %v323
      %v326 = vrsqrt.pop %v324
      %v327 = vmul.f32 %v311, %v325
      %v328 = vmul.f32 %v312, %v326
      %v330 = vlaneseq
      %v331 = vshrl.u32 %v330, 7
      %v332 = vsub.s32 0, %v331
      %v333 = vrot.slane %v288, %v332
      %v335 = vmul.f32 %v327, %v333
      %v336 = vmul.f32 %v328, %v333
      %v338 = vlaneseq
      %v339 = vshrl.u32 %v338, 7
      %v340 = vsub.s32 0, %v339
      %v341 = vrot.slane %v289, %v340
      %v343 = vadd.f32 %v335, %v341
      %v344 = vadd.f32 %v336, %v341
      %v345 = vpack.c.bf16 %v344, %v343
      %v350 = vunpack.c.l.b16 %v290
      %v351 = vunpack.c.l.b16 %v291
      %v352 = vunpack.c.l.b16 %v292
      %v353 = vunpack.c.l.b16 %v293
      %v354 = vpack.c.b16 %v351, %v350
      %v355 = vpack.c.b16 %v353, %v352
      %v359 = vsel %vm301, %v345, 0
      %361 = vmatprep.subr.bf16.mxu0 0
      %362 = vmatpush1.bf16.msra.mxu0 0
      %363 = vmatprep.subr.bf16.mxu0 0
      %364 = vmatpush1.bf16.msra.mxu0 0
      %365 = vmatprep.subr.bf16.mxu0 0
      %366 = vmatpush1.bf16.msra.mxu0 0
      %367 = vmatprep.subr.bf16.mxu0 0
      %368 = vmatpush1.bf16.msra.mxu0 0
      %369 = vmatprep.subr.bf16.mxu0 0
      %370 = vmatpush1.bf16.msra.mxu0 0
      %371 = vmatprep.subr.bf16.mxu0 0
      %372 = vmatpush1.bf16.msra.mxu0 0
      %373 = vmatprep.subr.bf16.mxu0 0
      %374 = vmatpush1.bf16.msra.mxu0 %v355
      %375 = vmatprep.subr.bf16.mxu0 0
      %376 = vmatpush1.bf16.msra.mxu0 %v354
      %377 = vmatprep.subr.bf16.mxu0 0
      %378 = vmatpush2.bf16.msra.mxu0 0
      %379 = vmatprep.subr.bf16.mxu0 0
      %380 = vmatpush2.bf16.msra.mxu0 0
      %381 = vmatprep.subr.bf16.mxu0 0
      %382 = vmatpush2.bf16.msra.mxu0 0
      %383 = vmatprep.subr.bf16.mxu0 0
      %384 = vmatpush2.bf16.msra.mxu0 0
      %385 = vmatprep.subr.bf16.mxu0 0
      %386 = vmatpush2.bf16.msra.mxu0 0
      %387 = vmatprep.subr.bf16.mxu0 0
      %388 = vmatpush2.bf16.msra.mxu0 0
      %389 = vmatprep.subr.bf16.mxu0 0
      %390 = vmatpush2.bf16.msra.mxu0 0
      %391 = vmatprep.subr.bf16.mxu0 0
      %392 = vmatpush2.bf16.msra.mxu0 0
      %393 = vmatprep.mubr.bf16.mxu0 0
      %394 = vmatmul.mubr.bf16.gmra.mxu0 %v359
      %v395 = vpop.f32.mrf.mxu0
      %v396 = vadd.f32 0.0, %v395
      %v397 = vpop.f32.mrf.mxu0
      %v398 = vpop.f32.mrf.mxu0
      %v399 = vadd.f32 0.0, %v398
      %v400 = vpop.f32.mrf.mxu0
      %401 = vdwg.mxu0
      %v402 = vld [vmem:[%s6] sm:$0xff]
      %v403 = vld [vmem:[%s6 + $0x8] sm:$0xff]
      %v404 = vpack.c.bf16 %v399, %v396
      %406 = vrot.lane.b32.xlu0 %v404, 96
      %v407 = vpop.permute.xlu0 %406
      %vm408 = vcmask 130048
      %v410 = vsel %vm408, %v404, 0
      %v413 = vsel %vm408, %v407, 0
      %415 = vmatprep.subr.bf16.mxu0 0
      %416 = vmatpush1.bf16.xpose.msra.mxu0 0
      %417 = vmatprep.subr.bf16.mxu0 0
      %418 = vmatpush1.bf16.xpose.msra.mxu0 0
      %419 = vmatprep.subr.bf16.mxu0 0
      %420 = vmatpush1.bf16.xpose.msra.mxu0 0
      %421 = vmatprep.subr.bf16.mxu0 0
      %422 = vmatpush1.bf16.xpose.msra.mxu0 0
      %423 = vmatprep.subr.bf16.mxu0 0
      %424 = vmatpush1.bf16.xpose.msra.mxu0 0
      %425 = vmatprep.subr.bf16.mxu0 0
      %426 = vmatpush1.bf16.xpose.msra.mxu0 0
      %427 = vmatprep.subr.bf16.mxu0 0
      %428 = vmatpush1.bf16.xpose.msra.mxu0 0
      %429 = vmatprep.subr.bf16.mxu0 0
      %430 = vmatpush1.bf16.xpose.msra.mxu0 %v413
      %431 = vmatprep.subr.bf16.mxu0 0
      %432 = vmatpush2.bf16.xpose.msra.mxu0 0
      %433 = vmatprep.subr.bf16.mxu0 0
      %434 = vmatpush2.bf16.xpose.msra.mxu0 0
      %435 = vmatprep.subr.bf16.mxu0 0
      %436 = vmatpush2.bf16.xpose.msra.mxu0 0
      %437 = vmatprep.subr.bf16.mxu0 0
      %438 = vmatpush2.bf16.xpose.msra.mxu0 0
      %439 = vmatprep.subr.bf16.mxu0 0
      %440 = vmatpush2.bf16.xpose.msra.mxu0 0
      %441 = vmatprep.subr.bf16.mxu0 0
      %442 = vmatpush2.bf16.xpose.msra.mxu0 0
      %443 = vmatprep.subr.bf16.mxu0 0
      %444 = vmatpush2.bf16.xpose.msra.mxu0 0
      %445 = vmatprep.subr.bf16.mxu0 0
      %446 = vmatpush2.bf16.xpose.msra.mxu0 0
      %447 = vmatprep.mubr.bf16.mxu0 0
      %448 = vmatmul.mubr.bf16.gmra.mxu0 %v410
      %v449 = vpop.f32.mrf.mxu0
      %v450 = vadd.f32 0.0, %v449
      %v451 = vpop.f32.mrf.mxu0
      %v452 = vpop.f32.mrf.mxu0
      %v453 = vadd.f32 0.0, %v452
      %v454 = vpop.f32.mrf.mxu0
      %455 = vdwg.mxu0
      %v456 = vmul.f32 %v450, 0.25
      %v457 = vmul.f32 %v453, 0.25
      %v458 = vadd.f32 %v456, %v402
      %v459 = vadd.f32 %v457, %v403
      %v460 = vsel %vm408, %v458, -inf
      %461 = vmax.xlane.f32.xlu0 %v460
      %v462 = vpop.xlane.xlu0 %461
      %v463 = vsel %vm408, %v459, -inf
      %464 = vmax.xlane.f32.xlu0 %v463
      %v465 = vpop.xlane.xlu0 %464
      %v466 = vsub.f32 %v458, %v462
      %v467 = vsub.f32 %v459, %v465
      %v468 = vmul.f32 %v466, 1.442695
      %v469 = vpow.pop %v468
      %v470 = vmul.f32 %v467, 1.442695
      %v471 = vpow.pop %v470
      %v472 = vsel %vm408, %v469, 0.0
      %473 = vadd.xlane.f32.xlu0 %v472
      %v474 = vpop.xlane.xlu0 %473
      %v475 = vsel %vm408, %v471, 0.0
      %476 = vadd.xlane.f32.xlu0 %v475
      %v477 = vpop.xlane.xlu0 %476
      %v478 = vrcp.pop %v474
      %v479 = vrcp.pop %v477
      %v480 = vmul.f32 %v469, %v478
      %v481 = vmul.f32 %v471, %v479
      %v482 = vpack.c.bf16 %v481, %v480
      %483 = vrot.lane.b32.xlu0 %v404, 64
      %v484 = vpop.permute.xlu0 %483
      %v487 = vsel %vm408, %v482, 0
      %489 = vmatprep.subr.bf16.mxu0 0
      %490 = vmatpush1.bf16.msra.mxu0 0
      %491 = vmatprep.subr.bf16.mxu0 0
      %492 = vmatpush1.bf16.msra.mxu0 0
      %493 = vmatprep.subr.bf16.mxu0 0
      %494 = vmatpush1.bf16.msra.mxu0 0
      %495 = vmatprep.subr.bf16.mxu0 0
      %496 = vmatpush1.bf16.msra.mxu0 0
      %497 = vmatprep.subr.bf16.mxu0 0
      %498 = vmatpush1.bf16.msra.mxu0 0
      %499 = vmatprep.subr.bf16.mxu0 0
      %500 = vmatpush1.bf16.msra.mxu0 0
      %501 = vmatprep.subr.bf16.mxu0 0
      %502 = vmatpush1.bf16.msra.mxu0 0
      %503 = vmatprep.subr.bf16.mxu0 0
      %504 = vmatpush1.bf16.msra.mxu0 %v484
      %505 = vmatprep.subr.bf16.mxu0 0
      %506 = vmatpush2.bf16.msra.mxu0 0
      %507 = vmatprep.subr.bf16.mxu0 0
      %508 = vmatpush2.bf16.msra.mxu0 0
      %509 = vmatprep.subr.bf16.mxu0 0
      %510 = vmatpush2.bf16.msra.mxu0 0
      %511 = vmatprep.subr.bf16.mxu0 0
      %512 = vmatpush2.bf16.msra.mxu0 0
      %513 = vmatprep.subr.bf16.mxu0 0
      %514 = vmatpush2.bf16.msra.mxu0 0
      %515 = vmatprep.subr.bf16.mxu0 0
      %516 = vmatpush2.bf16.msra.mxu0 0
      %517 = vmatprep.subr.bf16.mxu0 0
      %518 = vmatpush2.bf16.msra.mxu0 0
      %519 = vmatprep.subr.bf16.mxu0 0
      %520 = vmatpush2.bf16.msra.mxu0 0
      %521 = vmatprep.mubr.bf16.mxu0 0
      %522 = vmatmul.mubr.bf16.gmra.mxu0 %v487
      %v523 = vpop.f32.mrf.mxu0
      %v524 = vadd.f32 0.0, %v523
      %v525 = vpop.f32.mrf.mxu0
      %v526 = vpop.f32.mrf.mxu0
      %v527 = vadd.f32 0.0, %v526
      %v528 = vpop.f32.mrf.mxu0
      %529 = vdwg.mxu0
      %530 = vrot.lane.b32.xlu0 %v404, 112
      %v531 = vpop.permute.xlu0 %530
      %532 = vrot.lane.b32.xlu0 %v404, 80
      %v533 = vpop.permute.xlu0 %532
      %v535 = vsel %vm408, %v531, 0
      %v538 = vsel %vm408, %v533, 0
      %540 = vmatprep.subr.bf16.mxu0 0
      %541 = vmatpush1.bf16.xpose.msra.mxu0 0
      %542 = vmatprep.subr.bf16.mxu0 0
      %543 = vmatpush1.bf16.xpose.msra.mxu0 0
      %544 = vmatprep.subr.bf16.mxu0 0
      %545 = vmatpush1.bf16.xpose.msra.mxu0 0
      %546 = vmatprep.subr.bf16.mxu0 0
      %547 = vmatpush1.bf16.xpose.msra.mxu0 0
      %548 = vmatprep.subr.bf16.mxu0 0
      %549 = vmatpush1.bf16.xpose.msra.mxu0 0
      %550 = vmatprep.subr.bf16.mxu0 0
      %551 = vmatpush1.bf16.xpose.msra.mxu0 0
      %552 = vmatprep.subr.bf16.mxu0 0
      %553 = vmatpush1.bf16.xpose.msra.mxu0 0
      %554 = vmatprep.subr.bf16.mxu0 0
      %555 = vmatpush1.bf16.xpose.msra.mxu0 %v538
      %556 = vmatprep.subr.bf16.mxu0 0
      %557 = vmatpush2.bf16.xpose.msra.mxu0 0
      %558 = vmatprep.subr.bf16.mxu0 0
      %559 = vmatpush2.bf16.xpose.msra.mxu0 0
      %560 = vmatprep.subr.bf16.mxu0 0
      %561 = vmatpush2.bf16.xpose.msra.mxu0 0
      %562 = vmatprep.subr.bf16.mxu0 0
      %563 = vmatpush2.bf16.xpose.msra.mxu0 0
      %564 = vmatprep.subr.bf16.mxu0 0
      %565 = vmatpush2.bf16.xpose.msra.mxu0 0
      %566 = vmatprep.subr.bf16.mxu0 0
      %567 = vmatpush2.bf16.xpose.msra.mxu0 0
      %568 = vmatprep.subr.bf16.mxu0 0
      %569 = vmatpush2.bf16.xpose.msra.mxu0 0
      %570 = vmatprep.subr.bf16.mxu0 0
      %571 = vmatpush2.bf16.xpose.msra.mxu0 0
      %572 = vmatprep.mubr.bf16.mxu0 0
      %573 = vmatmul.mubr.bf16.gmra.mxu0 %v535
      %v574 = vpop.f32.mrf.mxu0
      %v575 = vadd.f32 0.0, %v574
      %v576 = vpop.f32.mrf.mxu0
      %v577 = vpop.f32.mrf.mxu0
      %v578 = vadd.f32 0.0, %v577
      %v579 = vpop.f32.mrf.mxu0
      %580 = vdwg.mxu0
      %v581 = vmul.f32 %v575, 0.25
      %v582 = vmul.f32 %v578, 0.25
      %v583 = vadd.f32 %v581, %v402
      %v584 = vadd.f32 %v582, %v403
      %v585 = vsel %vm408, %v583, -inf
      %586 = vmax.xlane.f32.xlu0 %v585
      %v587 = vpop.xlane.xlu0 %586
      %v588 = vsel %vm408, %v584, -inf
      %589 = vmax.xlane.f32.xlu0 %v588
      %v590 = vpop.xlane.xlu0 %589
      %v591 = vsub.f32 %v583, %v587
      %v592 = vsub.f32 %v584, %v590
      %v593 = vmul.f32 %v591, 1.442695
      %v594 = vpow.pop %v593
      %v595 = vmul.f32 %v592, 1.442695
      %v596 = vpow.pop %v595
      %v597 = vsel %vm408, %v594, 0.0
      %598 = vadd.xlane.f32.xlu0 %v597
      %v599 = vpop.xlane.xlu0 %598
      %v600 = vsel %vm408, %v596, 0.0
      %601 = vadd.xlane.f32.xlu0 %v600
      %v602 = vpop.xlane.xlu0 %601
      %v603 = vrcp.pop %v599
      %v604 = vrcp.pop %v602
      %v605 = vmul.f32 %v594, %v603
      %v606 = vmul.f32 %v596, %v604
      %v607 = vpack.c.bf16 %v606, %v605
      %608 = vrot.lane.b32.xlu0 %v404, 48
      %v609 = vpop.permute.xlu0 %608
      %v612 = vsel %vm408, %v607, 0
      %614 = vmatprep.subr.bf16.mxu0 0
      %615 = vmatpush1.bf16.msra.mxu0 0
      %616 = vmatprep.subr.bf16.mxu0 0
      %617 = vmatpush1.bf16.msra.mxu0 0
      %618 = vmatprep.subr.bf16.mxu0 0
      %619 = vmatpush1.bf16.msra.mxu0 0
      %620 = vmatprep.subr.bf16.mxu0 0
      %621 = vmatpush1.bf16.msra.mxu0 0
      %622 = vmatprep.subr.bf16.mxu0 0
      %623 = vmatpush1.bf16.msra.mxu0 0
      %624 = vmatprep.subr.bf16.mxu0 0
      %625 = vmatpush1.bf16.msra.mxu0 0
      %626 = vmatprep.subr.bf16.mxu0 0
      %627 = vmatpush1.bf16.msra.mxu0 0
      %628 = vmatprep.subr.bf16.mxu0 0
      %629 = vmatpush1.bf16.msra.mxu0 %v609
      %630 = vmatprep.subr.bf16.mxu0 0
      %631 = vmatpush2.bf16.msra.mxu0 0
      %632 = vmatprep.subr.bf16.mxu0 0
      %633 = vmatpush2.bf16.msra.mxu0 0
      %634 = vmatprep.subr.bf16.mxu0 0
      %635 = vmatpush2.bf16.msra.mxu0 0
      %636 = vmatprep.subr.bf16.mxu0 0
      %637 = vmatpush2.bf16.msra.mxu0 0
      %638 = vmatprep.subr.bf16.mxu0 0
      %639 = vmatpush2.bf16.msra.mxu0 0
      %640 = vmatprep.subr.bf16.mxu0 0
      %641 = vmatpush2.bf16.msra.mxu0 0
      %642 = vmatprep.subr.bf16.mxu0 0
      %643 = vmatpush2.bf16.msra.mxu0 0
      %644 = vmatprep.subr.bf16.mxu0 0
      %645 = vmatpush2.bf16.msra.mxu0 0
      %646 = vmatprep.mubr.bf16.mxu0 0
      %647 = vmatmul.mubr.bf16.gmra.mxu0 %v612
      %v648 = vpop.f32.mrf.mxu0
      %v649 = vadd.f32 0.0, %v648
      %v650 = vpop.f32.mrf.mxu0
      %v651 = vpop.f32.mrf.mxu0
      %v652 = vadd.f32 0.0, %v651
      %v653 = vpop.f32.mrf.mxu0
      %654 = vdwg.mxu0
      %657 = vrot.lane.b32.xlu0 %v649, 16
      %v658 = vpop.permute.xlu0 %657
      %659 = vrot.lane.b32.xlu0 %v652, 16
      %v660 = vpop.permute.xlu0 %659
      %v663 = vsel %vm408, %v524, %v658
      %v664 = vsel %vm408, %v527, %v660
      %v665 = vpack.c.bf16 %v664, %v663
      %v667 = vlaneseq
      %v668 = vshrl.u32 %v667, 7
      %v669 = vsub.s32 0, %v668
      %v670 = vrot.slane %v298, %v669
      %v676 = vunpack.c.l.b16 %v294
      %v677 = vunpack.c.l.b16 %v295
      %v678 = vunpack.c.l.b16 %v296
      %v679 = vunpack.c.l.b16 %v297
      %v680 = vpack.c.b16 %v677, %v676
      %v681 = vpack.c.b16 %v679, %v678
      %v685 = vsel %vm301, %v665, 0
      %687 = vmatprep.subr.bf16.mxu0 0
      %688 = vmatpush1.bf16.msra.mxu0 0
      %689 = vmatprep.subr.bf16.mxu0 0
      %690 = vmatpush1.bf16.msra.mxu0 0
      %691 = vmatprep.subr.bf16.mxu0 0
      %692 = vmatpush1.bf16.msra.mxu0 0
      %693 = vmatprep.subr.bf16.mxu0 0
      %694 = vmatpush1.bf16.msra.mxu0 0
      %695 = vmatprep.subr.bf16.mxu0 0
      %696 = vmatpush1.bf16.msra.mxu0 0
      %697 = vmatprep.subr.bf16.mxu0 0
      %698 = vmatpush1.bf16.msra.mxu0 0
      %699 = vmatprep.subr.bf16.mxu0 0
      %700 = vmatpush1.bf16.msra.mxu0 %v681
      %701 = vmatprep.subr.bf16.mxu0 0
      %702 = vmatpush1.bf16.msra.mxu0 %v680
      %703 = vmatprep.subr.bf16.mxu0 0
      %704 = vmatpush2.bf16.msra.mxu0 0
      %705 = vmatprep.subr.bf16.mxu0 0
      %706 = vmatpush2.bf16.msra.mxu0 0
      %707 = vmatprep.subr.bf16.mxu0 0
      %708 = vmatpush2.bf16.msra.mxu0 0
      %709 = vmatprep.subr.bf16.mxu0 0
      %710 = vmatpush2.bf16.msra.mxu0 0
      %711 = vmatprep.subr.bf16.mxu0 0
      %712 = vmatpush2.bf16.msra.mxu0 0
      %713 = vmatprep.subr.bf16.mxu0 0
      %714 = vmatpush2.bf16.msra.mxu0 0
      %715 = vmatprep.subr.bf16.mxu0 0
      %716 = vmatpush2.bf16.msra.mxu0 0
      %717 = vmatprep.subr.bf16.mxu0 0
      %718 = vmatpush2.bf16.msra.mxu0 0
      %719 = vmatprep.mubr.bf16.mxu0 0
      %720 = vmatmul.mubr.bf16.gmra.mxu0 %v685
      %v721 = vpop.f32.mrf.mxu0
      %v722 = vadd.f32 %v670, %v721
      %v723 = vpop.f32.mrf.mxu0
      %v724 = vpop.f32.mrf.mxu0
      %v725 = vadd.f32 %v670, %v724
      %v726 = vpop.f32.mrf.mxu0
      %727 = vdwg.mxu0
      %v728 = vadd.f32 %v722, %v299
      %v729 = vadd.f32 %v725, %v300
      %730 = vst.msk [vmem:[%s285] sm:$0xff] %vm301, %v728
      %731 = vst.msk [vmem:[%s285 + $0x8] sm:$0xff] %vm301, %v729
      %s732 = scalar_lea.vmem %s278, 16
      %v733 = vld [vmem:[%s732] sm:$0xff]
      %v734 = vld [vmem:[%s732 + $0x8] sm:$0xff]
      %v735 = vsel %vm301, %v733, 0.0
      %736 = vadd.xlane.f32.xlu0 %v735
      %v737 = vpop.xlane.xlu0 %736
      %v738 = vsel %vm301, %v734, 0.0
      %739 = vadd.xlane.f32.xlu0 %v738
      %v740 = vpop.xlane.xlu0 %739
      %v741 = vmul.f32 %v737, %v308
      %v742 = vmul.f32 %v740, %v308
      %v743 = vsub.f32 %v733, %v741
      %v744 = vsub.f32 %v734, %v742
      %v745 = vmul.f32 %v743, %v743
      %v746 = vmul.f32 %v744, %v744
      %v747 = vsel %vm301, %v745, 0.0
      %748 = vadd.xlane.f32.xlu0 %v747
      %v749 = vpop.xlane.xlu0 %748
      %v750 = vsel %vm301, %v746, 0.0
      %751 = vadd.xlane.f32.xlu0 %v750
      %v752 = vpop.xlane.xlu0 %751
      %v753 = vmul.f32 %v749, %v308
      %v754 = vmul.f32 %v752, %v308
      %v755 = vadd.f32 %v753, 1e-05
      %v756 = vadd.f32 %v754, 1e-05
      %v757 = vrsqrt.pop %v755
      %v758 = vrsqrt.pop %v756
      %v759 = vmul.f32 %v743, %v757
      %v760 = vmul.f32 %v744, %v758
      %v761 = vmul.f32 %v759, %v333
      %v762 = vmul.f32 %v760, %v333
      %v763 = vadd.f32 %v761, %v341
      %v764 = vadd.f32 %v762, %v341
      %v765 = vpack.c.bf16 %v764, %v763
      %v767 = vsel %vm301, %v765, 0
      %769 = vmatprep.subr.bf16.mxu0 0
      %770 = vmatpush1.bf16.msra.mxu0 0
      %771 = vmatprep.subr.bf16.mxu0 0
      %772 = vmatpush1.bf16.msra.mxu0 0
      %773 = vmatprep.subr.bf16.mxu0 0
      %774 = vmatpush1.bf16.msra.mxu0 0
      %775 = vmatprep.subr.bf16.mxu0 0
      %776 = vmatpush1.bf16.msra.mxu0 0
      %777 = vmatprep.subr.bf16.mxu0 0
      %778 = vmatpush1.bf16.msra.mxu0 0
      %779 = vmatprep.subr.bf16.mxu0 0
      %780 = vmatpush1.bf16.msra.mxu0 0
      %781 = vmatprep.subr.bf16.mxu0 0
      %782 = vmatpush1.bf16.msra.mxu0 %v355
      %783 = vmatprep.subr.bf16.mxu0 0
      %784 = vmatpush1.bf16.msra.mxu0 %v354
      %785 = vmatprep.subr.bf16.mxu0 0
      %786 = vmatpush2.bf16.msra.mxu0 0
      %787 = vmatprep.subr.bf16.mxu0 0
      %788 = vmatpush2.bf16.msra.mxu0 0
      %789 = vmatprep.subr.bf16.mxu0 0
      %790 = vmatpush2.bf16.msra.mxu0 0
      %791 = vmatprep.subr.bf16.mxu0 0
      %792 = vmatpush2.bf16.msra.mxu0 0
      %793 = vmatprep.subr.bf16.mxu0 0
      %794 = vmatpush2.bf16.msra.mxu0 0
      %795 = vmatprep.subr.bf16.mxu0 0
      %796 = vmatpush2.bf16.msra.mxu0 0
      %797 = vmatprep.subr.bf16.mxu0 0
      %798 = vmatpush2.bf16.msra.mxu0 0
      %799 = vmatprep.subr.bf16.mxu0 0
      %800 = vmatpush2.bf16.msra.mxu0 0
      %801 = vmatprep.mubr.bf16.mxu0 0
      %802 = vmatmul.mubr.bf16.gmra.mxu0 %v767
      %v803 = vpop.f32.mrf.mxu0
      %v804 = vadd.f32 0.0, %v803
      %v805 = vpop.f32.mrf.mxu0
      %v806 = vpop.f32.mrf.mxu0
      %v807 = vadd.f32 0.0, %v806
      %v808 = vpop.f32.mrf.mxu0
      %809 = vdwg.mxu0
      %v810 = vld [vmem:[%s6] sm:$0xff]
      %v811 = vld [vmem:[%s6 + $0x8] sm:$0xff]
      %v812 = vpack.c.bf16 %v807, %v804
      %814 = vrot.lane.b32.xlu0 %v812, 96
      %v815 = vpop.permute.xlu0 %814
      %v817 = vsel %vm408, %v812, 0
      %v820 = vsel %vm408, %v815, 0
      %822 = vmatprep.subr.bf16.mxu0 0
      %823 = vmatpush1.bf16.xpose.msra.mxu0 0
      %824 = vmatprep.subr.bf16.mxu0 0
      %825 = vmatpush1.bf16.xpose.msra.mxu0 0
      %826 = vmatprep.subr.bf16.mxu0 0
      %827 = vmatpush1.bf16.xpose.msra.mxu0 0
      %828 = vmatprep.subr.bf16.mxu0 0
      %829 = vmatpush1.bf16.xpose.msra.mxu0 0
      %830 = vmatprep.subr.bf16.mxu0 0
      %831 = vmatpush1.bf16.xpose.msra.mxu0 0
      %832 = vmatprep.subr.bf16.mxu0 0
      %833 = vmatpush1.bf16.xpose.msra.mxu0 0
      %834 = vmatprep.subr.bf16.mxu0 0
      %835 = vmatpush1.bf16.xpose.msra.mxu0 0
      %836 = vmatprep.subr.bf16.mxu0 0
      %837 = vmatpush1.bf16.xpose.msra.mxu0 %v820
      %838 = vmatprep.subr.bf16.mxu0 0
      %839 = vmatpush2.bf16.xpose.msra.mxu0 0
      %840 = vmatprep.subr.bf16.mxu0 0
      %841 = vmatpush2.bf16.xpose.msra.mxu0 0
      %842 = vmatprep.subr.bf16.mxu0 0
      %843 = vmatpush2.bf16.xpose.msra.mxu0 0
      %844 = vmatprep.subr.bf16.mxu0 0
      %845 = vmatpush2.bf16.xpose.msra.mxu0 0
      %846 = vmatprep.subr.bf16.mxu0 0
      %847 = vmatpush2.bf16.xpose.msra.mxu0 0
      %848 = vmatprep.subr.bf16.mxu0 0
      %849 = vmatpush2.bf16.xpose.msra.mxu0 0
      %850 = vmatprep.subr.bf16.mxu0 0
      %851 = vmatpush2.bf16.xpose.msra.mxu0 0
      %852 = vmatprep.subr.bf16.mxu0 0
      %853 = vmatpush2.bf16.xpose.msra.mxu0 0
      %854 = vmatprep.mubr.bf16.mxu0 0
      %855 = vmatmul.mubr.bf16.gmra.mxu0 %v817
      %v856 = vpop.f32.mrf.mxu0
      %v857 = vadd.f32 0.0, %v856
      %v858 = vpop.f32.mrf.mxu0
      %v859 = vpop.f32.mrf.mxu0
      %v860 = vadd.f32 0.0, %v859
      %v861 = vpop.f32.mrf.mxu0
      %862 = vdwg.mxu0
      %v863 = vmul.f32 %v857, 0.25
      %v864 = vmul.f32 %v860, 0.25
      %v865 = vadd.f32 %v863, %v810
      %v866 = vadd.f32 %v864, %v811
      %v867 = vsel %vm408, %v865, -inf
      %868 = vmax.xlane.f32.xlu0 %v867
      %v869 = vpop.xlane.xlu0 %868
      %v870 = vsel %vm408, %v866, -inf
      %871 = vmax.xlane.f32.xlu0 %v870
      %v872 = vpop.xlane.xlu0 %871
      %v873 = vsub.f32 %v865, %v869
      %v874 = vsub.f32 %v866, %v872
      %v875 = vmul.f32 %v873, 1.442695
      %v876 = vpow.pop %v875
      %v877 = vmul.f32 %v874, 1.442695
      %v878 = vpow.pop %v877
      %v879 = vsel %vm408, %v876, 0.0
      %880 = vadd.xlane.f32.xlu0 %v879
      %v881 = vpop.xlane.xlu0 %880
      %v882 = vsel %vm408, %v878, 0.0
      %883 = vadd.xlane.f32.xlu0 %v882
      %v884 = vpop.xlane.xlu0 %883
      %v885 = vrcp.pop %v881
      %v886 = vrcp.pop %v884
      %v887 = vmul.f32 %v876, %v885
      %v888 = vmul.f32 %v878, %v886
      %v889 = vpack.c.bf16 %v888, %v887
      %890 = vrot.lane.b32.xlu0 %v812, 64
      %v891 = vpop.permute.xlu0 %890
      %v894 = vsel %vm408, %v889, 0
      %896 = vmatprep.subr.bf16.mxu0 0
      %897 = vmatpush1.bf16.msra.mxu0 0
      %898 = vmatprep.subr.bf16.mxu0 0
      %899 = vmatpush1.bf16.msra.mxu0 0
      %900 = vmatprep.subr.bf16.mxu0 0
      %901 = vmatpush1.bf16.msra.mxu0 0
      %902 = vmatprep.subr.bf16.mxu0 0
      %903 = vmatpush1.bf16.msra.mxu0 0
      %904 = vmatprep.subr.bf16.mxu0 0
      %905 = vmatpush1.bf16.msra.mxu0 0
      %906 = vmatprep.subr.bf16.mxu0 0
      %907 = vmatpush1.bf16.msra.mxu0 0
      %908 = vmatprep.subr.bf16.mxu0 0
      %909 = vmatpush1.bf16.msra.mxu0 0
      %910 = vmatprep.subr.bf16.mxu0 0
      %911 = vmatpush1.bf16.msra.mxu0 %v891
      %912 = vmatprep.subr.bf16.mxu0 0
      %913 = vmatpush2.bf16.msra.mxu0 0
      %914 = vmatprep.subr.bf16.mxu0 0
      %915 = vmatpush2.bf16.msra.mxu0 0
      %916 = vmatprep.subr.bf16.mxu0 0
      %917 = vmatpush2.bf16.msra.mxu0 0
      %918 = vmatprep.subr.bf16.mxu0 0
      %919 = vmatpush2.bf16.msra.mxu0 0
      %920 = vmatprep.subr.bf16.mxu0 0
      %921 = vmatpush2.bf16.msra.mxu0 0
      %922 = vmatprep.subr.bf16.mxu0 0
      %923 = vmatpush2.bf16.msra.mxu0 0
      %924 = vmatprep.subr.bf16.mxu0 0
      %925 = vmatpush2.bf16.msra.mxu0 0
      %926 = vmatprep.subr.bf16.mxu0 0
      %927 = vmatpush2.bf16.msra.mxu0 0
      %928 = vmatprep.mubr.bf16.mxu0 0
      %929 = vmatmul.mubr.bf16.gmra.mxu0 %v894
      %v930 = vpop.f32.mrf.mxu0
      %v931 = vadd.f32 0.0, %v930
      %v932 = vpop.f32.mrf.mxu0
      %v933 = vpop.f32.mrf.mxu0
      %v934 = vadd.f32 0.0, %v933
      %v935 = vpop.f32.mrf.mxu0
      %936 = vdwg.mxu0
      %937 = vrot.lane.b32.xlu0 %v812, 112
      %v938 = vpop.permute.xlu0 %937
      %939 = vrot.lane.b32.xlu0 %v812, 80
      %v940 = vpop.permute.xlu0 %939
      %v942 = vsel %vm408, %v938, 0
      %v945 = vsel %vm408, %v940, 0
      %947 = vmatprep.subr.bf16.mxu0 0
      %948 = vmatpush1.bf16.xpose.msra.mxu0 0
      %949 = vmatprep.subr.bf16.mxu0 0
      %950 = vmatpush1.bf16.xpose.msra.mxu0 0
      %951 = vmatprep.subr.bf16.mxu0 0
      %952 = vmatpush1.bf16.xpose.msra.mxu0 0
      %953 = vmatprep.subr.bf16.mxu0 0
      %954 = vmatpush1.bf16.xpose.msra.mxu0 0
      %955 = vmatprep.subr.bf16.mxu0 0
      %956 = vmatpush1.bf16.xpose.msra.mxu0 0
      %957 = vmatprep.subr.bf16.mxu0 0
      %958 = vmatpush1.bf16.xpose.msra.mxu0 0
      %959 = vmatprep.subr.bf16.mxu0 0
      %960 = vmatpush1.bf16.xpose.msra.mxu0 0
      %961 = vmatprep.subr.bf16.mxu0 0
      %962 = vmatpush1.bf16.xpose.msra.mxu0 %v945
      %963 = vmatprep.subr.bf16.mxu0 0
      %964 = vmatpush2.bf16.xpose.msra.mxu0 0
      %965 = vmatprep.subr.bf16.mxu0 0
      %966 = vmatpush2.bf16.xpose.msra.mxu0 0
      %967 = vmatprep.subr.bf16.mxu0 0
      %968 = vmatpush2.bf16.xpose.msra.mxu0 0
      %969 = vmatprep.subr.bf16.mxu0 0
      %970 = vmatpush2.bf16.xpose.msra.mxu0 0
      %971 = vmatprep.subr.bf16.mxu0 0
      %972 = vmatpush2.bf16.xpose.msra.mxu0 0
      %973 = vmatprep.subr.bf16.mxu0 0
      %974 = vmatpush2.bf16.xpose.msra.mxu0 0
      %975 = vmatprep.subr.bf16.mxu0 0
      %976 = vmatpush2.bf16.xpose.msra.mxu0 0
      %977 = vmatprep.subr.bf16.mxu0 0
      %978 = vmatpush2.bf16.xpose.msra.mxu0 0
      %979 = vmatprep.mubr.bf16.mxu0 0
      %980 = vmatmul.mubr.bf16.gmra.mxu0 %v942
      %v981 = vpop.f32.mrf.mxu0
      %v982 = vadd.f32 0.0, %v981
      %v983 = vpop.f32.mrf.mxu0
      %v984 = vpop.f32.mrf.mxu0
      %v985 = vadd.f32 0.0, %v984
      %v986 = vpop.f32.mrf.mxu0
      %987 = vdwg.mxu0
      %v988 = vmul.f32 %v982, 0.25
      %v989 = vmul.f32 %v985, 0.25
      %v990 = vadd.f32 %v988, %v810
      %v991 = vadd.f32 %v989, %v811
      %v992 = vsel %vm408, %v990, -inf
      %993 = vmax.xlane.f32.xlu0 %v992
      %v994 = vpop.xlane.xlu0 %993
      %v995 = vsel %vm408, %v991, -inf
      %996 = vmax.xlane.f32.xlu0 %v995
      %v997 = vpop.xlane.xlu0 %996
      %v998 = vsub.f32 %v990, %v994
      %v999 = vsub.f32 %v991, %v997
      %v1000 = vmul.f32 %v998, 1.442695
      %v1001 = vpow.pop %v1000
      %v1002 = vmul.f32 %v999, 1.442695
      %v1003 = vpow.pop %v1002
      %v1004 = vsel %vm408, %v1001, 0.0
      %1005 = vadd.xlane.f32.xlu0 %v1004
      %v1006 = vpop.xlane.xlu0 %1005
      %v1007 = vsel %vm408, %v1003, 0.0
      %1008 = vadd.xlane.f32.xlu0 %v1007
      %v1009 = vpop.xlane.xlu0 %1008
      %v1010 = vrcp.pop %v1006
      %v1011 = vrcp.pop %v1009
      %v1012 = vmul.f32 %v1001, %v1010
      %v1013 = vmul.f32 %v1003, %v1011
      %v1014 = vpack.c.bf16 %v1013, %v1012
      %1015 = vrot.lane.b32.xlu0 %v812, 48
      %v1016 = vpop.permute.xlu0 %1015
      %v1019 = vsel %vm408, %v1014, 0
      %1021 = vmatprep.subr.bf16.mxu0 0
      %1022 = vmatpush1.bf16.msra.mxu0 0
      %1023 = vmatprep.subr.bf16.mxu0 0
      %1024 = vmatpush1.bf16.msra.mxu0 0
      %1025 = vmatprep.subr.bf16.mxu0 0
      %1026 = vmatpush1.bf16.msra.mxu0 0
      %1027 = vmatprep.subr.bf16.mxu0 0
      %1028 = vmatpush1.bf16.msra.mxu0 0
      %1029 = vmatprep.subr.bf16.mxu0 0
      %1030 = vmatpush1.bf16.msra.mxu0 0
      %1031 = vmatprep.subr.bf16.mxu0 0
      %1032 = vmatpush1.bf16.msra.mxu0 0
      %1033 = vmatprep.subr.bf16.mxu0 0
      %1034 = vmatpush1.bf16.msra.mxu0 0
      %1035 = vmatprep.subr.bf16.mxu0 0
      %1036 = vmatpush1.bf16.msra.mxu0 %v1016
      %1037 = vmatprep.subr.bf16.mxu0 0
      %1038 = vmatpush2.bf16.msra.mxu0 0
      %1039 = vmatprep.subr.bf16.mxu0 0
      %1040 = vmatpush2.bf16.msra.mxu0 0
      %1041 = vmatprep.subr.bf16.mxu0 0
      %1042 = vmatpush2.bf16.msra.mxu0 0
      %1043 = vmatprep.subr.bf16.mxu0 0
      %1044 = vmatpush2.bf16.msra.mxu0 0
      %1045 = vmatprep.subr.bf16.mxu0 0
      %1046 = vmatpush2.bf16.msra.mxu0 0
      %1047 = vmatprep.subr.bf16.mxu0 0
      %1048 = vmatpush2.bf16.msra.mxu0 0
      %1049 = vmatprep.subr.bf16.mxu0 0
      %1050 = vmatpush2.bf16.msra.mxu0 0
      %1051 = vmatprep.subr.bf16.mxu0 0
      %1052 = vmatpush2.bf16.msra.mxu0 0
      %1053 = vmatprep.mubr.bf16.mxu0 0
      %1054 = vmatmul.mubr.bf16.gmra.mxu0 %v1019
      %v1055 = vpop.f32.mrf.mxu0
      %v1056 = vadd.f32 0.0, %v1055
      %v1057 = vpop.f32.mrf.mxu0
      %v1058 = vpop.f32.mrf.mxu0
      %v1059 = vadd.f32 0.0, %v1058
      %v1060 = vpop.f32.mrf.mxu0
      %1061 = vdwg.mxu0
      %1064 = vrot.lane.b32.xlu0 %v1056, 16
      %v1065 = vpop.permute.xlu0 %1064
      %1066 = vrot.lane.b32.xlu0 %v1059, 16
      %v1067 = vpop.permute.xlu0 %1066
      %v1070 = vsel %vm408, %v931, %v1065
      %v1071 = vsel %vm408, %v934, %v1067
      %v1072 = vpack.c.bf16 %v1071, %v1070
      %v1074 = vsel %vm301, %v1072, 0
      %1076 = vmatprep.subr.bf16.mxu0 0
      %1077 = vmatpush1.bf16.msra.mxu0 0
      %1078 = vmatprep.subr.bf16.mxu0 0
      %1079 = vmatpush1.bf16.msra.mxu0 0
      %1080 = vmatprep.subr.bf16.mxu0 0
      %1081 = vmatpush1.bf16.msra.mxu0 0
      %1082 = vmatprep.subr.bf16.mxu0 0
      %1083 = vmatpush1.bf16.msra.mxu0 0
      %1084 = vmatprep.subr.bf16.mxu0 0
      %1085 = vmatpush1.bf16.msra.mxu0 0
      %1086 = vmatprep.subr.bf16.mxu0 0
      %1087 = vmatpush1.bf16.msra.mxu0 0
      %1088 = vmatprep.subr.bf16.mxu0 0
      %1089 = vmatpush1.bf16.msra.mxu0 %v681
      %1090 = vmatprep.subr.bf16.mxu0 0
      %1091 = vmatpush1.bf16.msra.mxu0 %v680
      %1092 = vmatprep.subr.bf16.mxu0 0
      %1093 = vmatpush2.bf16.msra.mxu0 0
      %1094 = vmatprep.subr.bf16.mxu0 0
      %1095 = vmatpush2.bf16.msra.mxu0 0
      %1096 = vmatprep.subr.bf16.mxu0 0
      %1097 = vmatpush2.bf16.msra.mxu0 0
      %1098 = vmatprep.subr.bf16.mxu0 0
      %1099 = vmatpush2.bf16.msra.mxu0 0
      %1100 = vmatprep.subr.bf16.mxu0 0
      %1101 = vmatpush2.bf16.msra.mxu0 0
      %1102 = vmatprep.subr.bf16.mxu0 0
      %1103 = vmatpush2.bf16.msra.mxu0 0
      %1104 = vmatprep.subr.bf16.mxu0 0
      %1105 = vmatpush2.bf16.msra.mxu0 0
      %1106 = vmatprep.subr.bf16.mxu0 0
      %1107 = vmatpush2.bf16.msra.mxu0 0
      %1108 = vmatprep.mubr.bf16.mxu0 0
      %1109 = vmatmul.mubr.bf16.gmra.mxu0 %v1074
      %v1110 = vpop.f32.mrf.mxu0
      %v1111 = vadd.f32 %v670, %v1110
      %v1112 = vpop.f32.mrf.mxu0
      %v1113 = vpop.f32.mrf.mxu0
      %v1114 = vadd.f32 %v670, %v1113
      %v1115 = vpop.f32.mrf.mxu0
      %1116 = vdwg.mxu0
      %v1117 = vadd.f32 %v1111, %v733
      %v1118 = vadd.f32 %v1114, %v734
      %s1119 = scalar_lea.vmem %s285, 16
      %1120 = vst.msk [vmem:[%s1119] sm:$0xff] %vm301, %v1117
      %1121 = vst.msk [vmem:[%s1119 + $0x8] sm:$0xff] %vm301, %v1118
      %s1122 = scalar_lea.vmem %s278, 32
      %v1123 = vld [vmem:[%s1122] sm:$0xff]
      %v1124 = vld [vmem:[%s1122 + $0x8] sm:$0xff]
      %v1125 = vsel %vm301, %v1123, 0.0
      %1126 = vadd.xlane.f32.xlu0 %v1125
      %v1127 = vpop.xlane.xlu0 %1126
      %v1128 = vsel %vm301, %v1124, 0.0
      %1129 = vadd.xlane.f32.xlu0 %v1128
      %v1130 = vpop.xlane.xlu0 %1129
      %v1131 = vmul.f32 %v1127, %v308
      %v1132 = vmul.f32 %v1130, %v308
      %v1133 = vsub.f32 %v1123, %v1131
      %v1134 = vsub.f32 %v1124, %v1132
      %v1135 = vmul.f32 %v1133, %v1133
      %v1136 = vmul.f32 %v1134, %v1134
      %v1137 = vsel %vm301, %v1135, 0.0
      %1138 = vadd.xlane.f32.xlu0 %v1137
      %v1139 = vpop.xlane.xlu0 %1138
      %v1140 = vsel %vm301, %v1136, 0.0
      %1141 = vadd.xlane.f32.xlu0 %v1140
      %v1142 = vpop.xlane.xlu0 %1141
      %v1143 = vmul.f32 %v1139, %v308
      %v1144 = vmul.f32 %v1142, %v308
      %v1145 = vadd.f32 %v1143, 1e-05
      %v1146 = vadd.f32 %v1144, 1e-05
      %v1147 = vrsqrt.pop %v1145
      %v1148 = vrsqrt.pop %v1146
      %v1149 = vmul.f32 %v1133, %v1147
      %v1150 = vmul.f32 %v1134, %v1148
      %v1151 = vmul.f32 %v1149, %v333
      %v1152 = vmul.f32 %v1150, %v333
      %v1153 = vadd.f32 %v1151, %v341
      %v1154 = vadd.f32 %v1152, %v341
      %v1155 = vpack.c.bf16 %v1154, %v1153
      %v1157 = vsel %vm301, %v1155, 0
      %1159 = vmatprep.subr.bf16.mxu0 0
      %1160 = vmatpush1.bf16.msra.mxu0 0
      %1161 = vmatprep.subr.bf16.mxu0 0
      %1162 = vmatpush1.bf16.msra.mxu0 0
      %1163 = vmatprep.subr.bf16.mxu0 0
      %1164 = vmatpush1.bf16.msra.mxu0 0
      %1165 = vmatprep.subr.bf16.mxu0 0
      %1166 = vmatpush1.bf16.msra.mxu0 0
      %1167 = vmatprep.subr.bf16.mxu0 0
      %1168 = vmatpush1.bf16.msra.mxu0 0
      %1169 = vmatprep.subr.bf16.mxu0 0
      %1170 = vmatpush1.bf16.msra.mxu0 0
      %1171 = vmatprep.subr.bf16.mxu0 0
      %1172 = vmatpush1.bf16.msra.mxu0 %v355
      %1173 = vmatprep.subr.bf16.mxu0 0
      %1174 = vmatpush1.bf16.msra.mxu0 %v354
      %1175 = vmatprep.subr.bf16.mxu0 0
      %1176 = vmatpush2.bf16.msra.mxu0 0
      %1177 = vmatprep.subr.bf16.mxu0 0
      %1178 = vmatpush2.bf16.msra.mxu0 0
      %1179 = vmatprep.subr.bf16.mxu0 0
      %1180 = vmatpush2.bf16.msra.mxu0 0
      %1181 = vmatprep.subr.bf16.mxu0 0
      %1182 = vmatpush2.bf16.msra.mxu0 0
      %1183 = vmatprep.subr.bf16.mxu0 0
      %1184 = vmatpush2.bf16.msra.mxu0 0
      %1185 = vmatprep.subr.bf16.mxu0 0
      %1186 = vmatpush2.bf16.msra.mxu0 0
      %1187 = vmatprep.subr.bf16.mxu0 0
      %1188 = vmatpush2.bf16.msra.mxu0 0
      %1189 = vmatprep.subr.bf16.mxu0 0
      %1190 = vmatpush2.bf16.msra.mxu0 0
      %1191 = vmatprep.mubr.bf16.mxu0 0
      %1192 = vmatmul.mubr.bf16.gmra.mxu0 %v1157
      %v1193 = vpop.f32.mrf.mxu0
      %v1194 = vadd.f32 0.0, %v1193
      %v1195 = vpop.f32.mrf.mxu0
      %v1196 = vpop.f32.mrf.mxu0
      %v1197 = vadd.f32 0.0, %v1196
      %v1198 = vpop.f32.mrf.mxu0
      %1199 = vdwg.mxu0
      %v1200 = vld [vmem:[%s6] sm:$0xff]
      %v1201 = vld [vmem:[%s6 + $0x8] sm:$0xff]
      %v1202 = vpack.c.bf16 %v1197, %v1194
      %1204 = vrot.lane.b32.xlu0 %v1202, 96
      %v1205 = vpop.permute.xlu0 %1204
      %v1207 = vsel %vm408, %v1202, 0
      %v1210 = vsel %vm408, %v1205, 0
      %1212 = vmatprep.subr.bf16.mxu0 0
      %1213 = vmatpush1.bf16.xpose.msra.mxu0 0
      %1214 = vmatprep.subr.bf16.mxu0 0
      %1215 = vmatpush1.bf16.xpose.msra.mxu0 0
      %1216 = vmatprep.subr.bf16.mxu0 0
      %1217 = vmatpush1.bf16.xpose.msra.mxu0 0
      %1218 = vmatprep.subr.bf16.mxu0 0
      %1219 = vmatpush1.bf16.xpose.msra.mxu0 0
      %1220 = vmatprep.subr.bf16.mxu0 0
      %1221 = vmatpush1.bf16.xpose.msra.mxu0 0
      %1222 = vmatprep.subr.bf16.mxu0 0
      %1223 = vmatpush1.bf16.xpose.msra.mxu0 0
      %1224 = vmatprep.subr.bf16.mxu0 0
      %1225 = vmatpush1.bf16.xpose.msra.mxu0 0
      %1226 = vmatprep.subr.bf16.mxu0 0
      %1227 = vmatpush1.bf16.xpose.msra.mxu0 %v1210
      %1228 = vmatprep.subr.bf16.mxu0 0
      %1229 = vmatpush2.bf16.xpose.msra.mxu0 0
      %1230 = vmatprep.subr.bf16.mxu0 0
      %1231 = vmatpush2.bf16.xpose.msra.mxu0 0
      %1232 = vmatprep.subr.bf16.mxu0 0
      %1233 = vmatpush2.bf16.xpose.msra.mxu0 0
      %1234 = vmatprep.subr.bf16.mxu0 0
      %1235 = vmatpush2.bf16.xpose.msra.mxu0 0
      %1236 = vmatprep.subr.bf16.mxu0 0
      %1237 = vmatpush2.bf16.xpose.msra.mxu0 0
      %1238 = vmatprep.subr.bf16.mxu0 0
      %1239 = vmatpush2.bf16.xpose.msra.mxu0 0
      %1240 = vmatprep.subr.bf16.mxu0 0
      %1241 = vmatpush2.bf16.xpose.msra.mxu0 0
      %1242 = vmatprep.subr.bf16.mxu0 0
      %1243 = vmatpush2.bf16.xpose.msra.mxu0 0
      %1244 = vmatprep.mubr.bf16.mxu0 0
      %1245 = vmatmul.mubr.bf16.gmra.mxu0 %v1207
      %v1246 = vpop.f32.mrf.mxu0
      %v1247 = vadd.f32 0.0, %v1246
      %v1248 = vpop.f32.mrf.mxu0
      %v1249 = vpop.f32.mrf.mxu0
      %v1250 = vadd.f32 0.0, %v1249
      %v1251 = vpop.f32.mrf.mxu0
      %1252 = vdwg.mxu0
      %v1253 = vmul.f32 %v1247, 0.25
      %v1254 = vmul.f32 %v1250, 0.25
      %v1255 = vadd.f32 %v1253, %v1200
      %v1256 = vadd.f32 %v1254, %v1201
      %v1257 = vsel %vm408, %v1255, -inf
      %1258 = vmax.xlane.f32.xlu0 %v1257
      %v1259 = vpop.xlane.xlu0 %1258
      %v1260 = vsel %vm408, %v1256, -inf
      %1261 = vmax.xlane.f32.xlu0 %v1260
      %v1262 = vpop.xlane.xlu0 %1261
      %v1263 = vsub.f32 %v1255, %v1259
      %v1264 = vsub.f32 %v1256, %v1262
      %v1265 = vmul.f32 %v1263, 1.442695
      %v1266 = vpow.pop %v1265
      %v1267 = vmul.f32 %v1264, 1.442695
      %v1268 = vpow.pop %v1267
      %v1269 = vsel %vm408, %v1266, 0.0
      %1270 = vadd.xlane.f32.xlu0 %v1269
      %v1271 = vpop.xlane.xlu0 %1270
      %v1272 = vsel %vm408, %v1268, 0.0
      %1273 = vadd.xlane.f32.xlu0 %v1272
      %v1274 = vpop.xlane.xlu0 %1273
      %v1275 = vrcp.pop %v1271
      %v1276 = vrcp.pop %v1274
      %v1277 = vmul.f32 %v1266, %v1275
      %v1278 = vmul.f32 %v1268, %v1276
      %v1279 = vpack.c.bf16 %v1278, %v1277
      %1280 = vrot.lane.b32.xlu0 %v1202, 64
      %v1281 = vpop.permute.xlu0 %1280
      %v1284 = vsel %vm408, %v1279, 0
      %1286 = vmatprep.subr.bf16.mxu0 0
      %1287 = vmatpush1.bf16.msra.mxu0 0
      %1288 = vmatprep.subr.bf16.mxu0 0
      %1289 = vmatpush1.bf16.msra.mxu0 0
      %1290 = vmatprep.subr.bf16.mxu0 0
      %1291 = vmatpush1.bf16.msra.mxu0 0
      %1292 = vmatprep.subr.bf16.mxu0 0
      %1293 = vmatpush1.bf16.msra.mxu0 0
      %1294 = vmatprep.subr.bf16.mxu0 0
      %1295 = vmatpush1.bf16.msra.mxu0 0
      %1296 = vmatprep.subr.bf16.mxu0 0
      %1297 = vmatpush1.bf16.msra.mxu0 0
      %1298 = vmatprep.subr.bf16.mxu0 0
      %1299 = vmatpush1.bf16.msra.mxu0 0
      %1300 = vmatprep.subr.bf16.mxu0 0
      %1301 = vmatpush1.bf16.msra.mxu0 %v1281
      %1302 = vmatprep.subr.bf16.mxu0 0
      %1303 = vmatpush2.bf16.msra.mxu0 0
      %1304 = vmatprep.subr.bf16.mxu0 0
      %1305 = vmatpush2.bf16.msra.mxu0 0
      %1306 = vmatprep.subr.bf16.mxu0 0
      %1307 = vmatpush2.bf16.msra.mxu0 0
      %1308 = vmatprep.subr.bf16.mxu0 0
      %1309 = vmatpush2.bf16.msra.mxu0 0
      %1310 = vmatprep.subr.bf16.mxu0 0
      %1311 = vmatpush2.bf16.msra.mxu0 0
      %1312 = vmatprep.subr.bf16.mxu0 0
      %1313 = vmatpush2.bf16.msra.mxu0 0
      %1314 = vmatprep.subr.bf16.mxu0 0
      %1315 = vmatpush2.bf16.msra.mxu0 0
      %1316 = vmatprep.subr.bf16.mxu0 0
      %1317 = vmatpush2.bf16.msra.mxu0 0
      %1318 = vmatprep.mubr.bf16.mxu0 0
      %1319 = vmatmul.mubr.bf16.gmra.mxu0 %v1284
      %v1320 = vpop.f32.mrf.mxu0
      %v1321 = vadd.f32 0.0, %v1320
      %v1322 = vpop.f32.mrf.mxu0
      %v1323 = vpop.f32.mrf.mxu0
      %v1324 = vadd.f32 0.0, %v1323
      %v1325 = vpop.f32.mrf.mxu0
      %1326 = vdwg.mxu0
      %1327 = vrot.lane.b32.xlu0 %v1202, 112
      %v1328 = vpop.permute.xlu0 %1327
      %1329 = vrot.lane.b32.xlu0 %v1202, 80
      %v1330 = vpop.permute.xlu0 %1329
      %v1332 = vsel %vm408, %v1328, 0
      %v1335 = vsel %vm408, %v1330, 0
      %1337 = vmatprep.subr.bf16.mxu0 0
      %1338 = vmatpush1.bf16.xpose.msra.mxu0 0
      %1339 = vmatprep.subr.bf16.mxu0 0
      %1340 = vmatpush1.bf16.xpose.msra.mxu0 0
      %1341 = vmatprep.subr.bf16.mxu0 0
      %1342 = vmatpush1.bf16.xpose.msra.mxu0 0
      %1343 = vmatprep.subr.bf16.mxu0 0
      %1344 = vmatpush1.bf16.xpose.msra.mxu0 0
      %1345 = vmatprep.subr.bf16.mxu0 0
      %1346 = vmatpush1.bf16.xpose.msra.mxu0 0
      %1347 = vmatprep.subr.bf16.mxu0 0
      %1348 = vmatpush1.bf16.xpose.msra.mxu0 0
      %1349 = vmatprep.subr.bf16.mxu0 0
      %1350 = vmatpush1.bf16.xpose.msra.mxu0 0
      %1351 = vmatprep.subr.bf16.mxu0 0
      %1352 = vmatpush1.bf16.xpose.msra.mxu0 %v1335
      %1353 = vmatprep.subr.bf16.mxu0 0
      %1354 = vmatpush2.bf16.xpose.msra.mxu0 0
      %1355 = vmatprep.subr.bf16.mxu0 0
      %1356 = vmatpush2.bf16.xpose.msra.mxu0 0
      %1357 = vmatprep.subr.bf16.mxu0 0
      %1358 = vmatpush2.bf16.xpose.msra.mxu0 0
      %1359 = vmatprep.subr.bf16.mxu0 0
      %1360 = vmatpush2.bf16.xpose.msra.mxu0 0
      %1361 = vmatprep.subr.bf16.mxu0 0
      %1362 = vmatpush2.bf16.xpose.msra.mxu0 0
      %1363 = vmatprep.subr.bf16.mxu0 0
      %1364 = vmatpush2.bf16.xpose.msra.mxu0 0
      %1365 = vmatprep.subr.bf16.mxu0 0
      %1366 = vmatpush2.bf16.xpose.msra.mxu0 0
      %1367 = vmatprep.subr.bf16.mxu0 0
      %1368 = vmatpush2.bf16.xpose.msra.mxu0 0
      %1369 = vmatprep.mubr.bf16.mxu0 0
      %1370 = vmatmul.mubr.bf16.gmra.mxu0 %v1332
      %v1371 = vpop.f32.mrf.mxu0
      %v1372 = vadd.f32 0.0, %v1371
      %v1373 = vpop.f32.mrf.mxu0
      %v1374 = vpop.f32.mrf.mxu0
      %v1375 = vadd.f32 0.0, %v1374
      %v1376 = vpop.f32.mrf.mxu0
      %1377 = vdwg.mxu0
      %v1378 = vmul.f32 %v1372, 0.25
      %v1379 = vmul.f32 %v1375, 0.25
      %v1380 = vadd.f32 %v1378, %v1200
      %v1381 = vadd.f32 %v1379, %v1201
      %v1382 = vsel %vm408, %v1380, -inf
      %1383 = vmax.xlane.f32.xlu0 %v1382
      %v1384 = vpop.xlane.xlu0 %1383
      %v1385 = vsel %vm408, %v1381, -inf
      %1386 = vmax.xlane.f32.xlu0 %v1385
      %v1387 = vpop.xlane.xlu0 %1386
      %v1388 = vsub.f32 %v1380, %v1384
      %v1389 = vsub.f32 %v1381, %v1387
      %v1390 = vmul.f32 %v1388, 1.442695
      %v1391 = vpow.pop %v1390
      %v1392 = vmul.f32 %v1389, 1.442695
      %v1393 = vpow.pop %v1392
      %v1394 = vsel %vm408, %v1391, 0.0
      %1395 = vadd.xlane.f32.xlu0 %v1394
      %v1396 = vpop.xlane.xlu0 %1395
      %v1397 = vsel %vm408, %v1393, 0.0
      %1398 = vadd.xlane.f32.xlu0 %v1397
      %v1399 = vpop.xlane.xlu0 %1398
      %v1400 = vrcp.pop %v1396
      %v1401 = vrcp.pop %v1399
      %v1402 = vmul.f32 %v1391, %v1400
      %v1403 = vmul.f32 %v1393, %v1401
      %v1404 = vpack.c.bf16 %v1403, %v1402
      %1405 = vrot.lane.b32.xlu0 %v1202, 48
      %v1406 = vpop.permute.xlu0 %1405
      %v1409 = vsel %vm408, %v1404, 0
      %1411 = vmatprep.subr.bf16.mxu0 0
      %1412 = vmatpush1.bf16.msra.mxu0 0
      %1413 = vmatprep.subr.bf16.mxu0 0
      %1414 = vmatpush1.bf16.msra.mxu0 0
      %1415 = vmatprep.subr.bf16.mxu0 0
      %1416 = vmatpush1.bf16.msra.mxu0 0
      %1417 = vmatprep.subr.bf16.mxu0 0
      %1418 = vmatpush1.bf16.msra.mxu0 0
      %1419 = vmatprep.subr.bf16.mxu0 0
      %1420 = vmatpush1.bf16.msra.mxu0 0
      %1421 = vmatprep.subr.bf16.mxu0 0
      %1422 = vmatpush1.bf16.msra.mxu0 0
      %1423 = vmatprep.subr.bf16.mxu0 0
      %1424 = vmatpush1.bf16.msra.mxu0 0
      %1425 = vmatprep.subr.bf16.mxu0 0
      %1426 = vmatpush1.bf16.msra.mxu0 %v1406
      %1427 = vmatprep.subr.bf16.mxu0 0
      %1428 = vmatpush2.bf16.msra.mxu0 0
      %1429 = vmatprep.subr.bf16.mxu0 0
      %1430 = vmatpush2.bf16.msra.mxu0 0
      %1431 = vmatprep.subr.bf16.mxu0 0
      %1432 = vmatpush2.bf16.msra.mxu0 0
      %1433 = vmatprep.subr.bf16.mxu0 0
      %1434 = vmatpush2.bf16.msra.mxu0 0
      %1435 = vmatprep.subr.bf16.mxu0 0
      %1436 = vmatpush2.bf16.msra.mxu0 0
      %1437 = vmatprep.subr.bf16.mxu0 0
      %1438 = vmatpush2.bf16.msra.mxu0 0
      %1439 = vmatprep.subr.bf16.mxu0 0
      %1440 = vmatpush2.bf16.msra.mxu0 0
      %1441 = vmatprep.subr.bf16.mxu0 0
      %1442 = vmatpush2.bf16.msra.mxu0 0
      %1443 = vmatprep.mubr.bf16.mxu0 0
      %1444 = vmatmul.mubr.bf16.gmra.mxu0 %v1409
      %v1445 = vpop.f32.mrf.mxu0
      %v1446 = vadd.f32 0.0, %v1445
      %v1447 = vpop.f32.mrf.mxu0
      %v1448 = vpop.f32.mrf.mxu0
      %v1449 = vadd.f32 0.0, %v1448
      %v1450 = vpop.f32.mrf.mxu0
      %1451 = vdwg.mxu0
      %1454 = vrot.lane.b32.xlu0 %v1446, 16
      %v1455 = vpop.permute.xlu0 %1454
      %1456 = vrot.lane.b32.xlu0 %v1449, 16
      %v1457 = vpop.permute.xlu0 %1456
      %v1460 = vsel %vm408, %v1321, %v1455
      %v1461 = vsel %vm408, %v1324, %v1457
      %v1462 = vpack.c.bf16 %v1461, %v1460
      %v1464 = vsel %vm301, %v1462, 0
      %1466 = vmatprep.subr.bf16.mxu0 0
      %1467 = vmatpush1.bf16.msra.mxu0 0
      %1468 = vmatprep.subr.bf16.mxu0 0
      %1469 = vmatpush1.bf16.msra.mxu0 0
      %1470 = vmatprep.subr.bf16.mxu0 0
      %1471 = vmatpush1.bf16.msra.mxu0 0
      %1472 = vmatprep.subr.bf16.mxu0 0
      %1473 = vmatpush1.bf16.msra.mxu0 0
      %1474 = vmatprep.subr.bf16.mxu0 0
      %1475 = vmatpush1.bf16.msra.mxu0 0
      %1476 = vmatprep.subr.bf16.mxu0 0
      %1477 = vmatpush1.bf16.msra.mxu0 0
      %1478 = vmatprep.subr.bf16.mxu0 0
      %1479 = vmatpush1.bf16.msra.mxu0 %v681
      %1480 = vmatprep.subr.bf16.mxu0 0
      %1481 = vmatpush1.bf16.msra.mxu0 %v680
      %1482 = vmatprep.subr.bf16.mxu0 0
      %1483 = vmatpush2.bf16.msra.mxu0 0
      %1484 = vmatprep.subr.bf16.mxu0 0
      %1485 = vmatpush2.bf16.msra.mxu0 0
      %1486 = vmatprep.subr.bf16.mxu0 0
      %1487 = vmatpush2.bf16.msra.mxu0 0
      %1488 = vmatprep.subr.bf16.mxu0 0
      %1489 = vmatpush2.bf16.msra.mxu0 0
      %1490 = vmatprep.subr.bf16.mxu0 0
      %1491 = vmatpush2.bf16.msra.mxu0 0
      %1492 = vmatprep.subr.bf16.mxu0 0
      %1493 = vmatpush2.bf16.msra.mxu0 0
      %1494 = vmatprep.subr.bf16.mxu0 0
      %1495 = vmatpush2.bf16.msra.mxu0 0
      %1496 = vmatprep.subr.bf16.mxu0 0
      %1497 = vmatpush2.bf16.msra.mxu0 0
      %1498 = vmatprep.mubr.bf16.mxu0 0
      %1499 = vmatmul.mubr.bf16.gmra.mxu0 %v1464
      %v1500 = vpop.f32.mrf.mxu0
      %v1501 = vadd.f32 %v670, %v1500
      %v1502 = vpop.f32.mrf.mxu0
      %v1503 = vpop.f32.mrf.mxu0
      %v1504 = vadd.f32 %v670, %v1503
      %v1505 = vpop.f32.mrf.mxu0
      %1506 = vdwg.mxu0
      %v1507 = vadd.f32 %v1501, %v1123
      %v1508 = vadd.f32 %v1504, %v1124
      %s1509 = scalar_lea.vmem %s285, 32
      %1510 = vst.msk [vmem:[%s1509] sm:$0xff] %vm301, %v1507
      %1511 = vst.msk [vmem:[%s1509 + $0x8] sm:$0xff] %vm301, %v1508
      %s1512 = scalar_lea.vmem %s278, 48
      %v1513 = vld [vmem:[%s1512] sm:$0xff]
      %v1514 = vld [vmem:[%s1512 + $0x8] sm:$0xff]
      %v1515 = vsel %vm301, %v1513, 0.0
      %1516 = vadd.xlane.f32.xlu0 %v1515
      %v1517 = vpop.xlane.xlu0 %1516
      %v1518 = vsel %vm301, %v1514, 0.0
      %1519 = vadd.xlane.f32.xlu0 %v1518
      %v1520 = vpop.xlane.xlu0 %1519
      %v1521 = vmul.f32 %v1517, %v308
      %v1522 = vmul.f32 %v1520, %v308
      %v1523 = vsub.f32 %v1513, %v1521
      %v1524 = vsub.f32 %v1514, %v1522
      %v1525 = vmul.f32 %v1523, %v1523
      %v1526 = vmul.f32 %v1524, %v1524
      %v1527 = vsel %vm301, %v1525, 0.0
      %1528 = vadd.xlane.f32.xlu0 %v1527
      %v1529 = vpop.xlane.xlu0 %1528
      %v1530 = vsel %vm301, %v1526, 0.0
      %1531 = vadd.xlane.f32.xlu0 %v1530
      %v1532 = vpop.xlane.xlu0 %1531
      %v1533 = vmul.f32 %v1529, %v308
      %v1534 = vmul.f32 %v1532, %v308
      %v1535 = vadd.f32 %v1533, 1e-05
      %v1536 = vadd.f32 %v1534, 1e-05
      %v1537 = vrsqrt.pop %v1535
      %v1538 = vrsqrt.pop %v1536
      %v1539 = vmul.f32 %v1523, %v1537
      %v1540 = vmul.f32 %v1524, %v1538
      %v1541 = vmul.f32 %v1539, %v333
      %v1542 = vmul.f32 %v1540, %v333
      %v1543 = vadd.f32 %v1541, %v341
      %v1544 = vadd.f32 %v1542, %v341
      %v1545 = vpack.c.bf16 %v1544, %v1543
      %v1547 = vsel %vm301, %v1545, 0
      %1549 = vmatprep.subr.bf16.mxu0 0
      %1550 = vmatpush1.bf16.msra.mxu0 0
      %1551 = vmatprep.subr.bf16.mxu0 0
      %1552 = vmatpush1.bf16.msra.mxu0 0
      %1553 = vmatprep.subr.bf16.mxu0 0
      %1554 = vmatpush1.bf16.msra.mxu0 0
      %1555 = vmatprep.subr.bf16.mxu0 0
      %1556 = vmatpush1.bf16.msra.mxu0 0
      %1557 = vmatprep.subr.bf16.mxu0 0
      %1558 = vmatpush1.bf16.msra.mxu0 0
      %1559 = vmatprep.subr.bf16.mxu0 0
      %1560 = vmatpush1.bf16.msra.mxu0 0
      %1561 = vmatprep.subr.bf16.mxu0 0
      %1562 = vmatpush1.bf16.msra.mxu0 %v355
      %1563 = vmatprep.subr.bf16.mxu0 0
      %1564 = vmatpush1.bf16.msra.mxu0 %v354
      %1565 = vmatprep.subr.bf16.mxu0 0
      %1566 = vmatpush2.bf16.msra.mxu0 0
      %1567 = vmatprep.subr.bf16.mxu0 0
      %1568 = vmatpush2.bf16.msra.mxu0 0
      %1569 = vmatprep.subr.bf16.mxu0 0
      %1570 = vmatpush2.bf16.msra.mxu0 0
      %1571 = vmatprep.subr.bf16.mxu0 0
      %1572 = vmatpush2.bf16.msra.mxu0 0
      %1573 = vmatprep.subr.bf16.mxu0 0
      %1574 = vmatpush2.bf16.msra.mxu0 0
      %1575 = vmatprep.subr.bf16.mxu0 0
      %1576 = vmatpush2.bf16.msra.mxu0 0
      %1577 = vmatprep.subr.bf16.mxu0 0
      %1578 = vmatpush2.bf16.msra.mxu0 0
      %1579 = vmatprep.subr.bf16.mxu0 0
      %1580 = vmatpush2.bf16.msra.mxu0 0
      %1581 = vmatprep.mubr.bf16.mxu0 0
      %1582 = vmatmul.mubr.bf16.gmra.mxu0 %v1547
      %v1583 = vpop.f32.mrf.mxu0
      %v1584 = vadd.f32 0.0, %v1583
      %v1585 = vpop.f32.mrf.mxu0
      %v1586 = vpop.f32.mrf.mxu0
      %v1587 = vadd.f32 0.0, %v1586
      %v1588 = vpop.f32.mrf.mxu0
      %1589 = vdwg.mxu0
      %v1590 = vld [vmem:[%s6] sm:$0xff]
      %v1591 = vld [vmem:[%s6 + $0x8] sm:$0xff]
      %v1592 = vpack.c.bf16 %v1587, %v1584
      %1594 = vrot.lane.b32.xlu0 %v1592, 96
      %v1595 = vpop.permute.xlu0 %1594
      %v1597 = vsel %vm408, %v1592, 0
      %v1600 = vsel %vm408, %v1595, 0
      %1602 = vmatprep.subr.bf16.mxu0 0
      %1603 = vmatpush1.bf16.xpose.msra.mxu0 0
      %1604 = vmatprep.subr.bf16.mxu0 0
      %1605 = vmatpush1.bf16.xpose.msra.mxu0 0
      %1606 = vmatprep.subr.bf16.mxu0 0
      %1607 = vmatpush1.bf16.xpose.msra.mxu0 0
      %1608 = vmatprep.subr.bf16.mxu0 0
      %1609 = vmatpush1.bf16.xpose.msra.mxu0 0
      %1610 = vmatprep.subr.bf16.mxu0 0
      %1611 = vmatpush1.bf16.xpose.msra.mxu0 0
      %1612 = vmatprep.subr.bf16.mxu0 0
      %1613 = vmatpush1.bf16.xpose.msra.mxu0 0
      %1614 = vmatprep.subr.bf16.mxu0 0
      %1615 = vmatpush1.bf16.xpose.msra.mxu0 0
      %1616 = vmatprep.subr.bf16.mxu0 0
      %1617 = vmatpush1.bf16.xpose.msra.mxu0 %v1600
      %1618 = vmatprep.subr.bf16.mxu0 0
      %1619 = vmatpush2.bf16.xpose.msra.mxu0 0
      %1620 = vmatprep.subr.bf16.mxu0 0
      %1621 = vmatpush2.bf16.xpose.msra.mxu0 0
      %1622 = vmatprep.subr.bf16.mxu0 0
      %1623 = vmatpush2.bf16.xpose.msra.mxu0 0
      %1624 = vmatprep.subr.bf16.mxu0 0
      %1625 = vmatpush2.bf16.xpose.msra.mxu0 0
      %1626 = vmatprep.subr.bf16.mxu0 0
      %1627 = vmatpush2.bf16.xpose.msra.mxu0 0
      %1628 = vmatprep.subr.bf16.mxu0 0
      %1629 = vmatpush2.bf16.xpose.msra.mxu0 0
      %1630 = vmatprep.subr.bf16.mxu0 0
      %1631 = vmatpush2.bf16.xpose.msra.mxu0 0
      %1632 = vmatprep.subr.bf16.mxu0 0
      %1633 = vmatpush2.bf16.xpose.msra.mxu0 0
      %1634 = vmatprep.mubr.bf16.mxu0 0
      %1635 = vmatmul.mubr.bf16.gmra.mxu0 %v1597
      %v1636 = vpop.f32.mrf.mxu0
      %v1637 = vadd.f32 0.0, %v1636
      %v1638 = vpop.f32.mrf.mxu0
      %v1639 = vpop.f32.mrf.mxu0
      %v1640 = vadd.f32 0.0, %v1639
      %v1641 = vpop.f32.mrf.mxu0
      %1642 = vdwg.mxu0
      %v1643 = vmul.f32 %v1637, 0.25
      %v1644 = vmul.f32 %v1640, 0.25
      %v1645 = vadd.f32 %v1643, %v1590
      %v1646 = vadd.f32 %v1644, %v1591
      %v1647 = vsel %vm408, %v1645, -inf
      %1648 = vmax.xlane.f32.xlu0 %v1647
      %v1649 = vpop.xlane.xlu0 %1648
      %v1650 = vsel %vm408, %v1646, -inf
      %1651 = vmax.xlane.f32.xlu0 %v1650
      %v1652 = vpop.xlane.xlu0 %1651
      %v1653 = vsub.f32 %v1645, %v1649
      %v1654 = vsub.f32 %v1646, %v1652
      %v1655 = vmul.f32 %v1653, 1.442695
      %v1656 = vpow.pop %v1655
      %v1657 = vmul.f32 %v1654, 1.442695
      %v1658 = vpow.pop %v1657
      %v1659 = vsel %vm408, %v1656, 0.0
      %1660 = vadd.xlane.f32.xlu0 %v1659
      %v1661 = vpop.xlane.xlu0 %1660
      %v1662 = vsel %vm408, %v1658, 0.0
      %1663 = vadd.xlane.f32.xlu0 %v1662
      %v1664 = vpop.xlane.xlu0 %1663
      %v1665 = vrcp.pop %v1661
      %v1666 = vrcp.pop %v1664
      %v1667 = vmul.f32 %v1656, %v1665
      %v1668 = vmul.f32 %v1658, %v1666
      %v1669 = vpack.c.bf16 %v1668, %v1667
      %1670 = vrot.lane.b32.xlu0 %v1592, 64
      %v1671 = vpop.permute.xlu0 %1670
      %v1674 = vsel %vm408, %v1669, 0
      %1676 = vmatprep.subr.bf16.mxu0 0
      %1677 = vmatpush1.bf16.msra.mxu0 0
      %1678 = vmatprep.subr.bf16.mxu0 0
      %1679 = vmatpush1.bf16.msra.mxu0 0
      %1680 = vmatprep.subr.bf16.mxu0 0
      %1681 = vmatpush1.bf16.msra.mxu0 0
      %1682 = vmatprep.subr.bf16.mxu0 0
      %1683 = vmatpush1.bf16.msra.mxu0 0
      %1684 = vmatprep.subr.bf16.mxu0 0
      %1685 = vmatpush1.bf16.msra.mxu0 0
      %1686 = vmatprep.subr.bf16.mxu0 0
      %1687 = vmatpush1.bf16.msra.mxu0 0
      %1688 = vmatprep.subr.bf16.mxu0 0
      %1689 = vmatpush1.bf16.msra.mxu0 0
      %1690 = vmatprep.subr.bf16.mxu0 0
      %1691 = vmatpush1.bf16.msra.mxu0 %v1671
      %1692 = vmatprep.subr.bf16.mxu0 0
      %1693 = vmatpush2.bf16.msra.mxu0 0
      %1694 = vmatprep.subr.bf16.mxu0 0
      %1695 = vmatpush2.bf16.msra.mxu0 0
      %1696 = vmatprep.subr.bf16.mxu0 0
      %1697 = vmatpush2.bf16.msra.mxu0 0
      %1698 = vmatprep.subr.bf16.mxu0 0
      %1699 = vmatpush2.bf16.msra.mxu0 0
      %1700 = vmatprep.subr.bf16.mxu0 0
      %1701 = vmatpush2.bf16.msra.mxu0 0
      %1702 = vmatprep.subr.bf16.mxu0 0
      %1703 = vmatpush2.bf16.msra.mxu0 0
      %1704 = vmatprep.subr.bf16.mxu0 0
      %1705 = vmatpush2.bf16.msra.mxu0 0
      %1706 = vmatprep.subr.bf16.mxu0 0
      %1707 = vmatpush2.bf16.msra.mxu0 0
      %1708 = vmatprep.mubr.bf16.mxu0 0
      %1709 = vmatmul.mubr.bf16.gmra.mxu0 %v1674
      %v1710 = vpop.f32.mrf.mxu0
      %v1711 = vadd.f32 0.0, %v1710
      %v1712 = vpop.f32.mrf.mxu0
      %v1713 = vpop.f32.mrf.mxu0
      %v1714 = vadd.f32 0.0, %v1713
      %v1715 = vpop.f32.mrf.mxu0
      %1716 = vdwg.mxu0
      %1717 = vrot.lane.b32.xlu0 %v1592, 112
      %v1718 = vpop.permute.xlu0 %1717
      %1719 = vrot.lane.b32.xlu0 %v1592, 80
      %v1720 = vpop.permute.xlu0 %1719
      %v1722 = vsel %vm408, %v1718, 0
      %v1725 = vsel %vm408, %v1720, 0
      %1727 = vmatprep.subr.bf16.mxu0 0
      %1728 = vmatpush1.bf16.xpose.msra.mxu0 0
      %1729 = vmatprep.subr.bf16.mxu0 0
      %1730 = vmatpush1.bf16.xpose.msra.mxu0 0
      %1731 = vmatprep.subr.bf16.mxu0 0
      %1732 = vmatpush1.bf16.xpose.msra.mxu0 0
      %1733 = vmatprep.subr.bf16.mxu0 0
      %1734 = vmatpush1.bf16.xpose.msra.mxu0 0
      %1735 = vmatprep.subr.bf16.mxu0 0
      %1736 = vmatpush1.bf16.xpose.msra.mxu0 0
      %1737 = vmatprep.subr.bf16.mxu0 0
      %1738 = vmatpush1.bf16.xpose.msra.mxu0 0
      %1739 = vmatprep.subr.bf16.mxu0 0
      %1740 = vmatpush1.bf16.xpose.msra.mxu0 0
      %1741 = vmatprep.subr.bf16.mxu0 0
      %1742 = vmatpush1.bf16.xpose.msra.mxu0 %v1725
      %1743 = vmatprep.subr.bf16.mxu0 0
      %1744 = vmatpush2.bf16.xpose.msra.mxu0 0
      %1745 = vmatprep.subr.bf16.mxu0 0
      %1746 = vmatpush2.bf16.xpose.msra.mxu0 0
      %1747 = vmatprep.subr.bf16.mxu0 0
      %1748 = vmatpush2.bf16.xpose.msra.mxu0 0
      %1749 = vmatprep.subr.bf16.mxu0 0
      %1750 = vmatpush2.bf16.xpose.msra.mxu0 0
      %1751 = vmatprep.subr.bf16.mxu0 0
      %1752 = vmatpush2.bf16.xpose.msra.mxu0 0
      %1753 = vmatprep.subr.bf16.mxu0 0
      %1754 = vmatpush2.bf16.xpose.msra.mxu0 0
      %1755 = vmatprep.subr.bf16.mxu0 0
      %1756 = vmatpush2.bf16.xpose.msra.mxu0 0
      %1757 = vmatprep.subr.bf16.mxu0 0
      %1758 = vmatpush2.bf16.xpose.msra.mxu0 0
      %1759 = vmatprep.mubr.bf16.mxu0 0
      %1760 = vmatmul.mubr.bf16.gmra.mxu0 %v1722
      %v1761 = vpop.f32.mrf.mxu0
      %v1762 = vadd.f32 0.0, %v1761
      %v1763 = vpop.f32.mrf.mxu0
      %v1764 = vpop.f32.mrf.mxu0
      %v1765 = vadd.f32 0.0, %v1764
      %v1766 = vpop.f32.mrf.mxu0
      %1767 = vdwg.mxu0
      %v1768 = vmul.f32 %v1762, 0.25
      %v1769 = vmul.f32 %v1765, 0.25
      %v1770 = vadd.f32 %v1768, %v1590
      %v1771 = vadd.f32 %v1769, %v1591
      %v1772 = vsel %vm408, %v1770, -inf
      %1773 = vmax.xlane.f32.xlu0 %v1772
      %v1774 = vpop.xlane.xlu0 %1773
      %v1775 = vsel %vm408, %v1771, -inf
      %1776 = vmax.xlane.f32.xlu0 %v1775
      %v1777 = vpop.xlane.xlu0 %1776
      %v1778 = vsub.f32 %v1770, %v1774
      %v1779 = vsub.f32 %v1771, %v1777
      %v1780 = vmul.f32 %v1778, 1.442695
      %v1781 = vpow.pop %v1780
      %v1782 = vmul.f32 %v1779, 1.442695
      %v1783 = vpow.pop %v1782
      %v1784 = vsel %vm408, %v1781, 0.0
      %1785 = vadd.xlane.f32.xlu0 %v1784
      %v1786 = vpop.xlane.xlu0 %1785
      %v1787 = vsel %vm408, %v1783, 0.0
      %1788 = vadd.xlane.f32.xlu0 %v1787
      %v1789 = vpop.xlane.xlu0 %1788
      %v1790 = vrcp.pop %v1786
      %v1791 = vrcp.pop %v1789
      %v1792 = vmul.f32 %v1781, %v1790
      %v1793 = vmul.f32 %v1783, %v1791
      %v1794 = vpack.c.bf16 %v1793, %v1792
      %1795 = vrot.lane.b32.xlu0 %v1592, 48
      %v1796 = vpop.permute.xlu0 %1795
      %v1799 = vsel %vm408, %v1794, 0
      %1801 = vmatprep.subr.bf16.mxu0 0
      %1802 = vmatpush1.bf16.msra.mxu0 0
      %1803 = vmatprep.subr.bf16.mxu0 0
      %1804 = vmatpush1.bf16.msra.mxu0 0
      %1805 = vmatprep.subr.bf16.mxu0 0
      %1806 = vmatpush1.bf16.msra.mxu0 0
      %1807 = vmatprep.subr.bf16.mxu0 0
      %1808 = vmatpush1.bf16.msra.mxu0 0
      %1809 = vmatprep.subr.bf16.mxu0 0
      %1810 = vmatpush1.bf16.msra.mxu0 0
      %1811 = vmatprep.subr.bf16.mxu0 0
      %1812 = vmatpush1.bf16.msra.mxu0 0
      %1813 = vmatprep.subr.bf16.mxu0 0
      %1814 = vmatpush1.bf16.msra.mxu0 0
      %1815 = vmatprep.subr.bf16.mxu0 0
      %1816 = vmatpush1.bf16.msra.mxu0 %v1796
      %1817 = vmatprep.subr.bf16.mxu0 0
      %1818 = vmatpush2.bf16.msra.mxu0 0
      %1819 = vmatprep.subr.bf16.mxu0 0
      %1820 = vmatpush2.bf16.msra.mxu0 0
      %1821 = vmatprep.subr.bf16.mxu0 0
      %1822 = vmatpush2.bf16.msra.mxu0 0
      %1823 = vmatprep.subr.bf16.mxu0 0
      %1824 = vmatpush2.bf16.msra.mxu0 0
      %1825 = vmatprep.subr.bf16.mxu0 0
      %1826 = vmatpush2.bf16.msra.mxu0 0
      %1827 = vmatprep.subr.bf16.mxu0 0
      %1828 = vmatpush2.bf16.msra.mxu0 0
      %1829 = vmatprep.subr.bf16.mxu0 0
      %1830 = vmatpush2.bf16.msra.mxu0 0
      %1831 = vmatprep.subr.bf16.mxu0 0
      %1832 = vmatpush2.bf16.msra.mxu0 0
      %1833 = vmatprep.mubr.bf16.mxu0 0
      %1834 = vmatmul.mubr.bf16.gmra.mxu0 %v1799
      %v1835 = vpop.f32.mrf.mxu0
      %v1836 = vadd.f32 0.0, %v1835
      %v1837 = vpop.f32.mrf.mxu0
      %v1838 = vpop.f32.mrf.mxu0
      %v1839 = vadd.f32 0.0, %v1838
      %v1840 = vpop.f32.mrf.mxu0
      %1841 = vdwg.mxu0
      %1844 = vrot.lane.b32.xlu0 %v1836, 16
      %v1845 = vpop.permute.xlu0 %1844
      %1846 = vrot.lane.b32.xlu0 %v1839, 16
      %v1847 = vpop.permute.xlu0 %1846
      %v1850 = vsel %vm408, %v1711, %v1845
      %v1851 = vsel %vm408, %v1714, %v1847
      %v1852 = vpack.c.bf16 %v1851, %v1850
      %v1854 = vsel %vm301, %v1852, 0
      %1856 = vmatprep.subr.bf16.mxu0 0
      %1857 = vmatpush1.bf16.msra.mxu0 0
      %1858 = vmatprep.subr.bf16.mxu0 0
      %1859 = vmatpush1.bf16.msra.mxu0 0
      %1860 = vmatprep.subr.bf16.mxu0 0
      %1861 = vmatpush1.bf16.msra.mxu0 0
      %1862 = vmatprep.subr.bf16.mxu0 0
      %1863 = vmatpush1.bf16.msra.mxu0 0
      %1864 = vmatprep.subr.bf16.mxu0 0
      %1865 = vmatpush1.bf16.msra.mxu0 0
      %1866 = vmatprep.subr.bf16.mxu0 0
      %1867 = vmatpush1.bf16.msra.mxu0 0
      %1868 = vmatprep.subr.bf16.mxu0 0
      %1869 = vmatpush1.bf16.msra.mxu0 %v681
      %1870 = vmatprep.subr.bf16.mxu0 0
      %1871 = vmatpush1.bf16.msra.mxu0 %v680
      %1872 = vmatprep.subr.bf16.mxu0 0
      %1873 = vmatpush2.bf16.msra.mxu0 0
      %1874 = vmatprep.subr.bf16.mxu0 0
      %1875 = vmatpush2.bf16.msra.mxu0 0
      %1876 = vmatprep.subr.bf16.mxu0 0
      %1877 = vmatpush2.bf16.msra.mxu0 0
      %1878 = vmatprep.subr.bf16.mxu0 0
      %1879 = vmatpush2.bf16.msra.mxu0 0
      %1880 = vmatprep.subr.bf16.mxu0 0
      %1881 = vmatpush2.bf16.msra.mxu0 0
      %1882 = vmatprep.subr.bf16.mxu0 0
      %1883 = vmatpush2.bf16.msra.mxu0 0
      %1884 = vmatprep.subr.bf16.mxu0 0
      %1885 = vmatpush2.bf16.msra.mxu0 0
      %1886 = vmatprep.subr.bf16.mxu0 0
      %1887 = vmatpush2.bf16.msra.mxu0 0
      %1888 = vmatprep.mubr.bf16.mxu0 0
      %1889 = vmatmul.mubr.bf16.gmra.mxu0 %v1854
      %v1890 = vpop.f32.mrf.mxu0
      %v1891 = vadd.f32 %v670, %v1890
      %v1892 = vpop.f32.mrf.mxu0
      %v1893 = vpop.f32.mrf.mxu0
      %v1894 = vadd.f32 %v670, %v1893
      %v1895 = vpop.f32.mrf.mxu0
      %1896 = vdwg.mxu0
      %v1897 = vadd.f32 %v1891, %v1513
      %v1898 = vadd.f32 %v1894, %v1514
      %s1899 = scalar_lea.vmem %s285, 48
      %1900 = vst.msk [vmem:[%s1899] sm:$0xff] %vm301, %v1897
      %1901 = vst.msk [vmem:[%s1899 + $0x8] sm:$0xff] %vm301, %v1898
      %s1902 = smul.u32 4, %s18
      %p1903 = scmp.lt.s32.totalorder %s1902, 7
      %s1904 = scalar_select %p1903, %s1902, 7
      %s1905 = smul.addr %s1904, 2
      %s1906 = smul.addr %s1905, 8
      %s1907 = scalar_lea.vmem %s7, %s1906
      // Predicated region
      $region49: #{_lambda_.6} parent=47 // pred_check
        %p1908 = pneg %p188
      $region50: #{_lambda_.6} parent=47 // pred_check_branch
        %1910 = sbr.rel (%p1908) target = $region52
      $region51: #{_lambda_.6} parent=47 // pred_region
        %s1911 = smul.u32 4, %s18
      $region52: #{_lambda_.6} parent=47 // pred_fallthru
        _
    $region48: #{_lambda_.6} parent=5 // pred_fallthru
      _
    %p1912 = scmp.le.s32.totalorder 2, %s13
    // Predicated region
    $region53: #{_lambda_.6} parent=5 // pred_check
      %p1913 = pneg %p1912
    $region54: #{_lambda_.6} parent=5 // pred_check_branch
      %1915 = sbr.rel (%p1913) target = $region56
    $region55: #{_lambda_.6} parent=5 // pred_region
      %s1916 = ssub.s32 %s13, 2
      // Predicated region
      $region57: #{_lambda_.6} parent=55 // pred_check
        %p1917 = pneg %p194
      $region58: #{_lambda_.6} parent=55 // pred_check_branch
        %1919 = sbr.rel (%p1917) target = $region60
      $region59: #{_lambda_.6} parent=55 // pred_region
        %s1920 = smul.u32 4, %s19
        %p1921 = scmp.lt.s32.totalorder %s1920, 7
        %s1922 = scalar_select %p1921, %s1920, 7
        %s1923 = smul.addr %s1922, 2
        %s1924 = smul.addr %s1923, 8
        %s1925 = scalar_lea.vmem %s7, %s1924
      $region60: #{_lambda_.6} parent=55 // pred_fallthru
        _
    $region56: #{_lambda_.6} parent=5 // pred_fallthru
      _
  $region6: #{_lambda_.6} parent=0 // loop_footer
    %s17 = sadd.s32 1, %s13
  $region7: #{_lambda_.6} parent=0 // loop_footer_branch
    %12 = sbr.rel target = $region3
  $region8: #{_lambda_.6} parent=0 // loop_exit
    _

// kernel: _lambda_.9
$region0: #{_lambda_.9}
  #allocation0 [shape = 'u32[]', space=smem, size = 0x4, offset = 0x4, fixed_abs, tag = 'smem constant byte address 0x4 - core index']
  #allocation1 [shape = 'u32[144,128]{1,0:T(1,128)}', space=vmem, size = 0x12000, scoped, tag = 'internal scratch']
  %s0 = inlined_call_operand.vmem [shape: f32[128,32], index: 0, kind: input, shape index: {}]
  %s1 = inlined_call_operand.vmem [shape: f32[1,32], index: 1, kind: input, shape index: {}]
  %s2 = inlined_call_operand.vmem [shape: f32[1,32], index: 2, kind: input, shape index: {}]
  %s3 = inlined_call_operand.vmem [shape: bf16[32,128], index: 3, kind: input, shape index: {}]
  %s4 = inlined_call_operand.vmem [shape: f32[1,128], index: 4, kind: input, shape index: {}]
  %s5 = inlined_call_operand.vmem [shape: bf16[128,32], index: 5, kind: input, shape index: {}]
  %s6 = inlined_call_operand.vmem [shape: f32[1,32], index: 6, kind: input, shape index: {}]
  %s7 = inlined_call_operand.hbm [shape: f32[128,32], index: 7, kind: output, shape index: {}]
  %s8 = sld [smem:[#allocation0]]
  $region61: #{_lambda_.9} parent=0
    _
  %s10 = ssub.s32 1, %s8
  %s11 = scalar_select 0, %s10, %s8
  $region1: #{_lambda_.9} parent=0
    #allocation2 [shape = 'u8[65536]{0}', space=vmem, size = 0x10000, scoped, tag = 'output window, operand 0']
    #allocation3 [shape = 's32[2]{0}', space=sflag, size = 0x8, scoped, tag = 'scoped memory for _lambda_.9']
    %12 = vsyncpa [#allocation3], 0
    %s13 = scalar_lea.sflag [#allocation3], 1
    %14 = vsyncpa %s13, 0
    loop: start=0, step=1, limit=4
    $region2: #{_lambda_.9} parent=1 // loop_pre_header
      _
    $region3: #{_lambda_.9} parent=1 // loop_header
      %s16 = sphi 0, %s20
      %p17 = scmp.ge.s32.totalorder %s16, 4
      %s26 = sphi 0, %s28
      %s29 = sphi 0, %s26
      %s30 = sphi 0, %s29
      %s46 = sphi 0, %s30
      %s50 = sphi 0, %s50
      %s52 = sphi 0, %s50
      %s53 = sphi 0, %s52
      %s67 = sphi 0, %s53
      %s71 = sphi 0, %s71
      %s73 = sphi 0, %s71
      %s74 = sphi 0, %s73
      %s88 = sphi 0, %s74
      %s92 = sphi 0, %s92
      %s94 = sphi 0, %s92
      %s95 = sphi 0, %s94
      %s109 = sphi 0, %s95
      %s113 = sphi 0, %s113
      %s115 = sphi 0, %s113
      %s116 = sphi 0, %s115
      %s130 = sphi 0, %s116
      %s134 = sphi 0, %s134
      %s136 = sphi 0, %s134
      %s137 = sphi 0, %s136
      %s151 = sphi 0, %s137
      %s155 = sphi 0, %s155
      %s157 = sphi 0, %s155
      %s158 = sphi 0, %s157
      %s172 = sphi 0, %s158
      %s178 = sphi 0, %s180
      %s181 = sphi 0, %s178
      %s182 = sphi 0, %s181
      %s198 = sphi 0, %s182
    $region4: #{_lambda_.9} parent=1 // loop_header_branch
      %19 = sbr.rel (%p17) target = $region8
    $region5: #{_lambda_.9} parent=1 // loop_body
      %s21 = ssub.s32 %s16, 1
      %s22 = ssub.s32 %s16, 2
      %s23 = sadd.s32 %s16, 1
      %s24 = ssub.s32 %s16, %s23
      %p25 = scmp.eq.s32.totalorder %s24, 0
      %s27 = sadd.s32 %s26, 1
      %s28 = scalar_select %p25, %s26, %s27
      %p31 = pneg %p25
      %p32 = scmp.eq.s32.totalorder %s16, 1
      %p33 = por %p31, %p32
      %p34 = scmp.ne.s32.totalorder %s26, %s29
      %p35 = scmp.eq.s32.totalorder %s16, 0
      %p36 = por %p34, %p35
      %p37 = scmp.ne.s32.totalorder %s26, %s29
      %p38 = scmp.eq.s32.totalorder %s21, 1
      %p39 = por %p37, %p38
      %p40 = scmp.ne.s32.totalorder %s29, %s30
      %p41 = scmp.eq.s32.totalorder %s21, 0
      %p42 = por %p40, %p41
      %p43 = scmp.ne.s32.totalorder %s29, %s30
      %p44 = scmp.eq.s32.totalorder %s22, 1
      %p45 = por %p43, %p44
      %p47 = scmp.ne.s32.totalorder %s30, %s46
      %p48 = scmp.eq.s32.totalorder %s22, 0
      %p49 = por %p47, %p48
      %s51 = sadd.s32 %s50, 1
      %p54 = scmp.eq.s32.totalorder %s16, 1
      %p55 = scmp.ne.s32.totalorder %s50, %s52
      %p56 = scmp.eq.s32.totalorder %s16, 0
      %p57 = por %p55, %p56
      %p58 = scmp.ne.s32.totalorder %s50, %s52
      %p59 = scmp.eq.s32.totalorder %s21, 1
      %p60 = por %p58, %p59
      %p61 = scmp.ne.s32.totalorder %s52, %s53
      %p62 = scmp.eq.s32.totalorder %s21, 0
      %p63 = por %p61, %p62
      %p64 = scmp.ne.s32.totalorder %s52, %s53
      %p65 = scmp.eq.s32.totalorder %s22, 1
      %p66 = por %p64, %p65
      %p68 = scmp.ne.s32.totalorder %s53, %s67
      %p69 = scmp.eq.s32.totalorder %s22, 0
      %p70 = por %p68, %p69
      %s72 = sadd.s32 %s71, 1
      %p75 = scmp.eq.s32.totalorder %s16, 1
      %p76 = scmp.ne.s32.totalorder %s71, %s73
      %p77 = scmp.eq.s32.totalorder %s16, 0
      %p78 = por %p76, %p77
      %p79 = scmp.ne.s32.totalorder %s71, %s73
      %p80 = scmp.eq.s32.totalorder %s21, 1
      %p81 = por %p79, %p80
      %p82 = scmp.ne.s32.totalorder %s73, %s74
      %p83 = scmp.eq.s32.totalorder %s21, 0
      %p84 = por %p82, %p83
      %p85 = scmp.ne.s32.totalorder %s73, %s74
      %p86 = scmp.eq.s32.totalorder %s22, 1
      %p87 = por %p85, %p86
      %p89 = scmp.ne.s32.totalorder %s74, %s88
      %p90 = scmp.eq.s32.totalorder %s22, 0
      %p91 = por %p89, %p90
      %s93 = sadd.s32 %s92, 1
      %p96 = scmp.eq.s32.totalorder %s16, 1
      %p97 = scmp.ne.s32.totalorder %s92, %s94
      %p98 = scmp.eq.s32.totalorder %s16, 0
      %p99 = por %p97, %p98
      %p100 = scmp.ne.s32.totalorder %s92, %s94
      %p101 = scmp.eq.s32.totalorder %s21, 1
      %p102 = por %p100, %p101
      %p103 = scmp.ne.s32.totalorder %s94, %s95
      %p104 = scmp.eq.s32.totalorder %s21, 0
      %p105 = por %p103, %p104
      %p106 = scmp.ne.s32.totalorder %s94, %s95
      %p107 = scmp.eq.s32.totalorder %s22, 1
      %p108 = por %p106, %p107
      %p110 = scmp.ne.s32.totalorder %s95, %s109
      %p111 = scmp.eq.s32.totalorder %s22, 0
      %p112 = por %p110, %p111
      %s114 = sadd.s32 %s113, 1
      %p117 = scmp.eq.s32.totalorder %s16, 1
      %p118 = scmp.ne.s32.totalorder %s113, %s115
      %p119 = scmp.eq.s32.totalorder %s16, 0
      %p120 = por %p118, %p119
      %p121 = scmp.ne.s32.totalorder %s113, %s115
      %p122 = scmp.eq.s32.totalorder %s21, 1
      %p123 = por %p121, %p122
      %p124 = scmp.ne.s32.totalorder %s115, %s116
      %p125 = scmp.eq.s32.totalorder %s21, 0
      %p126 = por %p124, %p125
      %p127 = scmp.ne.s32.totalorder %s115, %s116
      %p128 = scmp.eq.s32.totalorder %s22, 1
      %p129 = por %p127, %p128
      %p131 = scmp.ne.s32.totalorder %s116, %s130
      %p132 = scmp.eq.s32.totalorder %s22, 0
      %p133 = por %p131, %p132
      %s135 = sadd.s32 %s134, 1
      %p138 = scmp.eq.s32.totalorder %s16, 1
      %p139 = scmp.ne.s32.totalorder %s134, %s136
      %p140 = scmp.eq.s32.totalorder %s16, 0
      %p141 = por %p139, %p140
      %p142 = scmp.ne.s32.totalorder %s134, %s136
      %p143 = scmp.eq.s32.totalorder %s21, 1
      %p144 = por %p142, %p143
      %p145 = scmp.ne.s32.totalorder %s136, %s137
      %p146 = scmp.eq.s32.totalorder %s21, 0
      %p147 = por %p145, %p146
      %p148 = scmp.ne.s32.totalorder %s136, %s137
      %p149 = scmp.eq.s32.totalorder %s22, 1
      %p150 = por %p148, %p149
      %p152 = scmp.ne.s32.totalorder %s137, %s151
      %p153 = scmp.eq.s32.totalorder %s22, 0
      %p154 = por %p152, %p153
      %s156 = sadd.s32 %s155, 1
      %p159 = scmp.eq.s32.totalorder %s16, 1
      %p160 = scmp.ne.s32.totalorder %s155, %s157
      %p161 = scmp.eq.s32.totalorder %s16, 0
      %p162 = por %p160, %p161
      %p163 = scmp.ne.s32.totalorder %s155, %s157
      %p164 = scmp.eq.s32.totalorder %s21, 1
      %p165 = por %p163, %p164
      %p166 = scmp.ne.s32.totalorder %s157, %s158
      %p167 = scmp.eq.s32.totalorder %s21, 0
      %p168 = por %p166, %p167
      %p169 = scmp.ne.s32.totalorder %s157, %s158
      %p170 = scmp.eq.s32.totalorder %s22, 1
      %p171 = por %p169, %p170
      %p173 = scmp.ne.s32.totalorder %s158, %s172
      %p174 = scmp.eq.s32.totalorder %s22, 0
      %p175 = por %p173, %p174
      %s176 = ssub.s32 %s16, %s23
      %p177 = scmp.eq.s32.totalorder %s176, 0
      %s179 = sadd.s32 %s178, 1
      %s180 = scalar_select %p177, %s178, %s179
      %p183 = pneg %p177
      %p184 = scmp.eq.s32.totalorder %s16, 1
      %p185 = por %p183, %p184
      %p186 = scmp.ne.s32.totalorder %s178, %s181
      %p187 = scmp.eq.s32.totalorder %s16, 0
      %p188 = por %p186, %p187
      %p189 = scmp.ne.s32.totalorder %s178, %s181
      %p190 = scmp.eq.s32.totalorder %s21, 1
      %p191 = por %p189, %p190
      %p192 = scmp.ne.s32.totalorder %s181, %s182
      %p193 = scmp.eq.s32.totalorder %s21, 0
      %p194 = por %p192, %p193
      %p195 = scmp.ne.s32.totalorder %s181, %s182
      %p196 = scmp.eq.s32.totalorder %s22, 1
      %p197 = por %p195, %p196
      %p199 = scmp.ne.s32.totalorder %s182, %s198
      %p200 = scmp.eq.s32.totalorder %s22, 0
      %p201 = por %p199, %p200
      %p202 = scmp.le.s32.totalorder 1, %s16
      %p203 = scmp.lt.s32.totalorder %s16, 3
      %p204 = pnand %p202, %p203
      %p205 = pneg %p204
      // Predicated region
      $region9: #{_lambda_.9} parent=5 // pred_check
        _
      $region10: #{_lambda_.9} parent=5 // pred_check_branch
        %207 = sbr.rel (%p204) target = $region12
      $region11: #{_lambda_.9} parent=5 // pred_region
        %s208 = ssub.s32 %s16, 1
        // Predicated region
        $region13: #{_lambda_.9} parent=11 // pred_check
          %p209 = pneg %p63
        $region14: #{_lambda_.9} parent=11 // pred_check_branch
          %211 = sbr.rel (%p209) target = $region16
        $region15: #{_lambda_.9} parent=11 // pred_region
          _
        $region16: #{_lambda_.9} parent=11 // pred_fallthru
          _
        // Predicated region
        $region17: #{_lambda_.9} parent=11 // pred_check
          %p212 = pneg %p84
        $region18: #{_lambda_.9} parent=11 // pred_check_branch
          %214 = sbr.rel (%p212) target = $region20
        $region19: #{_lambda_.9} parent=11 // pred_region
          _
        $region20: #{_lambda_.9} parent=11 // pred_fallthru
          _
        // Predicated region
        $region21: #{_lambda_.9} parent=11 // pred_check
          %p215 = pneg %p105
        $region22: #{_lambda_.9} parent=11 // pred_check_branch
          %217 = sbr.rel (%p215) target = $region24
        $region23: #{_lambda_.9} parent=11 // pred_region
          _
        $region24: #{_lambda_.9} parent=11 // pred_fallthru
          _
        // Predicated region
        $region25: #{_lambda_.9} parent=11 // pred_check
          %p218 = pneg %p126
        $region26: #{_lambda_.9} parent=11 // pred_check_branch
          %220 = sbr.rel (%p218) target = $region28
        $region27: #{_lambda_.9} parent=11 // pred_region
          _
        $region28: #{_lambda_.9} parent=11 // pred_fallthru
          _
        // Predicated region
        $region29: #{_lambda_.9} parent=11 // pred_check
          %p221 = pneg %p147
        $region30: #{_lambda_.9} parent=11 // pred_check_branch
          %223 = sbr.rel (%p221) target = $region32
        $region31: #{_lambda_.9} parent=11 // pred_region
          _
        $region32: #{_lambda_.9} parent=11 // pred_fallthru
          _
        // Predicated region
        $region33: #{_lambda_.9} parent=11 // pred_check
          %p224 = pneg %p168
        $region34: #{_lambda_.9} parent=11 // pred_check_branch
          %226 = sbr.rel (%p224) target = $region36
        $region35: #{_lambda_.9} parent=11 // pred_region
          _
        $region36: #{_lambda_.9} parent=11 // pred_fallthru
          _
      $region12: #{_lambda_.9} parent=5 // pred_fallthru
        _
      %p227 = scmp.lt.s32.totalorder %s16, 2
      // Predicated region
      $region37: #{_lambda_.9} parent=5 // pred_check
        %p228 = pneg %p227
      $region38: #{_lambda_.9} parent=5 // pred_check_branch
        %230 = sbr.rel (%p228) target = $region40
      $region39: #{_lambda_.9} parent=5 // pred_region
        // Predicated region
        $region41: #{_lambda_.9} parent=39 // pred_check
          %p231 = pneg %p36
        $region42: #{_lambda_.9} parent=39 // pred_check_branch
          %233 = sbr.rel (%p231) target = $region44
        $region43: #{_lambda_.9} parent=39 // pred_region
          %s234 = smul.u32 8, %s16
          %p235 = scmp.lt.s32.totalorder %s234, 15
          %s236 = scalar_select %p235, %s234, 15
          %s237 = smul.addr %s236, 8
          %s238 = scalar_lea.vmem %s0, %s237
          %s239 = smul.u32 8, %s16
        $region44: #{_lambda_.9} parent=39 // pred_fallthru
          _
      $region40: #{_lambda_.9} parent=5 // pred_fallthru
        _
      %p240 = scmp.le.s32.totalorder 1, %s16
      %p241 = scmp.lt.s32.totalorder %s16, 3
      %p242 = pnand %p240, %p241
      %p243 = pneg %p242
      // Predicated region
      $region45: #{_lambda_.9} parent=5 // pred_check
        _
      $region46: #{_lambda_.9} parent=5 // pred_check_branch
        %245 = sbr.rel (%p242) target = $region48
      $region47: #{_lambda_.9} parent=5 // pred_region
        %s246 = ssub.s32 %s16, 1
        %s247 = smul.u32 8, %s21
        %p248 = scmp.lt.s32.totalorder %s247, 15
        %s249 = scalar_select %p248, %s247, 15
        %s250 = smul.addr %s249, 8
        %s251 = scalar_lea.vmem %s0, %s250
        %p252 = pneg %p42
        %p253 = pneg %p39
        %p254 = pneg %p63
        %p255 = pneg %p60
        %p256 = pneg %p84
        %p257 = pneg %p81
        %p258 = pneg %p105
        %p259 = pneg %p102
        %p260 = pneg %p126
        %p261 = pneg %p123
        %p262 = pneg %p147
        %p263 = pneg %p144
        %p264 = pneg %p168
        %p265 = pneg %p165
        %p266 = pneg %p194
        %p267 = pneg %p191
        %s268 = sand.u32 %s181, 1
        %s269 = scalar_lea.sflag [#allocation3], %s268
        %s270 = sand.u32 %s181, 1
        %s271 = smul.addr %s270, 64
        %s272 = scalar_lea.vmem [#allocation2], %s271
        %s273 = smul.u32 8, %s21
        %p274 = scmp.lt.s32.totalorder %s273, 15
        %s275 = scalar_select %p274, %s273, 15
        %s276 = smul.addr %s275, 8
        %s277 = scalar_lea.vmem %s0, %s276
        %s278 = smul.u32 8, %s21
        %s279 = smul.u32 8, %s21
        %v281 = vld [vmem:[%s277] sm:$0xff]
        %v282 = vld [vmem:[%s277 + $0x8] sm:$0xff]
        %v283 = vld [vmem:[%s277 + $0x10] sm:$0xff]
        %v284 = vld [vmem:[%s277 + $0x18] sm:$0xff]
        %v285 = vld [vmem:[%s277 + $0x20] sm:$0xff]
        %v286 = vld [vmem:[%s277 + $0x28] sm:$0xff]
        %v287 = vld [vmem:[%s277 + $0x30] sm:$0xff]
        %v288 = vld [vmem:[%s277 + $0x38] sm:$0xff]
        %v289 = vld [vmem:[%s1] sm:$0x1]
        %v290 = vld [vmem:[%s2] sm:$0x1]
        %vm291 = vcmask 261120
        %v292 = vsel %vm291, %v281, 0.0
        %293 = vadd.xlane.f32.xlu0 %v292
        %v294 = vpop.xlane.xlu0 %293
        %v295 = vsel %vm291, %v282, 0.0
        %296 = vadd.xlane.f32.xlu0 %v295
        %v297 = vpop.xlane.xlu0 %296
        %v298 = vsel %vm291, %v283, 0.0
        %299 = vadd.xlane.f32.xlu0 %v298
        %v300 = vpop.xlane.xlu0 %299
        %v301 = vsel %vm291, %v284, 0.0
        %302 = vadd.xlane.f32.xlu0 %v301
        %v303 = vpop.xlane.xlu0 %302
        %v304 = vsel %vm291, %v285, 0.0
        %305 = vadd.xlane.f32.xlu0 %v304
        %v306 = vpop.xlane.xlu0 %305
        %v307 = vsel %vm291, %v286, 0.0
        %308 = vadd.xlane.f32.xlu0 %v307
        %v309 = vpop.xlane.xlu0 %308
        %v310 = vsel %vm291, %v287, 0.0
        %311 = vadd.xlane.f32.xlu0 %v310
        %v312 = vpop.xlane.xlu0 %311
        %v313 = vsel %vm291, %v288, 0.0
        %314 = vadd.xlane.f32.xlu0 %v313
        %v315 = vpop.xlane.xlu0 %314
        %v316 = vrcp.pop 32.0
        %v317 = vmul.f32 %v294, %v316
        %v318 = vmul.f32 %v297, %v316
        %v319 = vmul.f32 %v300, %v316
        %v320 = vmul.f32 %v303, %v316
        %v321 = vmul.f32 %v306, %v316
        %v322 = vmul.f32 %v309, %v316
        %v323 = vmul.f32 %v312, %v316
        %v324 = vmul.f32 %v315, %v316
        %v325 = vsub.f32 %v281, %v317
        %v326 = vsub.f32 %v282, %v318
        %v327 = vsub.f32 %v283, %v319
        %v328 = vsub.f32 %v284, %v320
        %v329 = vsub.f32 %v285, %v321
        %v330 = vsub.f32 %v286, %v322
        %v331 = vsub.f32 %v287, %v323
        %v332 = vsub.f32 %v288, %v324
        %v333 = vmul.f32 %v325, %v325
        %v334 = vmul.f32 %v326, %v326
        %v335 = vmul.f32 %v327, %v327
        %v336 = vmul.f32 %v328, %v328
        %v337 = vmul.f32 %v329, %v329
        %v338 = vmul.f32 %v330, %v330
        %v339 = vmul.f32 %v331, %v331
        %v340 = vmul.f32 %v332, %v332
        %v341 = vsel %vm291, %v333, 0.0
        %342 = vadd.xlane.f32.xlu0 %v341
        %v343 = vpop.xlane.xlu0 %342
        %v344 = vsel %vm291, %v334, 0.0
        %345 = vadd.xlane.f32.xlu0 %v344
        %v346 = vpop.xlane.xlu0 %345
        %v347 = vsel %vm291, %v335, 0.0
        %348 = vadd.xlane.f32.xlu0 %v347
        %v349 = vpop.xlane.xlu0 %348
        %v350 = vsel %vm291, %v336, 0.0
        %351 = vadd.xlane.f32.xlu0 %v350
        %v352 = vpop.xlane.xlu0 %351
        %v353 = vsel %vm291, %v337, 0.0
        %354 = vadd.xlane.f32.xlu0 %v353
        %v355 = vpop.xlane.xlu0 %354
        %v356 = vsel %vm291, %v338, 0.0
        %357 = vadd.xlane.f32.xlu0 %v356
        %v358 = vpop.xlane.xlu0 %357
        %v359 = vsel %vm291, %v339, 0.0
        %360 = vadd.xlane.f32.xlu0 %v359
        %v361 = vpop.xlane.xlu0 %360
        %v362 = vsel %vm291, %v340, 0.0
        %363 = vadd.xlane.f32.xlu0 %v362
        %v364 = vpop.xlane.xlu0 %363
        %v365 = vmul.f32 %v343, %v316
        %v366 = vmul.f32 %v346, %v316
        %v367 = vmul.f32 %v349, %v316
        %v368 = vmul.f32 %v352, %v316
        %v369 = vmul.f32 %v355, %v316
        %v370 = vmul.f32 %v358, %v316
        %v371 = vmul.f32 %v361, %v316
        %v372 = vmul.f32 %v364, %v316
        %v373 = vadd.f32 %v365, 1e-05
        %v374 = vadd.f32 %v366, 1e-05
        %v375 = vadd.f32 %v367, 1e-05
        %v376 = vadd.f32 %v368, 1e-05
        %v377 = vadd.f32 %v369, 1e-05
        %v378 = vadd.f32 %v370, 1e-05
        %v379 = vadd.f32 %v371, 1e-05
        %v380 = vadd.f32 %v372, 1e-05
        %v381 = vrsqrt.pop %v373
        %v382 = vrsqrt.pop %v374
        %v383 = vrsqrt.pop %v375
        %v384 = vrsqrt.pop %v376
        %v385 = vrsqrt.pop %v377
        %v386 = vrsqrt.pop %v378
        %v387 = vrsqrt.pop %v379
        %v388 = vrsqrt.pop %v380
        %v389 = vmul.f32 %v325, %v381
        %v390 = vmul.f32 %v326, %v382
        %v391 = vmul.f32 %v327, %v383
        %v392 = vmul.f32 %v328, %v384
        %v393 = vmul.f32 %v329, %v385
        %v394 = vmul.f32 %v330, %v386
        %v395 = vmul.f32 %v331, %v387
        %v396 = vmul.f32 %v332, %v388
        %v398 = vlaneseq
        %v399 = vshrl.u32 %v398, 7
        %v400 = vsub.s32 0, %v399
        %v401 = vrot.slane %v289, %v400
        %v403 = vmul.f32 %v389, %v401
        %v404 = vmul.f32 %v390, %v401
        %v405 = vmul.f32 %v391, %v401
        %v406 = vmul.f32 %v392, %v401
        %v407 = vmul.f32 %v393, %v401
        %v408 = vmul.f32 %v394, %v401
        %v409 = vmul.f32 %v395, %v401
        %v410 = vmul.f32 %v396, %v401
        %v412 = vlaneseq
        %v413 = vshrl.u32 %v412, 7
        %v414 = vsub.s32 0, %v413
        %v415 = vrot.slane %v290, %v414
        %v417 = vadd.f32 %v403, %v415
        %v418 = vadd.f32 %v404, %v415
        %v419 = vadd.f32 %v405, %v415
        %v420 = vadd.f32 %v406, %v415
        %v421 = vadd.f32 %v407, %v415
        %v422 = vadd.f32 %v408, %v415
        %v423 = vadd.f32 %v409, %v415
        %v424 = vadd.f32 %v410, %v415
        %v425 = vpack.c.bf16 %v418, %v417
        %v426 = vpack.c.bf16 %v420, %v419
        %v427 = vpack.c.bf16 %v422, %v421
        %v428 = vpack.c.bf16 %v424, %v423
        %v429 = vld [vmem:[%s3] sm:$0xf]
        %v430 = vld [vmem:[%s3 + $0x4] sm:$0xf]
        %v431 = vld [vmem:[%s3 + $0x8] sm:$0xf]
        %v432 = vld [vmem:[%s3 + $0xc] sm:$0xf]
        %v433 = vld [vmem:[%s4] sm:$0x1]
        %v435 = vlaneseq
        %v436 = vshrl.u32 %v435, 7
        %v437 = vsub.s32 0, %v436
        %v438 = vrot.slane %v433, %v437
        %v444 = vunpack.c.l.b16 %v429
        %v445 = vunpack.c.l.b16 %v430
        %v446 = vunpack.c.l.b16 %v431
        %v447 = vunpack.c.l.b16 %v432
        %v448 = vpack.c.b16 %v445, %v444
        %v449 = vpack.c.b16 %v447, %v446
        %v453 = vsel %vm291, %v425, 0
        %v456 = vsel %vm291, %v426, 0
        %v459 = vsel %vm291, %v427, 0
        %v462 = vsel %vm291, %v428, 0
        %464 = vmatprep.subr.bf16.mxu0 0
        %465 = vmatpush1.bf16.msra.mxu0 0
        %466 = vmatprep.subr.bf16.mxu0 0
        %467 = vmatpush1.bf16.msra.mxu0 0
        %468 = vmatprep.subr.bf16.mxu0 0
        %469 = vmatpush1.bf16.msra.mxu0 0
        %470 = vmatprep.subr.bf16.mxu0 0
        %471 = vmatpush1.bf16.msra.mxu0 0
        %472 = vmatprep.subr.bf16.mxu0 0
        %473 = vmatpush1.bf16.msra.mxu0 0
        %474 = vmatprep.subr.bf16.mxu0 0
        %475 = vmatpush1.bf16.msra.mxu0 0
        %476 = vmatprep.subr.bf16.mxu0 0
        %477 = vmatpush1.bf16.msra.mxu0 %v449
        %478 = vmatprep.subr.bf16.mxu0 0
        %479 = vmatpush1.bf16.msra.mxu0 %v448
        %480 = vmatprep.subr.bf16.mxu0 0
        %481 = vmatpush2.bf16.msra.mxu0 0
        %482 = vmatprep.subr.bf16.mxu0 0
        %483 = vmatpush2.bf16.msra.mxu0 0
        %484 = vmatprep.subr.bf16.mxu0 0
        %485 = vmatpush2.bf16.msra.mxu0 0
        %486 = vmatprep.subr.bf16.mxu0 0
        %487 = vmatpush2.bf16.msra.mxu0 0
        %488 = vmatprep.subr.bf16.mxu0 0
        %489 = vmatpush2.bf16.msra.mxu0 0
        %490 = vmatprep.subr.bf16.mxu0 0
        %491 = vmatpush2.bf16.msra.mxu0 0
        %492 = vmatprep.subr.bf16.mxu0 0
        %493 = vmatpush2.bf16.msra.mxu0 0
        %494 = vmatprep.subr.bf16.mxu0 0
        %495 = vmatpush2.bf16.msra.mxu0 0
        %496 = vmatprep.mubr.bf16.mxu0 0
        %497 = vmatmul.mubr.bf16.gmra.mxu0 %v453
        %v498 = vpop.f32.mrf.mxu0
        %v499 = vadd.f32 %v438, %v498
        %v500 = vpop.f32.mrf.mxu0
        %v501 = vpop.f32.mrf.mxu0
        %v502 = vadd.f32 %v438, %v501
        %v503 = vpop.f32.mrf.mxu0
        %504 = vmatprep.mubr.bf16.mxu0 0
        %505 = vmatmul.mubr.bf16.gmra.mxu0 %v456
        %v506 = vpop.f32.mrf.mxu0
        %v507 = vadd.f32 %v438, %v506
        %v508 = vpop.f32.mrf.mxu0
        %v509 = vpop.f32.mrf.mxu0
        %v510 = vadd.f32 %v438, %v509
        %v511 = vpop.f32.mrf.mxu0
        %512 = vmatprep.mubr.bf16.mxu0 0
        %513 = vmatmul.mubr.bf16.gmra.mxu0 %v459
        %v514 = vpop.f32.mrf.mxu0
        %v515 = vadd.f32 %v438, %v514
        %v516 = vpop.f32.mrf.mxu0
        %v517 = vpop.f32.mrf.mxu0
        %v518 = vadd.f32 %v438, %v517
        %v519 = vpop.f32.mrf.mxu0
        %520 = vmatprep.mubr.bf16.mxu0 0
        %521 = vmatmul.mubr.bf16.gmra.mxu0 %v462
        %v522 = vpop.f32.mrf.mxu0
        %v523 = vadd.f32 %v438, %v522
        %v524 = vpop.f32.mrf.mxu0
        %v525 = vpop.f32.mrf.mxu0
        %v526 = vadd.f32 %v438, %v525
        %v527 = vpop.f32.mrf.mxu0
        %528 = vdwg.mxu0
        %v529 = vmul.f32 %v499, 0.5
        %v530 = vmul.f32 %v502, 0.5
        %v531 = vmul.f32 %v507, 0.5
        %v532 = vmul.f32 %v510, 0.5
        %v533 = vmul.f32 %v515, 0.5
        %v534 = vmul.f32 %v518, 0.5
        %v535 = vmul.f32 %v523, 0.5
        %v536 = vmul.f32 %v526, 0.5
        %v537 = vmul.f32 %v499, 0.044715
        %v538 = vmul.f32 %v502, 0.044715
        %v539 = vmul.f32 %v507, 0.044715
        %v540 = vmul.f32 %v510, 0.044715
        %v541 = vmul.f32 %v515, 0.044715
        %v542 = vmul.f32 %v518, 0.044715
        %v543 = vmul.f32 %v523, 0.044715
        %v544 = vmul.f32 %v526, 0.044715
        %v545 = vmul.f32 %v537, %v499
        %v546 = vmul.f32 %v538, %v502
        %v547 = vmul.f32 %v539, %v507
        %v548 = vmul.f32 %v540, %v510
        %v549 = vmul.f32 %v541, %v515
        %v550 = vmul.f32 %v542, %v518
        %v551 = vmul.f32 %v543, %v523
        %v552 = vmul.f32 %v544, %v526
        %v553 = vmul.f32 %v545, %v499
        %v554 = vmul.f32 %v546, %v502
        %v555 = vmul.f32 %v547, %v507
        %v556 = vmul.f32 %v548, %v510
        %v557 = vmul.f32 %v549, %v515
        %v558 = vmul.f32 %v550, %v518
        %v559 = vmul.f32 %v551, %v523
        %v560 = vmul.f32 %v552, %v526
        %v561 = vadd.f32 %v499, %v553
        %v562 = vadd.f32 %v502, %v554
        %v563 = vadd.f32 %v507, %v555
        %v564 = vadd.f32 %v510, %v556
        %v565 = vadd.f32 %v515, %v557
        %v566 = vadd.f32 %v518, %v558
        %v567 = vadd.f32 %v523, %v559
        %v568 = vadd.f32 %v526, %v560
        %v569 = vmul.f32 %v561, 0.7978846
        %v570 = vmul.f32 %v562, 0.7978846
        %v571 = vmul.f32 %v563, 0.7978846
        %v572 = vmul.f32 %v564, 0.7978846
        %v573 = vmul.f32 %v565, 0.7978846
        %v574 = vmul.f32 %v566, 0.7978846
        %v575 = vmul.f32 %v567, 0.7978846
        %v576 = vmul.f32 %v568, 0.7978846
        %v577 = vtanh.pop %v569
        %v578 = vtanh.pop %v570
        %v579 = vtanh.pop %v571
        %v580 = vtanh.pop %v572
        %v581 = vtanh.pop %v573
        %v582 = vtanh.pop %v574
        %v583 = vtanh.pop %v575
        %v584 = vtanh.pop %v576
        %v585 = vadd.f32 %v577, 1.0
        %v586 = vadd.f32 %v578, 1.0
        %v587 = vadd.f32 %v579, 1.0
        %v588 = vadd.f32 %v580, 1.0
        %v589 = vadd.f32 %v581, 1.0
        %v590 = vadd.f32 %v582, 1.0
        %v591 = vadd.f32 %v583, 1.0
        %v592 = vadd.f32 %v584, 1.0
        %v593 = vmul.f32 %v529, %v585
        %v594 = vmul.f32 %v530, %v586
        %v595 = vmul.f32 %v531, %v587
        %v596 = vmul.f32 %v532, %v588
        %v597 = vmul.f32 %v533, %v589
        %v598 = vmul.f32 %v534, %v590
        %v599 = vmul.f32 %v535, %v591
        %v600 = vmul.f32 %v536, %v592
        %v601 = vpack.c.bf16 %v594, %v593
        %v602 = vpack.c.bf16 %v596, %v595
        %v603 = vpack.c.bf16 %v598, %v597
        %v604 = vpack.c.bf16 %v600, %v599
        %v605 = vld [vmem:[%s5] sm:$0xf]
        %v606 = vld [vmem:[%s5 + $0x4] sm:$0xf]
        %v607 = vld [vmem:[%s5 + $0x8] sm:$0xf]
        %v608 = vld [vmem:[%s5 + $0xc] sm:$0xf]
        %v609 = vld [vmem:[%s5 + $0x10] sm:$0xf]
        %v610 = vld [vmem:[%s5 + $0x14] sm:$0xf]
        %v611 = vld [vmem:[%s5 + $0x18] sm:$0xf]
        %v612 = vld [vmem:[%s5 + $0x1c] sm:$0xf]
        %v613 = vld [vmem:[%s5 + $0x20] sm:$0xf]
        %v614 = vld [vmem:[%s5 + $0x24] sm:$0xf]
        %v615 = vld [vmem:[%s5 + $0x28] sm:$0xf]
        %v616 = vld [vmem:[%s5 + $0x2c] sm:$0xf]
        %v617 = vld [vmem:[%s5 + $0x30] sm:$0xf]
        %v618 = vld [vmem:[%s5 + $0x34] sm:$0xf]
        %v619 = vld [vmem:[%s5 + $0x38] sm:$0xf]
        %v620 = vld [vmem:[%s5 + $0x3c] sm:$0xf]
        %v621 = vld [vmem:[%s6] sm:$0x1]
        %v623 = vlaneseq
        %v624 = vshrl.u32 %v623, 7
        %v625 = vsub.s32 0, %v624
        %v626 = vrot.slane %v621, %v625
        %v644 = vunpack.c.l.b16 %v605
        %v645 = vunpack.c.l.b16 %v606
        %v646 = vunpack.c.l.b16 %v607
        %v647 = vunpack.c.l.b16 %v608
        %v648 = vunpack.c.l.b16 %v609
        %v649 = vunpack.c.l.b16 %v610
        %v650 = vunpack.c.l.b16 %v611
        %v651 = vunpack.c.l.b16 %v612
        %v652 = vunpack.c.l.b16 %v613
        %v653 = vunpack.c.l.b16 %v614
        %v654 = vunpack.c.l.b16 %v615
        %v655 = vunpack.c.l.b16 %v616
        %v656 = vunpack.c.l.b16 %v617
        %v657 = vunpack.c.l.b16 %v618
        %v658 = vunpack.c.l.b16 %v619
        %v659 = vunpack.c.l.b16 %v620
        %v660 = vpack.c.b16 %v645, %v644
        %v661 = vpack.c.b16 %v647, %v646
        %v662 = vpack.c.b16 %v649, %v648
        %v663 = vpack.c.b16 %v651, %v650
        %v664 = vpack.c.b16 %v653, %v652
        %v665 = vpack.c.b16 %v655, %v654
        %v666 = vpack.c.b16 %v657, %v656
        %v667 = vpack.c.b16 %v659, %v658
        %676 = vmatprep.subr.bf16.mxu0 0
        %677 = vmatpush1.bf16.msra.mxu0 %v667
        %678 = vmatprep.subr.bf16.mxu0 0
        %679 = vmatpush1.bf16.msra.mxu0 %v666
        %680 = vmatprep.subr.bf16.mxu0 0
        %681 = vmatpush1.bf16.msra.mxu0 %v665
        %682 = vmatprep.subr.bf16.mxu0 0
        %683 = vmatpush1.bf16.msra.mxu0 %v664
        %684 = vmatprep.subr.bf16.mxu0 0
        %685 = vmatpush1.bf16.msra.mxu0 %v663
        %686 = vmatprep.subr.bf16.mxu0 0
        %687 = vmatpush1.bf16.msra.mxu0 %v662
        %688 = vmatprep.subr.bf16.mxu0 0
        %689 = vmatpush1.bf16.msra.mxu0 %v661
        %690 = vmatprep.subr.bf16.mxu0 0
        %691 = vmatpush1.bf16.msra.mxu0 %v660
        %692 = vmatprep.subr.bf16.mxu0 0
        %693 = vmatpush2.bf16.msra.mxu0 0
        %694 = vmatprep.subr.bf16.mxu0 0
        %695 = vmatpush2.bf16.msra.mxu0 0
        %696 = vmatprep.subr.bf16.mxu0 0
        %697 = vmatpush2.bf16.msra.mxu0 0
        %698 = vmatprep.subr.bf16.mxu0 0
        %699 = vmatpush2.bf16.msra.mxu0 0
        %700 = vmatprep.subr.bf16.mxu0 0
        %701 = vmatpush2.bf16.msra.mxu0 0
        %702 = vmatprep.subr.bf16.mxu0 0
        %703 = vmatpush2.bf16.msra.mxu0 0
        %704 = vmatprep.subr.bf16.mxu0 0
        %705 = vmatpush2.bf16.msra.mxu0 0
        %706 = vmatprep.subr.bf16.mxu0 0
        %707 = vmatpush2.bf16.msra.mxu0 0
        %708 = vmatprep.mubr.bf16.mxu0 0
        %709 = vmatmul.mubr.bf16.gmra.mxu0 %v601
        %v710 = vpop.f32.mrf.mxu0
        %v711 = vadd.f32 %v626, %v710
        %v712 = vpop.f32.mrf.mxu0
        %v713 = vpop.f32.mrf.mxu0
        %v714 = vadd.f32 %v626, %v713
        %v715 = vpop.f32.mrf.mxu0
        %716 = vmatprep.mubr.bf16.mxu0 0
        %717 = vmatmul.mubr.bf16.gmra.mxu0 %v602
        %v718 = vpop.f32.mrf.mxu0
        %v719 = vadd.f32 %v626, %v718
        %v720 = vpop.f32.mrf.mxu0
        %v721 = vpop.f32.mrf.mxu0
        %v722 = vadd.f32 %v626, %v721
        %v723 = vpop.f32.mrf.mxu0
        %724 = vmatprep.mubr.bf16.mxu0 0
        %725 = vmatmul.mubr.bf16.gmra.mxu0 %v603
        %v726 = vpop.f32.mrf.mxu0
        %v727 = vadd.f32 %v626, %v726
        %v728 = vpop.f32.mrf.mxu0
        %v729 = vpop.f32.mrf.mxu0
        %v730 = vadd.f32 %v626, %v729
        %v731 = vpop.f32.mrf.mxu0
        %732 = vmatprep.mubr.bf16.mxu0 0
        %733 = vmatmul.mubr.bf16.gmra.mxu0 %v604
        %v734 = vpop.f32.mrf.mxu0
        %v735 = vadd.f32 %v626, %v734
        %v736 = vpop.f32.mrf.mxu0
        %v737 = vpop.f32.mrf.mxu0
        %v738 = vadd.f32 %v626, %v737
        %v739 = vpop.f32.mrf.mxu0
        %740 = vdwg.mxu0
        %v741 = vadd.f32 %v711, %v281
        %v742 = vadd.f32 %v714, %v282
        %v743 = vadd.f32 %v719, %v283
        %v744 = vadd.f32 %v722, %v284
        %v745 = vadd.f32 %v727, %v285
        %v746 = vadd.f32 %v730, %v286
        %v747 = vadd.f32 %v735, %v287
        %v748 = vadd.f32 %v738, %v288
        %749 = vst.msk [vmem:[%s272] sm:$0xff] %vm291, %v741
        %750 = vst.msk [vmem:[%s272 + $0x8] sm:$0xff] %vm291, %v742
        %751 = vst.msk [vmem:[%s272 + $0x10] sm:$0xff] %vm291, %v743
        %752 = vst.msk [vmem:[%s272 + $0x18] sm:$0xff] %vm291, %v744
        %753 = vst.msk [vmem:[%s272 + $0x20] sm:$0xff] %vm291, %v745
        %754 = vst.msk [vmem:[%s272 + $0x28] sm:$0xff] %vm291, %v746
        %755 = vst.msk [vmem:[%s272 + $0x30] sm:$0xff] %vm291, %v747
        %756 = vst.msk [vmem:[%s272 + $0x38] sm:$0xff] %vm291, %v748
        %s757 = sand.u32 %s181, 1
        %s758 = scalar_lea.sflag [#allocation3], %s757
        %s759 = sand.u32 %s181, 1
        %s760 = smul.addr %s759, 64
        %s761 = scalar_lea.vmem [#allocation2], %s760
        // Predicated region
        $region49: #{_lambda_.9} parent=47 // pred_check
          %p762 = pneg %p191
        $region50: #{_lambda_.9} parent=47 // pred_check_branch
          %764 = sbr.rel (%p762) target = $region52
        $region51: #{_lambda_.9} parent=47 // pred_region
          %s765 = smul.u32 8, %s21
          %s767 = ssub.s32 1024, 1024
          %768 = vsyncadd %s758, %s767
          %s769 = smul.addr %s765, 128
          %s770 = scalar_lea.hbm %s7, %s769
          %s771 = sshll.u32 %s761, 4
          %s772 = int_to_ptr.vmem [resolvable:$true] %s771
          %777 = dma.vmem_to_hbm [thread:$0]  %s772, 1024, %s770, %s758, 128, 128, 8
        $region52: #{_lambda_.9} parent=47 // pred_fallthru
          _
      $region48: #{_lambda_.9} parent=5 // pred_fallthru
        _
      %p778 = scmp.le.s32.totalorder 2, %s16
      // Predicated region
      $region53: #{_lambda_.9} parent=5 // pred_check
        %p779 = pneg %p778
      $region54: #{_lambda_.9} parent=5 // pred_check_branch
        %781 = sbr.rel (%p779) target = $region56
      $region55: #{_lambda_.9} parent=5 // pred_region
        %s782 = ssub.s32 %s16, 2
        // Predicated region
        $region57: #{_lambda_.9} parent=55 // pred_check
          %p783 = pneg %p197
        $region58: #{_lambda_.9} parent=55 // pred_check_branch
          %785 = sbr.rel (%p783) target = $region60
        $region59: #{_lambda_.9} parent=55 // pred_region
          %s786 = sand.u32 %s182, 1
          %s787 = scalar_lea.sflag [#allocation3], %s786
          %s788 = sand.u32 %s182, 1
          %s789 = smul.addr %s788, 64
          %s790 = scalar_lea.vmem [#allocation2], %s789
          %791 = dma.done %s787, 1024
        $region60: #{_lambda_.9} parent=55 // pred_fallthru
          _
      $region56: #{_lambda_.9} parent=5 // pred_fallthru
        _
    $region6: #{_lambda_.9} parent=1 // loop_footer
      %s20 = sadd.s32 1, %s16
    $region7: #{_lambda_.9} parent=1 // loop_footer_branch
      %15 = sbr.rel target = $region3
    $region8: #{_lambda_.9} parent=1 // loop_exit
      _
    %792 = vsyncpa [#allocation3], 1
    %s793 = scalar_lea.sflag [#allocation3], 1
    %794 = vsyncpa %s793, 1

// kernel: _lambda_.8
$region0: #{_lambda_.8}
  #allocation0 [shape = 'u32[]', space=smem, size = 0x4, offset = 0x4, fixed_abs, tag = 'smem constant byte address 0x4 - core index']
  #allocation1 [shape = 'u32[144,128]{1,0:T(1,128)}', space=vmem, size = 0x12000, scoped, tag = 'internal scratch']
  %s0 = inlined_call_operand.vmem [shape: f32[8,16,32], index: 0, kind: input, shape index: {}]
  %s1 = inlined_call_operand.vmem [shape: f32[1,32], index: 1, kind: input, shape index: {}]
  %s2 = inlined_call_operand.vmem [shape: f32[1,32], index: 2, kind: input, shape index: {}]
  %s3 = inlined_call_operand.vmem [shape: bf16[32,96], index: 3, kind: input, shape index: {}]
  %s4 = inlined_call_operand.vmem [shape: bf16[32,32], index: 4, kind: input, shape index: {}]
  %s5 = inlined_call_operand.vmem [shape: f32[1,32], index: 5, kind: input, shape index: {}]
  %s6 = inlined_call_operand.vmem [shape: f32[4,16,16], index: 6, kind: input, shape index: {}]
  %s7 = inlined_call_operand.vmem [shape: f32[8,16,32], index: 7, kind: output, shape index: {}]
  %s8 = sld [smem:[#allocation0]]
  $region61: #{_lambda_.8} parent=0
    _
  %s10 = ssub.s32 1, %s8
  %s11 = scalar_select 0, %s10, %s8
  loop: start=0, step=1, limit=4
  $region2: #{_lambda_.8} parent=0 // loop_pre_header
    _
  $region3: #{_lambda_.8} parent=0 // loop_header
    %s13 = sphi 0, %s17
    %p14 = scmp.ge.s32.totalorder %s13, 4
    %s23 = sphi 0, %s25
    %s26 = sphi 0, %s23
    %s27 = sphi 0, %s26
    %s43 = sphi 0, %s27
    %s47 = sphi 0, %s47
    %s49 = sphi 0, %s47
    %s50 = sphi 0, %s49
    %s64 = sphi 0, %s50
    %s68 = sphi 0, %s68
    %s70 = sphi 0, %s68
    %s71 = sphi 0, %s70
    %s85 = sphi 0, %s71
    %s89 = sphi 0, %s89
    %s91 = sphi 0, %s89
    %s92 = sphi 0, %s91
    %s106 = sphi 0, %s92
    %s110 = sphi 0, %s110
    %s112 = sphi 0, %s110
    %s113 = sphi 0, %s112
    %s127 = sphi 0, %s113
    %s131 = sphi 0, %s131
    %s133 = sphi 0, %s131
    %s134 = sphi 0, %s133
    %s148 = sphi 0, %s134
    %s152 = sphi 0, %s152
    %s154 = sphi 0, %s152
    %s155 = sphi 0, %s154
    %s169 = sphi 0, %s155
    %s175 = sphi 0, %s177
    %s178 = sphi 0, %s175
    %s179 = sphi 0, %s178
    %s195 = sphi 0, %s179
  $region4: #{_lambda_.8} parent=0 // loop_header_branch
    %16 = sbr.rel (%p14) target = $region8
  $region5: #{_lambda_.8} parent=0 // loop_body
    %s18 = ssub.s32 %s13, 1
    %s19 = ssub.s32 %s13, 2
    %s20 = sadd.s32 %s13, 1
    %s21 = ssub.s32 %s13, %s20
    %p22 = scmp.eq.s32.totalorder %s21, 0
    %s24 = sadd.s32 %s23, 1
    %s25 = scalar_select %p22, %s23, %s24
    %p28 = pneg %p22
    %p29 = scmp.eq.s32.totalorder %s13, 1
    %p30 = por %p28, %p29
    %p31 = scmp.ne.s32.totalorder %s23, %s26
    %p32 = scmp.eq.s32.totalorder %s13, 0
    %p33 = por %p31, %p32
    %p34 = scmp.ne.s32.totalorder %s23, %s26
    %p35 = scmp.eq.s32.totalorder %s18, 1
    %p36 = por %p34, %p35
    %p37 = scmp.ne.s32.totalorder %s26, %s27
    %p38 = scmp.eq.s32.totalorder %s18, 0
    %p39 = por %p37, %p38
    %p40 = scmp.ne.s32.totalorder %s26, %s27
    %p41 = scmp.eq.s32.totalorder %s19, 1
    %p42 = por %p40, %p41
    %p44 = scmp.ne.s32.totalorder %s27, %s43
    %p45 = scmp.eq.s32.totalorder %s19, 0
    %p46 = por %p44, %p45
    %s48 = sadd.s32 %s47, 1
    %p51 = scmp.eq.s32.totalorder %s13, 1
    %p52 = scmp.ne.s32.totalorder %s47, %s49
    %p53 = scmp.eq.s32.totalorder %s13, 0
    %p54 = por %p52, %p53
    %p55 = scmp.ne.s32.totalorder %s47, %s49
    %p56 = scmp.eq.s32.totalorder %s18, 1
    %p57 = por %p55, %p56
    %p58 = scmp.ne.s32.totalorder %s49, %s50
    %p59 = scmp.eq.s32.totalorder %s18, 0
    %p60 = por %p58, %p59
    %p61 = scmp.ne.s32.totalorder %s49, %s50
    %p62 = scmp.eq.s32.totalorder %s19, 1
    %p63 = por %p61, %p62
    %p65 = scmp.ne.s32.totalorder %s50, %s64
    %p66 = scmp.eq.s32.totalorder %s19, 0
    %p67 = por %p65, %p66
    %s69 = sadd.s32 %s68, 1
    %p72 = scmp.eq.s32.totalorder %s13, 1
    %p73 = scmp.ne.s32.totalorder %s68, %s70
    %p74 = scmp.eq.s32.totalorder %s13, 0
    %p75 = por %p73, %p74
    %p76 = scmp.ne.s32.totalorder %s68, %s70
    %p77 = scmp.eq.s32.totalorder %s18, 1
    %p78 = por %p76, %p77
    %p79 = scmp.ne.s32.totalorder %s70, %s71
    %p80 = scmp.eq.s32.totalorder %s18, 0
    %p81 = por %p79, %p80
    %p82 = scmp.ne.s32.totalorder %s70, %s71
    %p83 = scmp.eq.s32.totalorder %s19, 1
    %p84 = por %p82, %p83
    %p86 = scmp.ne.s32.totalorder %s71, %s85
    %p87 = scmp.eq.s32.totalorder %s19, 0
    %p88 = por %p86, %p87
    %s90 = sadd.s32 %s89, 1
    %p93 = scmp.eq.s32.totalorder %s13, 1
    %p94 = scmp.ne.s32.totalorder %s89, %s91
    %p95 = scmp.eq.s32.totalorder %s13, 0
    %p96 = por %p94, %p95
    %p97 = scmp.ne.s32.totalorder %s89, %s91
    %p98 = scmp.eq.s32.totalorder %s18, 1
    %p99 = por %p97, %p98
    %p100 = scmp.ne.s32.totalorder %s91, %s92
    %p101 = scmp.eq.s32.totalorder %s18, 0
    %p102 = por %p100, %p101
    %p103 = scmp.ne.s32.totalorder %s91, %s92
    %p104 = scmp.eq.s32.totalorder %s19, 1
    %p105 = por %p103, %p104
    %p107 = scmp.ne.s32.totalorder %s92, %s106
    %p108 = scmp.eq.s32.totalorder %s19, 0
    %p109 = por %p107, %p108
    %s111 = sadd.s32 %s110, 1
    %p114 = scmp.eq.s32.totalorder %s13, 1
    %p115 = scmp.ne.s32.totalorder %s110, %s112
    %p116 = scmp.eq.s32.totalorder %s13, 0
    %p117 = por %p115, %p116
    %p118 = scmp.ne.s32.totalorder %s110, %s112
    %p119 = scmp.eq.s32.totalorder %s18, 1
    %p120 = por %p118, %p119
    %p121 = scmp.ne.s32.totalorder %s112, %s113
    %p122 = scmp.eq.s32.totalorder %s18, 0
    %p123 = por %p121, %p122
    %p124 = scmp.ne.s32.totalorder %s112, %s113
    %p125 = scmp.eq.s32.totalorder %s19, 1
    %p126 = por %p124, %p125
    %p128 = scmp.ne.s32.totalorder %s113, %s127
    %p129 = scmp.eq.s32.totalorder %s19, 0
    %p130 = por %p128, %p129
    %s132 = sadd.s32 %s131, 1
    %p135 = scmp.eq.s32.totalorder %s13, 1
    %p136 = scmp.ne.s32.totalorder %s131, %s133
    %p137 = scmp.eq.s32.totalorder %s13, 0
    %p138 = por %p136, %p137
    %p139 = scmp.ne.s32.totalorder %s131, %s133
    %p140 = scmp.eq.s32.totalorder %s18, 1
    %p141 = por %p139, %p140
    %p142 = scmp.ne.s32.totalorder %s133, %s134
    %p143 = scmp.eq.s32.totalorder %s18, 0
    %p144 = por %p142, %p143
    %p145 = scmp.ne.s32.totalorder %s133, %s134
    %p146 = scmp.eq.s32.totalorder %s19, 1
    %p147 = por %p145, %p146
    %p149 = scmp.ne.s32.totalorder %s134, %s148
    %p150 = scmp.eq.s32.totalorder %s19, 0
    %p151 = por %p149, %p150
    %s153 = sadd.s32 %s152, 1
    %p156 = scmp.eq.s32.totalorder %s13, 1
    %p157 = scmp.ne.s32.totalorder %s152, %s154
    %p158 = scmp.eq.s32.totalorder %s13, 0
    %p159 = por %p157, %p158
    %p160 = scmp.ne.s32.totalorder %s152, %s154
    %p161 = scmp.eq.s32.totalorder %s18, 1
    %p162 = por %p160, %p161
    %p163 = scmp.ne.s32.totalorder %s154, %s155
    %p164 = scmp.eq.s32.totalorder %s18, 0
    %p165 = por %p163, %p164
    %p166 = scmp.ne.s32.totalorder %s154, %s155
    %p167 = scmp.eq.s32.totalorder %s19, 1
    %p168 = por %p166, %p167
    %p170 = scmp.ne.s32.totalorder %s155, %s169
    %p171 = scmp.eq.s32.totalorder %s19, 0
    %p172 = por %p170, %p171
    %s173 = ssub.s32 %s13, %s20
    %p174 = scmp.eq.s32.totalorder %s173, 0
    %s176 = sadd.s32 %s175, 1
    %s177 = scalar_select %p174, %s175, %s176
    %p180 = pneg %p174
    %p181 = scmp.eq.s32.totalorder %s13, 1
    %p182 = por %p180, %p181
    %p183 = scmp.ne.s32.totalorder %s175, %s178
    %p184 = scmp.eq.s32.totalorder %s13, 0
    %p185 = por %p183, %p184
    %p186 = scmp.ne.s32.totalorder %s175, %s178
    %p187 = scmp.eq.s32.totalorder %s18, 1
    %p188 = por %p186, %p187
    %p189 = scmp.ne.s32.totalorder %s178, %s179
    %p190 = scmp.eq.s32.totalorder %s18, 0
    %p191 = por %p189, %p190
    %p192 = scmp.ne.s32.totalorder %s178, %s179
    %p193 = scmp.eq.s32.totalorder %s19, 1
    %p194 = por %p192, %p193
    %p196 = scmp.ne.s32.totalorder %s179, %s195
    %p197 = scmp.eq.s32.totalorder %s19, 0
    %p198 = por %p196, %p197
    %p199 = scmp.le.s32.totalorder 1, %s13
    %p200 = scmp.lt.s32.totalorder %s13, 3
    %p201 = pnand %p199, %p200
    %p202 = pneg %p201
    // Predicated region
    $region9: #{_lambda_.8} parent=5 // pred_check
      _
    $region10: #{_lambda_.8} parent=5 // pred_check_branch
      %204 = sbr.rel (%p201) target = $region12
    $region11: #{_lambda_.8} parent=5 // pred_region
      %s205 = ssub.s32 %s13, 1
      // Predicated region
      $region13: #{_lambda_.8} parent=11 // pred_check
        %p206 = pneg %p60
      $region14: #{_lambda_.8} parent=11 // pred_check_branch
        %208 = sbr.rel (%p206) target = $region16
      $region15: #{_lambda_.8} parent=11 // pred_region
        _
      $region16: #{_lambda_.8} parent=11 // pred_fallthru
        _
      // Predicated region
      $region17: #{_lambda_.8} parent=11 // pred_check
        %p209 = pneg %p81
      $region18: #{_lambda_.8} parent=11 // pred_check_branch
        %211 = sbr.rel (%p209) target = $region20
      $region19: #{_lambda_.8} parent=11 // pred_region
        _
      $region20: #{_lambda_.8} parent=11 // pred_fallthru
        _
      // Predicated region
      $region21: #{_lambda_.8} parent=11 // pred_check
        %p212 = pneg %p102
      $region22: #{_lambda_.8} parent=11 // pred_check_branch
        %214 = sbr.rel (%p212) target = $region24
      $region23: #{_lambda_.8} parent=11 // pred_region
        _
      $region24: #{_lambda_.8} parent=11 // pred_fallthru
        _
      // Predicated region
      $region25: #{_lambda_.8} parent=11 // pred_check
        %p215 = pneg %p123
      $region26: #{_lambda_.8} parent=11 // pred_check_branch
        %217 = sbr.rel (%p215) target = $region28
      $region27: #{_lambda_.8} parent=11 // pred_region
        _
      $region28: #{_lambda_.8} parent=11 // pred_fallthru
        _
      // Predicated region
      $region29: #{_lambda_.8} parent=11 // pred_check
        %p218 = pneg %p144
      $region30: #{_lambda_.8} parent=11 // pred_check_branch
        %220 = sbr.rel (%p218) target = $region32
      $region31: #{_lambda_.8} parent=11 // pred_region
        _
      $region32: #{_lambda_.8} parent=11 // pred_fallthru
        _
      // Predicated region
      $region33: #{_lambda_.8} parent=11 // pred_check
        %p221 = pneg %p165
      $region34: #{_lambda_.8} parent=11 // pred_check_branch
        %223 = sbr.rel (%p221) target = $region36
      $region35: #{_lambda_.8} parent=11 // pred_region
        _
      $region36: #{_lambda_.8} parent=11 // pred_fallthru
        _
    $region12: #{_lambda_.8} parent=5 // pred_fallthru
      _
    %p224 = scmp.lt.s32.totalorder %s13, 2
    // Predicated region
    $region37: #{_lambda_.8} parent=5 // pred_check
      %p225 = pneg %p224
    $region38: #{_lambda_.8} parent=5 // pred_check_branch
      %227 = sbr.rel (%p225) target = $region40
    $region39: #{_lambda_.8} parent=5 // pred_region
      // Predicated region
      $region41: #{_lambda_.8} parent=39 // pred_check
        %p228 = pneg %p33
      $region42: #{_lambda_.8} parent=39 // pred_check_branch
        %230 = sbr.rel (%p228) target = $region44
      $region43: #{_lambda_.8} parent=39 // pred_region
        %s231 = smul.u32 4, %s13
        %p232 = scmp.lt.s32.totalorder %s231, 7
        %s233 = scalar_select %p232, %s231, 7
        %s234 = smul.addr %s233, 2
        %s235 = smul.addr %s234, 8
        %s236 = scalar_lea.vmem %s0, %s235
        %s237 = smul.u32 4, %s13
      $region44: #{_lambda_.8} parent=39 // pred_fallthru
        _
    $region40: #{_lambda_.8} parent=5 // pred_fallthru
      _
    %p238 = scmp.le.s32.totalorder 1, %s13
    %p239 = scmp.lt.s32.totalorder %s13, 3
    %p240 = pnand %p238, %p239
    %p241 = pneg %p240
    // Predicated region
    $region45: #{_lambda_.8} parent=5 // pred_check
      _
    $region46: #{_lambda_.8} parent=5 // pred_check_branch
      %243 = sbr.rel (%p240) target = $region48
    $region47: #{_lambda_.8} parent=5 // pred_region
      %s244 = ssub.s32 %s13, 1
      %s245 = smul.u32 4, %s18
      %p246 = scmp.lt.s32.totalorder %s245, 7
      %s247 = scalar_select %p246, %s245, 7
      %s248 = smul.addr %s247, 2
      %s249 = smul.addr %s248, 8
      %s250 = scalar_lea.vmem %s0, %s249
      %p251 = pneg %p39
      %p252 = pneg %p36
      %p253 = pneg %p60
      %p254 = pneg %p57
      %p255 = pneg %p81
      %p256 = pneg %p78
      %p257 = pneg %p102
      %p258 = pneg %p99
      %p259 = pneg %p123
      %p260 = pneg %p120
      %p261 = pneg %p144
      %p262 = pneg %p141
      %p263 = pneg %p165
      %p264 = pneg %p162
      %p265 = pneg %p191
      %p266 = pneg %p188
      %s267 = smul.u32 4, %s18
      %p268 = scmp.lt.s32.totalorder %s267, 7
      %s269 = scalar_select %p268, %s267, 7
      %s270 = smul.addr %s269, 2
      %s271 = smul.addr %s270, 8
      %s272 = scalar_lea.vmem %s7, %s271
      %s273 = smul.u32 4, %s18
      %p274 = scmp.lt.s32.totalorder %s273, 7
      %s275 = scalar_select %p274, %s273, 7
      %s276 = smul.addr %s275, 2
      %s277 = smul.addr %s276, 8
      %s278 = scalar_lea.vmem %s0, %s277
      %s279 = smul.u32 4, %s18
      %s280 = smul.u32 4, %s18
      %p281 = scmp.lt.s32.totalorder %s280, 7
      %s282 = scalar_select %p281, %s280, 7
      %s283 = smul.addr %s282, 2
      %s284 = smul.addr %s283, 8
      %s285 = scalar_lea.vmem %s7, %s284
      %s286 = smul.u32 4, %s18
      %v288 = vld [vmem:[%s1] sm:$0x1]
      %v289 = vld [vmem:[%s2] sm:$0x1]
      %v290 = vld [vmem:[%s3] sm:$0xf]
      %v291 = vld [vmem:[%s3 + $0x4] sm:$0xf]
      %v292 = vld [vmem:[%s3 + $0x8] sm:$0xf]
      %v293 = vld [vmem:[%s3 + $0xc] sm:$0xf]
      %v294 = vld [vmem:[%s4] sm:$0xf]
      %v295 = vld [vmem:[%s4 + $0x4] sm:$0xf]
      %v296 = vld [vmem:[%s4 + $0x8] sm:$0xf]
      %v297 = vld [vmem:[%s4 + $0xc] sm:$0xf]
      %v298 = vld [vmem:[%s5] sm:$0x1]
      %v299 = vld [vmem:[%s278] sm:$0xff]
      %v300 = vld [vmem:[%s278 + $0x8] sm:$0xff]
      %vm301 = vcmask 261120
      %v302 = vsel %vm301, %v299, 0.0
      %303 = vadd.xlane.f32.xlu0 %v302
      %v304 = vpop.xlane.xlu0 %303
      %v305 = vsel %vm301, %v300, 0.0
      %306 = vadd.xlane.f32.xlu0 %v305
      %v307 = vpop.xlane.xlu0 %306
      %v308 = vrcp.pop 32.0
      %v309 = vmul.f32 %v304, %v308
      %v310 = vmul.f32 %v307, %v308
      %v311 = vsub.f32 %v299, %v309
      %v312 = vsub.f32 %v300, %v310
      %v313 = vmul.f32 %v311, %v311
      %v314 = vmul.f32 %v312, %v312
      %v315 = vsel %vm301, %v313, 0.0
      %316 = vadd.xlane.f32.xlu0 %v315
      %v317 = vpop.xlane.xlu0 %316
      %v318 = vsel %vm301, %v314, 0.0
      %319 = vadd.xlane.f32.xlu0 %v318
      %v320 = vpop.xlane.xlu0 %319
      %v321 = vmul.f32 %v317, %v308
      %v322 = vmul.f32 %v320, %v308
      %v323 = vadd.f32 %v321, 1e-05
      %v324 = vadd.f32 %v322, 1e-05
      %v325 = vrsqrt.pop %v323
      %v326 = vrsqrt.pop %v324
      %v327 = vmul.f32 %v311, %v325
      %v328 = vmul.f32 %v312, %v326
      %v330 = vlaneseq
      %v331 = vshrl.u32 %v330, 7
      %v332 = vsub.s32 0, %v331
      %v333 = vrot.slane %v288, %v332
      %v335 = vmul.f32 %v327, %v333
      %v336 = vmul.f32 %v328, %v333
      %v338 = vlaneseq
      %v339 = vshrl.u32 %v338, 7
      %v340 = vsub.s32 0, %v339
      %v341 = vrot.slane %v289, %v340
      %v343 = vadd.f32 %v335, %v341
      %v344 = vadd.f32 %v336, %v341
      %v345 = vpack.c.bf16 %v344, %v343
      %v350 = vunpack.c.l.b16 %v290
      %v351 = vunpack.c.l.b16 %v291
      %v352 = vunpack.c.l.b16 %v292
      %v353 = vunpack.c.l.b16 %v293
      %v354 = vpack.c.b16 %v351, %v350
      %v355 = vpack.c.b16 %v353, %v352
      %v359 = vsel %vm301, %v345, 0
      %361 = vmatprep.subr.bf16.mxu0 0
      %362 = vmatpush1.bf16.msra.mxu0 0
      %363 = vmatprep.subr.bf16.mxu0 0
      %364 = vmatpush1.bf16.msra.mxu0 0
      %365 = vmatprep.subr.bf16.mxu0 0
      %366 = vmatpush1.bf16.msra.mxu0 0
      %367 = vmatprep.subr.bf16.mxu0 0
      %368 = vmatpush1.bf16.msra.mxu0 0
      %369 = vmatprep.subr.bf16.mxu0 0
      %370 = vmatpush1.bf16.msra.mxu0 0
      %371 = vmatprep.subr.bf16.mxu0 0
      %372 = vmatpush1.bf16.msra.mxu0 0
      %373 = vmatprep.subr.bf16.mxu0 0
      %374 = vmatpush1.bf16.msra.mxu0 %v355
      %375 = vmatprep.subr.bf16.mxu0 0
      %376 = vmatpush1.bf16.msra.mxu0 %v354
      %377 = vmatprep.subr.bf16.mxu0 0
      %378 = vmatpush2.bf16.msra.mxu0 0
      %379 = vmatprep.subr.bf16.mxu0 0
      %380 = vmatpush2.bf16.msra.mxu0 0
      %381 = vmatprep.subr.bf16.mxu0 0
      %382 = vmatpush2.bf16.msra.mxu0 0
      %383 = vmatprep.subr.bf16.mxu0 0
      %384 = vmatpush2.bf16.msra.mxu0 0
      %385 = vmatprep.subr.bf16.mxu0 0
      %386 = vmatpush2.bf16.msra.mxu0 0
      %387 = vmatprep.subr.bf16.mxu0 0
      %388 = vmatpush2.bf16.msra.mxu0 0
      %389 = vmatprep.subr.bf16.mxu0 0
      %390 = vmatpush2.bf16.msra.mxu0 0
      %391 = vmatprep.subr.bf16.mxu0 0
      %392 = vmatpush2.bf16.msra.mxu0 0
      %393 = vmatprep.mubr.bf16.mxu0 0
      %394 = vmatmul.mubr.bf16.gmra.mxu0 %v359
      %v395 = vpop.f32.mrf.mxu0
      %v396 = vadd.f32 0.0, %v395
      %v397 = vpop.f32.mrf.mxu0
      %v398 = vpop.f32.mrf.mxu0
      %v399 = vadd.f32 0.0, %v398
      %v400 = vpop.f32.mrf.mxu0
      %401 = vdwg.mxu0
      %v402 = vld [vmem:[%s6] sm:$0xff]
      %v403 = vld [vmem:[%s6 + $0x8] sm:$0xff]
      %v404 = vpack.c.bf16 %v399, %v396
      %406 = vrot.lane.b32.xlu0 %v404, 96
      %v407 = vpop.permute.xlu0 %406
      %vm408 = vcmask 130048
      %v410 = vsel %vm408, %v404, 0
      %v413 = vsel %vm408, %v407, 0
      %415 = vmatprep.subr.bf16.mxu0 0
      %416 = vmatpush1.bf16.xpose.msra.mxu0 0
      %417 = vmatprep.subr.bf16.mxu0 0
      %418 = vmatpush1.bf16.xpose.msra.mxu0 0
      %419 = vmatprep.subr.bf16.mxu0 0
      %420 = vmatpush1.bf16.xpose.msra.mxu0 0
      %421 = vmatprep.subr.bf16.mxu0 0
      %422 = vmatpush1.bf16.xpose.msra.mxu0 0
      %423 = vmatprep.subr.bf16.mxu0 0
      %424 = vmatpush1.bf16.xpose.msra.mxu0 0
      %425 = vmatprep.subr.bf16.mxu0 0
      %426 = vmatpush1.bf16.xpose.msra.mxu0 0
      %427 = vmatprep.subr.bf16.mxu0 0
      %428 = vmatpush1.bf16.xpose.msra.mxu0 0
      %429 = vmatprep.subr.bf16.mxu0 0
      %430 = vmatpush1.bf16.xpose.msra.mxu0 %v413
      %431 = vmatprep.subr.bf16.mxu0 0
      %432 = vmatpush2.bf16.xpose.msra.mxu0 0
      %433 = vmatprep.subr.bf16.mxu0 0
      %434 = vmatpush2.bf16.xpose.msra.mxu0 0
      %435 = vmatprep.subr.bf16.mxu0 0
      %436 = vmatpush2.bf16.xpose.msra.mxu0 0
      %437 = vmatprep.subr.bf16.mxu0 0
      %438 = vmatpush2.bf16.xpose.msra.mxu0 0
      %439 = vmatprep.subr.bf16.mxu0 0
      %440 = vmatpush2.bf16.xpose.msra.mxu0 0
      %441 = vmatprep.subr.bf16.mxu0 0
      %442 = vmatpush2.bf16.xpose.msra.mxu0 0
      %443 = vmatprep.subr.bf16.mxu0 0
      %444 = vmatpush2.bf16.xpose.msra.mxu0 0
      %445 = vmatprep.subr.bf16.mxu0 0
      %446 = vmatpush2.bf16.xpose.msra.mxu0 0
      %447 = vmatprep.mubr.bf16.mxu0 0
      %448 = vmatmul.mubr.bf16.gmra.mxu0 %v410
      %v449 = vpop.f32.mrf.mxu0
      %v450 = vadd.f32 0.0, %v449
      %v451 = vpop.f32.mrf.mxu0
      %v452 = vpop.f32.mrf.mxu0
      %v453 = vadd.f32 0.0, %v452
      %v454 = vpop.f32.mrf.mxu0
      %455 = vdwg.mxu0
      %v456 = vmul.f32 %v450, 0.25
      %v457 = vmul.f32 %v453, 0.25
      %v458 = vadd.f32 %v456, %v402
      %v459 = vadd.f32 %v457, %v403
      %v460 = vsel %vm408, %v458, -inf
      %461 = vmax.xlane.f32.xlu0 %v460
      %v462 = vpop.xlane.xlu0 %461
      %v463 = vsel %vm408, %v459, -inf
      %464 = vmax.xlane.f32.xlu0 %v463
      %v465 = vpop.xlane.xlu0 %464
      %v466 = vsub.f32 %v458, %v462
      %v467 = vsub.f32 %v459, %v465
      %v468 = vmul.f32 %v466, 1.442695
      %v469 = vpow.pop %v468
      %v470 = vmul.f32 %v467, 1.442695
      %v471 = vpow.pop %v470
      %v472 = vsel %vm408, %v469, 0.0
      %473 = vadd.xlane.f32.xlu0 %v472
      %v474 = vpop.xlane.xlu0 %473
      %v475 = vsel %vm408, %v471, 0.0
      %476 = vadd.xlane.f32.xlu0 %v475
      %v477 = vpop.xlane.xlu0 %476
      %v478 = vrcp.pop %v474
      %v479 = vrcp.pop %v477
      %v480 = vmul.f32 %v469, %v478
      %v481 = vmul.f32 %v471, %v479
      %v482 = vpack.c.bf16 %v481, %v480
      %483 = vrot.lane.b32.xlu0 %v404, 64
      %v484 = vpop.permute.xlu0 %483
      %v487 = vsel %vm408, %v482, 0
      %489 = vmatprep.subr.bf16.mxu0 0
      %490 = vmatpush1.bf16.msra.mxu0 0
      %491 = vmatprep.subr.bf16.mxu0 0
      %492 = vmatpush1.bf16.msra.mxu0 0
      %493 = vmatprep.subr.bf16.mxu0 0
      %494 = vmatpush1.bf16.msra.mxu0 0
      %495 = vmatprep.subr.bf16.mxu0 0
      %496 = vmatpush1.bf16.msra.mxu0 0
      %497 = vmatprep.subr.bf16.mxu0 0
      %498 = vmatpush1.bf16.msra.mxu0 0
      %499 = vmatprep.subr.bf16.mxu0 0
      %500 = vmatpush1.bf16.msra.mxu0 0
      %501 = vmatprep.subr.bf16.mxu0 0
      %502 = vmatpush1.bf16.msra.mxu0 0
      %503 = vmatprep.subr.bf16.mxu0 0
      %504 = vmatpush1.bf16.msra.mxu0 %v484
      %505 = vmatprep.subr.bf16.mxu0 0
      %506 = vmatpush2.bf16.msra.mxu0 0
      %507 = vmatprep.subr.bf16.mxu0 0
      %508 = vmatpush2.bf16.msra.mxu0 0
      %509 = vmatprep.subr.bf16.mxu0 0
      %510 = vmatpush2.bf16.msra.mxu0 0
      %511 = vmatprep.subr.bf16.mxu0 0
      %512 = vmatpush2.bf16.msra.mxu0 0
      %513 = vmatprep.subr.bf16.mxu0 0
      %514 = vmatpush2.bf16.msra.mxu0 0
      %515 = vmatprep.subr.bf16.mxu0 0
      %516 = vmatpush2.bf16.msra.mxu0 0
      %517 = vmatprep.subr.bf16.mxu0 0
      %518 = vmatpush2.bf16.msra.mxu0 0
      %519 = vmatprep.subr.bf16.mxu0 0
      %520 = vmatpush2.bf16.msra.mxu0 0
      %521 = vmatprep.mubr.bf16.mxu0 0
      %522 = vmatmul.mubr.bf16.gmra.mxu0 %v487
      %v523 = vpop.f32.mrf.mxu0
      %v524 = vadd.f32 0.0, %v523
      %v525 = vpop.f32.mrf.mxu0
      %v526 = vpop.f32.mrf.mxu0
      %v527 = vadd.f32 0.0, %v526
      %v528 = vpop.f32.mrf.mxu0
      %529 = vdwg.mxu0
      %530 = vrot.lane.b32.xlu0 %v404, 112
      %v531 = vpop.permute.xlu0 %530
      %532 = vrot.lane.b32.xlu0 %v404, 80
      %v533 = vpop.permute.xlu0 %532
      %v535 = vsel %vm408, %v531, 0
      %v538 = vsel %vm408, %v533, 0
      %540 = vmatprep.subr.bf16.mxu0 0
      %541 = vmatpush1.bf16.xpose.msra.mxu0 0
      %542 = vmatprep.subr.bf16.mxu0 0
      %543 = vmatpush1.bf16.xpose.msra.mxu0 0
      %544 = vmatprep.subr.bf16.mxu0 0
      %545 = vmatpush1.bf16.xpose.msra.mxu0 0
      %546 = vmatprep.subr.bf16.mxu0 0
      %547 = vmatpush1.bf16.xpose.msra.mxu0 0
      %548 = vmatprep.subr.bf16.mxu0 0
      %549 = vmatpush1.bf16.xpose.msra.mxu0 0
      %550 = vmatprep.subr.bf16.mxu0 0
      %551 = vmatpush1.bf16.xpose.msra.mxu0 0
      %552 = vmatprep.subr.bf16.mxu0 0
      %553 = vmatpush1.bf16.xpose.msra.mxu0 0
      %554 = vmatprep.subr.bf16.mxu0 0
      %555 = vmatpush1.bf16.xpose.msra.mxu0 %v538
      %556 = vmatprep.subr.bf16.mxu0 0
      %557 = vmatpush2.bf16.xpose.msra.mxu0 0
      %558 = vmatprep.subr.bf16.mxu0 0
      %559 = vmatpush2.bf16.xpose.msra.mxu0 0
      %560 = vmatprep.subr.bf16.mxu0 0
      %561 = vmatpush2.bf16.xpose.msra.mxu0 0
      %562 = vmatprep.subr.bf16.mxu0 0
      %563 = vmatpush2.bf16.xpose.msra.mxu0 0
      %564 = vmatprep.subr.bf16.mxu0 0
      %565 = vmatpush2.bf16.xpose.msra.mxu0 0
      %566 = vmatprep.subr.bf16.mxu0 0
      %567 = vmatpush2.bf16.xpose.msra.mxu0 0
      %568 = vmatprep.subr.bf16.mxu0 0
      %569 = vmatpush2.bf16.xpose.msra.mxu0 0
      %570 = vmatprep.subr.bf16.mxu0 0
      %571 = vmatpush2.bf16.xpose.msra.mxu0 0
      %572 = vmatprep.mubr.bf16.mxu0 0
      %573 = vmatmul.mubr.bf16.gmra.mxu0 %v535
      %v574 = vpop.f32.mrf.mxu0
      %v575 = vadd.f32 0.0, %v574
      %v576 = vpop.f32.mrf.mxu0
      %v577 = vpop.f32.mrf.mxu0
      %v578 = vadd.f32 0.0, %v577
      %v579 = vpop.f32.mrf.mxu0
      %580 = vdwg.mxu0
      %v581 = vmul.f32 %v575, 0.25
      %v582 = vmul.f32 %v578, 0.25
      %v583 = vadd.f32 %v581, %v402
      %v584 = vadd.f32 %v582, %v403
      %v585 = vsel %vm408, %v583, -inf
      %586 = vmax.xlane.f32.xlu0 %v585
      %v587 = vpop.xlane.xlu0 %586
      %v588 = vsel %vm408, %v584, -inf
      %589 = vmax.xlane.f32.xlu0 %v588
      %v590 = vpop.xlane.xlu0 %589
      %v591 = vsub.f32 %v583, %v587
      %v592 = vsub.f32 %v584, %v590
      %v593 = vmul.f32 %v591, 1.442695
      %v594 = vpow.pop %v593
      %v595 = vmul.f32 %v592, 1.442695
      %v596 = vpow.pop %v595
      %v597 = vsel %vm408, %v594, 0.0
      %598 = vadd.xlane.f32.xlu0 %v597
      %v599 = vpop.xlane.xlu0 %598
      %v600 = vsel %vm408, %v596, 0.0
      %601 = vadd.xlane.f32.xlu0 %v600
      %v602 = vpop.xlane.xlu0 %601
      %v603 = vrcp.pop %v599
      %v604 = vrcp.pop %v602
      %v605 = vmul.f32 %v594, %v603
      %v606 = vmul.f32 %v596, %v604
      %v607 = vpack.c.bf16 %v606, %v605
      %608 = vrot.lane.b32.xlu0 %v404, 48
      %v609 = vpop.permute.xlu0 %608
      %v612 = vsel %vm408, %v607, 0
      %614 = vmatprep.subr.bf16.mxu0 0
      %615 = vmatpush1.bf16.msra.mxu0 0
      %616 = vmatprep.subr.bf16.mxu0 0
      %617 = vmatpush1.bf16.msra.mxu0 0
      %618 = vmatprep.subr.bf16.mxu0 0
      %619 = vmatpush1.bf16.msra.mxu0 0
      %620 = vmatprep.subr.bf16.mxu0 0
      %621 = vmatpush1.bf16.msra.mxu0 0
      %622 = vmatprep.subr.bf16.mxu0 0
      %623 = vmatpush1.bf16.msra.mxu0 0
      %624 = vmatprep.subr.bf16.mxu0 0
      %625 = vmatpush1.bf16.msra.mxu0 0
      %626 = vmatprep.subr.bf16.mxu0 0
      %627 = vmatpush1.bf16.msra.mxu0 0
      %628 = vmatprep.subr.bf16.mxu0 0
      %629 = vmatpush1.bf16.msra.mxu0 %v609
      %630 = vmatprep.subr.bf16.mxu0 0
      %631 = vmatpush2.bf16.msra.mxu0 0
      %632 = vmatprep.subr.bf16.mxu0 0
      %633 = vmatpush2.bf16.msra.mxu0 0
      %634 = vmatprep.subr.bf16.mxu0 0
      %635 = vmatpush2.bf16.msra.mxu0 0
      %636 = vmatprep.subr.bf16.mxu0 0
      %637 = vmatpush2.bf16.msra.mxu0 0
      %638 = vmatprep.subr.bf16.mxu0 0
      %639 = vmatpush2.bf16.msra.mxu0 0
      %640 = vmatprep.subr.bf16.mxu0 0
      %641 = vmatpush2.bf16.msra.mxu0 0
      %642 = vmatprep.subr.bf16.mxu0 0
      %643 = vmatpush2.bf16.msra.mxu0 0
      %644 = vmatprep.subr.bf16.mxu0 0
      %645 = vmatpush2.bf16.msra.mxu0 0
      %646 = vmatprep.mubr.bf16.mxu0 0
      %647 = vmatmul.mubr.bf16.gmra.mxu0 %v612
      %v648 = vpop.f32.mrf.mxu0
      %v649 = vadd.f32 0.0, %v648
      %v650 = vpop.f32.mrf.mxu0
      %v651 = vpop.f32.mrf.mxu0
      %v652 = vadd.f32 0.0, %v651
      %v653 = vpop.f32.mrf.mxu0
      %654 = vdwg.mxu0
      %657 = vrot.lane.b32.xlu0 %v649, 16
      %v658 = vpop.permute.xlu0 %657
      %659 = vrot.lane.b32.xlu0 %v652, 16
      %v660 = vpop.permute.xlu0 %659
      %v663 = vsel %vm408, %v524, %v658
      %v664 = vsel %vm408, %v527, %v660
      %v665 = vpack.c.bf16 %v664, %v663
      %v667 = vlaneseq
      %v668 = vshrl.u32 %v667, 7
      %v669 = vsub.s32 0, %v668
      %v670 = vrot.slane %v298, %v669
      %v676 = vunpack.c.l.b16 %v294
      %v677 = vunpack.c.l.b16 %v295
      %v678 = vunpack.c.l.b16 %v296
      %v679 = vunpack.c.l.b16 %v297
      %v680 = vpack.c.b16 %v677, %v676
      %v681 = vpack.c.b16 %v679, %v678
      %v685 = vsel %vm301, %v665, 0
      %687 = vmatprep.subr.bf16.mxu0 0
      %688 = vmatpush1.bf16.msra.mxu0 0
      %689 = vmatprep.subr.bf16.mxu0 0
      %690 = vmatpush1.bf16.msra.mxu0 0
      %691 = vmatprep.subr.bf16.mxu0 0
      %692 = vmatpush1.bf16.msra.mxu0 0
      %693 = vmatprep.subr.bf16.mxu0 0
      %694 = vmatpush1.bf16.msra.mxu0 0
      %695 = vmatprep.subr.bf16.mxu0 0
      %696 = vmatpush1.bf16.msra.mxu0 0
      %697 = vmatprep.subr.bf16.mxu0 0
      %698 = vmatpush1.bf16.msra.mxu0 0
      %699 = vmatprep.subr.bf16.mxu0 0
      %700 = vmatpush1.bf16.msra.mxu0 %v681
      %701 = vmatprep.subr.bf16.mxu0 0
      %702 = vmatpush1.bf16.msra.mxu0 %v680
      %703 = vmatprep.subr.bf16.mxu0 0
      %704 = vmatpush2.bf16.msra.mxu0 0
      %705 = vmatprep.subr.bf16.mxu0 0
      %706 = vmatpush2.bf16.msra.mxu0 0
      %707 = vmatprep.subr.bf16.mxu0 0
      %708 = vmatpush2.bf16.msra.mxu0 0
      %709 = vmatprep.subr.bf16.mxu0 0
      %710 = vmatpush2.bf16.msra.mxu0 0
      %711 = vmatprep.subr.bf16.mxu0 0
      %712 = vmatpush2.bf16.msra.mxu0 0
      %713 = vmatprep.subr.bf16.mxu0 0
      %714 = vmatpush2.bf16.msra.mxu0 0
      %715 = vmatprep.subr.bf16.mxu0 0
      %716 = vmatpush2.bf16.msra.mxu0 0
      %717 = vmatprep.subr.bf16.mxu0 0
      %718 = vmatpush2.bf16.msra.mxu0 0
      %719 = vmatprep.mubr.bf16.mxu0 0
      %720 = vmatmul.mubr.bf16.gmra.mxu0 %v685
      %v721 = vpop.f32.mrf.mxu0
      %v722 = vadd.f32 %v670, %v721
      %v723 = vpop.f32.mrf.mxu0
      %v724 = vpop.f32.mrf.mxu0
      %v725 = vadd.f32 %v670, %v724
      %v726 = vpop.f32.mrf.mxu0
      %727 = vdwg.mxu0
      %v728 = vadd.f32 %v722, %v299
      %v729 = vadd.f32 %v725, %v300
      %730 = vst.msk [vmem:[%s285] sm:$0xff] %vm301, %v728
      %731 = vst.msk [vmem:[%s285 + $0x8] sm:$0xff] %vm301, %v729
      %s732 = scalar_lea.vmem %s278, 16
      %v733 = vld [vmem:[%s732] sm:$0xff]
      %v734 = vld [vmem:[%s732 + $0x8] sm:$0xff]
      %v735 = vsel %vm301, %v733, 0.0
      %736 = vadd.xlane.f32.xlu0 %v735
      %v737 = vpop.xlane.xlu0 %736
      %v738 = vsel %vm301, %v734, 0.0
      %739 = vadd.xlane.f32.xlu0 %v738
      %v740 = vpop.xlane.xlu0 %739
      %v741 = vmul.f32 %v737, %v308
      %v742 = vmul.f32 %v740, %v308
      %v743 = vsub.f32 %v733, %v741
      %v744 = vsub.f32 %v734, %v742
      %v745 = vmul.f32 %v743, %v743
      %v746 = vmul.f32 %v744, %v744
      %v747 = vsel %vm301, %v745, 0.0
      %748 = vadd.xlane.f32.xlu0 %v747
      %v749 = vpop.xlane.xlu0 %748
      %v750 = vsel %vm301, %v746, 0.0
      %751 = vadd.xlane.f32.xlu0 %v750
      %v752 = vpop.xlane.xlu0 %751
      %v753 = vmul.f32 %v749, %v308
      %v754 = vmul.f32 %v752, %v308
      %v755 = vadd.f32 %v753, 1e-05
      %v756 = vadd.f32 %v754, 1e-05
      %v757 = vrsqrt.pop %v755
      %v758 = vrsqrt.pop %v756
      %v759 = vmul.f32 %v743, %v757
      %v760 = vmul.f32 %v744, %v758
      %v761 = vmul.f32 %v759, %v333
      %v762 = vmul.f32 %v760, %v333
      %v763 = vadd.f32 %v761, %v341
      %v764 = vadd.f32 %v762, %v341
      %v765 = vpack.c.bf16 %v764, %v763
      %v767 = vsel %vm301, %v765, 0
      %769 = vmatprep.subr.bf16.mxu0 0
      %770 = vmatpush1.bf16.msra.mxu0 0
      %771 = vmatprep.subr.bf16.mxu0 0
      %772 = vmatpush1.bf16.msra.mxu0 0
      %773 = vmatprep.subr.bf16.mxu0 0
      %774 = vmatpush1.bf16.msra.mxu0 0
      %775 = vmatprep.subr.bf16.mxu0 0
      %776 = vmatpush1.bf16.msra.mxu0 0
      %777 = vmatprep.subr.bf16.mxu0 0
      %778 = vmatpush1.bf16.msra.mxu0 0
      %779 = vmatprep.subr.bf16.mxu0 0
      %780 = vmatpush1.bf16.msra.mxu0 0
      %781 = vmatprep.subr.bf16.mxu0 0
      %782 = vmatpush1.bf16.msra.mxu0 %v355
      %783 = vmatprep.subr.bf16.mxu0 0
      %784 = vmatpush1.bf16.msra.mxu0 %v354
      %785 = vmatprep.subr.bf16.mxu0 0
      %786 = vmatpush2.bf16.msra.mxu0 0
      %787 = vmatprep.subr.bf16.mxu0 0
      %788 = vmatpush2.bf16.msra.mxu0 0
      %789 = vmatprep.subr.bf16.mxu0 0
      %790 = vmatpush2.bf16.msra.mxu0 0
      %791 = vmatprep.subr.bf16.mxu0 0
      %792 = vmatpush2.bf16.msra.mxu0 0
      %793 = vmatprep.subr.bf16.mxu0 0
      %794 = vmatpush2.bf16.msra.mxu0 0
      %795 = vmatprep.subr.bf16.mxu0 0
      %796 = vmatpush2.bf16.msra.mxu0 0
      %797 = vmatprep.subr.bf16.mxu0 0
      %798 = vmatpush2.bf16.msra.mxu0 0
      %799 = vmatprep.subr.bf16.mxu0 0
      %800 = vmatpush2.bf16.msra.mxu0 0
      %801 = vmatprep.mubr.bf16.mxu0 0
      %802 = vmatmul.mubr.bf16.gmra.mxu0 %v767
      %v803 = vpop.f32.mrf.mxu0
      %v804 = vadd.f32 0.0, %v803
      %v805 = vpop.f32.mrf.mxu0
      %v806 = vpop.f32.mrf.mxu0
      %v807 = vadd.f32 0.0, %v806
      %v808 = vpop.f32.mrf.mxu0
      %809 = vdwg.mxu0
      %s810 = scalar_lea.vmem %s6, 16
      %v811 = vld [vmem:[%s810] sm:$0xff]
      %v812 = vld [vmem:[%s810 + $0x8] sm:$0xff]
      %v813 = vpack.c.bf16 %v807, %v804
      %815 = vrot.lane.b32.xlu0 %v813, 96
      %v816 = vpop.permute.xlu0 %815
      %v818 = vsel %vm408, %v813, 0
      %v821 = vsel %vm408, %v816, 0
      %823 = vmatprep.subr.bf16.mxu0 0
      %824 = vmatpush1.bf16.xpose.msra.mxu0 0
      %825 = vmatprep.subr.bf16.mxu0 0
      %826 = vmatpush1.bf16.xpose.msra.mxu0 0
      %827 = vmatprep.subr.bf16.mxu0 0
      %828 = vmatpush1.bf16.xpose.msra.mxu0 0
      %829 = vmatprep.subr.bf16.mxu0 0
      %830 = vmatpush1.bf16.xpose.msra.mxu0 0
      %831 = vmatprep.subr.bf16.mxu0 0
      %832 = vmatpush1.bf16.xpose.msra.mxu0 0
      %833 = vmatprep.subr.bf16.mxu0 0
      %834 = vmatpush1.bf16.xpose.msra.mxu0 0
      %835 = vmatprep.subr.bf16.mxu0 0
      %836 = vmatpush1.bf16.xpose.msra.mxu0 0
      %837 = vmatprep.subr.bf16.mxu0 0
      %838 = vmatpush1.bf16.xpose.msra.mxu0 %v821
      %839 = vmatprep.subr.bf16.mxu0 0
      %840 = vmatpush2.bf16.xpose.msra.mxu0 0
      %841 = vmatprep.subr.bf16.mxu0 0
      %842 = vmatpush2.bf16.xpose.msra.mxu0 0
      %843 = vmatprep.subr.bf16.mxu0 0
      %844 = vmatpush2.bf16.xpose.msra.mxu0 0
      %845 = vmatprep.subr.bf16.mxu0 0
      %846 = vmatpush2.bf16.xpose.msra.mxu0 0
      %847 = vmatprep.subr.bf16.mxu0 0
      %848 = vmatpush2.bf16.xpose.msra.mxu0 0
      %849 = vmatprep.subr.bf16.mxu0 0
      %850 = vmatpush2.bf16.xpose.msra.mxu0 0
      %851 = vmatprep.subr.bf16.mxu0 0
      %852 = vmatpush2.bf16.xpose.msra.mxu0 0
      %853 = vmatprep.subr.bf16.mxu0 0
      %854 = vmatpush2.bf16.xpose.msra.mxu0 0
      %855 = vmatprep.mubr.bf16.mxu0 0
      %856 = vmatmul.mubr.bf16.gmra.mxu0 %v818
      %v857 = vpop.f32.mrf.mxu0
      %v858 = vadd.f32 0.0, %v857
      %v859 = vpop.f32.mrf.mxu0
      %v860 = vpop.f32.mrf.mxu0
      %v861 = vadd.f32 0.0, %v860
      %v862 = vpop.f32.mrf.mxu0
      %863 = vdwg.mxu0
      %v864 = vmul.f32 %v858, 0.25
      %v865 = vmul.f32 %v861, 0.25
      %v866 = vadd.f32 %v864, %v811
      %v867 = vadd.f32 %v865, %v812
      %v868 = vsel %vm408, %v866, -inf
      %869 = vmax.xlane.f32.xlu0 %v868
      %v870 = vpop.xlane.xlu0 %869
      %v871 = vsel %vm408, %v867, -inf
      %872 = vmax.xlane.f32.xlu0 %v871
      %v873 = vpop.xlane.xlu0 %872
      %v874 = vsub.f32 %v866, %v870
      %v875 = vsub.f32 %v867, %v873
      %v876 = vmul.f32 %v874, 1.442695
      %v877 = vpow.pop %v876
      %v878 = vmul.f32 %v875, 1.442695
      %v879 = vpow.pop %v878
      %v880 = vsel %vm408, %v877, 0.0
      %881 = vadd.xlane.f32.xlu0 %v880
      %v882 = vpop.xlane.xlu0 %881
      %v883 = vsel %vm408, %v879, 0.0
      %884 = vadd.xlane.f32.xlu0 %v883
      %v885 = vpop.xlane.xlu0 %884
      %v886 = vrcp.pop %v882
      %v887 = vrcp.pop %v885
      %v888 = vmul.f32 %v877, %v886
      %v889 = vmul.f32 %v879, %v887
      %v890 = vpack.c.bf16 %v889, %v888
      %891 = vrot.lane.b32.xlu0 %v813, 64
      %v892 = vpop.permute.xlu0 %891
      %v895 = vsel %vm408, %v890, 0
      %897 = vmatprep.subr.bf16.mxu0 0
      %898 = vmatpush1.bf16.msra.mxu0 0
      %899 = vmatprep.subr.bf16.mxu0 0
      %900 = vmatpush1.bf16.msra.mxu0 0
      %901 = vmatprep.subr.bf16.mxu0 0
      %902 = vmatpush1.bf16.msra.mxu0 0
      %903 = vmatprep.subr.bf16.mxu0 0
      %904 = vmatpush1.bf16.msra.mxu0 0
      %905 = vmatprep.subr.bf16.mxu0 0
      %906 = vmatpush1.bf16.msra.mxu0 0
      %907 = vmatprep.subr.bf16.mxu0 0
      %908 = vmatpush1.bf16.msra.mxu0 0
      %909 = vmatprep.subr.bf16.mxu0 0
      %910 = vmatpush1.bf16.msra.mxu0 0
      %911 = vmatprep.subr.bf16.mxu0 0
      %912 = vmatpush1.bf16.msra.mxu0 %v892
      %913 = vmatprep.subr.bf16.mxu0 0
      %914 = vmatpush2.bf16.msra.mxu0 0
      %915 = vmatprep.subr.bf16.mxu0 0
      %916 = vmatpush2.bf16.msra.mxu0 0
      %917 = vmatprep.subr.bf16.mxu0 0
      %918 = vmatpush2.bf16.msra.mxu0 0
      %919 = vmatprep.subr.bf16.mxu0 0
      %920 = vmatpush2.bf16.msra.mxu0 0
      %921 = vmatprep.subr.bf16.mxu0 0
      %922 = vmatpush2.bf16.msra.mxu0 0
      %923 = vmatprep.subr.bf16.mxu0 0
      %924 = vmatpush2.bf16.msra.mxu0 0
      %925 = vmatprep.subr.bf16.mxu0 0
      %926 = vmatpush2.bf16.msra.mxu0 0
      %927 = vmatprep.subr.bf16.mxu0 0
      %928 = vmatpush2.bf16.msra.mxu0 0
      %929 = vmatprep.mubr.bf16.mxu0 0
      %930 = vmatmul.mubr.bf16.gmra.mxu0 %v895
      %v931 = vpop.f32.mrf.mxu0
      %v932 = vadd.f32 0.0, %v931
      %v933 = vpop.f32.mrf.mxu0
      %v934 = vpop.f32.mrf.mxu0
      %v935 = vadd.f32 0.0, %v934
      %v936 = vpop.f32.mrf.mxu0
      %937 = vdwg.mxu0
      %938 = vrot.lane.b32.xlu0 %v813, 112
      %v939 = vpop.permute.xlu0 %938
      %940 = vrot.lane.b32.xlu0 %v813, 80
      %v941 = vpop.permute.xlu0 %940
      %v943 = vsel %vm408, %v939, 0
      %v946 = vsel %vm408, %v941, 0
      %948 = vmatprep.subr.bf16.mxu0 0
      %949 = vmatpush1.bf16.xpose.msra.mxu0 0
      %950 = vmatprep.subr.bf16.mxu0 0
      %951 = vmatpush1.bf16.xpose.msra.mxu0 0
      %952 = vmatprep.subr.bf16.mxu0 0
      %953 = vmatpush1.bf16.xpose.msra.mxu0 0
      %954 = vmatprep.subr.bf16.mxu0 0
      %955 = vmatpush1.bf16.xpose.msra.mxu0 0
      %956 = vmatprep.subr.bf16.mxu0 0
      %957 = vmatpush1.bf16.xpose.msra.mxu0 0
      %958 = vmatprep.subr.bf16.mxu0 0
      %959 = vmatpush1.bf16.xpose.msra.mxu0 0
      %960 = vmatprep.subr.bf16.mxu0 0
      %961 = vmatpush1.bf16.xpose.msra.mxu0 0
      %962 = vmatprep.subr.bf16.mxu0 0
      %963 = vmatpush1.bf16.xpose.msra.mxu0 %v946
      %964 = vmatprep.subr.bf16.mxu0 0
      %965 = vmatpush2.bf16.xpose.msra.mxu0 0
      %966 = vmatprep.subr.bf16.mxu0 0
      %967 = vmatpush2.bf16.xpose.msra.mxu0 0
      %968 = vmatprep.subr.bf16.mxu0 0
      %969 = vmatpush2.bf16.xpose.msra.mxu0 0
      %970 = vmatprep.subr.bf16.mxu0 0
      %971 = vmatpush2.bf16.xpose.msra.mxu0 0
      %972 = vmatprep.subr.bf16.mxu0 0
      %973 = vmatpush2.bf16.xpose.msra.mxu0 0
      %974 = vmatprep.subr.bf16.mxu0 0
      %975 = vmatpush2.bf16.xpose.msra.mxu0 0
      %976 = vmatprep.subr.bf16.mxu0 0
      %977 = vmatpush2.bf16.xpose.msra.mxu0 0
      %978 = vmatprep.subr.bf16.mxu0 0
      %979 = vmatpush2.bf16.xpose.msra.mxu0 0
      %980 = vmatprep.mubr.bf16.mxu0 0
      %981 = vmatmul.mubr.bf16.gmra.mxu0 %v943
      %v982 = vpop.f32.mrf.mxu0
      %v983 = vadd.f32 0.0, %v982
      %v984 = vpop.f32.mrf.mxu0
      %v985 = vpop.f32.mrf.mxu0
      %v986 = vadd.f32 0.0, %v985
      %v987 = vpop.f32.mrf.mxu0
      %988 = vdwg.mxu0
      %v989 = vmul.f32 %v983, 0.25
      %v990 = vmul.f32 %v986, 0.25
      %v991 = vadd.f32 %v989, %v811
      %v992 = vadd.f32 %v990, %v812
      %v993 = vsel %vm408, %v991, -inf
      %994 = vmax.xlane.f32.xlu0 %v993
      %v995 = vpop.xlane.xlu0 %994
      %v996 = vsel %vm408, %v992, -inf
      %997 = vmax.xlane.f32.xlu0 %v996
      %v998 = vpop.xlane.xlu0 %997
      %v999 = vsub.f32 %v991, %v995
      %v1000 = vsub.f32 %v992, %v998
      %v1001 = vmul.f32 %v999, 1.442695
      %v1002 = vpow.pop %v1001
      %v1003 = vmul.f32 %v1000, 1.442695
      %v1004 = vpow.pop %v1003
      %v1005 = vsel %vm408, %v1002, 0.0
      %1006 = vadd.xlane.f32.xlu0 %v1005
      %v1007 = vpop.xlane.xlu0 %1006
      %v1008 = vsel %vm408, %v1004, 0.0
      %1009 = vadd.xlane.f32.xlu0 %v1008
      %v1010 = vpop.xlane.xlu0 %1009
      %v1011 = vrcp.pop %v1007
      %v1012 = vrcp.pop %v1010
      %v1013 = vmul.f32 %v1002, %v1011
      %v1014 = vmul.f32 %v1004, %v1012
      %v1015 = vpack.c.bf16 %v1014, %v1013
      %1016 = vrot.lane.b32.xlu0 %v813, 48
      %v1017 = vpop.permute.xlu0 %1016
      %v1020 = vsel %vm408, %v1015, 0
      %1022 = vmatprep.subr.bf16.mxu0 0
      %1023 = vmatpush1.bf16.msra.mxu0 0
      %1024 = vmatprep.subr.bf16.mxu0 0
      %1025 = vmatpush1.bf16.msra.mxu0 0
      %1026 = vmatprep.subr.bf16.mxu0 0
      %1027 = vmatpush1.bf16.msra.mxu0 0
      %1028 = vmatprep.subr.bf16.mxu0 0
      %1029 = vmatpush1.bf16.msra.mxu0 0
      %1030 = vmatprep.subr.bf16.mxu0 0
      %1031 = vmatpush1.bf16.msra.mxu0 0
      %1032 = vmatprep.subr.bf16.mxu0 0
      %1033 = vmatpush1.bf16.msra.mxu0 0
      %1034 = vmatprep.subr.bf16.mxu0 0
      %1035 = vmatpush1.bf16.msra.mxu0 0
      %1036 = vmatprep.subr.bf16.mxu0 0
      %1037 = vmatpush1.bf16.msra.mxu0 %v1017
      %1038 = vmatprep.subr.bf16.mxu0 0
      %1039 = vmatpush2.bf16.msra.mxu0 0
      %1040 = vmatprep.subr.bf16.mxu0 0
      %1041 = vmatpush2.bf16.msra.mxu0 0
      %1042 = vmatprep.subr.bf16.mxu0 0
      %1043 = vmatpush2.bf16.msra.mxu0 0
      %1044 = vmatprep.subr.bf16.mxu0 0
      %1045 = vmatpush2.bf16.msra.mxu0 0
      %1046 = vmatprep.subr.bf16.mxu0 0
      %1047 = vmatpush2.bf16.msra.mxu0 0
      %1048 = vmatprep.subr.bf16.mxu0 0
      %1049 = vmatpush2.bf16.msra.mxu0 0
      %1050 = vmatprep.subr.bf16.mxu0 0
      %1051 = vmatpush2.bf16.msra.mxu0 0
      %1052 = vmatprep.subr.bf16.mxu0 0
      %1053 = vmatpush2.bf16.msra.mxu0 0
      %1054 = vmatprep.mubr.bf16.mxu0 0
      %1055 = vmatmul.mubr.bf16.gmra.mxu0 %v1020
      %v1056 = vpop.f32.mrf.mxu0
      %v1057 = vadd.f32 0.0, %v1056
      %v1058 = vpop.f32.mrf.mxu0
      %v1059 = vpop.f32.mrf.mxu0
      %v1060 = vadd.f32 0.0, %v1059
      %v1061 = vpop.f32.mrf.mxu0
      %1062 = vdwg.mxu0
      %1065 = vrot.lane.b32.xlu0 %v1057, 16
      %v1066 = vpop.permute.xlu0 %1065
      %1067 = vrot.lane.b32.xlu0 %v1060, 16
      %v1068 = vpop.permute.xlu0 %1067
      %v1071 = vsel %vm408, %v932, %v1066
      %v1072 = vsel %vm408, %v935, %v1068
      %v1073 = vpack.c.bf16 %v1072, %v1071
      %v1075 = vsel %vm301, %v1073, 0
      %1077 = vmatprep.subr.bf16.mxu0 0
      %1078 = vmatpush1.bf16.msra.mxu0 0
      %1079 = vmatprep.subr.bf16.mxu0 0
      %1080 = vmatpush1.bf16.msra.mxu0 0
      %1081 = vmatprep.subr.bf16.mxu0 0
      %1082 = vmatpush1.bf16.msra.mxu0 0
      %1083 = vmatprep.subr.bf16.mxu0 0
      %1084 = vmatpush1.bf16.msra.mxu0 0
      %1085 = vmatprep.subr.bf16.mxu0 0
      %1086 = vmatpush1.bf16.msra.mxu0 0
      %1087 = vmatprep.subr.bf16.mxu0 0
      %1088 = vmatpush1.bf16.msra.mxu0 0
      %1089 = vmatprep.subr.bf16.mxu0 0
      %1090 = vmatpush1.bf16.msra.mxu0 %v681
      %1091 = vmatprep.subr.bf16.mxu0 0
      %1092 = vmatpush1.bf16.msra.mxu0 %v680
      %1093 = vmatprep.subr.bf16.mxu0 0
      %1094 = vmatpush2.bf16.msra.mxu0 0
      %1095 = vmatprep.subr.bf16.mxu0 0
      %1096 = vmatpush2.bf16.msra.mxu0 0
      %1097 = vmatprep.subr.bf16.mxu0 0
      %1098 = vmatpush2.bf16.msra.mxu0 0
      %1099 = vmatprep.subr.bf16.mxu0 0
      %1100 = vmatpush2.bf16.msra.mxu0 0
      %1101 = vmatprep.subr.bf16.mxu0 0
      %1102 = vmatpush2.bf16.msra.mxu0 0
      %1103 = vmatprep.subr.bf16.mxu0 0
      %1104 = vmatpush2.bf16.msra.mxu0 0
      %1105 = vmatprep.subr.bf16.mxu0 0
      %1106 = vmatpush2.bf16.msra.mxu0 0
      %1107 = vmatprep.subr.bf16.mxu0 0
      %1108 = vmatpush2.bf16.msra.mxu0 0
      %1109 = vmatprep.mubr.bf16.mxu0 0
      %1110 = vmatmul.mubr.bf16.gmra.mxu0 %v1075
      %v1111 = vpop.f32.mrf.mxu0
      %v1112 = vadd.f32 %v670, %v1111
      %v1113 = vpop.f32.mrf.mxu0
      %v1114 = vpop.f32.mrf.mxu0
      %v1115 = vadd.f32 %v670, %v1114
      %v1116 = vpop.f32.mrf.mxu0
      %1117 = vdwg.mxu0
      %v1118 = vadd.f32 %v1112, %v733
      %v1119 = vadd.f32 %v1115, %v734
      %s1120 = scalar_lea.vmem %s285, 16
      %1121 = vst.msk [vmem:[%s1120] sm:$0xff] %vm301, %v1118
      %1122 = vst.msk [vmem:[%s1120 + $0x8] sm:$0xff] %vm301, %v1119
      %s1123 = scalar_lea.vmem %s278, 32
      %v1124 = vld [vmem:[%s1123] sm:$0xff]
      %v1125 = vld [vmem:[%s1123 + $0x8] sm:$0xff]
      %v1126 = vsel %vm301, %v1124, 0.0
      %1127 = vadd.xlane.f32.xlu0 %v1126
      %v1128 = vpop.xlane.xlu0 %1127
      %v1129 = vsel %vm301, %v1125, 0.0
      %1130 = vadd.xlane.f32.xlu0 %v1129
      %v1131 = vpop.xlane.xlu0 %1130
      %v1132 = vmul.f32 %v1128, %v308
      %v1133 = vmul.f32 %v1131, %v308
      %v1134 = vsub.f32 %v1124, %v1132
      %v1135 = vsub.f32 %v1125, %v1133
      %v1136 = vmul.f32 %v1134, %v1134
      %v1137 = vmul.f32 %v1135, %v1135
      %v1138 = vsel %vm301, %v1136, 0.0
      %1139 = vadd.xlane.f32.xlu0 %v1138
      %v1140 = vpop.xlane.xlu0 %1139
      %v1141 = vsel %vm301, %v1137, 0.0
      %1142 = vadd.xlane.f32.xlu0 %v1141
      %v1143 = vpop.xlane.xlu0 %1142
      %v1144 = vmul.f32 %v1140, %v308
      %v1145 = vmul.f32 %v1143, %v308
      %v1146 = vadd.f32 %v1144, 1e-05
      %v1147 = vadd.f32 %v1145, 1e-05
      %v1148 = vrsqrt.pop %v1146
      %v1149 = vrsqrt.pop %v1147
      %v1150 = vmul.f32 %v1134, %v1148
      %v1151 = vmul.f32 %v1135, %v1149
      %v1152 = vmul.f32 %v1150, %v333
      %v1153 = vmul.f32 %v1151, %v333
      %v1154 = vadd.f32 %v1152, %v341
      %v1155 = vadd.f32 %v1153, %v341
      %v1156 = vpack.c.bf16 %v1155, %v1154
      %v1158 = vsel %vm301, %v1156, 0
      %1160 = vmatprep.subr.bf16.mxu0 0
      %1161 = vmatpush1.bf16.msra.mxu0 0
      %1162 = vmatprep.subr.bf16.mxu0 0
      %1163 = vmatpush1.bf16.msra.mxu0 0
      %1164 = vmatprep.subr.bf16.mxu0 0
      %1165 = vmatpush1.bf16.msra.mxu0 0
      %1166 = vmatprep.subr.bf16.mxu0 0
      %1167 = vmatpush1.bf16.msra.mxu0 0
      %1168 = vmatprep.subr.bf16.mxu0 0
      %1169 = vmatpush1.bf16.msra.mxu0 0
      %1170 = vmatprep.subr.bf16.mxu0 0
      %1171 = vmatpush1.bf16.msra.mxu0 0
      %1172 = vmatprep.subr.bf16.mxu0 0
      %1173 = vmatpush1.bf16.msra.mxu0 %v355
      %1174 = vmatprep.subr.bf16.mxu0 0
      %1175 = vmatpush1.bf16.msra.mxu0 %v354
      %1176 = vmatprep.subr.bf16.mxu0 0
      %1177 = vmatpush2.bf16.msra.mxu0 0
      %1178 = vmatprep.subr.bf16.mxu0 0
      %1179 = vmatpush2.bf16.msra.mxu0 0
      %1180 = vmatprep.subr.bf16.mxu0 0
      %1181 = vmatpush2.bf16.msra.mxu0 0
      %1182 = vmatprep.subr.bf16.mxu0 0
      %1183 = vmatpush2.bf16.msra.mxu0 0
      %1184 = vmatprep.subr.bf16.mxu0 0
      %1185 = vmatpush2.bf16.msra.mxu0 0
      %1186 = vmatprep.subr.bf16.mxu0 0
      %1187 = vmatpush2.bf16.msra.mxu0 0
      %1188 = vmatprep.subr.bf16.mxu0 0
      %1189 = vmatpush2.bf16.msra.mxu0 0
      %1190 = vmatprep.subr.bf16.mxu0 0
      %1191 = vmatpush2.bf16.msra.mxu0 0
      %1192 = vmatprep.mubr.bf16.mxu0 0
      %1193 = vmatmul.mubr.bf16.gmra.mxu0 %v1158
      %v1194 = vpop.f32.mrf.mxu0
      %v1195 = vadd.f32 0.0, %v1194
      %v1196 = vpop.f32.mrf.mxu0
      %v1197 = vpop.f32.mrf.mxu0
      %v1198 = vadd.f32 0.0, %v1197
      %v1199 = vpop.f32.mrf.mxu0
      %1200 = vdwg.mxu0
      %s1201 = scalar_lea.vmem %s6, 32
      %v1202 = vld [vmem:[%s1201] sm:$0xff]
      %v1203 = vld [vmem:[%s1201 + $0x8] sm:$0xff]
      %v1204 = vpack.c.bf16 %v1198, %v1195
      %1206 = vrot.lane.b32.xlu0 %v1204, 96
      %v1207 = vpop.permute.xlu0 %1206
      %v1209 = vsel %vm408, %v1204, 0
      %v1212 = vsel %vm408, %v1207, 0
      %1214 = vmatprep.subr.bf16.mxu0 0
      %1215 = vmatpush1.bf16.xpose.msra.mxu0 0
      %1216 = vmatprep.subr.bf16.mxu0 0
      %1217 = vmatpush1.bf16.xpose.msra.mxu0 0
      %1218 = vmatprep.subr.bf16.mxu0 0
      %1219 = vmatpush1.bf16.xpose.msra.mxu0 0
      %1220 = vmatprep.subr.bf16.mxu0 0
      %1221 = vmatpush1.bf16.xpose.msra.mxu0 0
      %1222 = vmatprep.subr.bf16.mxu0 0
      %1223 = vmatpush1.bf16.xpose.msra.mxu0 0
      %1224 = vmatprep.subr.bf16.mxu0 0
      %1225 = vmatpush1.bf16.xpose.msra.mxu0 0
      %1226 = vmatprep.subr.bf16.mxu0 0
      %1227 = vmatpush1.bf16.xpose.msra.mxu0 0
      %1228 = vmatprep.subr.bf16.mxu0 0
      %1229 = vmatpush1.bf16.xpose.msra.mxu0 %v1212
      %1230 = vmatprep.subr.bf16.mxu0 0
      %1231 = vmatpush2.bf16.xpose.msra.mxu0 0
      %1232 = vmatprep.subr.bf16.mxu0 0
      %1233 = vmatpush2.bf16.xpose.msra.mxu0 0
      %1234 = vmatprep.subr.bf16.mxu0 0
      %1235 = vmatpush2.bf16.xpose.msra.mxu0 0
      %1236 = vmatprep.subr.bf16.mxu0 0
      %1237 = vmatpush2.bf16.xpose.msra.mxu0 0
      %1238 = vmatprep.subr.bf16.mxu0 0
      %1239 = vmatpush2.bf16.xpose.msra.mxu0 0
      %1240 = vmatprep.subr.bf16.mxu0 0
      %1241 = vmatpush2.bf16.xpose.msra.mxu0 0
      %1242 = vmatprep.subr.bf16.mxu0 0
      %1243 = vmatpush2.bf16.xpose.msra.mxu0 0
      %1244 = vmatprep.subr.bf16.mxu0 0
      %1245 = vmatpush2.bf16.xpose.msra.mxu0 0
      %1246 = vmatprep.mubr.bf16.mxu0 0
      %1247 = vmatmul.mubr.bf16.gmra.mxu0 %v1209
      %v1248 = vpop.f32.mrf.mxu0
      %v1249 = vadd.f32 0.0, %v1248
      %v1250 = vpop.f32.mrf.mxu0
      %v1251 = vpop.f32.mrf.mxu0
      %v1252 = vadd.f32 0.0, %v1251
      %v1253 = vpop.f32.mrf.mxu0
      %1254 = vdwg.mxu0
      %v1255 = vmul.f32 %v1249, 0.25
      %v1256 = vmul.f32 %v1252, 0.25
      %v1257 = vadd.f32 %v1255, %v1202
      %v1258 = vadd.f32 %v1256, %v1203
      %v1259 = vsel %vm408, %v1257, -inf
      %1260 = vmax.xlane.f32.xlu0 %v1259
      %v1261 = vpop.xlane.xlu0 %1260
      %v1262 = vsel %vm408, %v1258, -inf
      %1263 = vmax.xlane.f32.xlu0 %v1262
      %v1264 = vpop.xlane.xlu0 %1263
      %v1265 = vsub.f32 %v1257, %v1261
      %v1266 = vsub.f32 %v1258, %v1264
      %v1267 = vmul.f32 %v1265, 1.442695
      %v1268 = vpow.pop %v1267
      %v1269 = vmul.f32 %v1266, 1.442695
      %v1270 = vpow.pop %v1269
      %v1271 = vsel %vm408, %v1268, 0.0
      %1272 = vadd.xlane.f32.xlu0 %v1271
      %v1273 = vpop.xlane.xlu0 %1272
      %v1274 = vsel %vm408, %v1270, 0.0
      %1275 = vadd.xlane.f32.xlu0 %v1274
      %v1276 = vpop.xlane.xlu0 %1275
      %v1277 = vrcp.pop %v1273
      %v1278 = vrcp.pop %v1276
      %v1279 = vmul.f32 %v1268, %v1277
      %v1280 = vmul.f32 %v1270, %v1278
      %v1281 = vpack.c.bf16 %v1280, %v1279
      %1282 = vrot.lane.b32.xlu0 %v1204, 64
      %v1283 = vpop.permute.xlu0 %1282
      %v1286 = vsel %vm408, %v1281, 0
      %1288 = vmatprep.subr.bf16.mxu0 0
      %1289 = vmatpush1.bf16.msra.mxu0 0
      %1290 = vmatprep.subr.bf16.mxu0 0
      %1291 = vmatpush1.bf16.msra.mxu0 0
      %1292 = vmatprep.subr.bf16.mxu0 0
      %1293 = vmatpush1.bf16.msra.mxu0 0
      %1294 = vmatprep.subr.bf16.mxu0 0
      %1295 = vmatpush1.bf16.msra.mxu0 0
      %1296 = vmatprep.subr.bf16.mxu0 0
      %1297 = vmatpush1.bf16.msra.mxu0 0
      %1298 = vmatprep.subr.bf16.mxu0 0
      %1299 = vmatpush1.bf16.msra.mxu0 0
      %1300 = vmatprep.subr.bf16.mxu0 0
      %1301 = vmatpush1.bf16.msra.mxu0 0
      %1302 = vmatprep.subr.bf16.mxu0 0
      %1303 = vmatpush1.bf16.msra.mxu0 %v1283
      %1304 = vmatprep.subr.bf16.mxu0 0
      %1305 = vmatpush2.bf16.msra.mxu0 0
      %1306 = vmatprep.subr.bf16.mxu0 0
      %1307 = vmatpush2.bf16.msra.mxu0 0
      %1308 = vmatprep.subr.bf16.mxu0 0
      %1309 = vmatpush2.bf16.msra.mxu0 0
      %1310 = vmatprep.subr.bf16.mxu0 0
      %1311 = vmatpush2.bf16.msra.mxu0 0
      %1312 = vmatprep.subr.bf16.mxu0 0
      %1313 = vmatpush2.bf16.msra.mxu0 0
      %1314 = vmatprep.subr.bf16.mxu0 0
      %1315 = vmatpush2.bf16.msra.mxu0 0
      %1316 = vmatprep.subr.bf16.mxu0 0
      %1317 = vmatpush2.bf16.msra.mxu0 0
      %1318 = vmatprep.subr.bf16.mxu0 0
      %1319 = vmatpush2.bf16.msra.mxu0 0
      %1320 = vmatprep.mubr.bf16.mxu0 0
      %1321 = vmatmul.mubr.bf16.gmra.mxu0 %v1286
      %v1322 = vpop.f32.mrf.mxu0
      %v1323 = vadd.f32 0.0, %v1322
      %v1324 = vpop.f32.mrf.mxu0
      %v1325 = vpop.f32.mrf.mxu0
      %v1326 = vadd.f32 0.0, %v1325
      %v1327 = vpop.f32.mrf.mxu0
      %1328 = vdwg.mxu0
      %1329 = vrot.lane.b32.xlu0 %v1204, 112
      %v1330 = vpop.permute.xlu0 %1329
      %1331 = vrot.lane.b32.xlu0 %v1204, 80
      %v1332 = vpop.permute.xlu0 %1331
      %v1334 = vsel %vm408, %v1330, 0
      %v1337 = vsel %vm408, %v1332, 0
      %1339 = vmatprep.subr.bf16.mxu0 0
      %1340 = vmatpush1.bf16.xpose.msra.mxu0 0
      %1341 = vmatprep.subr.bf16.mxu0 0
      %1342 = vmatpush1.bf16.xpose.msra.mxu0 0
      %1343 = vmatprep.subr.bf16.mxu0 0
      %1344 = vmatpush1.bf16.xpose.msra.mxu0 0
      %1345 = vmatprep.subr.bf16.mxu0 0
      %1346 = vmatpush1.bf16.xpose.msra.mxu0 0
      %1347 = vmatprep.subr.bf16.mxu0 0
      %1348 = vmatpush1.bf16.xpose.msra.mxu0 0
      %1349 = vmatprep.subr.bf16.mxu0 0
      %1350 = vmatpush1.bf16.xpose.msra.mxu0 0
      %1351 = vmatprep.subr.bf16.mxu0 0
      %1352 = vmatpush1.bf16.xpose.msra.mxu0 0
      %1353 = vmatprep.subr.bf16.mxu0 0
      %1354 = vmatpush1.bf16.xpose.msra.mxu0 %v1337
      %1355 = vmatprep.subr.bf16.mxu0 0
      %1356 = vmatpush2.bf16.xpose.msra.mxu0 0
      %1357 = vmatprep.subr.bf16.mxu0 0
      %1358 = vmatpush2.bf16.xpose.msra.mxu0 0
      %1359 = vmatprep.subr.bf16.mxu0 0
      %1360 = vmatpush2.bf16.xpose.msra.mxu0 0
      %1361 = vmatprep.subr.bf16.mxu0 0
      %1362 = vmatpush2.bf16.xpose.msra.mxu0 0
      %1363 = vmatprep.subr.bf16.mxu0 0
      %1364 = vmatpush2.bf16.xpose.msra.mxu0 0
      %1365 = vmatprep.subr.bf16.mxu0 0
      %1366 = vmatpush2.bf16.xpose.msra.mxu0 0
      %1367 = vmatprep.subr.bf16.mxu0 0
      %1368 = vmatpush2.bf16.xpose.msra.mxu0 0
      %1369 = vmatprep.subr.bf16.mxu0 0
      %1370 = vmatpush2.bf16.xpose.msra.mxu0 0
      %1371 = vmatprep.mubr.bf16.mxu0 0
      %1372 = vmatmul.mubr.bf16.gmra.mxu0 %v1334
      %v1373 = vpop.f32.mrf.mxu0
      %v1374 = vadd.f32 0.0, %v1373
      %v1375 = vpop.f32.mrf.mxu0
      %v1376 = vpop.f32.mrf.mxu0
      %v1377 = vadd.f32 0.0, %v1376
      %v1378 = vpop.f32.mrf.mxu0
      %1379 = vdwg.mxu0
      %v1380 = vmul.f32 %v1374, 0.25
      %v1381 = vmul.f32 %v1377, 0.25
      %v1382 = vadd.f32 %v1380, %v1202
      %v1383 = vadd.f32 %v1381, %v1203
      %v1384 = vsel %vm408, %v1382, -inf
      %1385 = vmax.xlane.f32.xlu0 %v1384
      %v1386 = vpop.xlane.xlu0 %1385
      %v1387 = vsel %vm408, %v1383, -inf
      %1388 = vmax.xlane.f32.xlu0 %v1387
      %v1389 = vpop.xlane.xlu0 %1388
      %v1390 = vsub.f32 %v1382, %v1386
      %v1391 = vsub.f32 %v1383, %v1389
      %v1392 = vmul.f32 %v1390, 1.442695
      %v1393 = vpow.pop %v1392
      %v1394 = vmul.f32 %v1391, 1.442695
      %v1395 = vpow.pop %v1394
      %v1396 = vsel %vm408, %v1393, 0.0
      %1397 = vadd.xlane.f32.xlu0 %v1396
      %v1398 = vpop.xlane.xlu0 %1397
      %v1399 = vsel %vm408, %v1395, 0.0
      %1400 = vadd.xlane.f32.xlu0 %v1399
      %v1401 = vpop.xlane.xlu0 %1400
      %v1402 = vrcp.pop %v1398
      %v1403 = vrcp.pop %v1401
      %v1404 = vmul.f32 %v1393, %v1402
      %v1405 = vmul.f32 %v1395, %v1403
      %v1406 = vpack.c.bf16 %v1405, %v1404
      %1407 = vrot.lane.b32.xlu0 %v1204, 48
      %v1408 = vpop.permute.xlu0 %1407
      %v1411 = vsel %vm408, %v1406, 0
      %1413 = vmatprep.subr.bf16.mxu0 0
      %1414 = vmatpush1.bf16.msra.mxu0 0
      %1415 = vmatprep.subr.bf16.mxu0 0
      %1416 = vmatpush1.bf16.msra.mxu0 0
      %1417 = vmatprep.subr.bf16.mxu0 0
      %1418 = vmatpush1.bf16.msra.mxu0 0
      %1419 = vmatprep.subr.bf16.mxu0 0
      %1420 = vmatpush1.bf16.msra.mxu0 0
      %1421 = vmatprep.subr.bf16.mxu0 0
      %1422 = vmatpush1.bf16.msra.mxu0 0
      %1423 = vmatprep.subr.bf16.mxu0 0
      %1424 = vmatpush1.bf16.msra.mxu0 0
      %1425 = vmatprep.subr.bf16.mxu0 0
      %1426 = vmatpush1.bf16.msra.mxu0 0
      %1427 = vmatprep.subr.bf16.mxu0 0
      %1428 = vmatpush1.bf16.msra.mxu0 %v1408
      %1429 = vmatprep.subr.bf16.mxu0 0
      %1430 = vmatpush2.bf16.msra.mxu0 0
      %1431 = vmatprep.subr.bf16.mxu0 0
      %1432 = vmatpush2.bf16.msra.mxu0 0
      %1433 = vmatprep.subr.bf16.mxu0 0
      %1434 = vmatpush2.bf16.msra.mxu0 0
      %1435 = vmatprep.subr.bf16.mxu0 0
      %1436 = vmatpush2.bf16.msra.mxu0 0
      %1437 = vmatprep.subr.bf16.mxu0 0
      %1438 = vmatpush2.bf16.msra.mxu0 0
      %1439 = vmatprep.subr.bf16.mxu0 0
      %1440 = vmatpush2.bf16.msra.mxu0 0
      %1441 = vmatprep.subr.bf16.mxu0 0
      %1442 = vmatpush2.bf16.msra.mxu0 0
      %1443 = vmatprep.subr.bf16.mxu0 0
      %1444 = vmatpush2.bf16.msra.mxu0 0
      %1445 = vmatprep.mubr.bf16.mxu0 0
      %1446 = vmatmul.mubr.bf16.gmra.mxu0 %v1411
      %v1447 = vpop.f32.mrf.mxu0
      %v1448 = vadd.f32 0.0, %v1447
      %v1449 = vpop.f32.mrf.mxu0
      %v1450 = vpop.f32.mrf.mxu0
      %v1451 = vadd.f32 0.0, %v1450
      %v1452 = vpop.f32.mrf.mxu0
      %1453 = vdwg.mxu0
      %1456 = vrot.lane.b32.xlu0 %v1448, 16
      %v1457 = vpop.permute.xlu0 %1456
      %1458 = vrot.lane.b32.xlu0 %v1451, 16
      %v1459 = vpop.permute.xlu0 %1458
      %v1462 = vsel %vm408, %v1323, %v1457
      %v1463 = vsel %vm408, %v1326, %v1459
      %v1464 = vpack.c.bf16 %v1463, %v1462
      %v1466 = vsel %vm301, %v1464, 0
      %1468 = vmatprep.subr.bf16.mxu0 0
      %1469 = vmatpush1.bf16.msra.mxu0 0
      %1470 = vmatprep.subr.bf16.mxu0 0
      %1471 = vmatpush1.bf16.msra.mxu0 0
      %1472 = vmatprep.subr.bf16.mxu0 0
      %1473 = vmatpush1.bf16.msra.mxu0 0
      %1474 = vmatprep.subr.bf16.mxu0 0
      %1475 = vmatpush1.bf16.msra.mxu0 0
      %1476 = vmatprep.subr.bf16.mxu0 0
      %1477 = vmatpush1.bf16.msra.mxu0 0
      %1478 = vmatprep.subr.bf16.mxu0 0
      %1479 = vmatpush1.bf16.msra.mxu0 0
      %1480 = vmatprep.subr.bf16.mxu0 0
      %1481 = vmatpush1.bf16.msra.mxu0 %v681
      %1482 = vmatprep.subr.bf16.mxu0 0
      %1483 = vmatpush1.bf16.msra.mxu0 %v680
      %1484 = vmatprep.subr.bf16.mxu0 0
      %1485 = vmatpush2.bf16.msra.mxu0 0
      %1486 = vmatprep.subr.bf16.mxu0 0
      %1487 = vmatpush2.bf16.msra.mxu0 0
      %1488 = vmatprep.subr.bf16.mxu0 0
      %1489 = vmatpush2.bf16.msra.mxu0 0
      %1490 = vmatprep.subr.bf16.mxu0 0
      %1491 = vmatpush2.bf16.msra.mxu0 0
      %1492 = vmatprep.subr.bf16.mxu0 0
      %1493 = vmatpush2.bf16.msra.mxu0 0
      %1494 = vmatprep.subr.bf16.mxu0 0
      %1495 = vmatpush2.bf16.msra.mxu0 0
      %1496 = vmatprep.subr.bf16.mxu0 0
      %1497 = vmatpush2.bf16.msra.mxu0 0
      %1498 = vmatprep.subr.bf16.mxu0 0
      %1499 = vmatpush2.bf16.msra.mxu0 0
      %1500 = vmatprep.mubr.bf16.mxu0 0
      %1501 = vmatmul.mubr.bf16.gmra.mxu0 %v1466
      %v1502 = vpop.f32.mrf.mxu0
      %v1503 = vadd.f32 %v670, %v1502
      %v1504 = vpop.f32.mrf.mxu0
      %v1505 = vpop.f32.mrf.mxu0
      %v1506 = vadd.f32 %v670, %v1505
      %v1507 = vpop.f32.mrf.mxu0
      %1508 = vdwg.mxu0
      %v1509 = vadd.f32 %v1503, %v1124
      %v1510 = vadd.f32 %v1506, %v1125
      %s1511 = scalar_lea.vmem %s285, 32
      %1512 = vst.msk [vmem:[%s1511] sm:$0xff] %vm301, %v1509
      %1513 = vst.msk [vmem:[%s1511 + $0x8] sm:$0xff] %vm301, %v1510
      %s1514 = scalar_lea.vmem %s278, 48
      %v1515 = vld [vmem:[%s1514] sm:$0xff]
      %v1516 = vld [vmem:[%s1514 + $0x8] sm:$0xff]
      %v1517 = vsel %vm301, %v1515, 0.0
      %1518 = vadd.xlane.f32.xlu0 %v1517
      %v1519 = vpop.xlane.xlu0 %1518
      %v1520 = vsel %vm301, %v1516, 0.0
      %1521 = vadd.xlane.f32.xlu0 %v1520
      %v1522 = vpop.xlane.xlu0 %1521
      %v1523 = vmul.f32 %v1519, %v308
      %v1524 = vmul.f32 %v1522, %v308
      %v1525 = vsub.f32 %v1515, %v1523
      %v1526 = vsub.f32 %v1516, %v1524
      %v1527 = vmul.f32 %v1525, %v1525
      %v1528 = vmul.f32 %v1526, %v1526
      %v1529 = vsel %vm301, %v1527, 0.0
      %1530 = vadd.xlane.f32.xlu0 %v1529
      %v1531 = vpop.xlane.xlu0 %1530
      %v1532 = vsel %vm301, %v1528, 0.0
      %1533 = vadd.xlane.f32.xlu0 %v1532
      %v1534 = vpop.xlane.xlu0 %1533
      %v1535 = vmul.f32 %v1531, %v308
      %v1536 = vmul.f32 %v1534, %v308
      %v1537 = vadd.f32 %v1535, 1e-05
      %v1538 = vadd.f32 %v1536, 1e-05
      %v1539 = vrsqrt.pop %v1537
      %v1540 = vrsqrt.pop %v1538
      %v1541 = vmul.f32 %v1525, %v1539
      %v1542 = vmul.f32 %v1526, %v1540
      %v1543 = vmul.f32 %v1541, %v333
      %v1544 = vmul.f32 %v1542, %v333
      %v1545 = vadd.f32 %v1543, %v341
      %v1546 = vadd.f32 %v1544, %v341
      %v1547 = vpack.c.bf16 %v1546, %v1545
      %v1549 = vsel %vm301, %v1547, 0
      %1551 = vmatprep.subr.bf16.mxu0 0
      %1552 = vmatpush1.bf16.msra.mxu0 0
      %1553 = vmatprep.subr.bf16.mxu0 0
      %1554 = vmatpush1.bf16.msra.mxu0 0
      %1555 = vmatprep.subr.bf16.mxu0 0
      %1556 = vmatpush1.bf16.msra.mxu0 0
      %1557 = vmatprep.subr.bf16.mxu0 0
      %1558 = vmatpush1.bf16.msra.mxu0 0
      %1559 = vmatprep.subr.bf16.mxu0 0
      %1560 = vmatpush1.bf16.msra.mxu0 0
      %1561 = vmatprep.subr.bf16.mxu0 0
      %1562 = vmatpush1.bf16.msra.mxu0 0
      %1563 = vmatprep.subr.bf16.mxu0 0
      %1564 = vmatpush1.bf16.msra.mxu0 %v355
      %1565 = vmatprep.subr.bf16.mxu0 0
      %1566 = vmatpush1.bf16.msra.mxu0 %v354
      %1567 = vmatprep.subr.bf16.mxu0 0
      %1568 = vmatpush2.bf16.msra.mxu0 0
      %1569 = vmatprep.subr.bf16.mxu0 0
      %1570 = vmatpush2.bf16.msra.mxu0 0
      %1571 = vmatprep.subr.bf16.mxu0 0
      %1572 = vmatpush2.bf16.msra.mxu0 0
      %1573 = vmatprep.subr.bf16.mxu0 0
      %1574 = vmatpush2.bf16.msra.mxu0 0
      %1575 = vmatprep.subr.bf16.mxu0 0
      %1576 = vmatpush2.bf16.msra.mxu0 0
      %1577 = vmatprep.subr.bf16.mxu0 0
      %1578 = vmatpush2.bf16.msra.mxu0 0
      %1579 = vmatprep.subr.bf16.mxu0 0
      %1580 = vmatpush2.bf16.msra.mxu0 0
      %1581 = vmatprep.subr.bf16.mxu0 0
      %1582 = vmatpush2.bf16.msra.mxu0 0
      %1583 = vmatprep.mubr.bf16.mxu0 0
      %1584 = vmatmul.mubr.bf16.gmra.mxu0 %v1549
      %v1585 = vpop.f32.mrf.mxu0
      %v1586 = vadd.f32 0.0, %v1585
      %v1587 = vpop.f32.mrf.mxu0
      %v1588 = vpop.f32.mrf.mxu0
      %v1589 = vadd.f32 0.0, %v1588
      %v1590 = vpop.f32.mrf.mxu0
      %1591 = vdwg.mxu0
      %s1592 = scalar_lea.vmem %s6, 48
      %v1593 = vld [vmem:[%s1592] sm:$0xff]
      %v1594 = vld [vmem:[%s1592 + $0x8] sm:$0xff]
      %v1595 = vpack.c.bf16 %v1589, %v1586
      %1597 = vrot.lane.b32.xlu0 %v1595, 96
      %v1598 = vpop.permute.xlu0 %1597
      %v1600 = vsel %vm408, %v1595, 0
      %v1603 = vsel %vm408, %v1598, 0
      %1605 = vmatprep.subr.bf16.mxu0 0
      %1606 = vmatpush1.bf16.xpose.msra.mxu0 0
      %1607 = vmatprep.subr.bf16.mxu0 0
      %1608 = vmatpush1.bf16.xpose.msra.mxu0 0
      %1609 = vmatprep.subr.bf16.mxu0 0
      %1610 = vmatpush1.bf16.xpose.msra.mxu0 0
      %1611 = vmatprep.subr.bf16.mxu0 0
      %1612 = vmatpush1.bf16.xpose.msra.mxu0 0
      %1613 = vmatprep.subr.bf16.mxu0 0
      %1614 = vmatpush1.bf16.xpose.msra.mxu0 0
      %1615 = vmatprep.subr.bf16.mxu0 0
      %1616 = vmatpush1.bf16.xpose.msra.mxu0 0
      %1617 = vmatprep.subr.bf16.mxu0 0
      %1618 = vmatpush1.bf16.xpose.msra.mxu0 0
      %1619 = vmatprep.subr.bf16.mxu0 0
      %1620 = vmatpush1.bf16.xpose.msra.mxu0 %v1603
      %1621 = vmatprep.subr.bf16.mxu0 0
      %1622 = vmatpush2.bf16.xpose.msra.mxu0 0
      %1623 = vmatprep.subr.bf16.mxu0 0
      %1624 = vmatpush2.bf16.xpose.msra.mxu0 0
      %1625 = vmatprep.subr.bf16.mxu0 0
      %1626 = vmatpush2.bf16.xpose.msra.mxu0 0
      %1627 = vmatprep.subr.bf16.mxu0 0
      %1628 = vmatpush2.bf16.xpose.msra.mxu0 0
      %1629 = vmatprep.subr.bf16.mxu0 0
      %1630 = vmatpush2.bf16.xpose.msra.mxu0 0
      %1631 = vmatprep.subr.bf16.mxu0 0
      %1632 = vmatpush2.bf16.xpose.msra.mxu0 0
      %1633 = vmatprep.subr.bf16.mxu0 0
      %1634 = vmatpush2.bf16.xpose.msra.mxu0 0
      %1635 = vmatprep.subr.bf16.mxu0 0
      %1636 = vmatpush2.bf16.xpose.msra.mxu0 0
      %1637 = vmatprep.mubr.bf16.mxu0 0
      %1638 = vmatmul.mubr.bf16.gmra.mxu0 %v1600
      %v1639 = vpop.f32.mrf.mxu0
      %v1640 = vadd.f32 0.0, %v1639
      %v1641 = vpop.f32.mrf.mxu0
      %v1642 = vpop.f32.mrf.mxu0
      %v1643 = vadd.f32 0.0, %v1642
      %v1644 = vpop.f32.mrf.mxu0
      %1645 = vdwg.mxu0
      %v1646 = vmul.f32 %v1640, 0.25
      %v1647 = vmul.f32 %v1643, 0.25
      %v1648 = vadd.f32 %v1646, %v1593
      %v1649 = vadd.f32 %v1647, %v1594
      %v1650 = vsel %vm408, %v1648, -inf
      %1651 = vmax.xlane.f32.xlu0 %v1650
      %v1652 = vpop.xlane.xlu0 %1651
      %v1653 = vsel %vm408, %v1649, -inf
      %1654 = vmax.xlane.f32.xlu0 %v1653
      %v1655 = vpop.xlane.xlu0 %1654
      %v1656 = vsub.f32 %v1648, %v1652
      %v1657 = vsub.f32 %v1649, %v1655
      %v1658 = vmul.f32 %v1656, 1.442695
      %v1659 = vpow.pop %v1658
      %v1660 = vmul.f32 %v1657, 1.442695
      %v1661 = vpow.pop %v1660
      %v1662 = vsel %vm408, %v1659, 0.0
      %1663 = vadd.xlane.f32.xlu0 %v1662
      %v1664 = vpop.xlane.xlu0 %1663
      %v1665 = vsel %vm408, %v1661, 0.0
      %1666 = vadd.xlane.f32.xlu0 %v1665
      %v1667 = vpop.xlane.xlu0 %1666
      %v1668 = vrcp.pop %v1664
      %v1669 = vrcp.pop %v1667
      %v1670 = vmul.f32 %v1659, %v1668
      %v1671 = vmul.f32 %v1661, %v1669
      %v1672 = vpack.c.bf16 %v1671, %v1670
      %1673 = vrot.lane.b32.xlu0 %v1595, 64
      %v1674 = vpop.permute.xlu0 %1673
      %v1677 = vsel %vm408, %v1672, 0
      %1679 = vmatprep.subr.bf16.mxu0 0
      %1680 = vmatpush1.bf16.msra.mxu0 0
      %1681 = vmatprep.subr.bf16.mxu0 0
      %1682 = vmatpush1.bf16.msra.mxu0 0
      %1683 = vmatprep.subr.bf16.mxu0 0
      %1684 = vmatpush1.bf16.msra.mxu0 0
      %1685 = vmatprep.subr.bf16.mxu0 0
      %1686 = vmatpush1.bf16.msra.mxu0 0
      %1687 = vmatprep.subr.bf16.mxu0 0
      %1688 = vmatpush1.bf16.msra.mxu0 0
      %1689 = vmatprep.subr.bf16.mxu0 0
      %1690 = vmatpush1.bf16.msra.mxu0 0
      %1691 = vmatprep.subr.bf16.mxu0 0
      %1692 = vmatpush1.bf16.msra.mxu0 0
      %1693 = vmatprep.subr.bf16.mxu0 0
      %1694 = vmatpush1.bf16.msra.mxu0 %v1674
      %1695 = vmatprep.subr.bf16.mxu0 0
      %1696 = vmatpush2.bf16.msra.mxu0 0
      %1697 = vmatprep.subr.bf16.mxu0 0
      %1698 = vmatpush2.bf16.msra.mxu0 0
      %1699 = vmatprep.subr.bf16.mxu0 0
      %1700 = vmatpush2.bf16.msra.mxu0 0
      %1701 = vmatprep.subr.bf16.mxu0 0
      %1702 = vmatpush2.bf16.msra.mxu0 0
      %1703 = vmatprep.subr.bf16.mxu0 0
      %1704 = vmatpush2.bf16.msra.mxu0 0
      %1705 = vmatprep.subr.bf16.mxu0 0
      %1706 = vmatpush2.bf16.msra.mxu0 0
      %1707 = vmatprep.subr.bf16.mxu0 0
      %1708 = vmatpush2.bf16.msra.mxu0 0
      %1709 = vmatprep.subr.bf16.mxu0 0
      %1710 = vmatpush2.bf16.msra.mxu0 0
      %1711 = vmatprep.mubr.bf16.mxu0 0
      %1712 = vmatmul.mubr.bf16.gmra.mxu0 %v1677
      %v1713 = vpop.f32.mrf.mxu0
      %v1714 = vadd.f32 0.0, %v1713
      %v1715 = vpop.f32.mrf.mxu0
      %v1716 = vpop.f32.mrf.mxu0
      %v1717 = vadd.f32 0.0, %v1716
      %v1718 = vpop.f32.mrf.mxu0
      %1719 = vdwg.mxu0
      %1720 = vrot.lane.b32.xlu0 %v1595, 112
      %v1721 = vpop.permute.xlu0 %1720
      %1722 = vrot.lane.b32.xlu0 %v1595, 80
      %v1723 = vpop.permute.xlu0 %1722
      %v1725 = vsel %vm408, %v1721, 0
      %v1728 = vsel %vm408, %v1723, 0
      %1730 = vmatprep.subr.bf16.mxu0 0
      %1731 = vmatpush1.bf16.xpose.msra.mxu0 0
      %1732 = vmatprep.subr.bf16.mxu0 0
      %1733 = vmatpush1.bf16.xpose.msra.mxu0 0
      %1734 = vmatprep.subr.bf16.mxu0 0
      %1735 = vmatpush1.bf16.xpose.msra.mxu0 0
      %1736 = vmatprep.subr.bf16.mxu0 0
      %1737 = vmatpush1.bf16.xpose.msra.mxu0 0
      %1738 = vmatprep.subr.bf16.mxu0 0
      %1739 = vmatpush1.bf16.xpose.msra.mxu0 0
      %1740 = vmatprep.subr.bf16.mxu0 0
      %1741 = vmatpush1.bf16.xpose.msra.mxu0 0
      %1742 = vmatprep.subr.bf16.mxu0 0
      %1743 = vmatpush1.bf16.xpose.msra.mxu0 0
      %1744 = vmatprep.subr.bf16.mxu0 0
      %1745 = vmatpush1.bf16.xpose.msra.mxu0 %v1728
      %1746 = vmatprep.subr.bf16.mxu0 0
      %1747 = vmatpush2.bf16.xpose.msra.mxu0 0
      %1748 = vmatprep.subr.bf16.mxu0 0
      %1749 = vmatpush2.bf16.xpose.msra.mxu0 0
      %1750 = vmatprep.subr.bf16.mxu0 0
      %1751 = vmatpush2.bf16.xpose.msra.mxu0 0
      %1752 = vmatprep.subr.bf16.mxu0 0
      %1753 = vmatpush2.bf16.xpose.msra.mxu0 0
      %1754 = vmatprep.subr.bf16.mxu0 0
      %1755 = vmatpush2.bf16.xpose.msra.mxu0 0
      %1756 = vmatprep.subr.bf16.mxu0 0
      %1757 = vmatpush2.bf16.xpose.msra.mxu0 0
      %1758 = vmatprep.subr.bf16.mxu0 0
      %1759 = vmatpush2.bf16.xpose.msra.mxu0 0
      %1760 = vmatprep.subr.bf16.mxu0 0
      %1761 = vmatpush2.bf16.xpose.msra.mxu0 0
      %1762 = vmatprep.mubr.bf16.mxu0 0
      %1763 = vmatmul.mubr.bf16.gmra.mxu0 %v1725
      %v1764 = vpop.f32.mrf.mxu0
      %v1765 = vadd.f32 0.0, %v1764
      %v1766 = vpop.f32.mrf.mxu0
      %v1767 = vpop.f32.mrf.mxu0
      %v1768 = vadd.f32 0.0, %v1767
      %v1769 = vpop.f32.mrf.mxu0
      %1770 = vdwg.mxu0
      %v1771 = vmul.f32 %v1765, 0.25
      %v1772 = vmul.f32 %v1768, 0.25
      %v1773 = vadd.f32 %v1771, %v1593
      %v1774 = vadd.f32 %v1772, %v1594
      %v1775 = vsel %vm408, %v1773, -inf
      %1776 = vmax.xlane.f32.xlu0 %v1775
      %v1777 = vpop.xlane.xlu0 %1776
      %v1778 = vsel %vm408, %v1774, -inf
      %1779 = vmax.xlane.f32.xlu0 %v1778
      %v1780 = vpop.xlane.xlu0 %1779
      %v1781 = vsub.f32 %v1773, %v1777
      %v1782 = vsub.f32 %v1774, %v1780
      %v1783 = vmul.f32 %v1781, 1.442695
      %v1784 = vpow.pop %v1783
      %v1785 = vmul.f32 %v1782, 1.442695
      %v1786 = vpow.pop %v1785
      %v1787 = vsel %vm408, %v1784, 0.0
      %1788 = vadd.xlane.f32.xlu0 %v1787
      %v1789 = vpop.xlane.xlu0 %1788
      %v1790 = vsel %vm408, %v1786, 0.0
      %1791 = vadd.xlane.f32.xlu0 %v1790
      %v1792 = vpop.xlane.xlu0 %1791
      %v1793 = vrcp.pop %v1789
      %v1794 = vrcp.pop %v1792
      %v1795 = vmul.f32 %v1784, %v1793
      %v1796 = vmul.f32 %v1786, %v1794
      %v1797 = vpack.c.bf16 %v1796, %v1795
      %1798 = vrot.lane.b32.xlu0 %v1595, 48
      %v1799 = vpop.permute.xlu0 %1798
      %v1802 = vsel %vm408, %v1797, 0
      %1804 = vmatprep.subr.bf16.mxu0 0
      %1805 = vmatpush1.bf16.msra.mxu0 0
      %1806 = vmatprep.subr.bf16.mxu0 0
      %1807 = vmatpush1.bf16.msra.mxu0 0
      %1808 = vmatprep.subr.bf16.mxu0 0
      %1809 = vmatpush1.bf16.msra.mxu0 0
      %1810 = vmatprep.subr.bf16.mxu0 0
      %1811 = vmatpush1.bf16.msra.mxu0 0
      %1812 = vmatprep.subr.bf16.mxu0 0
      %1813 = vmatpush1.bf16.msra.mxu0 0
      %1814 = vmatprep.subr.bf16.mxu0 0
      %1815 = vmatpush1.bf16.msra.mxu0 0
      %1816 = vmatprep.subr.bf16.mxu0 0
      %1817 = vmatpush1.bf16.msra.mxu0 0
      %1818 = vmatprep.subr.bf16.mxu0 0
      %1819 = vmatpush1.bf16.msra.mxu0 %v1799
      %1820 = vmatprep.subr.bf16.mxu0 0
      %1821 = vmatpush2.bf16.msra.mxu0 0
      %1822 = vmatprep.subr.bf16.mxu0 0
      %1823 = vmatpush2.bf16.msra.mxu0 0
      %1824 = vmatprep.subr.bf16.mxu0 0
      %1825 = vmatpush2.bf16.msra.mxu0 0
      %1826 = vmatprep.subr.bf16.mxu0 0
      %1827 = vmatpush2.bf16.msra.mxu0 0
      %1828 = vmatprep.subr.bf16.mxu0 0
      %1829 = vmatpush2.bf16.msra.mxu0 0
      %1830 = vmatprep.subr.bf16.mxu0 0
      %1831 = vmatpush2.bf16.msra.mxu0 0
      %1832 = vmatprep.subr.bf16.mxu0 0
      %1833 = vmatpush2.bf16.msra.mxu0 0
      %1834 = vmatprep.subr.bf16.mxu0 0
      %1835 = vmatpush2.bf16.msra.mxu0 0
      %1836 = vmatprep.mubr.bf16.mxu0 0
      %1837 = vmatmul.mubr.bf16.gmra.mxu0 %v1802
      %v1838 = vpop.f32.mrf.mxu0
      %v1839 = vadd.f32 0.0, %v1838
      %v1840 = vpop.f32.mrf.mxu0
      %v1841 = vpop.f32.mrf.mxu0
      %v1842 = vadd.f32 0.0, %v1841
      %v1843 = vpop.f32.mrf.mxu0
      %1844 = vdwg.mxu0
      %1847 = vrot.lane.b32.xlu0 %v1839, 16
      %v1848 = vpop.permute.xlu0 %1847
      %1849 = vrot.lane.b32.xlu0 %v1842, 16
      %v1850 = vpop.permute.xlu0 %1849
      %v1853 = vsel %vm408, %v1714, %v1848
      %v1854 = vsel %vm408, %v1717, %v1850
      %v1855 = vpack.c.bf16 %v1854, %v1853
      %v1857 = vsel %vm301, %v1855, 0
      %1859 = vmatprep.subr.bf16.mxu0 0
      %1860 = vmatpush1.bf16.msra.mxu0 0
      %1861 = vmatprep.subr.bf16.mxu0 0
      %1862 = vmatpush1.bf16.msra.mxu0 0
      %1863 = vmatprep.subr.bf16.mxu0 0
      %1864 = vmatpush1.bf16.msra.mxu0 0
      %1865 = vmatprep.subr.bf16.mxu0 0
      %1866 = vmatpush1.bf16.msra.mxu0 0
      %1867 = vmatprep.subr.bf16.mxu0 0
      %1868 = vmatpush1.bf16.msra.mxu0 0
      %1869 = vmatprep.subr.bf16.mxu0 0
      %1870 = vmatpush1.bf16.msra.mxu0 0
      %1871 = vmatprep.subr.bf16.mxu0 0
      %1872 = vmatpush1.bf16.msra.mxu0 %v681
      %1873 = vmatprep.subr.bf16.mxu0 0
      %1874 = vmatpush1.bf16.msra.mxu0 %v680
      %1875 = vmatprep.subr.bf16.mxu0 0
      %1876 = vmatpush2.bf16.msra.mxu0 0
      %1877 = vmatprep.subr.bf16.mxu0 0
      %1878 = vmatpush2.bf16.msra.mxu0 0
      %1879 = vmatprep.subr.bf16.mxu0 0
      %1880 = vmatpush2.bf16.msra.mxu0 0
      %1881 = vmatprep.subr.bf16.mxu0 0
      %1882 = vmatpush2.bf16.msra.mxu0 0
      %1883 = vmatprep.subr.bf16.mxu0 0
      %1884 = vmatpush2.bf16.msra.mxu0 0
      %1885 = vmatprep.subr.bf16.mxu0 0
      %1886 = vmatpush2.bf16.msra.mxu0 0
      %1887 = vmatprep.subr.bf16.mxu0 0
      %1888 = vmatpush2.bf16.msra.mxu0 0
      %1889 = vmatprep.subr.bf16.mxu0 0
      %1890 = vmatpush2.bf16.msra.mxu0 0
      %1891 = vmatprep.mubr.bf16.mxu0 0
      %1892 = vmatmul.mubr.bf16.gmra.mxu0 %v1857
      %v1893 = vpop.f32.mrf.mxu0
      %v1894 = vadd.f32 %v670, %v1893
      %v1895 = vpop.f32.mrf.mxu0
      %v1896 = vpop.f32.mrf.mxu0
      %v1897 = vadd.f32 %v670, %v1896
      %v1898 = vpop.f32.mrf.mxu0
      %1899 = vdwg.mxu0
      %v1900 = vadd.f32 %v1894, %v1515
      %v1901 = vadd.f32 %v1897, %v1516
      %s1902 = scalar_lea.vmem %s285, 48
      %1903 = vst.msk [vmem:[%s1902] sm:$0xff] %vm301, %v1900
      %1904 = vst.msk [vmem:[%s1902 + $0x8] sm:$0xff] %vm301, %v1901
      %s1905 = smul.u32 4, %s18
      %p1906 = scmp.lt.s32.totalorder %s1905, 7
      %s1907 = scalar_select %p1906, %s1905, 7
      %s1908 = smul.addr %s1907, 2
      %s1909 = smul.addr %s1908, 8
      %s1910 = scalar_lea.vmem %s7, %s1909
      // Predicated region
      $region49: #{_lambda_.8} parent=47 // pred_check
        %p1911 = pneg %p188
      $region50: #{_lambda_.8} parent=47 // pred_check_branch
        %1913 = sbr.rel (%p1911) target = $region52
      $region51: #{_lambda_.8} parent=47 // pred_region
        %s1914 = smul.u32 4, %s18
      $region52: #{_lambda_.8} parent=47 // pred_fallthru
        _
    $region48: #{_lambda_.8} parent=5 // pred_fallthru
      _
    %p1915 = scmp.le.s32.totalorder 2, %s13
    // Predicated region
    $region53: #{_lambda_.8} parent=5 // pred_check
      %p1916 = pneg %p1915
    $region54: #{_lambda_.8} parent=5 // pred_check_branch
      %1918 = sbr.rel (%p1916) target = $region56
    $region55: #{_lambda_.8} parent=5 // pred_region
      %s1919 = ssub.s32 %s13, 2
      // Predicated region
      $region57: #{_lambda_.8} parent=55 // pred_check
        %p1920 = pneg %p194
      $region58: #{_lambda_.8} parent=55 // pred_check_branch
        %1922 = sbr.rel (%p1920) target = $region60
      $region59: #{_lambda_.8} parent=55 // pred_region
        %s1923 = smul.u32 4, %s19
        %p1924 = scmp.lt.s32.totalorder %s1923, 7
        %s1925 = scalar_select %p1924, %s1923, 7
        %s1926 = smul.addr %s1925, 2
        %s1927 = smul.addr %s1926, 8
        %s1928 = scalar_lea.vmem %s7, %s1927
      $region60: #{_lambda_.8} parent=55 // pred_fallthru
        _
    $region56: #{_lambda_.8} parent=5 // pred_fallthru
      _
  $region6: #{_lambda_.8} parent=0 // loop_footer
    %s17 = sadd.s32 1, %s13
  $region7: #{_lambda_.8} parent=0 // loop_footer_branch
    %12 = sbr.rel target = $region3
  $region8: #{_lambda_.8} parent=0 // loop_exit
    _

</llo_original>
